<compile_context>
chip_gen: v6e
topology: v6e:2x2x1
jax: 0.10.0
libtpu: 0.0.40
codegen_flags: <defaults>
</compile_context>

<pallas_src>
import functools

import jax
import jax.numpy as jnp
import numpy as np
from jax.experimental import pallas as pl
from jax.experimental.pallas import tpu as pltpu


# ---------------------------------------------------------------------------
# Fused kernel: squeeze(1x1)+ReLU+concat -> pose0(3x3)+ReLU -> pose1(3x3)+ReLU
#               -> head(spatial mean -> 1x1 proj -> 0.01 scale)
# One grid step == NB batch elements.
# ---------------------------------------------------------------------------
def _pose_decoder_kernel(feats_ref, sq_w_ref, sq_b_ref,
                         p0_w_ref, p0_b_ref, p1_w_ref, p1_b_ref,
                         p2_wt_ref, p2_b_ref,
                         o_ref,
                         cat_pad, x1_pad,
                         *, F, H, W, NB):
    f32 = jnp.float32
    bf16 = jnp.bfloat16
    C_last = feats_ref.shape[-1]
    HW = H * W
    Cin0 = F * 256

    # --- zero only the 1-pixel borders of the padded scratch buffers; the
    #     interiors are fully overwritten below.  Done every step because
    #     scratch is per-core under megacore sharding (a first-step-only init
    #     would leave the second core's border uninitialized).
    def zero_border(buf, C):
        buf[:, 0:1, :, :] = jnp.zeros((NB, 1, W + 2, C), bf16)
        buf[:, H + 1:H + 2, :, :] = jnp.zeros((NB, 1, W + 2, C), bf16)
        buf[:, :, 0:1, :] = jnp.zeros((NB, H + 2, 1, C), bf16)
        buf[:, :, W + 1:W + 2, :] = jnp.zeros((NB, H + 2, 1, C), bf16)

    zero_border(cat_pad, Cin0)
    zero_border(x1_pad, 256)

    # --- squeeze 1x1 conv + ReLU: one fused MXU matmul over all NB*F maps.
    x = feats_ref[...].reshape(NB * F * HW, C_last)                     # bf16
    sq = jnp.dot(x, sq_w_ref[...], preferred_element_type=f32)          # MXU
    sq = jnp.maximum(sq + sq_b_ref[...], 0.0)                           # f32 epilogue
    sq = sq.reshape(NB, F, H, W, 256).astype(bf16)
    # channel-concat of the F squeezed maps, written once into the interior.
    cat = jnp.concatenate([sq[:, f] for f in range(F)], axis=-1)        # (NB,H,W,Cin0)
    cat_pad[:, 1:1 + H, 1:1 + W, :] = cat

    # --- 3x3 conv (pad=1) via im2col + ONE long-K matmul (value accumulation).
    def conv3x3(pad_buf, w_ref, b_ref):
        Cin = pad_buf.shape[-1]
        taps = [pad_buf[:, dy:dy + H, dx:dx + W, :].reshape(NB * HW, Cin)
                for dy in range(3) for dx in range(3)]
        patches = jnp.concatenate(taps, axis=-1)                        # (NB*HW, 9*Cin)
        y = jnp.dot(patches, w_ref[...], preferred_element_type=f32)    # MXU, K=9*Cin
        return jnp.maximum(y + b_ref[...], 0.0)                         # (NB*HW,256) f32

    x1 = conv3x3(cat_pad, p0_w_ref, p0_b_ref)
    x1_pad[:, 1:1 + H, 1:1 + W, :] = x1.reshape(NB, H, W, 256).astype(bf16)
    x2 = conv3x3(x1_pad, p1_w_ref, p1_b_ref)

    # --- head: spatial mean FIRST (mean is linear), then tiny 256 -> 6*nf
    #     projection on the VPU (broadcast-multiply + lane reduce), 0.01 scale.
    m = jnp.mean(x2.reshape(NB, HW, 256), axis=1)                       # (NB,256) f32
    prod = m[:, None, :] * p2_wt_ref[...][None, :, :]                   # (NB,Cout,256)
    vec = jnp.sum(prod, axis=-1) + p2_b_ref[...]                        # (NB,Cout)
    o_ref[...] = (0.01 * vec).reshape(NB, 1, -1).astype(o_ref.dtype)


# ---------------------------------------------------------------------------
# Wrapper
# ---------------------------------------------------------------------------
def _pick_batch_fold(B, HW):
    """nb batch elements per grid step: target matmul M = nb*HW >= ~256 while
    keeping >= 2 grid steps (v7x two-TC sharding) when the batch allows it."""
    target = max(1, -(-256 // HW))                       # ceil(256 / HW)
    divs = [d for d in range(1, B + 1) if B % d == 0 and d <= target]
    pref = [d for d in divs if B // d >= 2]
    if pref:
        return max(pref)
    return max(divs) if divs else 1


def pose_decoder_forward(input_features, params, num_frames_to_predict_for):
    """input_features: list (len = num_input_features) of lists of NCHW arrays.
    Only the last feature map of each list is used (as in the PyTorch module)."""
    last_features = [f[-1] for f in input_features]
    F = len(last_features)
    B, C_last, H, W = last_features[0].shape
    nf = num_frames_to_predict_for
    Cout = 6 * nf
    Cin0 = F * 256
    HW = H * W
    NB = _pick_batch_fold(B, HW)

    # NCHW -> (B, F, H, W, C); bf16 activations halve HBM bytes and feed the MXU.
    feats = jnp.stack([jnp.transpose(f, (0, 2, 3, 1)) for f in last_features],
                      axis=1).astype(jnp.bfloat16)                 # (B,F,H,W,C_last)

    sq_w = params["squeeze_w"].astype(jnp.bfloat16)                # (C_last, 256)
    sq_b = params["squeeze_b"].reshape(1, 256).astype(jnp.float32)
    p0_w = params["pose0_w"].reshape(9 * Cin0, 256).astype(jnp.bfloat16)  # im2col K
    p0_b = params["pose0_b"].reshape(1, 256).astype(jnp.float32)
    p1_w = params["pose1_w"].reshape(9 * 256, 256).astype(jnp.bfloat16)
    p1_b = params["pose1_b"].reshape(1, 256).astype(jnp.float32)
    p2_wt = params["pose2_w"].T.astype(jnp.float32)                # (Cout, 256)
    p2_b = params["pose2_b"].reshape(1, Cout).astype(jnp.float32)

    flops = 2 * B * HW * 256 * (F * C_last + 9 * Cin0 + 9 * 256) + 2 * B * 256 * Cout
    bytes_accessed = int(
        feats.size * 2 + sq_w.size * 2 + p0_w.size * 2 + p1_w.size * 2
        + (sq_b.size + p0_b.size + p1_b.size + p2_wt.size + p2_b.size) * 4
        + B * Cout * 4)

    kernel = functools.partial(_pose_decoder_kernel, F=F, H=H, W=W, NB=NB)
    const2 = lambda b: (0, 0)   # weights/biases stay resident (constant block)

    out = pl.pallas_call(
        kernel,
        out_shape=jax.ShapeDtypeStruct((B, 1, Cout), jnp.float32),
        grid=(B // NB,),
        in_specs=[
            pl.BlockSpec((NB, F, H, W, C_last), lambda b: (b, 0, 0, 0, 0)),
            pl.BlockSpec((C_last, 256), const2),
            pl.BlockSpec((1, 256), const2),
            pl.BlockSpec((9 * Cin0, 256), const2),
            pl.BlockSpec((1, 256), const2),
            pl.BlockSpec((9 * 256, 256), const2),
            pl.BlockSpec((1, 256), const2),
            pl.BlockSpec((Cout, 256), const2),
            pl.BlockSpec((1, Cout), const2),
        ],
        out_specs=pl.BlockSpec((NB, 1, Cout), lambda b: (b, 0, 0)),
        scratch_shapes=[
            pltpu.VMEM((NB, H + 2, W + 2, Cin0), jnp.bfloat16),  # padded concat act
            pltpu.VMEM((NB, H + 2, W + 2, 256), jnp.bfloat16),   # padded pose0 act
        ],
        compiler_params=pltpu.CompilerParams(
            dimension_semantics=("parallel",)),
        cost_estimate=pl.CostEstimate(flops=flops, transcendentals=0,
                                      bytes_accessed=bytes_accessed),
    )(feats, sq_w, sq_b, p0_w, p0_b, p1_w, p1_b, p2_wt, p2_b)

    vec = out.reshape(-1, nf, 1, 6)
    axisangle = vec[..., :3]
    translation = vec[..., 3:]
    return axisangle, translation


# ---------------------------------------------------------------------------
# Deterministic parameter init (synthetic, mirrors module's __init__ shapes)
# ---------------------------------------------------------------------------
def init_params(key, num_ch_enc_last, num_input_features, num_frames):
    ks = jax.random.split(key, 8)
    s = 0.05
    return {
        # squeeze: Conv2d(num_ch_enc[-1], 256, 1) stored as (Cin, Cout)
        "squeeze_w": s * jax.random.normal(ks[0], (num_ch_enc_last, 256), jnp.float32),
        "squeeze_b": s * jax.random.normal(ks[1], (256,), jnp.float32),
        # pose0: Conv2d(num_input_features*256, 256, 3, 1, 1) as (kh, kw, Cin, Cout)
        "pose0_w": s * jax.random.normal(ks[2], (3, 3, num_input_features * 256, 256), jnp.float32),
        "pose0_b": s * jax.random.normal(ks[3], (256,), jnp.float32),
        # pose1: Conv2d(256, 256, 3, 1, 1)
        "pose1_w": s * jax.random.normal(ks[4], (3, 3, 256, 256), jnp.float32),
        "pose1_b": s * jax.random.normal(ks[5], (256,), jnp.float32),
        # pose2: Conv2d(256, 6*num_frames, 1)
        "pose2_w": s * jax.random.normal(ks[6], (256, 6 * num_frames), jnp.float32),
        "pose2_b": s * jax.random.normal(ks[7], (6 * num_frames,), jnp.float32),
    }


# ---------------------------------------------------------------------------
# Pure-JAX f32 reference (mirrors the PyTorch module) for a sanity check.
# ---------------------------------------------------------------------------
def _reference_forward(input_features, params, nf):
    def conv(x, w_hwio, b, pad):
        out = jax.lax.conv_general_dilated(
            x, w_hwio, window_strides=(1, 1), padding=pad,
            dimension_numbers=("NCHW", "HWIO", "NCHW"))
        return out + b.reshape(1, -1, 1, 1)

    last = [f[-1] for f in input_features]
    sqw = params["squeeze_w"][None, None]                  # (1,1,Cin,256)
    cat = [jax.nn.relu(conv(f, sqw, params["squeeze_b"], "VALID")) for f in last]
    out = jnp.concatenate(cat, axis=1)
    out = jax.nn.relu(conv(out, params["pose0_w"], params["pose0_b"], "SAME"))
    out = jax.nn.relu(conv(out, params["pose1_w"], params["pose1_b"], "SAME"))
    out = conv(out, params["pose2_w"][None, None], params["pose2_b"], "VALID")
    out = 0.01 * out.mean(axis=(2, 3))
    vec = out.reshape(-1, nf, 1, 6)
    return vec[..., :3], vec[..., 3:]


if __name__ == "__main__":
    key = jax.random.PRNGKey(0)
    num_ch_enc = [4, 8, 16]
    num_input_features = 2
    num_frames = num_input_features - 1  # default num_frames_to_predict_for
    B, H, W = 2, 8, 8
    C_last = num_ch_enc[-1]

    kparam, kf0, kf1 = jax.random.split(key, 3)
    params = init_params(kparam, C_last, num_input_features, num_frames)

    # Each entry of input_features is itself a list of encoder features; only
    # the last one (shape (B, num_ch_enc[-1], H, W)) is used.
    input_features = [
        [jax.random.normal(kf0, (B, C_last, H, W), jnp.float32)],
        [jax.random.normal(kf1, (B, C_last, H, W), jnp.float32)],
    ]

    axisangle, translation = pose_decoder_forward(input_features, params, num_frames)
    jax.block_until_ready((axisangle, translation))

    assert axisangle.shape == (B, num_frames, 1, 3), axisangle.shape
    assert translation.shape == (B, num_frames, 1, 3), translation.shape
    assert axisangle.dtype == jnp.float32 and translation.dtype == jnp.float32

    # Loose-tolerance sanity check vs. f32 reference (kernel uses bf16 matmuls).
    ref_aa, ref_tr = _reference_forward(input_features, params, num_frames)
    np.testing.assert_allclose(np.asarray(axisangle), np.asarray(ref_aa),
                               rtol=0.1, atol=2e-3)
    np.testing.assert_allclose(np.asarray(translation), np.asarray(ref_tr),
                               rtol=0.1, atol=2e-3)
    print("KERNEL_OK")
</pallas_src>

<mosaic_0001>
module attributes {stable_mosaic.version = 11 : i64} {
  func.func @_pose_decoder_kernel(%arg0: i32, %arg1: memref<1x2x8x8x16xbf16, #tpu.memory_space<vmem>>, %arg2: memref<16x256xbf16, #tpu.memory_space<vmem>>, %arg3: memref<1x256xf32, #tpu.memory_space<vmem>>, %arg4: memref<4608x256xbf16, #tpu.memory_space<vmem>>, %arg5: memref<1x256xf32, #tpu.memory_space<vmem>>, %arg6: memref<2304x256xbf16, #tpu.memory_space<vmem>>, %arg7: memref<1x256xf32, #tpu.memory_space<vmem>>, %arg8: memref<6x256xf32, #tpu.memory_space<vmem>>, %arg9: memref<1x6xf32, #tpu.memory_space<vmem>>, %arg10: memref<1x1x6xf32, #tpu.memory_space<vmem>>, %arg11: memref<1x10x10x512xbf16, #tpu.memory_space<vmem>>, %arg12: memref<1x10x10x256xbf16, #tpu.memory_space<vmem>>) attributes {dimension_semantics = [#tpu.dimension_semantics<parallel>], iteration_bounds = array<i64: 2>, scalar_prefetch = 0 : i64, scratch_operands = 2 : i64, tpu.core_type = #tpu.core_type<tc>, window_params = [{transform_indices = @transform_0, window_bounds = array<i64: 1, 2, 8, 8, 16>}, {pipeline_mode = #tpu.pipeline_mode<synchronous>, transform_indices = @transform_1, window_bounds = array<i64: 16, 256>}, {pipeline_mode = #tpu.pipeline_mode<synchronous>, transform_indices = @transform_2, window_bounds = array<i64: 1, 256>}, {pipeline_mode = #tpu.pipeline_mode<synchronous>, transform_indices = @transform_3, window_bounds = array<i64: 4608, 256>}, {pipeline_mode = #tpu.pipeline_mode<synchronous>, transform_indices = @transform_4, window_bounds = array<i64: 1, 256>}, {pipeline_mode = #tpu.pipeline_mode<synchronous>, transform_indices = @transform_5, window_bounds = array<i64: 2304, 256>}, {pipeline_mode = #tpu.pipeline_mode<synchronous>, transform_indices = @transform_6, window_bounds = array<i64: 1, 256>}, {pipeline_mode = #tpu.pipeline_mode<synchronous>, transform_indices = @transform_7, window_bounds = array<i64: 6, 256>}, {pipeline_mode = #tpu.pipeline_mode<synchronous>, transform_indices = @transform_8, window_bounds = array<i64: 1, 6>}, {transform_indices = @transform_9, window_bounds = array<i64: 1, 1, 6>}]} {
    %cst = arith.constant 0.000000e+00 : bf16
    %0 = vector.broadcast %cst : bf16 to vector<1x1x10x512xbf16>
    %c0 = arith.constant 0 : index
    %c0_0 = arith.constant 0 : index
    %c0_1 = arith.constant 0 : index
    %c0_2 = arith.constant 0 : index
    %1 = vector.load %arg11[%c0, %c0_0, %c0_1, %c0_2] : memref<1x10x10x512xbf16, #tpu.memory_space<vmem>>, vector<1x1x10x512xbf16>
    tpu.vector_store %arg11[%c0, %c0_0, %c0_1, %c0_2], %0 {strides = array<i32>} : memref<1x10x10x512xbf16, #tpu.memory_space<vmem>>, vector<1x1x10x512xbf16>,
    %cst_3 = arith.constant 0.000000e+00 : bf16
    %2 = vector.broadcast %cst_3 : bf16 to vector<1x1x10x512xbf16>
    %c0_4 = arith.constant 0 : index
    %c9 = arith.constant 9 : index
    %c0_5 = arith.constant 0 : index
    %c0_6 = arith.constant 0 : index
    %3 = vector.load %arg11[%c0_4, %c9, %c0_5, %c0_6] : memref<1x10x10x512xbf16, #tpu.memory_space<vmem>>, vector<1x1x10x512xbf16>
    tpu.vector_store %arg11[%c0_4, %c9, %c0_5, %c0_6], %2 {strides = array<i32>} : memref<1x10x10x512xbf16, #tpu.memory_space<vmem>>, vector<1x1x10x512xbf16>,
    %cst_7 = arith.constant 0.000000e+00 : bf16
    %4 = vector.broadcast %cst_7 : bf16 to vector<1x10x1x512xbf16>
    %c0_8 = arith.constant 0 : index
    %c0_9 = arith.constant 0 : index
    %c0_10 = arith.constant 0 : index
    %c0_11 = arith.constant 0 : index
    %5 = vector.load %arg11[%c0_8, %c0_9, %c0_10, %c0_11] : memref<1x10x10x512xbf16, #tpu.memory_space<vmem>>, vector<1x10x1x512xbf16>
    tpu.vector_store %arg11[%c0_8, %c0_9, %c0_10, %c0_11], %4 {strides = array<i32>} : memref<1x10x10x512xbf16, #tpu.memory_space<vmem>>, vector<1x10x1x512xbf16>,
    %cst_12 = arith.constant 0.000000e+00 : bf16
    %6 = vector.broadcast %cst_12 : bf16 to vector<1x10x1x512xbf16>
    %c0_13 = arith.constant 0 : index
    %c0_14 = arith.constant 0 : index
    %c9_15 = arith.constant 9 : index
    %c0_16 = arith.constant 0 : index
    %7 = vector.load %arg11[%c0_13, %c0_14, %c9_15, %c0_16] : memref<1x10x10x512xbf16, #tpu.memory_space<vmem>>, vector<1x10x1x512xbf16>
    tpu.vector_store %arg11[%c0_13, %c0_14, %c9_15, %c0_16], %6 {strides = array<i32>} : memref<1x10x10x512xbf16, #tpu.memory_space<vmem>>, vector<1x10x1x512xbf16>,
    %cst_17 = arith.constant 0.000000e+00 : bf16
    %8 = vector.broadcast %cst_17 : bf16 to vector<1x1x10x256xbf16>
    %c0_18 = arith.constant 0 : index
    %c0_19 = arith.constant 0 : index
    %c0_20 = arith.constant 0 : index
    %c0_21 = arith.constant 0 : index
    %9 = vector.load %arg12[%c0_18, %c0_19, %c0_20, %c0_21] : memref<1x10x10x256xbf16, #tpu.memory_space<vmem>>, vector<1x1x10x256xbf16>
    tpu.vector_store %arg12[%c0_18, %c0_19, %c0_20, %c0_21], %8 {strides = array<i32>} : memref<1x10x10x256xbf16, #tpu.memory_space<vmem>>, vector<1x1x10x256xbf16>,
    %cst_22 = arith.constant 0.000000e+00 : bf16
    %10 = vector.broadcast %cst_22 : bf16 to vector<1x1x10x256xbf16>
    %c0_23 = arith.constant 0 : index
    %c9_24 = arith.constant 9 : index
    %c0_25 = arith.constant 0 : index
    %c0_26 = arith.constant 0 : index
    %11 = vector.load %arg12[%c0_23, %c9_24, %c0_25, %c0_26] : memref<1x10x10x256xbf16, #tpu.memory_space<vmem>>, vector<1x1x10x256xbf16>
    tpu.vector_store %arg12[%c0_23, %c9_24, %c0_25, %c0_26], %10 {strides = array<i32>} : memref<1x10x10x256xbf16, #tpu.memory_space<vmem>>, vector<1x1x10x256xbf16>,
    %cst_27 = arith.constant 0.000000e+00 : bf16
    %12 = vector.broadcast %cst_27 : bf16 to vector<1x10x1x256xbf16>
    %c0_28 = arith.constant 0 : index
    %c0_29 = arith.constant 0 : index
    %c0_30 = arith.constant 0 : index
    %c0_31 = arith.constant 0 : index
    %13 = vector.load %arg12[%c0_28, %c0_29, %c0_30, %c0_31] : memref<1x10x10x256xbf16, #tpu.memory_space<vmem>>, vector<1x10x1x256xbf16>
    tpu.vector_store %arg12[%c0_28, %c0_29, %c0_30, %c0_31], %12 {strides = array<i32>} : memref<1x10x10x256xbf16, #tpu.memory_space<vmem>>, vector<1x10x1x256xbf16>,
    %cst_32 = arith.constant 0.000000e+00 : bf16
    %14 = vector.broadcast %cst_32 : bf16 to vector<1x10x1x256xbf16>
    %c0_33 = arith.constant 0 : index
    %c0_34 = arith.constant 0 : index
    %c9_35 = arith.constant 9 : index
    %c0_36 = arith.constant 0 : index
    %15 = vector.load %arg12[%c0_33, %c0_34, %c9_35, %c0_36] : memref<1x10x10x256xbf16, #tpu.memory_space<vmem>>, vector<1x10x1x256xbf16>
    tpu.vector_store %arg12[%c0_33, %c0_34, %c9_35, %c0_36], %14 {strides = array<i32>} : memref<1x10x10x256xbf16, #tpu.memory_space<vmem>>, vector<1x10x1x256xbf16>,
    %c0_37 = arith.constant 0 : index
    %c0_38 = arith.constant 0 : index
    %c0_39 = arith.constant 0 : index
    %c0_40 = arith.constant 0 : index
    %c0_41 = arith.constant 0 : index
    %16 = vector.load %arg1[%c0_37, %c0_38, %c0_39, %c0_40, %c0_41] : memref<1x2x8x8x16xbf16, #tpu.memory_space<vmem>>, vector<1x2x8x8x16xbf16>
    %17 = vector.shape_cast %16 : vector<1x2x8x8x16xbf16> to vector<128x16xbf16>
    %c0_42 = arith.constant 0 : index
    %c0_43 = arith.constant 0 : index
    %18 = vector.load %arg2[%c0_42, %c0_43] : memref<16x256xbf16, #tpu.memory_space<vmem>>, vector<16x256xbf16>
    %cst_44 = arith.constant dense<0.000000e+00> : vector<128x256xf32>
    %19 = tpu.matmul %17, %18, %cst_44 {dimension_numbers = #tpu.dot_dimension_numbers<[1], [0], [0], [1], [0, 0, 1, 1], [], []>} : vector<128x16xbf16>, vector<16x256xbf16>, vector<128x256xf32> -> vector<128x256xf32>
    %c0_45 = arith.constant 0 : index
    %c0_46 = arith.constant 0 : index
    %20 = vector.load %arg3[%c0_45, %c0_46] : memref<1x256xf32, #tpu.memory_space<vmem>>, vector<1x256xf32>
    %21 = vector.broadcast %20 : vector<1x256xf32> to vector<128x256xf32>
    %22 = arith.addf %19, %21 : vector<128x256xf32>
    %cst_47 = arith.constant 0.000000e+00 : f32
    %23 = vector.broadcast %cst_47 : f32 to vector<128x256xf32>
    %24 = arith.maximumf %22, %23 : vector<128x256xf32>
    %25 = vector.shape_cast %24 : vector<128x256xf32> to vector<1x2x8x8x256xf32>
    %26 = arith.truncf %25 : vector<1x2x8x8x256xf32> to vector<1x2x8x8x256xbf16>
    %27 = vector.extract_strided_slice %26 {offsets = [0, 0, 0, 0, 0], sizes = [1, 1, 8, 8, 256], strides = [1, 1, 1, 1, 1]} : vector<1x2x8x8x256xbf16> to vector<1x1x8x8x256xbf16>
    %28 = vector.shape_cast %27 : vector<1x1x8x8x256xbf16> to vector<1x8x8x256xbf16>
    %29 = vector.extract_strided_slice %26 {offsets = [0, 1, 0, 0, 0], sizes = [1, 1, 8, 8, 256], strides = [1, 1, 1, 1, 1]} : vector<1x2x8x8x256xbf16> to vector<1x1x8x8x256xbf16>
    %30 = vector.shape_cast %29 : vector<1x1x8x8x256xbf16> to vector<1x8x8x256xbf16>
    %31 = tpu.concatenate %28, %30 in 3 : vector<1x8x8x256xbf16>, vector<1x8x8x256xbf16> -> vector<1x8x8x512xbf16>
    %c0_48 = arith.constant 0 : index
    %c1 = arith.constant 1 : index
    %c1_49 = arith.constant 1 : index
    %c0_50 = arith.constant 0 : index
    %32 = vector.load %arg11[%c0_48, %c1, %c1_49, %c0_50] : memref<1x10x10x512xbf16, #tpu.memory_space<vmem>>, vector<1x8x8x512xbf16>
    tpu.vector_store %arg11[%c0_48, %c1, %c1_49, %c0_50], %31 {strides = array<i32>} : memref<1x10x10x512xbf16, #tpu.memory_space<vmem>>, vector<1x8x8x512xbf16>,
    %c0_51 = arith.constant 0 : index
    %c0_52 = arith.constant 0 : index
    %c0_53 = arith.constant 0 : index
    %c0_54 = arith.constant 0 : index
    %33 = vector.load %arg11[%c0_51, %c0_52, %c0_53, %c0_54] : memref<1x10x10x512xbf16, #tpu.memory_space<vmem>>, vector<1x8x8x512xbf16>
    %34 = vector.shape_cast %33 : vector<1x8x8x512xbf16> to vector<64x512xbf16>
    %c0_55 = arith.constant 0 : index
    %c0_56 = arith.constant 0 : index
    %c1_57 = arith.constant 1 : index
    %c0_58 = arith.constant 0 : index
    %35 = vector.load %arg11[%c0_55, %c0_56, %c1_57, %c0_58] : memref<1x10x10x512xbf16, #tpu.memory_space<vmem>>, vector<1x8x8x512xbf16>
    %36 = vector.shape_cast %35 : vector<1x8x8x512xbf16> to vector<64x512xbf16>
    %c0_59 = arith.constant 0 : index
    %c0_60 = arith.constant 0 : index
    %c2 = arith.constant 2 : index
    %c0_61 = arith.constant 0 : index
    %37 = vector.load %arg11[%c0_59, %c0_60, %c2, %c0_61] : memref<1x10x10x512xbf16, #tpu.memory_space<vmem>>, vector<1x8x8x512xbf16>
    %38 = vector.shape_cast %37 : vector<1x8x8x512xbf16> to vector<64x512xbf16>
    %c0_62 = arith.constant 0 : index
    %c1_63 = arith.constant 1 : index
    %c0_64 = arith.constant 0 : index
    %c0_65 = arith.constant 0 : index
    %39 = vector.load %arg11[%c0_62, %c1_63, %c0_64, %c0_65] : memref<1x10x10x512xbf16, #tpu.memory_space<vmem>>, vector<1x8x8x512xbf16>
    %40 = vector.shape_cast %39 : vector<1x8x8x512xbf16> to vector<64x512xbf16>
    %c0_66 = arith.constant 0 : index
    %c1_67 = arith.constant 1 : index
    %c1_68 = arith.constant 1 : index
    %c0_69 = arith.constant 0 : index
    %41 = vector.load %arg11[%c0_66, %c1_67, %c1_68, %c0_69] : memref<1x10x10x512xbf16, #tpu.memory_space<vmem>>, vector<1x8x8x512xbf16>
    %42 = vector.shape_cast %41 : vector<1x8x8x512xbf16> to vector<64x512xbf16>
    %c0_70 = arith.constant 0 : index
    %c1_71 = arith.constant 1 : index
    %c2_72 = arith.constant 2 : index
    %c0_73 = arith.constant 0 : index
    %43 = vector.load %arg11[%c0_70, %c1_71, %c2_72, %c0_73] : memref<1x10x10x512xbf16, #tpu.memory_space<vmem>>, vector<1x8x8x512xbf16>
    %44 = vector.shape_cast %43 : vector<1x8x8x512xbf16> to vector<64x512xbf16>
    %c0_74 = arith.constant 0 : index
    %c2_75 = arith.constant 2 : index
    %c0_76 = arith.constant 0 : index
    %c0_77 = arith.constant 0 : index
    %45 = vector.load %arg11[%c0_74, %c2_75, %c0_76, %c0_77] : memref<1x10x10x512xbf16, #tpu.memory_space<vmem>>, vector<1x8x8x512xbf16>
    %46 = vector.shape_cast %45 : vector<1x8x8x512xbf16> to vector<64x512xbf16>
    %c0_78 = arith.constant 0 : index
    %c2_79 = arith.constant 2 : index
    %c1_80 = arith.constant 1 : index
    %c0_81 = arith.constant 0 : index
    %47 = vector.load %arg11[%c0_78, %c2_79, %c1_80, %c0_81] : memref<1x10x10x512xbf16, #tpu.memory_space<vmem>>, vector<1x8x8x512xbf16>
    %48 = vector.shape_cast %47 : vector<1x8x8x512xbf16> to vector<64x512xbf16>
    %c0_82 = arith.constant 0 : index
    %c2_83 = arith.constant 2 : index
    %c2_84 = arith.constant 2 : index
    %c0_85 = arith.constant 0 : index
    %49 = vector.load %arg11[%c0_82, %c2_83, %c2_84, %c0_85] : memref<1x10x10x512xbf16, #tpu.memory_space<vmem>>, vector<1x8x8x512xbf16>
    %50 = vector.shape_cast %49 : vector<1x8x8x512xbf16> to vector<64x512xbf16>
    %51 = tpu.concatenate %34, %36, %38, %40, %42, %44, %46, %48, %50 in 1 : vector<64x512xbf16>, vector<64x512xbf16>, vector<64x512xbf16>, vector<64x512xbf16>, vector<64x512xbf16>, vector<64x512xbf16>, vector<64x512xbf16>, vector<64x512xbf16>, vector<64x512xbf16> -> vector<64x4608xbf16>
    %c0_86 = arith.constant 0 : index
    %c0_87 = arith.constant 0 : index
    %52 = vector.load %arg4[%c0_86, %c0_87] : memref<4608x256xbf16, #tpu.memory_space<vmem>>, vector<4608x256xbf16>
    %cst_88 = arith.constant dense<0.000000e+00> : vector<64x256xf32>
    %53 = tpu.matmul %51, %52, %cst_88 {dimension_numbers = #tpu.dot_dimension_numbers<[1], [0], [0], [1], [0, 0, 1, 1], [], []>} : vector<64x4608xbf16>, vector<4608x256xbf16>, vector<64x256xf32> -> vector<64x256xf32>
    %c0_89 = arith.constant 0 : index
    %c0_90 = arith.constant 0 : index
    %54 = vector.load %arg5[%c0_89, %c0_90] : memref<1x256xf32, #tpu.memory_space<vmem>>, vector<1x256xf32>
    %55 = vector.broadcast %54 : vector<1x256xf32> to vector<64x256xf32>
    %56 = arith.addf %53, %55 : vector<64x256xf32>
    %cst_91 = arith.constant 0.000000e+00 : f32
    %57 = vector.broadcast %cst_91 : f32 to vector<64x256xf32>
    %58 = arith.maximumf %56, %57 : vector<64x256xf32>
    %59 = vector.shape_cast %58 : vector<64x256xf32> to vector<1x8x8x256xf32>
    %60 = arith.truncf %59 : vector<1x8x8x256xf32> to vector<1x8x8x256xbf16>
    %c0_92 = arith.constant 0 : index
    %c1_93 = arith.constant 1 : index
    %c1_94 = arith.constant 1 : index
    %c0_95 = arith.constant 0 : index
    %61 = vector.load %arg12[%c0_92, %c1_93, %c1_94, %c0_95] : memref<1x10x10x256xbf16, #tpu.memory_space<vmem>>, vector<1x8x8x256xbf16>
    tpu.vector_store %arg12[%c0_92, %c1_93, %c1_94, %c0_95], %60 {strides = array<i32>} : memref<1x10x10x256xbf16, #tpu.memory_space<vmem>>, vector<1x8x8x256xbf16>,
    %c0_96 = arith.constant 0 : index
    %c0_97 = arith.constant 0 : index
    %c0_98 = arith.constant 0 : index
    %c0_99 = arith.constant 0 : index
    %62 = vector.load %arg12[%c0_96, %c0_97, %c0_98, %c0_99] : memref<1x10x10x256xbf16, #tpu.memory_space<vmem>>, vector<1x8x8x256xbf16>
    %63 = vector.shape_cast %62 : vector<1x8x8x256xbf16> to vector<64x256xbf16>
    %c0_100 = arith.constant 0 : index
    %c0_101 = arith.constant 0 : index
    %c1_102 = arith.constant 1 : index
    %c0_103 = arith.constant 0 : index
    %64 = vector.load %arg12[%c0_100, %c0_101, %c1_102, %c0_103] : memref<1x10x10x256xbf16, #tpu.memory_space<vmem>>, vector<1x8x8x256xbf16>
    %65 = vector.shape_cast %64 : vector<1x8x8x256xbf16> to vector<64x256xbf16>
    %c0_104 = arith.constant 0 : index
    %c0_105 = arith.constant 0 : index
    %c2_106 = arith.constant 2 : index
    %c0_107 = arith.constant 0 : index
    %66 = vector.load %arg12[%c0_104, %c0_105, %c2_106, %c0_107] : memref<1x10x10x256xbf16, #tpu.memory_space<vmem>>, vector<1x8x8x256xbf16>
    %67 = vector.shape_cast %66 : vector<1x8x8x256xbf16> to vector<64x256xbf16>
    %c0_108 = arith.constant 0 : index
    %c1_109 = arith.constant 1 : index
    %c0_110 = arith.constant 0 : index
    %c0_111 = arith.constant 0 : index
    %68 = vector.load %arg12[%c0_108, %c1_109, %c0_110, %c0_111] : memref<1x10x10x256xbf16, #tpu.memory_space<vmem>>, vector<1x8x8x256xbf16>
    %69 = vector.shape_cast %68 : vector<1x8x8x256xbf16> to vector<64x256xbf16>
    %c0_112 = arith.constant 0 : index
    %c1_113 = arith.constant 1 : index
    %c1_114 = arith.constant 1 : index
    %c0_115 = arith.constant 0 : index
    %70 = vector.load %arg12[%c0_112, %c1_113, %c1_114, %c0_115] : memref<1x10x10x256xbf16, #tpu.memory_space<vmem>>, vector<1x8x8x256xbf16>
    %71 = vector.shape_cast %70 : vector<1x8x8x256xbf16> to vector<64x256xbf16>
    %c0_116 = arith.constant 0 : index
    %c1_117 = arith.constant 1 : index
    %c2_118 = arith.constant 2 : index
    %c0_119 = arith.constant 0 : index
    %72 = vector.load %arg12[%c0_116, %c1_117, %c2_118, %c0_119] : memref<1x10x10x256xbf16, #tpu.memory_space<vmem>>, vector<1x8x8x256xbf16>
    %73 = vector.shape_cast %72 : vector<1x8x8x256xbf16> to vector<64x256xbf16>
    %c0_120 = arith.constant 0 : index
    %c2_121 = arith.constant 2 : index
    %c0_122 = arith.constant 0 : index
    %c0_123 = arith.constant 0 : index
    %74 = vector.load %arg12[%c0_120, %c2_121, %c0_122, %c0_123] : memref<1x10x10x256xbf16, #tpu.memory_space<vmem>>, vector<1x8x8x256xbf16>
    %75 = vector.shape_cast %74 : vector<1x8x8x256xbf16> to vector<64x256xbf16>
    %c0_124 = arith.constant 0 : index
    %c2_125 = arith.constant 2 : index
    %c1_126 = arith.constant 1 : index
    %c0_127 = arith.constant 0 : index
    %76 = vector.load %arg12[%c0_124, %c2_125, %c1_126, %c0_127] : memref<1x10x10x256xbf16, #tpu.memory_space<vmem>>, vector<1x8x8x256xbf16>
    %77 = vector.shape_cast %76 : vector<1x8x8x256xbf16> to vector<64x256xbf16>
    %c0_128 = arith.constant 0 : index
    %c2_129 = arith.constant 2 : index
    %c2_130 = arith.constant 2 : index
    %c0_131 = arith.constant 0 : index
    %78 = vector.load %arg12[%c0_128, %c2_129, %c2_130, %c0_131] : memref<1x10x10x256xbf16, #tpu.memory_space<vmem>>, vector<1x8x8x256xbf16>
    %79 = vector.shape_cast %78 : vector<1x8x8x256xbf16> to vector<64x256xbf16>
    %80 = tpu.concatenate %63, %65, %67, %69, %71, %73, %75, %77, %79 in 1 : vector<64x256xbf16>, vector<64x256xbf16>, vector<64x256xbf16>, vector<64x256xbf16>, vector<64x256xbf16>, vector<64x256xbf16>, vector<64x256xbf16>, vector<64x256xbf16>, vector<64x256xbf16> -> vector<64x2304xbf16>
    %c0_132 = arith.constant 0 : index
    %c0_133 = arith.constant 0 : index
    %81 = vector.load %arg6[%c0_132, %c0_133] : memref<2304x256xbf16, #tpu.memory_space<vmem>>, vector<2304x256xbf16>
    %cst_134 = arith.constant dense<0.000000e+00> : vector<64x256xf32>
    %82 = tpu.matmul %80, %81, %cst_134 {dimension_numbers = #tpu.dot_dimension_numbers<[1], [0], [0], [1], [0, 0, 1, 1], [], []>} : vector<64x2304xbf16>, vector<2304x256xbf16>, vector<64x256xf32> -> vector<64x256xf32>
    %c0_135 = arith.constant 0 : index
    %c0_136 = arith.constant 0 : index
    %83 = vector.load %arg7[%c0_135, %c0_136] : memref<1x256xf32, #tpu.memory_space<vmem>>, vector<1x256xf32>
    %84 = vector.broadcast %83 : vector<1x256xf32> to vector<64x256xf32>
    %85 = arith.addf %82, %84 : vector<64x256xf32>
    %cst_137 = arith.constant 0.000000e+00 : f32
    %86 = vector.broadcast %cst_137 : f32 to vector<64x256xf32>
    %87 = arith.maximumf %85, %86 : vector<64x256xf32>
    %88 = vector.shape_cast %87 : vector<64x256xf32> to vector<1x64x256xf32>
    %cst_138 = arith.constant dense<0.000000e+00> : vector<1x256xf32>
    %89 = vector.multi_reduction <add>, %88, %cst_138 [1] : vector<1x64x256xf32> to vector<1x256xf32>
    %cst_139 = arith.constant 6.400000e+01 : f32
    %90 = vector.broadcast %cst_139 : f32 to vector<1x256xf32>
    %91 = arith.divf %89, %90 : vector<1x256xf32>
    %92 = vector.shape_cast %91 : vector<1x256xf32> to vector<1x1x256xf32>
    %c0_140 = arith.constant 0 : index
    %c0_141 = arith.constant 0 : index
    %93 = vector.load %arg8[%c0_140, %c0_141] : memref<6x256xf32, #tpu.memory_space<vmem>>, vector<6x256xf32>
    %94 = vector.shape_cast %93 : vector<6x256xf32> to vector<1x6x256xf32>
    %95 = vector.broadcast %92 : vector<1x1x256xf32> to vector<1x6x256xf32>
    %96 = arith.mulf %95, %94 : vector<1x6x256xf32>
    %cst_142 = arith.constant dense<0.000000e+00> : vector<1x6xf32>
    %97 = vector.multi_reduction <add>, %96, %cst_142 [2] : vector<1x6x256xf32> to vector<1x6xf32>
    %c0_143 = arith.constant 0 : index
    %c0_144 = arith.constant 0 : index
    %98 = vector.load %arg9[%c0_143, %c0_144] : memref<1x6xf32, #tpu.memory_space<vmem>>, vector<1x6xf32>
    %99 = arith.addf %97, %98 : vector<1x6xf32>
    %cst_145 = arith.constant 0.00999999977 : f32
    %100 = vector.broadcast %cst_145 : f32 to vector<1x6xf32>
    %101 = arith.mulf %100, %99 : vector<1x6xf32>
    %102 = vector.shape_cast %101 : vector<1x6xf32> to vector<1x1x6xf32>
    %c0_146 = arith.constant 0 : index
    %c0_147 = arith.constant 0 : index
    %c0_148 = arith.constant 0 : index
    %103 = vector.load %arg10[%c0_146, %c0_147, %c0_148] : memref<1x1x6xf32, #tpu.memory_space<vmem>>, vector<1x1x6xf32>
    tpu.vector_store %arg10[%c0_146, %c0_147, %c0_148], %102 {strides = array<i32>} : memref<1x1x6xf32, #tpu.memory_space<vmem>>, vector<1x1x6xf32>,
    return
  }
  func.func @transform_0(%arg0: i32) -> (i32, i32, i32, i32, i32) {
    %c0_i32 = arith.constant 0 : i32
    %c0_i32_0 = arith.constant 0 : i32
    %c0_i32_1 = arith.constant 0 : i32
    %c0_i32_2 = arith.constant 0 : i32
    %c0_i32_3 = arith.constant 0 : i32
    return %arg0, %c0_i32, %c0_i32_0, %c0_i32_1, %c0_i32_2 : i32, i32, i32, i32, i32
  }
  func.func @transform_1(%arg0: i32) -> (i32, i32) {
    %c0_i32 = arith.constant 0 : i32
    %c0_i32_0 = arith.constant 0 : i32
    %c0_i32_1 = arith.constant 0 : i32
    return %c0_i32, %c0_i32_0 : i32, i32
  }
  func.func @transform_2(%arg0: i32) -> (i32, i32) {
    %c0_i32 = arith.constant 0 : i32
    %c0_i32_0 = arith.constant 0 : i32
    %c0_i32_1 = arith.constant 0 : i32
    return %c0_i32, %c0_i32_0 : i32, i32
  }
  func.func @transform_3(%arg0: i32) -> (i32, i32) {
    %c0_i32 = arith.constant 0 : i32
    %c0_i32_0 = arith.constant 0 : i32
    %c0_i32_1 = arith.constant 0 : i32
    return %c0_i32, %c0_i32_0 : i32, i32
  }
  func.func @transform_4(%arg0: i32) -> (i32, i32) {
    %c0_i32 = arith.constant 0 : i32
    %c0_i32_0 = arith.constant 0 : i32
    %c0_i32_1 = arith.constant 0 : i32
    return %c0_i32, %c0_i32_0 : i32, i32
  }
  func.func @transform_5(%arg0: i32) -> (i32, i32) {
    %c0_i32 = arith.constant 0 : i32
    %c0_i32_0 = arith.constant 0 : i32
    %c0_i32_1 = arith.constant 0 : i32
    return %c0_i32, %c0_i32_0 : i32, i32
  }
  func.func @transform_6(%arg0: i32) -> (i32, i32) {
    %c0_i32 = arith.constant 0 : i32
    %c0_i32_0 = arith.constant 0 : i32
    %c0_i32_1 = arith.constant 0 : i32
    return %c0_i32, %c0_i32_0 : i32, i32
  }
  func.func @transform_7(%arg0: i32) -> (i32, i32) {
    %c0_i32 = arith.constant 0 : i32
    %c0_i32_0 = arith.constant 0 : i32
    %c0_i32_1 = arith.constant 0 : i32
    return %c0_i32, %c0_i32_0 : i32, i32
  }
  func.func @transform_8(%arg0: i32) -> (i32, i32) {
    %c0_i32 = arith.constant 0 : i32
    %c0_i32_0 = arith.constant 0 : i32
    %c0_i32_1 = arith.constant 0 : i32
    return %c0_i32, %c0_i32_0 : i32, i32
  }
  func.func @transform_9(%arg0: i32) -> (i32, i32, i32) {
    %c0_i32 = arith.constant 0 : i32
    %c0_i32_0 = arith.constant 0 : i32
    %c0_i32_1 = arith.constant 0 : i32
    return %arg0, %c0_i32, %c0_i32_0 : i32, i32, i32
  }
}

</mosaic_0001>

<llo_original>
// kernel: tpu_custom_call.1
$region0: #{tpu_custom_call.1}
  #allocation0 [shape = 'u32[]', space=smem, size = 0x4, offset = 0x4, fixed_abs, tag = 'smem constant byte address 0x4 - core index']
  #allocation1 [shape = 'u32[144,128]{1,0:T(1,128)}', space=vmem, size = 0x12000, scoped, tag = 'internal scratch']
  #allocation2 [shape = 'bf16[1,10,10,512]{3,2,1,0:T(8,128)(2,1)}', space=vmem, size = 0x28000, scoped, tag = 'scratch operand']
  #allocation3 [shape = 'bf16[1,10,10,256]{3,2,1,0:T(8,128)(2,1)}', space=vmem, size = 0x14000, scoped, tag = 'scratch operand']
  %s0 = inlined_call_operand.hbm [shape: bf16[2,2,8,8,16], index: 0, kind: input, shape index: {}]
  %s1 = inlined_call_operand.hbm [shape: bf16[16,256], index: 1, kind: input, shape index: {}]
  %s2 = inlined_call_operand.hbm [shape: f32[1,256], index: 2, kind: input, shape index: {}]
  %s3 = inlined_call_operand.hbm [shape: bf16[4608,256], index: 3, kind: input, shape index: {}]
  %s4 = inlined_call_operand.hbm [shape: f32[1,256], index: 4, kind: input, shape index: {}]
  %s5 = inlined_call_operand.hbm [shape: bf16[2304,256], index: 5, kind: input, shape index: {}]
  %s6 = inlined_call_operand.hbm [shape: f32[1,256], index: 6, kind: input, shape index: {}]
  %s7 = inlined_call_operand.hbm [shape: f32[6,256], index: 7, kind: input, shape index: {}]
  %s8 = inlined_call_operand.hbm [shape: f32[1,6], index: 8, kind: input, shape index: {}]
  %s9 = inlined_call_operand.hbm [shape: f32[2,1,6], index: 9, kind: output, shape index: {}]
  %s10 = sld [smem:[#allocation0]]
  $region105: #{tpu_custom_call.1} parent=0
    _
  %s12 = ssub.s32 1, %s10
  %s13 = scalar_select 0, %s12, %s10
  $region1: #{tpu_custom_call.1} parent=0
    #allocation4 [shape = 'u8[65536]{0}', space=vmem, size = 0x10000, scoped, tag = 'input window, operand 0']
    #allocation5 [shape = 's32[2]{0}', space=sflag, size = 0x8, scoped, tag = 'scoped memory for tpu_custom_call.1']
    #allocation6 [shape = 's32[2]{0}', space=sflag, size = 0x8, scoped, tag = 'scoped memory for tpu_custom_call.1']
    #allocation7 [shape = 'u8[8192]{0}', space=vmem, size = 0x2000, scoped, tag = 'input window, operand 1, single buffered']
    #allocation8 [shape = 's32[1]{0}', space=sflag, size = 0x4, scoped, tag = 'scoped memory for tpu_custom_call.1']
    #allocation9 [shape = 'u8[1024]{0}', space=vmem, size = 0x400, scoped, tag = 'input window, operand 2, single buffered']
    #allocation10 [shape = 'u8[2359296]{0}', space=vmem, size = 0x240000, scoped, tag = 'input window, operand 3, single buffered']
    #allocation11 [shape = 's32[1]{0}', space=sflag, size = 0x4, scoped, tag = 'scoped memory for tpu_custom_call.1']
    #allocation12 [shape = 'u8[1024]{0}', space=vmem, size = 0x400, scoped, tag = 'input window, operand 4, single buffered']
    #allocation13 [shape = 'u8[1179648]{0}', space=vmem, size = 0x120000, scoped, tag = 'input window, operand 5, single buffered']
    #allocation14 [shape = 's32[1]{0}', space=sflag, size = 0x4, scoped, tag = 'scoped memory for tpu_custom_call.1']
    #allocation15 [shape = 'u8[1024]{0}', space=vmem, size = 0x400, scoped, tag = 'input window, operand 6, single buffered']
    #allocation16 [shape = 'u8[8192]{0}', space=vmem, size = 0x2000, scoped, tag = 'input window, operand 7, single buffered']
    #allocation17 [shape = 's32[1]{0}', space=sflag, size = 0x4, scoped, tag = 'scoped memory for tpu_custom_call.1']
    #allocation18 [shape = 'u8[512]{0}', space=vmem, size = 0x400, scoped, tag = 'input window, operand 8, single buffered']
    #allocation19 [shape = 'u8[1024]{0}', space=vmem, size = 0x400, scoped, tag = 'output window, operand 0']
    %14 = vsyncpa [#allocation5], 0
    %s15 = scalar_lea.sflag [#allocation5], 1
    %16 = vsyncpa %s15, 0
    %17 = vsyncpa [#allocation8], 0
    %18 = vsyncpa [#allocation11], 0
    %19 = vsyncpa [#allocation14], 0
    %20 = vsyncpa [#allocation17], 0
    %21 = vsyncpa [#allocation6], 0
    %s22 = scalar_lea.sflag [#allocation6], 1
    %23 = vsyncpa %s22, 0
    loop: start=0, step=1, limit=4
    $region2: #{tpu_custom_call.1} parent=1 // loop_pre_header
      _
    $region3: #{tpu_custom_call.1} parent=1 // loop_header
      %s25 = sphi 0, %s29
      %p26 = scmp.ge.s32.totalorder %s25, 4
      %s35 = sphi 0, %s37
      %s38 = sphi 0, %s35
      %s39 = sphi 0, %s38
      %s55 = sphi 0, %s39
      %s59 = sphi 0, %s59
      %s61 = sphi 0, %s59
      %s62 = sphi 0, %s61
      %s76 = sphi 0, %s62
      %s80 = sphi 0, %s80
      %s82 = sphi 0, %s80
      %s83 = sphi 0, %s82
      %s97 = sphi 0, %s83
      %s101 = sphi 0, %s101
      %s103 = sphi 0, %s101
      %s104 = sphi 0, %s103
      %s118 = sphi 0, %s104
      %s122 = sphi 0, %s122
      %s124 = sphi 0, %s122
      %s125 = sphi 0, %s124
      %s139 = sphi 0, %s125
      %s143 = sphi 0, %s143
      %s145 = sphi 0, %s143
      %s146 = sphi 0, %s145
      %s160 = sphi 0, %s146
      %s164 = sphi 0, %s164
      %s166 = sphi 0, %s164
      %s167 = sphi 0, %s166
      %s181 = sphi 0, %s167
      %s185 = sphi 0, %s185
      %s187 = sphi 0, %s185
      %s188 = sphi 0, %s187
      %s202 = sphi 0, %s188
      %s206 = sphi 0, %s206
      %s208 = sphi 0, %s206
      %s209 = sphi 0, %s208
      %s223 = sphi 0, %s209
      %s229 = sphi 0, %s231
      %s232 = sphi 0, %s229
      %s233 = sphi 0, %s232
      %s249 = sphi 0, %s233
    $region4: #{tpu_custom_call.1} parent=1 // loop_header_branch
      %28 = sbr.rel (%p26) target = $region8
    $region5: #{tpu_custom_call.1} parent=1 // loop_body
      %s30 = ssub.s32 %s25, 1
      %s31 = ssub.s32 %s25, 2
      %s32 = sadd.s32 %s25, 1
      %s33 = ssub.s32 %s25, %s32
      %p34 = scmp.eq.s32.totalorder %s33, 0
      %s36 = sadd.s32 %s35, 1
      %s37 = scalar_select %p34, %s35, %s36
      %p40 = pneg %p34
      %p41 = scmp.eq.s32.totalorder %s25, 1
      %p42 = por %p40, %p41
      %p43 = scmp.ne.s32.totalorder %s35, %s38
      %p44 = scmp.eq.s32.totalorder %s25, 0
      %p45 = por %p43, %p44
      %p46 = scmp.ne.s32.totalorder %s35, %s38
      %p47 = scmp.eq.s32.totalorder %s30, 1
      %p48 = por %p46, %p47
      %p49 = scmp.ne.s32.totalorder %s38, %s39
      %p50 = scmp.eq.s32.totalorder %s30, 0
      %p51 = por %p49, %p50
      %p52 = scmp.ne.s32.totalorder %s38, %s39
      %p53 = scmp.eq.s32.totalorder %s31, 1
      %p54 = por %p52, %p53
      %p56 = scmp.ne.s32.totalorder %s39, %s55
      %p57 = scmp.eq.s32.totalorder %s31, 0
      %p58 = por %p56, %p57
      %s60 = sadd.s32 %s59, 1
      %p63 = scmp.eq.s32.totalorder %s25, 1
      %p64 = scmp.ne.s32.totalorder %s59, %s61
      %p65 = scmp.eq.s32.totalorder %s25, 0
      %p66 = por %p64, %p65
      %p67 = scmp.ne.s32.totalorder %s59, %s61
      %p68 = scmp.eq.s32.totalorder %s30, 1
      %p69 = por %p67, %p68
      %p70 = scmp.ne.s32.totalorder %s61, %s62
      %p71 = scmp.eq.s32.totalorder %s30, 0
      %p72 = por %p70, %p71
      %p73 = scmp.ne.s32.totalorder %s61, %s62
      %p74 = scmp.eq.s32.totalorder %s31, 1
      %p75 = por %p73, %p74
      %p77 = scmp.ne.s32.totalorder %s62, %s76
      %p78 = scmp.eq.s32.totalorder %s31, 0
      %p79 = por %p77, %p78
      %s81 = sadd.s32 %s80, 1
      %p84 = scmp.eq.s32.totalorder %s25, 1
      %p85 = scmp.ne.s32.totalorder %s80, %s82
      %p86 = scmp.eq.s32.totalorder %s25, 0
      %p87 = por %p85, %p86
      %p88 = scmp.ne.s32.totalorder %s80, %s82
      %p89 = scmp.eq.s32.totalorder %s30, 1
      %p90 = por %p88, %p89
      %p91 = scmp.ne.s32.totalorder %s82, %s83
      %p92 = scmp.eq.s32.totalorder %s30, 0
      %p93 = por %p91, %p92
      %p94 = scmp.ne.s32.totalorder %s82, %s83
      %p95 = scmp.eq.s32.totalorder %s31, 1
      %p96 = por %p94, %p95
      %p98 = scmp.ne.s32.totalorder %s83, %s97
      %p99 = scmp.eq.s32.totalorder %s31, 0
      %p100 = por %p98, %p99
      %s102 = sadd.s32 %s101, 1
      %p105 = scmp.eq.s32.totalorder %s25, 1
      %p106 = scmp.ne.s32.totalorder %s101, %s103
      %p107 = scmp.eq.s32.totalorder %s25, 0
      %p108 = por %p106, %p107
      %p109 = scmp.ne.s32.totalorder %s101, %s103
      %p110 = scmp.eq.s32.totalorder %s30, 1
      %p111 = por %p109, %p110
      %p112 = scmp.ne.s32.totalorder %s103, %s104
      %p113 = scmp.eq.s32.totalorder %s30, 0
      %p114 = por %p112, %p113
      %p115 = scmp.ne.s32.totalorder %s103, %s104
      %p116 = scmp.eq.s32.totalorder %s31, 1
      %p117 = por %p115, %p116
      %p119 = scmp.ne.s32.totalorder %s104, %s118
      %p120 = scmp.eq.s32.totalorder %s31, 0
      %p121 = por %p119, %p120
      %s123 = sadd.s32 %s122, 1
      %p126 = scmp.eq.s32.totalorder %s25, 1
      %p127 = scmp.ne.s32.totalorder %s122, %s124
      %p128 = scmp.eq.s32.totalorder %s25, 0
      %p129 = por %p127, %p128
      %p130 = scmp.ne.s32.totalorder %s122, %s124
      %p131 = scmp.eq.s32.totalorder %s30, 1
      %p132 = por %p130, %p131
      %p133 = scmp.ne.s32.totalorder %s124, %s125
      %p134 = scmp.eq.s32.totalorder %s30, 0
      %p135 = por %p133, %p134
      %p136 = scmp.ne.s32.totalorder %s124, %s125
      %p137 = scmp.eq.s32.totalorder %s31, 1
      %p138 = por %p136, %p137
      %p140 = scmp.ne.s32.totalorder %s125, %s139
      %p141 = scmp.eq.s32.totalorder %s31, 0
      %p142 = por %p140, %p141
      %s144 = sadd.s32 %s143, 1
      %p147 = scmp.eq.s32.totalorder %s25, 1
      %p148 = scmp.ne.s32.totalorder %s143, %s145
      %p149 = scmp.eq.s32.totalorder %s25, 0
      %p150 = por %p148, %p149
      %p151 = scmp.ne.s32.totalorder %s143, %s145
      %p152 = scmp.eq.s32.totalorder %s30, 1
      %p153 = por %p151, %p152
      %p154 = scmp.ne.s32.totalorder %s145, %s146
      %p155 = scmp.eq.s32.totalorder %s30, 0
      %p156 = por %p154, %p155
      %p157 = scmp.ne.s32.totalorder %s145, %s146
      %p158 = scmp.eq.s32.totalorder %s31, 1
      %p159 = por %p157, %p158
      %p161 = scmp.ne.s32.totalorder %s146, %s160
      %p162 = scmp.eq.s32.totalorder %s31, 0
      %p163 = por %p161, %p162
      %s165 = sadd.s32 %s164, 1
      %p168 = scmp.eq.s32.totalorder %s25, 1
      %p169 = scmp.ne.s32.totalorder %s164, %s166
      %p170 = scmp.eq.s32.totalorder %s25, 0
      %p171 = por %p169, %p170
      %p172 = scmp.ne.s32.totalorder %s164, %s166
      %p173 = scmp.eq.s32.totalorder %s30, 1
      %p174 = por %p172, %p173
      %p175 = scmp.ne.s32.totalorder %s166, %s167
      %p176 = scmp.eq.s32.totalorder %s30, 0
      %p177 = por %p175, %p176
      %p178 = scmp.ne.s32.totalorder %s166, %s167
      %p179 = scmp.eq.s32.totalorder %s31, 1
      %p180 = por %p178, %p179
      %p182 = scmp.ne.s32.totalorder %s167, %s181
      %p183 = scmp.eq.s32.totalorder %s31, 0
      %p184 = por %p182, %p183
      %s186 = sadd.s32 %s185, 1
      %p189 = scmp.eq.s32.totalorder %s25, 1
      %p190 = scmp.ne.s32.totalorder %s185, %s187
      %p191 = scmp.eq.s32.totalorder %s25, 0
      %p192 = por %p190, %p191
      %p193 = scmp.ne.s32.totalorder %s185, %s187
      %p194 = scmp.eq.s32.totalorder %s30, 1
      %p195 = por %p193, %p194
      %p196 = scmp.ne.s32.totalorder %s187, %s188
      %p197 = scmp.eq.s32.totalorder %s30, 0
      %p198 = por %p196, %p197
      %p199 = scmp.ne.s32.totalorder %s187, %s188
      %p200 = scmp.eq.s32.totalorder %s31, 1
      %p201 = por %p199, %p200
      %p203 = scmp.ne.s32.totalorder %s188, %s202
      %p204 = scmp.eq.s32.totalorder %s31, 0
      %p205 = por %p203, %p204
      %s207 = sadd.s32 %s206, 1
      %p210 = scmp.eq.s32.totalorder %s25, 1
      %p211 = scmp.ne.s32.totalorder %s206, %s208
      %p212 = scmp.eq.s32.totalorder %s25, 0
      %p213 = por %p211, %p212
      %p214 = scmp.ne.s32.totalorder %s206, %s208
      %p215 = scmp.eq.s32.totalorder %s30, 1
      %p216 = por %p214, %p215
      %p217 = scmp.ne.s32.totalorder %s208, %s209
      %p218 = scmp.eq.s32.totalorder %s30, 0
      %p219 = por %p217, %p218
      %p220 = scmp.ne.s32.totalorder %s208, %s209
      %p221 = scmp.eq.s32.totalorder %s31, 1
      %p222 = por %p220, %p221
      %p224 = scmp.ne.s32.totalorder %s209, %s223
      %p225 = scmp.eq.s32.totalorder %s31, 0
      %p226 = por %p224, %p225
      %s227 = ssub.s32 %s25, %s32
      %p228 = scmp.eq.s32.totalorder %s227, 0
      %s230 = sadd.s32 %s229, 1
      %s231 = scalar_select %p228, %s229, %s230
      %p234 = pneg %p228
      %p235 = scmp.eq.s32.totalorder %s25, 1
      %p236 = por %p234, %p235
      %p237 = scmp.ne.s32.totalorder %s229, %s232
      %p238 = scmp.eq.s32.totalorder %s25, 0
      %p239 = por %p237, %p238
      %p240 = scmp.ne.s32.totalorder %s229, %s232
      %p241 = scmp.eq.s32.totalorder %s30, 1
      %p242 = por %p240, %p241
      %p243 = scmp.ne.s32.totalorder %s232, %s233
      %p244 = scmp.eq.s32.totalorder %s30, 0
      %p245 = por %p243, %p244
      %p246 = scmp.ne.s32.totalorder %s232, %s233
      %p247 = scmp.eq.s32.totalorder %s31, 1
      %p248 = por %p246, %p247
      %p250 = scmp.ne.s32.totalorder %s233, %s249
      %p251 = scmp.eq.s32.totalorder %s31, 0
      %p252 = por %p250, %p251
      %p253 = scmp.le.s32.totalorder 1, %s25
      %p254 = scmp.lt.s32.totalorder %s25, 3
      %p255 = pnand %p253, %p254
      %p256 = pneg %p255
      // Predicated region
      $region9: #{tpu_custom_call.1} parent=5 // pred_check
        _
      $region10: #{tpu_custom_call.1} parent=5 // pred_check_branch
        %258 = sbr.rel (%p255) target = $region12
      $region11: #{tpu_custom_call.1} parent=5 // pred_region
        %s259 = ssub.s32 %s25, 1
        // Predicated region
        $region13: #{tpu_custom_call.1} parent=11 // pred_check
          %p260 = pneg %p72
        $region14: #{tpu_custom_call.1} parent=11 // pred_check_branch
          %262 = sbr.rel (%p260) target = $region16
        $region15: #{tpu_custom_call.1} parent=11 // pred_region
          %s264 = ssub.s32 256, 256
          %265 = vsyncadd [#allocation8], %s264
          %s266 = sshll.u32 [#allocation7], 4
          %s267 = int_to_ptr.vmem [resolvable:$true] %s266
          %272 = dma.hbm_to_vmem [thread:$0]  %s1, 256, %s267, [#allocation8], 128, 128, 8
        $region16: #{tpu_custom_call.1} parent=11 // pred_fallthru
          _
        // Predicated region
        $region17: #{tpu_custom_call.1} parent=11 // pred_check
          %p273 = pneg %p93
        $region18: #{tpu_custom_call.1} parent=11 // pred_check_branch
          %275 = sbr.rel (%p273) target = $region20
        $region19: #{tpu_custom_call.1} parent=11 // pred_region
          %s277 = ssub.s32 32, 32
          %278 = vsyncadd [#allocation8], %s277
          %s280 = sshll.u32 [#allocation9], 4
          %s281 = int_to_ptr.vmem [resolvable:$true] %s280
          %283 = dma.hbm_to_vmem [thread:$0]  %s2, 32, %s281, [#allocation8]
        $region20: #{tpu_custom_call.1} parent=11 // pred_fallthru
          _
        // Predicated region
        $region21: #{tpu_custom_call.1} parent=11 // pred_check
          %p284 = pneg %p114
        $region22: #{tpu_custom_call.1} parent=11 // pred_check_branch
          %286 = sbr.rel (%p284) target = $region24
        $region23: #{tpu_custom_call.1} parent=11 // pred_region
          %s288 = ssub.s32 73728, 73728
          %289 = vsyncadd [#allocation11], %s288
          %s290 = sshll.u32 [#allocation10], 4
          %s291 = int_to_ptr.vmem [resolvable:$true] %s290
          %296 = dma.hbm_to_vmem [thread:$0]  %s3, 73728, %s291, [#allocation11], 128, 128, 8
        $region24: #{tpu_custom_call.1} parent=11 // pred_fallthru
          _
        // Predicated region
        $region25: #{tpu_custom_call.1} parent=11 // pred_check
          %p297 = pneg %p135
        $region26: #{tpu_custom_call.1} parent=11 // pred_check_branch
          %299 = sbr.rel (%p297) target = $region28
        $region27: #{tpu_custom_call.1} parent=11 // pred_region
          %s301 = ssub.s32 32, 32
          %302 = vsyncadd [#allocation11], %s301
          %s304 = sshll.u32 [#allocation12], 4
          %s305 = int_to_ptr.vmem [resolvable:$true] %s304
          %307 = dma.hbm_to_vmem [thread:$0]  %s4, 32, %s305, [#allocation11]
        $region28: #{tpu_custom_call.1} parent=11 // pred_fallthru
          _
        // Predicated region
        $region29: #{tpu_custom_call.1} parent=11 // pred_check
          %p308 = pneg %p156
        $region30: #{tpu_custom_call.1} parent=11 // pred_check_branch
          %310 = sbr.rel (%p308) target = $region32
        $region31: #{tpu_custom_call.1} parent=11 // pred_region
          %s312 = ssub.s32 36864, 36864
          %313 = vsyncadd [#allocation14], %s312
          %s314 = sshll.u32 [#allocation13], 4
          %s315 = int_to_ptr.vmem [resolvable:$true] %s314
          %320 = dma.hbm_to_vmem [thread:$0]  %s5, 36864, %s315, [#allocation14], 128, 128, 8
        $region32: #{tpu_custom_call.1} parent=11 // pred_fallthru
          _
        // Predicated region
        $region33: #{tpu_custom_call.1} parent=11 // pred_check
          %p321 = pneg %p177
        $region34: #{tpu_custom_call.1} parent=11 // pred_check_branch
          %323 = sbr.rel (%p321) target = $region36
        $region35: #{tpu_custom_call.1} parent=11 // pred_region
          %s325 = ssub.s32 32, 32
          %326 = vsyncadd [#allocation14], %s325
          %s328 = sshll.u32 [#allocation15], 4
          %s329 = int_to_ptr.vmem [resolvable:$true] %s328
          %331 = dma.hbm_to_vmem [thread:$0]  %s6, 32, %s329, [#allocation14]
        $region36: #{tpu_custom_call.1} parent=11 // pred_fallthru
          _
        // Predicated region
        $region37: #{tpu_custom_call.1} parent=11 // pred_check
          %p332 = pneg %p198
        $region38: #{tpu_custom_call.1} parent=11 // pred_check_branch
          %334 = sbr.rel (%p332) target = $region40
        $region39: #{tpu_custom_call.1} parent=11 // pred_region
          %s336 = ssub.s32 256, 256
          %337 = vsyncadd [#allocation17], %s336
          %s339 = sshll.u32 [#allocation16], 4
          %s340 = int_to_ptr.vmem [resolvable:$true] %s339
          %342 = dma.hbm_to_vmem [thread:$0]  %s7, 256, %s340, [#allocation17]
        $region40: #{tpu_custom_call.1} parent=11 // pred_fallthru
          _
        // Predicated region
        $region41: #{tpu_custom_call.1} parent=11 // pred_check
          %p343 = pneg %p219
        $region42: #{tpu_custom_call.1} parent=11 // pred_check_branch
          %345 = sbr.rel (%p343) target = $region44
        $region43: #{tpu_custom_call.1} parent=11 // pred_region
          %s347 = ssub.s32 16, 16
          %348 = vsyncadd [#allocation17], %s347
          %s350 = sshll.u32 [#allocation18], 4
          %s351 = int_to_ptr.vmem [resolvable:$true] %s350
          %353 = dma.hbm_to_vmem [thread:$0]  %s8, 16, %s351, [#allocation17]
        $region44: #{tpu_custom_call.1} parent=11 // pred_fallthru
          _
      $region12: #{tpu_custom_call.1} parent=5 // pred_fallthru
        _
      %p354 = scmp.lt.s32.totalorder %s25, 2
      // Predicated region
      $region45: #{tpu_custom_call.1} parent=5 // pred_check
        %p355 = pneg %p354
      $region46: #{tpu_custom_call.1} parent=5 // pred_check_branch
        %357 = sbr.rel (%p355) target = $region48
      $region47: #{tpu_custom_call.1} parent=5 // pred_region
        // Predicated region
        $region49: #{tpu_custom_call.1} parent=47 // pred_check
          %p358 = pneg %p45
        $region50: #{tpu_custom_call.1} parent=47 // pred_check_branch
          %360 = sbr.rel (%p358) target = $region52
        $region51: #{tpu_custom_call.1} parent=47 // pred_region
          %s361 = sand.u32 %s35, 1
          %s362 = scalar_lea.sflag [#allocation5], %s361
          %s363 = sand.u32 %s35, 1
          %s364 = smul.addr %s363, 64
          %s365 = scalar_lea.vmem [#allocation4], %s364
          %s367 = ssub.s32 1024, 1024
          %368 = vsyncadd %s362, %s367
          %s369 = smul.addr %s25, 16
          %s370 = smul.addr %s369, 64
          %s371 = scalar_lea.hbm %s0, %s370
          %s372 = sshll.u32 %s365, 4
          %s373 = int_to_ptr.vmem [resolvable:$true] %s372
          %378 = dma.hbm_to_vmem [thread:$0]  %s371, 1024, %s373, %s362, 64, 64, 4
        $region52: #{tpu_custom_call.1} parent=47 // pred_fallthru
          _
      $region48: #{tpu_custom_call.1} parent=5 // pred_fallthru
        _
      %p379 = scmp.le.s32.totalorder 1, %s25
      %p380 = scmp.lt.s32.totalorder %s25, 3
      %p381 = pnand %p379, %p380
      %p382 = pneg %p381
      // Predicated region
      $region53: #{tpu_custom_call.1} parent=5 // pred_check
        _
      $region54: #{tpu_custom_call.1} parent=5 // pred_check_branch
        %384 = sbr.rel (%p381) target = $region56
      $region55: #{tpu_custom_call.1} parent=5 // pred_region
        %s385 = ssub.s32 %s25, 1
        %s386 = sand.u32 %s38, 1
        %s387 = scalar_lea.sflag [#allocation5], %s386
        %s388 = sand.u32 %s38, 1
        %s389 = smul.addr %s388, 64
        %s390 = scalar_lea.vmem [#allocation4], %s389
        // Predicated region
        $region57: #{tpu_custom_call.1} parent=55 // pred_check
          %p391 = pneg %p51
        $region58: #{tpu_custom_call.1} parent=55 // pred_check_branch
          %393 = sbr.rel (%p391) target = $region60
        $region59: #{tpu_custom_call.1} parent=55 // pred_region
          %394 = dma.done %s387, 1024
        $region60: #{tpu_custom_call.1} parent=55 // pred_fallthru
          _
        // Predicated region
        $region61: #{tpu_custom_call.1} parent=55 // pred_check
          %p395 = pneg %p72
        $region62: #{tpu_custom_call.1} parent=55 // pred_check_branch
          %397 = sbr.rel (%p395) target = $region64
        $region63: #{tpu_custom_call.1} parent=55 // pred_region
          %398 = dma.done [#allocation8], 256
        $region64: #{tpu_custom_call.1} parent=55 // pred_fallthru
          _
        // Predicated region
        $region65: #{tpu_custom_call.1} parent=55 // pred_check
          %p399 = pneg %p93
        $region66: #{tpu_custom_call.1} parent=55 // pred_check_branch
          %401 = sbr.rel (%p399) target = $region68
        $region67: #{tpu_custom_call.1} parent=55 // pred_region
          %402 = dma.done [#allocation8], 32
        $region68: #{tpu_custom_call.1} parent=55 // pred_fallthru
          _
        // Predicated region
        $region69: #{tpu_custom_call.1} parent=55 // pred_check
          %p403 = pneg %p114
        $region70: #{tpu_custom_call.1} parent=55 // pred_check_branch
          %405 = sbr.rel (%p403) target = $region72
        $region71: #{tpu_custom_call.1} parent=55 // pred_region
          %406 = dma.done [#allocation11], 73728
        $region72: #{tpu_custom_call.1} parent=55 // pred_fallthru
          _
        // Predicated region
        $region73: #{tpu_custom_call.1} parent=55 // pred_check
          %p407 = pneg %p135
        $region74: #{tpu_custom_call.1} parent=55 // pred_check_branch
          %409 = sbr.rel (%p407) target = $region76
        $region75: #{tpu_custom_call.1} parent=55 // pred_region
          %410 = dma.done [#allocation11], 32
        $region76: #{tpu_custom_call.1} parent=55 // pred_fallthru
          _
        // Predicated region
        $region77: #{tpu_custom_call.1} parent=55 // pred_check
          %p411 = pneg %p156
        $region78: #{tpu_custom_call.1} parent=55 // pred_check_branch
          %413 = sbr.rel (%p411) target = $region80
        $region79: #{tpu_custom_call.1} parent=55 // pred_region
          %414 = dma.done [#allocation14], 36864
        $region80: #{tpu_custom_call.1} parent=55 // pred_fallthru
          _
        // Predicated region
        $region81: #{tpu_custom_call.1} parent=55 // pred_check
          %p415 = pneg %p177
        $region82: #{tpu_custom_call.1} parent=55 // pred_check_branch
          %417 = sbr.rel (%p415) target = $region84
        $region83: #{tpu_custom_call.1} parent=55 // pred_region
          %418 = dma.done [#allocation14], 32
        $region84: #{tpu_custom_call.1} parent=55 // pred_fallthru
          _
        // Predicated region
        $region85: #{tpu_custom_call.1} parent=55 // pred_check
          %p419 = pneg %p198
        $region86: #{tpu_custom_call.1} parent=55 // pred_check_branch
          %421 = sbr.rel (%p419) target = $region88
        $region87: #{tpu_custom_call.1} parent=55 // pred_region
          %422 = dma.done [#allocation17], 256
        $region88: #{tpu_custom_call.1} parent=55 // pred_fallthru
          _
        // Predicated region
        $region89: #{tpu_custom_call.1} parent=55 // pred_check
          %p423 = pneg %p219
        $region90: #{tpu_custom_call.1} parent=55 // pred_check_branch
          %425 = sbr.rel (%p423) target = $region92
        $region91: #{tpu_custom_call.1} parent=55 // pred_region
          %426 = dma.done [#allocation17], 16
        $region92: #{tpu_custom_call.1} parent=55 // pred_fallthru
          _
        %s427 = sand.u32 %s38, 1
        %s428 = scalar_lea.sflag [#allocation5], %s427
        %s429 = sand.u32 %s38, 1
        %s430 = smul.addr %s429, 64
        %s431 = scalar_lea.vmem [#allocation4], %s430
        %p432 = pneg %p51
        %p433 = pneg %p48
        %p434 = pneg %p72
        %p435 = pneg %p69
        %p436 = pneg %p93
        %p437 = pneg %p90
        %p438 = pneg %p114
        %p439 = pneg %p111
        %p440 = pneg %p135
        %p441 = pneg %p132
        %p442 = pneg %p156
        %p443 = pneg %p153
        %p444 = pneg %p177
        %p445 = pneg %p174
        %p446 = pneg %p198
        %p447 = pneg %p195
        %p448 = pneg %p219
        %p449 = pneg %p216
        %p450 = pneg %p245
        %p451 = pneg %p242
        %s452 = sand.u32 %s232, 1
        %s453 = scalar_lea.sflag [#allocation6], %s452
        %s454 = sand.u32 %s232, 1
        %s455 = scalar_lea.vmem [#allocation19], %s454
        %457 = vst [vmem:[#allocation2] sm:$0xff] 0
        %458 = vst [vmem:[#allocation2 + $0x8] sm:$0xff] 0
        %459 = vst [vmem:[#allocation2 + $0x10] sm:$0x11] 0
        %460 = vst [vmem:[#allocation2 + $0x18] sm:$0x11] 0
        %s461 = scalar_lea.vmem [#allocation2], 288
        %462 = vst [vmem:[%s461] sm:$0xff] 0
        %463 = vst [vmem:[%s461 + $0x8] sm:$0xff] 0
        %464 = vst [vmem:[%s461 + $0x10] sm:$0x11] 0
        %465 = vst [vmem:[%s461 + $0x18] sm:$0x11] 0
        %vm466 = vcmask 1040384
        %vm467 = vsmask.f32 256
        %vm468 = vmand %vm466, %vm467
        %vm469 = vcmask 1044484
        %vm470 = vsmask.f32 4352
        %vm471 = vmand %vm469, %vm470
        %vm472 = vmor %vm471, %vm468
        %v473 = vld [vmem:[#allocation2] sm:$0x11]
        %v474 = vsel %vm472, 0, %v473
        %475 = vst [vmem:[#allocation2] sm:$0x11] %v474
        %v476 = vld [vmem:[#allocation2 + $0x8] sm:$0x11]
        %v477 = vsel %vm472, 0, %v476
        %478 = vst [vmem:[#allocation2 + $0x8] sm:$0x11] %v477
        %v479 = vld [vmem:[#allocation2 + $0x20] sm:$0x11]
        %v480 = vsel %vm472, 0, %v479
        %481 = vst [vmem:[#allocation2 + $0x20] sm:$0x11] %v480
        %v482 = vld [vmem:[#allocation2 + $0x28] sm:$0x11]
        %v483 = vsel %vm472, 0, %v482
        %484 = vst [vmem:[#allocation2 + $0x28] sm:$0x11] %v483
        %v485 = vld [vmem:[#allocation2 + $0x40] sm:$0x11]
        %v486 = vsel %vm472, 0, %v485
        %487 = vst [vmem:[#allocation2 + $0x40] sm:$0x11] %v486
        %v488 = vld [vmem:[#allocation2 + $0x48] sm:$0x11]
        %v489 = vsel %vm472, 0, %v488
        %490 = vst [vmem:[#allocation2 + $0x48] sm:$0x11] %v489
        %v491 = vld [vmem:[#allocation2 + $0x60] sm:$0x11]
        %v492 = vsel %vm472, 0, %v491
        %493 = vst [vmem:[#allocation2 + $0x60] sm:$0x11] %v492
        %v494 = vld [vmem:[#allocation2 + $0x68] sm:$0x11]
        %v495 = vsel %vm472, 0, %v494
        %496 = vst [vmem:[#allocation2 + $0x68] sm:$0x11] %v495
        %v497 = vld [vmem:[#allocation2 + $0x80] sm:$0x11]
        %v498 = vsel %vm472, 0, %v497
        %499 = vst [vmem:[#allocation2 + $0x80] sm:$0x11] %v498
        %v500 = vld [vmem:[#allocation2 + $0x88] sm:$0x11]
        %v501 = vsel %vm472, 0, %v500
        %502 = vst [vmem:[#allocation2 + $0x88] sm:$0x11] %v501
        %v503 = vld [vmem:[#allocation2 + $0xa0] sm:$0x11]
        %v504 = vsel %vm472, 0, %v503
        %505 = vst [vmem:[#allocation2 + $0xa0] sm:$0x11] %v504
        %v506 = vld [vmem:[#allocation2 + $0xa8] sm:$0x11]
        %v507 = vsel %vm472, 0, %v506
        %508 = vst [vmem:[#allocation2 + $0xa8] sm:$0x11] %v507
        %v509 = vld [vmem:[#allocation2 + $0xc0] sm:$0x11]
        %v510 = vsel %vm472, 0, %v509
        %511 = vst [vmem:[#allocation2 + $0xc0] sm:$0x11] %v510
        %v512 = vld [vmem:[#allocation2 + $0xc8] sm:$0x11]
        %v513 = vsel %vm472, 0, %v512
        %514 = vst [vmem:[#allocation2 + $0xc8] sm:$0x11] %v513
        %v515 = vld [vmem:[#allocation2 + $0xe0] sm:$0x11]
        %v516 = vsel %vm472, 0, %v515
        %517 = vst [vmem:[#allocation2 + $0xe0] sm:$0x11] %v516
        %v518 = vld [vmem:[#allocation2 + $0xe8] sm:$0x11]
        %v519 = vsel %vm472, 0, %v518
        %520 = vst [vmem:[#allocation2 + $0xe8] sm:$0x11] %v519
        %v521 = vld [vmem:[#allocation2 + $0x100] sm:$0x11]
        %v522 = vsel %vm472, 0, %v521
        %523 = vst [vmem:[#allocation2 + $0x100] sm:$0x11] %v522
        %v524 = vld [vmem:[#allocation2 + $0x108] sm:$0x11]
        %v525 = vsel %vm472, 0, %v524
        %526 = vst [vmem:[#allocation2 + $0x108] sm:$0x11] %v525
        %v527 = vld [vmem:[#allocation2 + $0x120] sm:$0x11]
        %v528 = vsel %vm472, 0, %v527
        %529 = vst [vmem:[#allocation2 + $0x120] sm:$0x11] %v528
        %v530 = vld [vmem:[#allocation2 + $0x128] sm:$0x11]
        %v531 = vsel %vm472, 0, %v530
        %532 = vst [vmem:[#allocation2 + $0x128] sm:$0x11] %v531
        %vm533 = vsmask.f32 7938
        %vm534 = vmand %vm466, %vm533
        %vm535 = vsmask.f32 7954
        %vm536 = vmand %vm469, %vm535
        %vm537 = vmor %vm536, %vm534
        %v538 = vld [vmem:[#allocation2 + $0x10] sm:$0x11]
        %v539 = vsel %vm537, 0, %v538
        %540 = vst [vmem:[#allocation2 + $0x10] sm:$0x11] %v539
        %v541 = vld [vmem:[#allocation2 + $0x18] sm:$0x11]
        %v542 = vsel %vm537, 0, %v541
        %543 = vst [vmem:[#allocation2 + $0x18] sm:$0x11] %v542
        %v544 = vld [vmem:[#allocation2 + $0x30] sm:$0x11]
        %v545 = vsel %vm537, 0, %v544
        %546 = vst [vmem:[#allocation2 + $0x30] sm:$0x11] %v545
        %v547 = vld [vmem:[#allocation2 + $0x38] sm:$0x11]
        %v548 = vsel %vm537, 0, %v547
        %549 = vst [vmem:[#allocation2 + $0x38] sm:$0x11] %v548
        %v550 = vld [vmem:[#allocation2 + $0x50] sm:$0x11]
        %v551 = vsel %vm537, 0, %v550
        %552 = vst [vmem:[#allocation2 + $0x50] sm:$0x11] %v551
        %v553 = vld [vmem:[#allocation2 + $0x58] sm:$0x11]
        %v554 = vsel %vm537, 0, %v553
        %555 = vst [vmem:[#allocation2 + $0x58] sm:$0x11] %v554
        %v556 = vld [vmem:[#allocation2 + $0x70] sm:$0x11]
        %v557 = vsel %vm537, 0, %v556
        %558 = vst [vmem:[#allocation2 + $0x70] sm:$0x11] %v557
        %v559 = vld [vmem:[#allocation2 + $0x78] sm:$0x11]
        %v560 = vsel %vm537, 0, %v559
        %561 = vst [vmem:[#allocation2 + $0x78] sm:$0x11] %v560
        %v562 = vld [vmem:[#allocation2 + $0x90] sm:$0x11]
        %v563 = vsel %vm537, 0, %v562
        %564 = vst [vmem:[#allocation2 + $0x90] sm:$0x11] %v563
        %v565 = vld [vmem:[#allocation2 + $0x98] sm:$0x11]
        %v566 = vsel %vm537, 0, %v565
        %567 = vst [vmem:[#allocation2 + $0x98] sm:$0x11] %v566
        %v568 = vld [vmem:[#allocation2 + $0xb0] sm:$0x11]
        %v569 = vsel %vm537, 0, %v568
        %570 = vst [vmem:[#allocation2 + $0xb0] sm:$0x11] %v569
        %v571 = vld [vmem:[#allocation2 + $0xb8] sm:$0x11]
        %v572 = vsel %vm537, 0, %v571
        %573 = vst [vmem:[#allocation2 + $0xb8] sm:$0x11] %v572
        %v574 = vld [vmem:[#allocation2 + $0xd0] sm:$0x11]
        %v575 = vsel %vm537, 0, %v574
        %576 = vst [vmem:[#allocation2 + $0xd0] sm:$0x11] %v575
        %v577 = vld [vmem:[#allocation2 + $0xd8] sm:$0x11]
        %v578 = vsel %vm537, 0, %v577
        %579 = vst [vmem:[#allocation2 + $0xd8] sm:$0x11] %v578
        %v580 = vld [vmem:[#allocation2 + $0xf0] sm:$0x11]
        %v581 = vsel %vm537, 0, %v580
        %582 = vst [vmem:[#allocation2 + $0xf0] sm:$0x11] %v581
        %v583 = vld [vmem:[#allocation2 + $0xf8] sm:$0x11]
        %v584 = vsel %vm537, 0, %v583
        %585 = vst [vmem:[#allocation2 + $0xf8] sm:$0x11] %v584
        %v586 = vld [vmem:[#allocation2 + $0x110] sm:$0x11]
        %v587 = vsel %vm537, 0, %v586
        %588 = vst [vmem:[#allocation2 + $0x110] sm:$0x11] %v587
        %v589 = vld [vmem:[#allocation2 + $0x118] sm:$0x11]
        %v590 = vsel %vm537, 0, %v589
        %591 = vst [vmem:[#allocation2 + $0x118] sm:$0x11] %v590
        %v592 = vld [vmem:[#allocation2 + $0x130] sm:$0x11]
        %v593 = vsel %vm537, 0, %v592
        %594 = vst [vmem:[#allocation2 + $0x130] sm:$0x11] %v593
        %v595 = vld [vmem:[#allocation2 + $0x138] sm:$0x11]
        %v596 = vsel %vm537, 0, %v595
        %597 = vst [vmem:[#allocation2 + $0x138] sm:$0x11] %v596
        %598 = vst [vmem:[#allocation3] sm:$0xff] 0
        %599 = vst [vmem:[#allocation3 + $0x8] sm:$0x11] 0
        %s600 = scalar_lea.vmem [#allocation3], 144
        %601 = vst [vmem:[%s600] sm:$0xff] 0
        %602 = vst [vmem:[%s600 + $0x8] sm:$0x11] 0
        %v603 = vld [vmem:[#allocation3] sm:$0x11]
        %v604 = vsel %vm472, 0, %v603
        %605 = vst [vmem:[#allocation3] sm:$0x11] %v604
        %v606 = vld [vmem:[#allocation3 + $0x10] sm:$0x11]
        %v607 = vsel %vm472, 0, %v606
        %608 = vst [vmem:[#allocation3 + $0x10] sm:$0x11] %v607
        %v609 = vld [vmem:[#allocation3 + $0x20] sm:$0x11]
        %v610 = vsel %vm472, 0, %v609
        %611 = vst [vmem:[#allocation3 + $0x20] sm:$0x11] %v610
        %v612 = vld [vmem:[#allocation3 + $0x30] sm:$0x11]
        %v613 = vsel %vm472, 0, %v612
        %614 = vst [vmem:[#allocation3 + $0x30] sm:$0x11] %v613
        %v615 = vld [vmem:[#allocation3 + $0x40] sm:$0x11]
        %v616 = vsel %vm472, 0, %v615
        %617 = vst [vmem:[#allocation3 + $0x40] sm:$0x11] %v616
        %v618 = vld [vmem:[#allocation3 + $0x50] sm:$0x11]
        %v619 = vsel %vm472, 0, %v618
        %620 = vst [vmem:[#allocation3 + $0x50] sm:$0x11] %v619
        %v621 = vld [vmem:[#allocation3 + $0x60] sm:$0x11]
        %v622 = vsel %vm472, 0, %v621
        %623 = vst [vmem:[#allocation3 + $0x60] sm:$0x11] %v622
        %v624 = vld [vmem:[#allocation3 + $0x70] sm:$0x11]
        %v625 = vsel %vm472, 0, %v624
        %626 = vst [vmem:[#allocation3 + $0x70] sm:$0x11] %v625
        %v627 = vld [vmem:[#allocation3 + $0x80] sm:$0x11]
        %v628 = vsel %vm472, 0, %v627
        %629 = vst [vmem:[#allocation3 + $0x80] sm:$0x11] %v628
        %v630 = vld [vmem:[#allocation3 + $0x90] sm:$0x11]
        %v631 = vsel %vm472, 0, %v630
        %632 = vst [vmem:[#allocation3 + $0x90] sm:$0x11] %v631
        %v633 = vld [vmem:[#allocation3 + $0x8] sm:$0x11]
        %v634 = vsel %vm537, 0, %v633
        %635 = vst [vmem:[#allocation3 + $0x8] sm:$0x11] %v634
        %v636 = vld [vmem:[#allocation3 + $0x18] sm:$0x11]
        %v637 = vsel %vm537, 0, %v636
        %638 = vst [vmem:[#allocation3 + $0x18] sm:$0x11] %v637
        %v639 = vld [vmem:[#allocation3 + $0x28] sm:$0x11]
        %v640 = vsel %vm537, 0, %v639
        %641 = vst [vmem:[#allocation3 + $0x28] sm:$0x11] %v640
        %v642 = vld [vmem:[#allocation3 + $0x38] sm:$0x11]
        %v643 = vsel %vm537, 0, %v642
        %644 = vst [vmem:[#allocation3 + $0x38] sm:$0x11] %v643
        %v645 = vld [vmem:[#allocation3 + $0x48] sm:$0x11]
        %v646 = vsel %vm537, 0, %v645
        %647 = vst [vmem:[#allocation3 + $0x48] sm:$0x11] %v646
        %v648 = vld [vmem:[#allocation3 + $0x58] sm:$0x11]
        %v649 = vsel %vm537, 0, %v648
        %650 = vst [vmem:[#allocation3 + $0x58] sm:$0x11] %v649
        %v651 = vld [vmem:[#allocation3 + $0x68] sm:$0x11]
        %v652 = vsel %vm537, 0, %v651
        %653 = vst [vmem:[#allocation3 + $0x68] sm:$0x11] %v652
        %v654 = vld [vmem:[#allocation3 + $0x78] sm:$0x11]
        %v655 = vsel %vm537, 0, %v654
        %656 = vst [vmem:[#allocation3 + $0x78] sm:$0x11] %v655
        %v657 = vld [vmem:[#allocation3 + $0x88] sm:$0x11]
        %v658 = vsel %vm537, 0, %v657
        %659 = vst [vmem:[#allocation3 + $0x88] sm:$0x11] %v658
        %v660 = vld [vmem:[#allocation3 + $0x98] sm:$0x11]
        %v661 = vsel %vm537, 0, %v660
        %662 = vst [vmem:[#allocation3 + $0x98] sm:$0x11] %v661
        %v663 = vld [vmem:[%s390] sm:$0xf]
        %v664 = vld [vmem:[%s390 + $0x4] sm:$0xf]
        %v665 = vld [vmem:[%s390 + $0x8] sm:$0xf]
        %v666 = vld [vmem:[%s390 + $0xc] sm:$0xf]
        %v667 = vld [vmem:[%s390 + $0x10] sm:$0xf]
        %v668 = vld [vmem:[%s390 + $0x14] sm:$0xf]
        %v669 = vld [vmem:[%s390 + $0x18] sm:$0xf]
        %v670 = vld [vmem:[%s390 + $0x1c] sm:$0xf]
        %v671 = vld [vmem:[%s390 + $0x20] sm:$0xf]
        %v672 = vld [vmem:[%s390 + $0x24] sm:$0xf]
        %v673 = vld [vmem:[%s390 + $0x28] sm:$0xf]
        %v674 = vld [vmem:[%s390 + $0x2c] sm:$0xf]
        %v675 = vld [vmem:[%s390 + $0x30] sm:$0xf]
        %v676 = vld [vmem:[%s390 + $0x34] sm:$0xf]
        %v677 = vld [vmem:[%s390 + $0x38] sm:$0xf]
        %v678 = vld [vmem:[%s390 + $0x3c] sm:$0xf]
        %v679 = vld [vmem:[#allocation7] sm:$0xff]
        %v680 = vld [vmem:[#allocation7 + $0x8] sm:$0xff]
        %v681 = vld [vmem:[#allocation9] sm:$0x3]
        %v683 = vlaneseq
        %v684 = vshrl.u32 %v683, 7
        %v685 = vsub.s32 0, %v684
        %v686 = vrot.slane %v681, %v685
        %v687 = vlaneseq
        %v688 = vshrl.u32 %v687, 7
        %v689 = vsub.s32 1, %v688
        %v690 = vrot.slane %v681, %v689
        %v709 = vunpack.c.l.b16 %v663
        %v710 = vunpack.c.l.b16 %v664
        %v711 = vunpack.c.l.b16 %v665
        %v712 = vunpack.c.l.b16 %v666
        %v713 = vunpack.c.l.b16 %v667
        %v714 = vunpack.c.l.b16 %v668
        %v715 = vunpack.c.l.b16 %v669
        %v716 = vunpack.c.l.b16 %v670
        %v717 = vunpack.c.l.b16 %v671
        %v718 = vunpack.c.l.b16 %v672
        %v719 = vunpack.c.l.b16 %v673
        %v720 = vunpack.c.l.b16 %v674
        %v721 = vunpack.c.l.b16 %v675
        %v722 = vunpack.c.l.b16 %v676
        %v723 = vunpack.c.l.b16 %v677
        %v724 = vunpack.c.l.b16 %v678
        %v725 = vpack.c.b16 %v710, %v709
        %v726 = vpack.c.b16 %v712, %v711
        %v727 = vpack.c.b16 %v714, %v713
        %v728 = vpack.c.b16 %v716, %v715
        %v729 = vpack.c.b16 %v718, %v717
        %v730 = vpack.c.b16 %v720, %v719
        %v731 = vpack.c.b16 %v722, %v721
        %v732 = vpack.c.b16 %v724, %v723
        %v735 = vunpack.c.l.b16 %v679
        %v736 = vunpack.c.h.b16 %v679
        %v737 = vunpack.c.l.b16 %v680
        %v738 = vunpack.c.h.b16 %v680
        %v739 = vpack.c.b16 %v737, %v735
        %v740 = vpack.c.b16 %v738, %v736
        %vm743 = vcmask 130048
        %v745 = vsel %vm743, %v725, 0
        %v748 = vsel %vm743, %v726, 0
        %v751 = vsel %vm743, %v727, 0
        %v754 = vsel %vm743, %v728, 0
        %v757 = vsel %vm743, %v729, 0
        %v760 = vsel %vm743, %v730, 0
        %v763 = vsel %vm743, %v731, 0
        %v766 = vsel %vm743, %v732, 0
        %768 = vmatprep.subr.bf16.mxu0 0
        %769 = vmatpush1.bf16.msra.mxu0 0
        %770 = vmatprep.subr.bf16.mxu0 0
        %771 = vmatpush1.bf16.msra.mxu0 0
        %772 = vmatprep.subr.bf16.mxu0 0
        %773 = vmatpush1.bf16.msra.mxu0 0
        %774 = vmatprep.subr.bf16.mxu0 0
        %775 = vmatpush1.bf16.msra.mxu0 0
        %776 = vmatprep.subr.bf16.mxu0 0
        %777 = vmatpush1.bf16.msra.mxu0 0
        %778 = vmatprep.subr.bf16.mxu0 0
        %779 = vmatpush1.bf16.msra.mxu0 0
        %780 = vmatprep.subr.bf16.mxu0 0
        %781 = vmatpush1.bf16.msra.mxu0 0
        %782 = vmatprep.subr.bf16.mxu0 %v740
        %783 = vmatpush1.bf16.msra.mxu0 %v739
        %784 = vmatprep.subr.bf16.mxu0 0
        %785 = vmatpush2.bf16.msra.mxu0 0
        %786 = vmatprep.subr.bf16.mxu0 0
        %787 = vmatpush2.bf16.msra.mxu0 0
        %788 = vmatprep.subr.bf16.mxu0 0
        %789 = vmatpush2.bf16.msra.mxu0 0
        %790 = vmatprep.subr.bf16.mxu0 0
        %791 = vmatpush2.bf16.msra.mxu0 0
        %792 = vmatprep.subr.bf16.mxu0 0
        %793 = vmatpush2.bf16.msra.mxu0 0
        %794 = vmatprep.subr.bf16.mxu0 0
        %795 = vmatpush2.bf16.msra.mxu0 0
        %796 = vmatprep.subr.bf16.mxu0 0
        %797 = vmatpush2.bf16.msra.mxu0 0
        %798 = vmatprep.subr.bf16.mxu0 0
        %799 = vmatpush2.bf16.msra.mxu0 0
        %800 = vmatprep.mubr.bf16.mxu0 0
        %801 = vmatmul.mubr.bf16.gmra.mxu0 %v745
        %v802 = vpop.f32.mrf.mxu0
        %v803 = vadd.f32 %v686, %v802
        %v804 = vpop.f32.mrf.mxu0
        %v805 = vadd.f32 %v690, %v804
        %v806 = vpop.f32.mrf.mxu0
        %v807 = vadd.f32 %v686, %v806
        %v808 = vpop.f32.mrf.mxu0
        %v809 = vadd.f32 %v690, %v808
        %810 = vmatprep.mubr.bf16.mxu0 0
        %811 = vmatmul.mubr.bf16.gmra.mxu0 %v748
        %v812 = vpop.f32.mrf.mxu0
        %v813 = vadd.f32 %v686, %v812
        %v814 = vpop.f32.mrf.mxu0
        %v815 = vadd.f32 %v690, %v814
        %v816 = vpop.f32.mrf.mxu0
        %v817 = vadd.f32 %v686, %v816
        %v818 = vpop.f32.mrf.mxu0
        %v819 = vadd.f32 %v690, %v818
        %820 = vmatprep.mubr.bf16.mxu0 0
        %821 = vmatmul.mubr.bf16.gmra.mxu0 %v751
        %v822 = vpop.f32.mrf.mxu0
        %v823 = vadd.f32 %v686, %v822
        %v824 = vpop.f32.mrf.mxu0
        %v825 = vadd.f32 %v690, %v824
        %v826 = vpop.f32.mrf.mxu0
        %v827 = vadd.f32 %v686, %v826
        %v828 = vpop.f32.mrf.mxu0
        %v829 = vadd.f32 %v690, %v828
        %830 = vmatprep.mubr.bf16.mxu0 0
        %831 = vmatmul.mubr.bf16.gmra.mxu0 %v754
        %v832 = vpop.f32.mrf.mxu0
        %v833 = vadd.f32 %v686, %v832
        %v834 = vpop.f32.mrf.mxu0
        %v835 = vadd.f32 %v690, %v834
        %v836 = vpop.f32.mrf.mxu0
        %v837 = vadd.f32 %v686, %v836
        %v838 = vpop.f32.mrf.mxu0
        %v839 = vadd.f32 %v690, %v838
        %840 = vmatprep.mubr.bf16.mxu0 0
        %841 = vmatmul.mubr.bf16.gmra.mxu0 %v757
        %v842 = vpop.f32.mrf.mxu0
        %v843 = vadd.f32 %v686, %v842
        %v844 = vpop.f32.mrf.mxu0
        %v845 = vadd.f32 %v690, %v844
        %v846 = vpop.f32.mrf.mxu0
        %v847 = vadd.f32 %v686, %v846
        %v848 = vpop.f32.mrf.mxu0
        %v849 = vadd.f32 %v690, %v848
        %850 = vmatprep.mubr.bf16.mxu0 0
        %851 = vmatmul.mubr.bf16.gmra.mxu0 %v760
        %v852 = vpop.f32.mrf.mxu0
        %v853 = vadd.f32 %v686, %v852
        %v854 = vpop.f32.mrf.mxu0
        %v855 = vadd.f32 %v690, %v854
        %v856 = vpop.f32.mrf.mxu0
        %v857 = vadd.f32 %v686, %v856
        %v858 = vpop.f32.mrf.mxu0
        %v859 = vadd.f32 %v690, %v858
        %860 = vmatprep.mubr.bf16.mxu0 0
        %861 = vmatmul.mubr.bf16.gmra.mxu0 %v763
        %v862 = vpop.f32.mrf.mxu0
        %v863 = vadd.f32 %v686, %v862
        %v864 = vpop.f32.mrf.mxu0
        %v865 = vadd.f32 %v690, %v864
        %v866 = vpop.f32.mrf.mxu0
        %v867 = vadd.f32 %v686, %v866
        %v868 = vpop.f32.mrf.mxu0
        %v869 = vadd.f32 %v690, %v868
        %870 = vmatprep.mubr.bf16.mxu0 0
        %871 = vmatmul.mubr.bf16.gmra.mxu0 %v766
        %v872 = vpop.f32.mrf.mxu0
        %v873 = vadd.f32 %v686, %v872
        %v874 = vpop.f32.mrf.mxu0
        %v875 = vadd.f32 %v690, %v874
        %v876 = vpop.f32.mrf.mxu0
        %v877 = vadd.f32 %v686, %v876
        %v878 = vpop.f32.mrf.mxu0
        %v879 = vadd.f32 %v690, %v878
        %880 = vdwg.mxu0
        %v881 = vmax.f32 %v803, 0.0
        %v882 = vmax.f32 %v805, 0.0
        %v883 = vmax.f32 %v807, 0.0
        %v884 = vmax.f32 %v809, 0.0
        %v885 = vmax.f32 %v813, 0.0
        %v886 = vmax.f32 %v815, 0.0
        %v887 = vmax.f32 %v817, 0.0
        %v888 = vmax.f32 %v819, 0.0
        %v889 = vmax.f32 %v823, 0.0
        %v890 = vmax.f32 %v825, 0.0
        %v891 = vmax.f32 %v827, 0.0
        %v892 = vmax.f32 %v829, 0.0
        %v893 = vmax.f32 %v833, 0.0
        %v894 = vmax.f32 %v835, 0.0
        %v895 = vmax.f32 %v837, 0.0
        %v896 = vmax.f32 %v839, 0.0
        %v897 = vmax.f32 %v843, 0.0
        %v898 = vmax.f32 %v845, 0.0
        %v899 = vmax.f32 %v847, 0.0
        %v900 = vmax.f32 %v849, 0.0
        %v901 = vmax.f32 %v853, 0.0
        %v902 = vmax.f32 %v855, 0.0
        %v903 = vmax.f32 %v857, 0.0
        %v904 = vmax.f32 %v859, 0.0
        %v905 = vmax.f32 %v863, 0.0
        %v906 = vmax.f32 %v865, 0.0
        %v907 = vmax.f32 %v867, 0.0
        %v908 = vmax.f32 %v869, 0.0
        %v909 = vmax.f32 %v873, 0.0
        %v910 = vmax.f32 %v875, 0.0
        %v911 = vmax.f32 %v877, 0.0
        %v912 = vmax.f32 %v879, 0.0
        %v913 = vpack.c.bf16 %v881, %v881
        %v914 = vpack.c.bf16 %v882, %v882
        %v915 = vpack.c.bf16 %v883, %v883
        %v916 = vpack.c.bf16 %v884, %v884
        %v917 = vpack.c.bf16 %v885, %v885
        %v918 = vpack.c.bf16 %v886, %v886
        %v919 = vpack.c.bf16 %v887, %v887
        %v920 = vpack.c.bf16 %v888, %v888
        %v921 = vpack.c.bf16 %v889, %v889
        %v922 = vpack.c.bf16 %v890, %v890
        %v923 = vpack.c.bf16 %v891, %v891
        %v924 = vpack.c.bf16 %v892, %v892
        %v925 = vpack.c.bf16 %v893, %v893
        %v926 = vpack.c.bf16 %v894, %v894
        %v927 = vpack.c.bf16 %v895, %v895
        %v928 = vpack.c.bf16 %v896, %v896
        %v929 = vpack.c.bf16 %v897, %v897
        %v930 = vpack.c.bf16 %v898, %v898
        %v931 = vpack.c.bf16 %v899, %v899
        %v932 = vpack.c.bf16 %v900, %v900
        %v933 = vpack.c.bf16 %v901, %v901
        %v934 = vpack.c.bf16 %v902, %v902
        %v935 = vpack.c.bf16 %v903, %v903
        %v936 = vpack.c.bf16 %v904, %v904
        %v937 = vpack.c.bf16 %v905, %v905
        %v938 = vpack.c.bf16 %v906, %v906
        %v939 = vpack.c.bf16 %v907, %v907
        %v940 = vpack.c.bf16 %v908, %v908
        %v941 = vpack.c.bf16 %v909, %v909
        %v942 = vpack.c.bf16 %v910, %v910
        %v943 = vpack.c.bf16 %v911, %v911
        %v944 = vpack.c.bf16 %v912, %v912
        %v977 = vunpack.c.l.b16 %v913
        %v978 = vunpack.c.l.b16 %v914
        %v979 = vunpack.c.l.b16 %v929
        %v980 = vunpack.c.l.b16 %v930
        %v981 = vunpack.c.l.b16 %v915
        %v982 = vunpack.c.l.b16 %v916
        %v983 = vunpack.c.l.b16 %v931
        %v984 = vunpack.c.l.b16 %v932
        %v985 = vunpack.c.l.b16 %v917
        %v986 = vunpack.c.l.b16 %v918
        %v987 = vunpack.c.l.b16 %v933
        %v988 = vunpack.c.l.b16 %v934
        %v989 = vunpack.c.l.b16 %v919
        %v990 = vunpack.c.l.b16 %v920
        %v991 = vunpack.c.l.b16 %v935
        %v992 = vunpack.c.l.b16 %v936
        %v993 = vunpack.c.l.b16 %v921
        %v994 = vunpack.c.l.b16 %v922
        %v995 = vunpack.c.l.b16 %v937
        %v996 = vunpack.c.l.b16 %v938
        %v997 = vunpack.c.l.b16 %v923
        %v998 = vunpack.c.l.b16 %v924
        %v999 = vunpack.c.l.b16 %v939
        %v1000 = vunpack.c.l.b16 %v940
        %v1001 = vunpack.c.l.b16 %v925
        %v1002 = vunpack.c.l.b16 %v926
        %v1003 = vunpack.c.l.b16 %v941
        %v1004 = vunpack.c.l.b16 %v942
        %v1005 = vunpack.c.l.b16 %v927
        %v1006 = vunpack.c.l.b16 %v928
        %v1007 = vunpack.c.l.b16 %v943
        %v1008 = vunpack.c.l.b16 %v944
        %v1009 = vpack.c.b16 %v978, %v977
        %v1010 = vpack.c.b16 %v980, %v979
        %v1011 = vpack.c.b16 %v982, %v981
        %v1012 = vpack.c.b16 %v984, %v983
        %v1013 = vpack.c.b16 %v986, %v985
        %v1014 = vpack.c.b16 %v988, %v987
        %v1015 = vpack.c.b16 %v990, %v989
        %v1016 = vpack.c.b16 %v992, %v991
        %v1017 = vpack.c.b16 %v994, %v993
        %v1018 = vpack.c.b16 %v996, %v995
        %v1019 = vpack.c.b16 %v998, %v997
        %v1020 = vpack.c.b16 %v1000, %v999
        %v1021 = vpack.c.b16 %v1002, %v1001
        %v1022 = vpack.c.b16 %v1004, %v1003
        %v1023 = vpack.c.b16 %v1006, %v1005
        %v1024 = vpack.c.b16 %v1008, %v1007
        %v1026 = vshrl.u32 %v1009, 16
        %v1028 = vrot.slane %v1026, 7
        %v1029 = vshll.u32 %v1009, 16
        %v1031 = vor.u32 %v1028, %v1029
        %v1033 = vshrl.u32 %v1010, 16
        %v1035 = vrot.slane %v1033, 7
        %v1036 = vshll.u32 %v1010, 16
        %v1038 = vor.u32 %v1035, %v1036
        %v1039 = vrot.slane %v1028, 4
        %v1040 = vrot.slane %v1035, 4
        %v1042 = vshrl.u32 %v1011, 16
        %v1044 = vrot.slane %v1042, 7
        %v1045 = vshll.u32 %v1011, 16
        %v1047 = vor.u32 %v1044, %v1045
        %v1049 = vshrl.u32 %v1012, 16
        %v1051 = vrot.slane %v1049, 7
        %v1052 = vshll.u32 %v1012, 16
        %v1054 = vor.u32 %v1051, %v1052
        %v1055 = vrot.slane %v1044, 4
        %v1056 = vrot.slane %v1051, 4
        %v1058 = vshrl.u32 %v1013, 16
        %v1060 = vrot.slane %v1058, 7
        %v1061 = vshll.u32 %v1013, 16
        %v1063 = vor.u32 %v1060, %v1061
        %v1065 = vshrl.u32 %v1014, 16
        %v1067 = vrot.slane %v1065, 7
        %v1068 = vshll.u32 %v1014, 16
        %v1070 = vor.u32 %v1067, %v1068
        %v1071 = vrot.slane %v1060, 4
        %v1072 = vrot.slane %v1067, 4
        %v1074 = vshrl.u32 %v1015, 16
        %v1076 = vrot.slane %v1074, 7
        %v1077 = vshll.u32 %v1015, 16
        %v1079 = vor.u32 %v1076, %v1077
        %v1081 = vshrl.u32 %v1016, 16
        %v1083 = vrot.slane %v1081, 7
        %v1084 = vshll.u32 %v1016, 16
        %v1086 = vor.u32 %v1083, %v1084
        %v1087 = vrot.slane %v1076, 4
        %v1088 = vrot.slane %v1083, 4
        %v1090 = vshrl.u32 %v1017, 16
        %v1092 = vrot.slane %v1090, 7
        %v1093 = vshll.u32 %v1017, 16
        %v1095 = vor.u32 %v1092, %v1093
        %v1097 = vshrl.u32 %v1018, 16
        %v1099 = vrot.slane %v1097, 7
        %v1100 = vshll.u32 %v1018, 16
        %v1102 = vor.u32 %v1099, %v1100
        %v1103 = vrot.slane %v1092, 4
        %v1104 = vrot.slane %v1099, 4
        %v1106 = vshrl.u32 %v1019, 16
        %v1108 = vrot.slane %v1106, 7
        %v1109 = vshll.u32 %v1019, 16
        %v1111 = vor.u32 %v1108, %v1109
        %v1113 = vshrl.u32 %v1020, 16
        %v1115 = vrot.slane %v1113, 7
        %v1116 = vshll.u32 %v1020, 16
        %v1118 = vor.u32 %v1115, %v1116
        %v1119 = vrot.slane %v1108, 4
        %v1120 = vrot.slane %v1115, 4
        %v1122 = vshrl.u32 %v1021, 16
        %v1124 = vrot.slane %v1122, 7
        %v1125 = vshll.u32 %v1021, 16
        %v1127 = vor.u32 %v1124, %v1125
        %v1129 = vshrl.u32 %v1022, 16
        %v1131 = vrot.slane %v1129, 7
        %v1132 = vshll.u32 %v1022, 16
        %v1134 = vor.u32 %v1131, %v1132
        %v1135 = vrot.slane %v1124, 4
        %v1136 = vrot.slane %v1131, 4
        %v1138 = vshrl.u32 %v1023, 16
        %v1140 = vrot.slane %v1138, 7
        %v1141 = vshll.u32 %v1023, 16
        %v1143 = vor.u32 %v1140, %v1141
        %v1145 = vshrl.u32 %v1024, 16
        %v1147 = vrot.slane %v1145, 7
        %v1148 = vshll.u32 %v1024, 16
        %v1150 = vor.u32 %v1147, %v1148
        %v1151 = vrot.slane %v1140, 4
        %v1152 = vrot.slane %v1147, 4
        %s1185 = scalar_lea.vmem [#allocation2], 32
        %vm1186 = vcmask 1043456
        %vm1187 = vmand %vm1186, %vm533
        %vm1188 = vcmask 1047556
        %vm1189 = vmand %vm1188, %vm535
        %vm1190 = vmor %vm1189, %vm1187
        %v1191 = vld [vmem:[%s1185] sm:$0xff]
        %v1192 = vsel %vm1190, %v1031, %v1191
        %1193 = vst [vmem:[%s1185] sm:$0xff] %v1192
        %v1194 = vld [vmem:[%s1185 + $0x8] sm:$0xff]
        %v1195 = vsel %vm1190, %v1038, %v1194
        %1196 = vst [vmem:[%s1185 + $0x8] sm:$0xff] %v1195
        %v1197 = vld [vmem:[%s1185 + $0x10] sm:$0x11]
        %v1198 = vsel %vm472, %v1039, %v1197
        %1199 = vst [vmem:[%s1185 + $0x10] sm:$0x11] %v1198
        %v1200 = vld [vmem:[%s1185 + $0x18] sm:$0x11]
        %v1201 = vsel %vm472, %v1040, %v1200
        %1202 = vst [vmem:[%s1185 + $0x18] sm:$0x11] %v1201
        %v1203 = vld [vmem:[%s1185 + $0x20] sm:$0xff]
        %v1204 = vsel %vm1190, %v1047, %v1203
        %1205 = vst [vmem:[%s1185 + $0x20] sm:$0xff] %v1204
        %v1206 = vld [vmem:[%s1185 + $0x28] sm:$0xff]
        %v1207 = vsel %vm1190, %v1054, %v1206
        %1208 = vst [vmem:[%s1185 + $0x28] sm:$0xff] %v1207
        %v1209 = vld [vmem:[%s1185 + $0x30] sm:$0x11]
        %v1210 = vsel %vm472, %v1055, %v1209
        %1211 = vst [vmem:[%s1185 + $0x30] sm:$0x11] %v1210
        %v1212 = vld [vmem:[%s1185 + $0x38] sm:$0x11]
        %v1213 = vsel %vm472, %v1056, %v1212
        %1214 = vst [vmem:[%s1185 + $0x38] sm:$0x11] %v1213
        %v1215 = vld [vmem:[%s1185 + $0x40] sm:$0xff]
        %v1216 = vsel %vm1190, %v1063, %v1215
        %1217 = vst [vmem:[%s1185 + $0x40] sm:$0xff] %v1216
        %v1218 = vld [vmem:[%s1185 + $0x48] sm:$0xff]
        %v1219 = vsel %vm1190, %v1070, %v1218
        %1220 = vst [vmem:[%s1185 + $0x48] sm:$0xff] %v1219
        %v1221 = vld [vmem:[%s1185 + $0x50] sm:$0x11]
        %v1222 = vsel %vm472, %v1071, %v1221
        %1223 = vst [vmem:[%s1185 + $0x50] sm:$0x11] %v1222
        %v1224 = vld [vmem:[%s1185 + $0x58] sm:$0x11]
        %v1225 = vsel %vm472, %v1072, %v1224
        %1226 = vst [vmem:[%s1185 + $0x58] sm:$0x11] %v1225
        %v1227 = vld [vmem:[%s1185 + $0x60] sm:$0xff]
        %v1228 = vsel %vm1190, %v1079, %v1227
        %1229 = vst [vmem:[%s1185 + $0x60] sm:$0xff] %v1228
        %v1230 = vld [vmem:[%s1185 + $0x68] sm:$0xff]
        %v1231 = vsel %vm1190, %v1086, %v1230
        %1232 = vst [vmem:[%s1185 + $0x68] sm:$0xff] %v1231
        %v1233 = vld [vmem:[%s1185 + $0x70] sm:$0x11]
        %v1234 = vsel %vm472, %v1087, %v1233
        %1235 = vst [vmem:[%s1185 + $0x70] sm:$0x11] %v1234
        %v1236 = vld [vmem:[%s1185 + $0x78] sm:$0x11]
        %v1237 = vsel %vm472, %v1088, %v1236
        %1238 = vst [vmem:[%s1185 + $0x78] sm:$0x11] %v1237
        %v1239 = vld [vmem:[%s1185 + $0x80] sm:$0xff]
        %v1240 = vsel %vm1190, %v1095, %v1239
        %1241 = vst [vmem:[%s1185 + $0x80] sm:$0xff] %v1240
        %v1242 = vld [vmem:[%s1185 + $0x88] sm:$0xff]
        %v1243 = vsel %vm1190, %v1102, %v1242
        %1244 = vst [vmem:[%s1185 + $0x88] sm:$0xff] %v1243
        %v1245 = vld [vmem:[%s1185 + $0x90] sm:$0x11]
        %v1246 = vsel %vm472, %v1103, %v1245
        %1247 = vst [vmem:[%s1185 + $0x90] sm:$0x11] %v1246
        %v1248 = vld [vmem:[%s1185 + $0x98] sm:$0x11]
        %v1249 = vsel %vm472, %v1104, %v1248
        %1250 = vst [vmem:[%s1185 + $0x98] sm:$0x11] %v1249
        %v1251 = vld [vmem:[%s1185 + $0xa0] sm:$0xff]
        %v1252 = vsel %vm1190, %v1111, %v1251
        %1253 = vst [vmem:[%s1185 + $0xa0] sm:$0xff] %v1252
        %v1254 = vld [vmem:[%s1185 + $0xa8] sm:$0xff]
        %v1255 = vsel %vm1190, %v1118, %v1254
        %1256 = vst [vmem:[%s1185 + $0xa8] sm:$0xff] %v1255
        %v1257 = vld [vmem:[%s1185 + $0xb0] sm:$0x11]
        %v1258 = vsel %vm472, %v1119, %v1257
        %1259 = vst [vmem:[%s1185 + $0xb0] sm:$0x11] %v1258
        %v1260 = vld [vmem:[%s1185 + $0xb8] sm:$0x11]
        %v1261 = vsel %vm472, %v1120, %v1260
        %1262 = vst [vmem:[%s1185 + $0xb8] sm:$0x11] %v1261
        %v1263 = vld [vmem:[%s1185 + $0xc0] sm:$0xff]
        %v1264 = vsel %vm1190, %v1127, %v1263
        %1265 = vst [vmem:[%s1185 + $0xc0] sm:$0xff] %v1264
        %v1266 = vld [vmem:[%s1185 + $0xc8] sm:$0xff]
        %v1267 = vsel %vm1190, %v1134, %v1266
        %1268 = vst [vmem:[%s1185 + $0xc8] sm:$0xff] %v1267
        %v1269 = vld [vmem:[%s1185 + $0xd0] sm:$0x11]
        %v1270 = vsel %vm472, %v1135, %v1269
        %1271 = vst [vmem:[%s1185 + $0xd0] sm:$0x11] %v1270
        %v1272 = vld [vmem:[%s1185 + $0xd8] sm:$0x11]
        %v1273 = vsel %vm472, %v1136, %v1272
        %1274 = vst [vmem:[%s1185 + $0xd8] sm:$0x11] %v1273
        %v1275 = vld [vmem:[%s1185 + $0xe0] sm:$0xff]
        %v1276 = vsel %vm1190, %v1143, %v1275
        %1277 = vst [vmem:[%s1185 + $0xe0] sm:$0xff] %v1276
        %v1278 = vld [vmem:[%s1185 + $0xe8] sm:$0xff]
        %v1279 = vsel %vm1190, %v1150, %v1278
        %1280 = vst [vmem:[%s1185 + $0xe8] sm:$0xff] %v1279
        %v1281 = vld [vmem:[%s1185 + $0xf0] sm:$0x11]
        %v1282 = vsel %vm472, %v1151, %v1281
        %1283 = vst [vmem:[%s1185 + $0xf0] sm:$0x11] %v1282
        %v1284 = vld [vmem:[%s1185 + $0xf8] sm:$0x11]
        %v1285 = vsel %vm472, %v1152, %v1284
        %1286 = vst [vmem:[%s1185 + $0xf8] sm:$0x11] %v1285
        %v1287 = vld [vmem:[#allocation2] sm:$0xff]
        %v1288 = vld [vmem:[#allocation2 + $0x8] sm:$0xff]
        %v1289 = vld [vmem:[#allocation2 + $0x20] sm:$0xff]
        %v1290 = vld [vmem:[#allocation2 + $0x28] sm:$0xff]
        %v1291 = vld [vmem:[#allocation2 + $0x40] sm:$0xff]
        %v1292 = vld [vmem:[#allocation2 + $0x48] sm:$0xff]
        %v1293 = vld [vmem:[#allocation2 + $0x60] sm:$0xff]
        %v1294 = vld [vmem:[#allocation2 + $0x68] sm:$0xff]
        %v1295 = vld [vmem:[#allocation2 + $0x80] sm:$0xff]
        %v1296 = vld [vmem:[#allocation2 + $0x88] sm:$0xff]
        %v1297 = vld [vmem:[#allocation2 + $0xa0] sm:$0xff]
        %v1298 = vld [vmem:[#allocation2 + $0xa8] sm:$0xff]
        %v1299 = vld [vmem:[#allocation2 + $0xc0] sm:$0xff]
        %v1300 = vld [vmem:[#allocation2 + $0xc8] sm:$0xff]
        %v1301 = vld [vmem:[#allocation2 + $0xe0] sm:$0xff]
        %v1302 = vld [vmem:[#allocation2 + $0xe8] sm:$0xff]
        %v1303 = vld [vmem:[#allocation2 + $0x10] sm:$0x11]
        %v1304 = vld [vmem:[#allocation2 + $0x18] sm:$0x11]
        %v1305 = vld [vmem:[#allocation2 + $0x30] sm:$0x11]
        %v1306 = vld [vmem:[#allocation2 + $0x38] sm:$0x11]
        %v1307 = vld [vmem:[#allocation2 + $0x50] sm:$0x11]
        %v1308 = vld [vmem:[#allocation2 + $0x58] sm:$0x11]
        %v1309 = vld [vmem:[#allocation2 + $0x70] sm:$0x11]
        %v1310 = vld [vmem:[#allocation2 + $0x78] sm:$0x11]
        %v1311 = vld [vmem:[#allocation2 + $0x90] sm:$0x11]
        %v1312 = vld [vmem:[#allocation2 + $0x98] sm:$0x11]
        %v1313 = vld [vmem:[#allocation2 + $0xb0] sm:$0x11]
        %v1314 = vld [vmem:[#allocation2 + $0xb8] sm:$0x11]
        %v1315 = vld [vmem:[#allocation2 + $0xd0] sm:$0x11]
        %v1316 = vld [vmem:[#allocation2 + $0xd8] sm:$0x11]
        %v1317 = vld [vmem:[#allocation2 + $0xf0] sm:$0x11]
        %v1318 = vld [vmem:[#allocation2 + $0xf8] sm:$0x11]
        %vm1319 = vsmask.f32 3328
        %vm1320 = vsmask.f32 7440
        %vm1321 = vmor %vm1319, %vm1320
        %v1323 = vshrl.u32 %v1287, 16
        %v1325 = vrot.slane %v1323, 4
        %v1326 = vshll.u32 %v1287, 16
        %v1328 = vrot.slane %v1326, 5
        %v1329 = vor.u32 %v1325, %v1328
        %v1330 = vrot.slane %v1329, 4
        %v1332 = vshll.u32 %v1303, 16
        %v1334 = vrot.slane %v1332, 5
        %v1335 = vsel %vm1321, %v1330, %v1334
        %v1337 = vshrl.u32 %v1288, 16
        %v1339 = vrot.slane %v1337, 4
        %v1340 = vshll.u32 %v1288, 16
        %v1342 = vrot.slane %v1340, 5
        %v1343 = vor.u32 %v1339, %v1342
        %v1344 = vrot.slane %v1343, 4
        %v1346 = vshll.u32 %v1304, 16
        %v1348 = vrot.slane %v1346, 5
        %v1349 = vsel %vm1321, %v1344, %v1348
        %v1351 = vshrl.u32 %v1289, 16
        %v1353 = vrot.slane %v1351, 4
        %v1354 = vshll.u32 %v1289, 16
        %v1356 = vrot.slane %v1354, 5
        %v1357 = vor.u32 %v1353, %v1356
        %v1358 = vrot.slane %v1357, 4
        %v1360 = vshll.u32 %v1305, 16
        %v1362 = vrot.slane %v1360, 5
        %v1363 = vsel %vm1321, %v1358, %v1362
        %v1365 = vshrl.u32 %v1290, 16
        %v1367 = vrot.slane %v1365, 4
        %v1368 = vshll.u32 %v1290, 16
        %v1370 = vrot.slane %v1368, 5
        %v1371 = vor.u32 %v1367, %v1370
        %v1372 = vrot.slane %v1371, 4
        %v1374 = vshll.u32 %v1306, 16
        %v1376 = vrot.slane %v1374, 5
        %v1377 = vsel %vm1321, %v1372, %v1376
        %v1379 = vshrl.u32 %v1291, 16
        %v1381 = vrot.slane %v1379, 4
        %v1382 = vshll.u32 %v1291, 16
        %v1384 = vrot.slane %v1382, 5
        %v1385 = vor.u32 %v1381, %v1384
        %v1386 = vrot.slane %v1385, 4
        %v1388 = vshll.u32 %v1307, 16
        %v1390 = vrot.slane %v1388, 5
        %v1391 = vsel %vm1321, %v1386, %v1390
        %v1393 = vshrl.u32 %v1292, 16
        %v1395 = vrot.slane %v1393, 4
        %v1396 = vshll.u32 %v1292, 16
        %v1398 = vrot.slane %v1396, 5
        %v1399 = vor.u32 %v1395, %v1398
        %v1400 = vrot.slane %v1399, 4
        %v1402 = vshll.u32 %v1308, 16
        %v1404 = vrot.slane %v1402, 5
        %v1405 = vsel %vm1321, %v1400, %v1404
        %v1407 = vshrl.u32 %v1293, 16
        %v1409 = vrot.slane %v1407, 4
        %v1410 = vshll.u32 %v1293, 16
        %v1412 = vrot.slane %v1410, 5
        %v1413 = vor.u32 %v1409, %v1412
        %v1414 = vrot.slane %v1413, 4
        %v1416 = vshll.u32 %v1309, 16
        %v1418 = vrot.slane %v1416, 5
        %v1419 = vsel %vm1321, %v1414, %v1418
        %v1421 = vshrl.u32 %v1294, 16
        %v1423 = vrot.slane %v1421, 4
        %v1424 = vshll.u32 %v1294, 16
        %v1426 = vrot.slane %v1424, 5
        %v1427 = vor.u32 %v1423, %v1426
        %v1428 = vrot.slane %v1427, 4
        %v1430 = vshll.u32 %v1310, 16
        %v1432 = vrot.slane %v1430, 5
        %v1433 = vsel %vm1321, %v1428, %v1432
        %v1435 = vshrl.u32 %v1295, 16
        %v1437 = vrot.slane %v1435, 4
        %v1438 = vshll.u32 %v1295, 16
        %v1440 = vrot.slane %v1438, 5
        %v1441 = vor.u32 %v1437, %v1440
        %v1442 = vrot.slane %v1441, 4
        %v1444 = vshll.u32 %v1311, 16
        %v1446 = vrot.slane %v1444, 5
        %v1447 = vsel %vm1321, %v1442, %v1446
        %v1449 = vshrl.u32 %v1296, 16
        %v1451 = vrot.slane %v1449, 4
        %v1452 = vshll.u32 %v1296, 16
        %v1454 = vrot.slane %v1452, 5
        %v1455 = vor.u32 %v1451, %v1454
        %v1456 = vrot.slane %v1455, 4
        %v1458 = vshll.u32 %v1312, 16
        %v1460 = vrot.slane %v1458, 5
        %v1461 = vsel %vm1321, %v1456, %v1460
        %v1463 = vshrl.u32 %v1297, 16
        %v1465 = vrot.slane %v1463, 4
        %v1466 = vshll.u32 %v1297, 16
        %v1468 = vrot.slane %v1466, 5
        %v1469 = vor.u32 %v1465, %v1468
        %v1470 = vrot.slane %v1469, 4
        %v1472 = vshll.u32 %v1313, 16
        %v1474 = vrot.slane %v1472, 5
        %v1475 = vsel %vm1321, %v1470, %v1474
        %v1477 = vshrl.u32 %v1298, 16
        %v1479 = vrot.slane %v1477, 4
        %v1480 = vshll.u32 %v1298, 16
        %v1482 = vrot.slane %v1480, 5
        %v1483 = vor.u32 %v1479, %v1482
        %v1484 = vrot.slane %v1483, 4
        %v1486 = vshll.u32 %v1314, 16
        %v1488 = vrot.slane %v1486, 5
        %v1489 = vsel %vm1321, %v1484, %v1488
        %v1491 = vshrl.u32 %v1299, 16
        %v1493 = vrot.slane %v1491, 4
        %v1494 = vshll.u32 %v1299, 16
        %v1496 = vrot.slane %v1494, 5
        %v1497 = vor.u32 %v1493, %v1496
        %v1498 = vrot.slane %v1497, 4
        %v1500 = vshll.u32 %v1315, 16
        %v1502 = vrot.slane %v1500, 5
        %v1503 = vsel %vm1321, %v1498, %v1502
        %v1505 = vshrl.u32 %v1300, 16
        %v1507 = vrot.slane %v1505, 4
        %v1508 = vshll.u32 %v1300, 16
        %v1510 = vrot.slane %v1508, 5
        %v1511 = vor.u32 %v1507, %v1510
        %v1512 = vrot.slane %v1511, 4
        %v1514 = vshll.u32 %v1316, 16
        %v1516 = vrot.slane %v1514, 5
        %v1517 = vsel %vm1321, %v1512, %v1516
        %v1519 = vshrl.u32 %v1301, 16
        %v1521 = vrot.slane %v1519, 4
        %v1522 = vshll.u32 %v1301, 16
        %v1524 = vrot.slane %v1522, 5
        %v1525 = vor.u32 %v1521, %v1524
        %v1526 = vrot.slane %v1525, 4
        %v1528 = vshll.u32 %v1317, 16
        %v1530 = vrot.slane %v1528, 5
        %v1531 = vsel %vm1321, %v1526, %v1530
        %v1533 = vshrl.u32 %v1302, 16
        %v1535 = vrot.slane %v1533, 4
        %v1536 = vshll.u32 %v1302, 16
        %v1538 = vrot.slane %v1536, 5
        %v1539 = vor.u32 %v1535, %v1538
        %v1540 = vrot.slane %v1539, 4
        %v1542 = vshll.u32 %v1318, 16
        %v1544 = vrot.slane %v1542, 5
        %v1545 = vsel %vm1321, %v1540, %v1544
        %v1546 = vld [vmem:[#allocation2] sm:$0xee]
        %v1547 = vld [vmem:[#allocation2 + $0x8] sm:$0xee]
        %v1548 = vld [vmem:[#allocation2 + $0x20] sm:$0xee]
        %v1549 = vld [vmem:[#allocation2 + $0x28] sm:$0xee]
        %v1550 = vld [vmem:[#allocation2 + $0x40] sm:$0xee]
        %v1551 = vld [vmem:[#allocation2 + $0x48] sm:$0xee]
        %v1552 = vld [vmem:[#allocation2 + $0x60] sm:$0xee]
        %v1553 = vld [vmem:[#allocation2 + $0x68] sm:$0xee]
        %v1554 = vld [vmem:[#allocation2 + $0x80] sm:$0xee]
        %v1555 = vld [vmem:[#allocation2 + $0x88] sm:$0xee]
        %v1556 = vld [vmem:[#allocation2 + $0xa0] sm:$0xee]
        %v1557 = vld [vmem:[#allocation2 + $0xa8] sm:$0xee]
        %v1558 = vld [vmem:[#allocation2 + $0xc0] sm:$0xee]
        %v1559 = vld [vmem:[#allocation2 + $0xc8] sm:$0xee]
        %v1560 = vld [vmem:[#allocation2 + $0xe0] sm:$0xee]
        %v1561 = vld [vmem:[#allocation2 + $0xe8] sm:$0xee]
        %vm1594 = vcmask 1042432
        %vm1595 = vcmask 1046532
        %vm1596 = vmor %vm1594, %vm1595
        %v1597 = vrot.slane %v1546, 5
        %v1598 = vrot.slane %v1597, 4
        %v1599 = vrot.slane %v1303, 5
        %v1600 = vsel %vm1596, %v1598, %v1599
        %v1601 = vrot.slane %v1547, 5
        %v1602 = vrot.slane %v1601, 4
        %v1603 = vrot.slane %v1304, 5
        %v1604 = vsel %vm1596, %v1602, %v1603
        %v1605 = vrot.slane %v1548, 5
        %v1606 = vrot.slane %v1605, 4
        %v1607 = vrot.slane %v1305, 5
        %v1608 = vsel %vm1596, %v1606, %v1607
        %v1609 = vrot.slane %v1549, 5
        %v1610 = vrot.slane %v1609, 4
        %v1611 = vrot.slane %v1306, 5
        %v1612 = vsel %vm1596, %v1610, %v1611
        %v1613 = vrot.slane %v1550, 5
        %v1614 = vrot.slane %v1613, 4
        %v1615 = vrot.slane %v1307, 5
        %v1616 = vsel %vm1596, %v1614, %v1615
        %v1617 = vrot.slane %v1551, 5
        %v1618 = vrot.slane %v1617, 4
        %v1619 = vrot.slane %v1308, 5
        %v1620 = vsel %vm1596, %v1618, %v1619
        %v1621 = vrot.slane %v1552, 5
        %v1622 = vrot.slane %v1621, 4
        %v1623 = vrot.slane %v1309, 5
        %v1624 = vsel %vm1596, %v1622, %v1623
        %v1625 = vrot.slane %v1553, 5
        %v1626 = vrot.slane %v1625, 4
        %v1627 = vrot.slane %v1310, 5
        %v1628 = vsel %vm1596, %v1626, %v1627
        %v1629 = vrot.slane %v1554, 5
        %v1630 = vrot.slane %v1629, 4
        %v1631 = vrot.slane %v1311, 5
        %v1632 = vsel %vm1596, %v1630, %v1631
        %v1633 = vrot.slane %v1555, 5
        %v1634 = vrot.slane %v1633, 4
        %v1635 = vrot.slane %v1312, 5
        %v1636 = vsel %vm1596, %v1634, %v1635
        %v1637 = vrot.slane %v1556, 5
        %v1638 = vrot.slane %v1637, 4
        %v1639 = vrot.slane %v1313, 5
        %v1640 = vsel %vm1596, %v1638, %v1639
        %v1641 = vrot.slane %v1557, 5
        %v1642 = vrot.slane %v1641, 4
        %v1643 = vrot.slane %v1314, 5
        %v1644 = vsel %vm1596, %v1642, %v1643
        %v1645 = vrot.slane %v1558, 5
        %v1646 = vrot.slane %v1645, 4
        %v1647 = vrot.slane %v1315, 5
        %v1648 = vsel %vm1596, %v1646, %v1647
        %v1649 = vrot.slane %v1559, 5
        %v1650 = vrot.slane %v1649, 4
        %v1651 = vrot.slane %v1316, 5
        %v1652 = vsel %vm1596, %v1650, %v1651
        %v1653 = vrot.slane %v1560, 5
        %v1654 = vrot.slane %v1653, 4
        %v1655 = vrot.slane %v1317, 5
        %v1656 = vsel %vm1596, %v1654, %v1655
        %v1657 = vrot.slane %v1561, 5
        %v1658 = vrot.slane %v1657, 4
        %v1659 = vrot.slane %v1318, 5
        %v1660 = vsel %vm1596, %v1658, %v1659
        %v1661 = vld [vmem:[%s1185] sm:$0xff]
        %v1662 = vld [vmem:[%s1185 + $0x8] sm:$0xff]
        %v1663 = vld [vmem:[%s1185 + $0x20] sm:$0xff]
        %v1664 = vld [vmem:[%s1185 + $0x28] sm:$0xff]
        %v1665 = vld [vmem:[%s1185 + $0x40] sm:$0xff]
        %v1666 = vld [vmem:[%s1185 + $0x48] sm:$0xff]
        %v1667 = vld [vmem:[%s1185 + $0x60] sm:$0xff]
        %v1668 = vld [vmem:[%s1185 + $0x68] sm:$0xff]
        %v1669 = vld [vmem:[%s1185 + $0x80] sm:$0xff]
        %v1670 = vld [vmem:[%s1185 + $0x88] sm:$0xff]
        %v1671 = vld [vmem:[%s1185 + $0xa0] sm:$0xff]
        %v1672 = vld [vmem:[%s1185 + $0xa8] sm:$0xff]
        %v1673 = vld [vmem:[%s1185 + $0xc0] sm:$0xff]
        %v1674 = vld [vmem:[%s1185 + $0xc8] sm:$0xff]
        %v1675 = vld [vmem:[%s1185 + $0xe0] sm:$0xff]
        %v1676 = vld [vmem:[%s1185 + $0xe8] sm:$0xff]
        %v1677 = vld [vmem:[%s1185 + $0x10] sm:$0x11]
        %v1678 = vld [vmem:[%s1185 + $0x18] sm:$0x11]
        %v1679 = vld [vmem:[%s1185 + $0x30] sm:$0x11]
        %v1680 = vld [vmem:[%s1185 + $0x38] sm:$0x11]
        %v1681 = vld [vmem:[%s1185 + $0x50] sm:$0x11]
        %v1682 = vld [vmem:[%s1185 + $0x58] sm:$0x11]
        %v1683 = vld [vmem:[%s1185 + $0x70] sm:$0x11]
        %v1684 = vld [vmem:[%s1185 + $0x78] sm:$0x11]
        %v1685 = vld [vmem:[%s1185 + $0x90] sm:$0x11]
        %v1686 = vld [vmem:[%s1185 + $0x98] sm:$0x11]
        %v1687 = vld [vmem:[%s1185 + $0xb0] sm:$0x11]
        %v1688 = vld [vmem:[%s1185 + $0xb8] sm:$0x11]
        %v1689 = vld [vmem:[%s1185 + $0xd0] sm:$0x11]
        %v1690 = vld [vmem:[%s1185 + $0xd8] sm:$0x11]
        %v1691 = vld [vmem:[%s1185 + $0xf0] sm:$0x11]
        %v1692 = vld [vmem:[%s1185 + $0xf8] sm:$0x11]
        %v1694 = vshrl.u32 %v1661, 16
        %v1696 = vrot.slane %v1694, 4
        %v1697 = vshll.u32 %v1661, 16
        %v1699 = vrot.slane %v1697, 5
        %v1700 = vor.u32 %v1696, %v1699
        %v1701 = vrot.slane %v1700, 4
        %v1703 = vshll.u32 %v1677, 16
        %v1705 = vrot.slane %v1703, 5
        %v1706 = vsel %vm1321, %v1701, %v1705
        %v1708 = vshrl.u32 %v1662, 16
        %v1710 = vrot.slane %v1708, 4
        %v1711 = vshll.u32 %v1662, 16
        %v1713 = vrot.slane %v1711, 5
        %v1714 = vor.u32 %v1710, %v1713
        %v1715 = vrot.slane %v1714, 4
        %v1717 = vshll.u32 %v1678, 16
        %v1719 = vrot.slane %v1717, 5
        %v1720 = vsel %vm1321, %v1715, %v1719
        %v1722 = vshrl.u32 %v1663, 16
        %v1724 = vrot.slane %v1722, 4
        %v1725 = vshll.u32 %v1663, 16
        %v1727 = vrot.slane %v1725, 5
        %v1728 = vor.u32 %v1724, %v1727
        %v1729 = vrot.slane %v1728, 4
        %v1731 = vshll.u32 %v1679, 16
        %v1733 = vrot.slane %v1731, 5
        %v1734 = vsel %vm1321, %v1729, %v1733
        %v1736 = vshrl.u32 %v1664, 16
        %v1738 = vrot.slane %v1736, 4
        %v1739 = vshll.u32 %v1664, 16
        %v1741 = vrot.slane %v1739, 5
        %v1742 = vor.u32 %v1738, %v1741
        %v1743 = vrot.slane %v1742, 4
        %v1745 = vshll.u32 %v1680, 16
        %v1747 = vrot.slane %v1745, 5
        %v1748 = vsel %vm1321, %v1743, %v1747
        %v1750 = vshrl.u32 %v1665, 16
        %v1752 = vrot.slane %v1750, 4
        %v1753 = vshll.u32 %v1665, 16
        %v1755 = vrot.slane %v1753, 5
        %v1756 = vor.u32 %v1752, %v1755
        %v1757 = vrot.slane %v1756, 4
        %v1759 = vshll.u32 %v1681, 16
        %v1761 = vrot.slane %v1759, 5
        %v1762 = vsel %vm1321, %v1757, %v1761
        %v1764 = vshrl.u32 %v1666, 16
        %v1766 = vrot.slane %v1764, 4
        %v1767 = vshll.u32 %v1666, 16
        %v1769 = vrot.slane %v1767, 5
        %v1770 = vor.u32 %v1766, %v1769
        %v1771 = vrot.slane %v1770, 4
        %v1773 = vshll.u32 %v1682, 16
        %v1775 = vrot.slane %v1773, 5
        %v1776 = vsel %vm1321, %v1771, %v1775
        %v1778 = vshrl.u32 %v1667, 16
        %v1780 = vrot.slane %v1778, 4
        %v1781 = vshll.u32 %v1667, 16
        %v1783 = vrot.slane %v1781, 5
        %v1784 = vor.u32 %v1780, %v1783
        %v1785 = vrot.slane %v1784, 4
        %v1787 = vshll.u32 %v1683, 16
        %v1789 = vrot.slane %v1787, 5
        %v1790 = vsel %vm1321, %v1785, %v1789
        %v1792 = vshrl.u32 %v1668, 16
        %v1794 = vrot.slane %v1792, 4
        %v1795 = vshll.u32 %v1668, 16
        %v1797 = vrot.slane %v1795, 5
        %v1798 = vor.u32 %v1794, %v1797
        %v1799 = vrot.slane %v1798, 4
        %v1801 = vshll.u32 %v1684, 16
        %v1803 = vrot.slane %v1801, 5
        %v1804 = vsel %vm1321, %v1799, %v1803
        %v1806 = vshrl.u32 %v1669, 16
        %v1808 = vrot.slane %v1806, 4
        %v1809 = vshll.u32 %v1669, 16
        %v1811 = vrot.slane %v1809, 5
        %v1812 = vor.u32 %v1808, %v1811
        %v1813 = vrot.slane %v1812, 4
        %v1815 = vshll.u32 %v1685, 16
        %v1817 = vrot.slane %v1815, 5
        %v1818 = vsel %vm1321, %v1813, %v1817
        %v1820 = vshrl.u32 %v1670, 16
        %v1822 = vrot.slane %v1820, 4
        %v1823 = vshll.u32 %v1670, 16
        %v1825 = vrot.slane %v1823, 5
        %v1826 = vor.u32 %v1822, %v1825
        %v1827 = vrot.slane %v1826, 4
        %v1829 = vshll.u32 %v1686, 16
        %v1831 = vrot.slane %v1829, 5
        %v1832 = vsel %vm1321, %v1827, %v1831
        %v1834 = vshrl.u32 %v1671, 16
        %v1836 = vrot.slane %v1834, 4
        %v1837 = vshll.u32 %v1671, 16
        %v1839 = vrot.slane %v1837, 5
        %v1840 = vor.u32 %v1836, %v1839
        %v1841 = vrot.slane %v1840, 4
        %v1843 = vshll.u32 %v1687, 16
        %v1845 = vrot.slane %v1843, 5
        %v1846 = vsel %vm1321, %v1841, %v1845
        %v1848 = vshrl.u32 %v1672, 16
        %v1850 = vrot.slane %v1848, 4
        %v1851 = vshll.u32 %v1672, 16
        %v1853 = vrot.slane %v1851, 5
        %v1854 = vor.u32 %v1850, %v1853
        %v1855 = vrot.slane %v1854, 4
        %v1857 = vshll.u32 %v1688, 16
        %v1859 = vrot.slane %v1857, 5
        %v1860 = vsel %vm1321, %v1855, %v1859
        %v1862 = vshrl.u32 %v1673, 16
        %v1864 = vrot.slane %v1862, 4
        %v1865 = vshll.u32 %v1673, 16
        %v1867 = vrot.slane %v1865, 5
        %v1868 = vor.u32 %v1864, %v1867
        %v1869 = vrot.slane %v1868, 4
        %v1871 = vshll.u32 %v1689, 16
        %v1873 = vrot.slane %v1871, 5
        %v1874 = vsel %vm1321, %v1869, %v1873
        %v1876 = vshrl.u32 %v1674, 16
        %v1878 = vrot.slane %v1876, 4
        %v1879 = vshll.u32 %v1674, 16
        %v1881 = vrot.slane %v1879, 5
        %v1882 = vor.u32 %v1878, %v1881
        %v1883 = vrot.slane %v1882, 4
        %v1885 = vshll.u32 %v1690, 16
        %v1887 = vrot.slane %v1885, 5
        %v1888 = vsel %vm1321, %v1883, %v1887
        %v1890 = vshrl.u32 %v1675, 16
        %v1892 = vrot.slane %v1890, 4
        %v1893 = vshll.u32 %v1675, 16
        %v1895 = vrot.slane %v1893, 5
        %v1896 = vor.u32 %v1892, %v1895
        %v1897 = vrot.slane %v1896, 4
        %v1899 = vshll.u32 %v1691, 16
        %v1901 = vrot.slane %v1899, 5
        %v1902 = vsel %vm1321, %v1897, %v1901
        %v1904 = vshrl.u32 %v1676, 16
        %v1906 = vrot.slane %v1904, 4
        %v1907 = vshll.u32 %v1676, 16
        %v1909 = vrot.slane %v1907, 5
        %v1910 = vor.u32 %v1906, %v1909
        %v1911 = vrot.slane %v1910, 4
        %v1913 = vshll.u32 %v1692, 16
        %v1915 = vrot.slane %v1913, 5
        %v1916 = vsel %vm1321, %v1911, %v1915
        %v1917 = vld [vmem:[%s1185] sm:$0xee]
        %v1918 = vld [vmem:[%s1185 + $0x8] sm:$0xee]
        %v1919 = vld [vmem:[%s1185 + $0x20] sm:$0xee]
        %v1920 = vld [vmem:[%s1185 + $0x28] sm:$0xee]
        %v1921 = vld [vmem:[%s1185 + $0x40] sm:$0xee]
        %v1922 = vld [vmem:[%s1185 + $0x48] sm:$0xee]
        %v1923 = vld [vmem:[%s1185 + $0x60] sm:$0xee]
        %v1924 = vld [vmem:[%s1185 + $0x68] sm:$0xee]
        %v1925 = vld [vmem:[%s1185 + $0x80] sm:$0xee]
        %v1926 = vld [vmem:[%s1185 + $0x88] sm:$0xee]
        %v1927 = vld [vmem:[%s1185 + $0xa0] sm:$0xee]
        %v1928 = vld [vmem:[%s1185 + $0xa8] sm:$0xee]
        %v1929 = vld [vmem:[%s1185 + $0xc0] sm:$0xee]
        %v1930 = vld [vmem:[%s1185 + $0xc8] sm:$0xee]
        %v1931 = vld [vmem:[%s1185 + $0xe0] sm:$0xee]
        %v1932 = vld [vmem:[%s1185 + $0xe8] sm:$0xee]
        %v1965 = vrot.slane %v1917, 5
        %v1966 = vrot.slane %v1965, 4
        %v1967 = vrot.slane %v1677, 5
        %v1968 = vsel %vm1596, %v1966, %v1967
        %v1969 = vrot.slane %v1918, 5
        %v1970 = vrot.slane %v1969, 4
        %v1971 = vrot.slane %v1678, 5
        %v1972 = vsel %vm1596, %v1970, %v1971
        %v1973 = vrot.slane %v1919, 5
        %v1974 = vrot.slane %v1973, 4
        %v1975 = vrot.slane %v1679, 5
        %v1976 = vsel %vm1596, %v1974, %v1975
        %v1977 = vrot.slane %v1920, 5
        %v1978 = vrot.slane %v1977, 4
        %v1979 = vrot.slane %v1680, 5
        %v1980 = vsel %vm1596, %v1978, %v1979
        %v1981 = vrot.slane %v1921, 5
        %v1982 = vrot.slane %v1981, 4
        %v1983 = vrot.slane %v1681, 5
        %v1984 = vsel %vm1596, %v1982, %v1983
        %v1985 = vrot.slane %v1922, 5
        %v1986 = vrot.slane %v1985, 4
        %v1987 = vrot.slane %v1682, 5
        %v1988 = vsel %vm1596, %v1986, %v1987
        %v1989 = vrot.slane %v1923, 5
        %v1990 = vrot.slane %v1989, 4
        %v1991 = vrot.slane %v1683, 5
        %v1992 = vsel %vm1596, %v1990, %v1991
        %v1993 = vrot.slane %v1924, 5
        %v1994 = vrot.slane %v1993, 4
        %v1995 = vrot.slane %v1684, 5
        %v1996 = vsel %vm1596, %v1994, %v1995
        %v1997 = vrot.slane %v1925, 5
        %v1998 = vrot.slane %v1997, 4
        %v1999 = vrot.slane %v1685, 5
        %v2000 = vsel %vm1596, %v1998, %v1999
        %v2001 = vrot.slane %v1926, 5
        %v2002 = vrot.slane %v2001, 4
        %v2003 = vrot.slane %v1686, 5
        %v2004 = vsel %vm1596, %v2002, %v2003
        %v2005 = vrot.slane %v1927, 5
        %v2006 = vrot.slane %v2005, 4
        %v2007 = vrot.slane %v1687, 5
        %v2008 = vsel %vm1596, %v2006, %v2007
        %v2009 = vrot.slane %v1928, 5
        %v2010 = vrot.slane %v2009, 4
        %v2011 = vrot.slane %v1688, 5
        %v2012 = vsel %vm1596, %v2010, %v2011
        %v2013 = vrot.slane %v1929, 5
        %v2014 = vrot.slane %v2013, 4
        %v2015 = vrot.slane %v1689, 5
        %v2016 = vsel %vm1596, %v2014, %v2015
        %v2017 = vrot.slane %v1930, 5
        %v2018 = vrot.slane %v2017, 4
        %v2019 = vrot.slane %v1690, 5
        %v2020 = vsel %vm1596, %v2018, %v2019
        %v2021 = vrot.slane %v1931, 5
        %v2022 = vrot.slane %v2021, 4
        %v2023 = vrot.slane %v1691, 5
        %v2024 = vsel %vm1596, %v2022, %v2023
        %v2025 = vrot.slane %v1932, 5
        %v2026 = vrot.slane %v2025, 4
        %v2027 = vrot.slane %v1692, 5
        %v2028 = vsel %vm1596, %v2026, %v2027
        %s2029 = scalar_lea.vmem [#allocation2], 64
        %v2030 = vld [vmem:[%s2029] sm:$0xff]
        %v2031 = vld [vmem:[%s2029 + $0x8] sm:$0xff]
        %v2032 = vld [vmem:[%s2029 + $0x20] sm:$0xff]
        %v2033 = vld [vmem:[%s2029 + $0x28] sm:$0xff]
        %v2034 = vld [vmem:[%s2029 + $0x40] sm:$0xff]
        %v2035 = vld [vmem:[%s2029 + $0x48] sm:$0xff]
        %v2036 = vld [vmem:[%s2029 + $0x60] sm:$0xff]
        %v2037 = vld [vmem:[%s2029 + $0x68] sm:$0xff]
        %v2038 = vld [vmem:[%s2029 + $0x80] sm:$0xff]
        %v2039 = vld [vmem:[%s2029 + $0x88] sm:$0xff]
        %v2040 = vld [vmem:[%s2029 + $0xa0] sm:$0xff]
        %v2041 = vld [vmem:[%s2029 + $0xa8] sm:$0xff]
        %v2042 = vld [vmem:[%s2029 + $0xc0] sm:$0xff]
        %v2043 = vld [vmem:[%s2029 + $0xc8] sm:$0xff]
        %v2044 = vld [vmem:[%s2029 + $0xe0] sm:$0xff]
        %v2045 = vld [vmem:[%s2029 + $0xe8] sm:$0xff]
        %v2046 = vld [vmem:[%s2029 + $0x10] sm:$0x11]
        %v2047 = vld [vmem:[%s2029 + $0x18] sm:$0x11]
        %v2048 = vld [vmem:[%s2029 + $0x30] sm:$0x11]
        %v2049 = vld [vmem:[%s2029 + $0x38] sm:$0x11]
        %v2050 = vld [vmem:[%s2029 + $0x50] sm:$0x11]
        %v2051 = vld [vmem:[%s2029 + $0x58] sm:$0x11]
        %v2052 = vld [vmem:[%s2029 + $0x70] sm:$0x11]
        %v2053 = vld [vmem:[%s2029 + $0x78] sm:$0x11]
        %v2054 = vld [vmem:[%s2029 + $0x90] sm:$0x11]
        %v2055 = vld [vmem:[%s2029 + $0x98] sm:$0x11]
        %v2056 = vld [vmem:[%s2029 + $0xb0] sm:$0x11]
        %v2057 = vld [vmem:[%s2029 + $0xb8] sm:$0x11]
        %v2058 = vld [vmem:[%s2029 + $0xd0] sm:$0x11]
        %v2059 = vld [vmem:[%s2029 + $0xd8] sm:$0x11]
        %v2060 = vld [vmem:[%s2029 + $0xf0] sm:$0x11]
        %v2061 = vld [vmem:[%s2029 + $0xf8] sm:$0x11]
        %v2063 = vshrl.u32 %v2030, 16
        %v2065 = vrot.slane %v2063, 4
        %v2066 = vshll.u32 %v2030, 16
        %v2068 = vrot.slane %v2066, 5
        %v2069 = vor.u32 %v2065, %v2068
        %v2070 = vrot.slane %v2069, 4
        %v2072 = vshll.u32 %v2046, 16
        %v2074 = vrot.slane %v2072, 5
        %v2075 = vsel %vm1321, %v2070, %v2074
        %v2077 = vshrl.u32 %v2031, 16
        %v2079 = vrot.slane %v2077, 4
        %v2080 = vshll.u32 %v2031, 16
        %v2082 = vrot.slane %v2080, 5
        %v2083 = vor.u32 %v2079, %v2082
        %v2084 = vrot.slane %v2083, 4
        %v2086 = vshll.u32 %v2047, 16
        %v2088 = vrot.slane %v2086, 5
        %v2089 = vsel %vm1321, %v2084, %v2088
        %v2091 = vshrl.u32 %v2032, 16
        %v2093 = vrot.slane %v2091, 4
        %v2094 = vshll.u32 %v2032, 16
        %v2096 = vrot.slane %v2094, 5
        %v2097 = vor.u32 %v2093, %v2096
        %v2098 = vrot.slane %v2097, 4
        %v2100 = vshll.u32 %v2048, 16
        %v2102 = vrot.slane %v2100, 5
        %v2103 = vsel %vm1321, %v2098, %v2102
        %v2105 = vshrl.u32 %v2033, 16
        %v2107 = vrot.slane %v2105, 4
        %v2108 = vshll.u32 %v2033, 16
        %v2110 = vrot.slane %v2108, 5
        %v2111 = vor.u32 %v2107, %v2110
        %v2112 = vrot.slane %v2111, 4
        %v2114 = vshll.u32 %v2049, 16
        %v2116 = vrot.slane %v2114, 5
        %v2117 = vsel %vm1321, %v2112, %v2116
        %v2119 = vshrl.u32 %v2034, 16
        %v2121 = vrot.slane %v2119, 4
        %v2122 = vshll.u32 %v2034, 16
        %v2124 = vrot.slane %v2122, 5
        %v2125 = vor.u32 %v2121, %v2124
        %v2126 = vrot.slane %v2125, 4
        %v2128 = vshll.u32 %v2050, 16
        %v2130 = vrot.slane %v2128, 5
        %v2131 = vsel %vm1321, %v2126, %v2130
        %v2133 = vshrl.u32 %v2035, 16
        %v2135 = vrot.slane %v2133, 4
        %v2136 = vshll.u32 %v2035, 16
        %v2138 = vrot.slane %v2136, 5
        %v2139 = vor.u32 %v2135, %v2138
        %v2140 = vrot.slane %v2139, 4
        %v2142 = vshll.u32 %v2051, 16
        %v2144 = vrot.slane %v2142, 5
        %v2145 = vsel %vm1321, %v2140, %v2144
        %v2147 = vshrl.u32 %v2036, 16
        %v2149 = vrot.slane %v2147, 4
        %v2150 = vshll.u32 %v2036, 16
        %v2152 = vrot.slane %v2150, 5
        %v2153 = vor.u32 %v2149, %v2152
        %v2154 = vrot.slane %v2153, 4
        %v2156 = vshll.u32 %v2052, 16
        %v2158 = vrot.slane %v2156, 5
        %v2159 = vsel %vm1321, %v2154, %v2158
        %v2161 = vshrl.u32 %v2037, 16
        %v2163 = vrot.slane %v2161, 4
        %v2164 = vshll.u32 %v2037, 16
        %v2166 = vrot.slane %v2164, 5
        %v2167 = vor.u32 %v2163, %v2166
        %v2168 = vrot.slane %v2167, 4
        %v2170 = vshll.u32 %v2053, 16
        %v2172 = vrot.slane %v2170, 5
        %v2173 = vsel %vm1321, %v2168, %v2172
        %v2175 = vshrl.u32 %v2038, 16
        %v2177 = vrot.slane %v2175, 4
        %v2178 = vshll.u32 %v2038, 16
        %v2180 = vrot.slane %v2178, 5
        %v2181 = vor.u32 %v2177, %v2180
        %v2182 = vrot.slane %v2181, 4
        %v2184 = vshll.u32 %v2054, 16
        %v2186 = vrot.slane %v2184, 5
        %v2187 = vsel %vm1321, %v2182, %v2186
        %v2189 = vshrl.u32 %v2039, 16
        %v2191 = vrot.slane %v2189, 4
        %v2192 = vshll.u32 %v2039, 16
        %v2194 = vrot.slane %v2192, 5
        %v2195 = vor.u32 %v2191, %v2194
        %v2196 = vrot.slane %v2195, 4
        %v2198 = vshll.u32 %v2055, 16
        %v2200 = vrot.slane %v2198, 5
        %v2201 = vsel %vm1321, %v2196, %v2200
        %v2203 = vshrl.u32 %v2040, 16
        %v2205 = vrot.slane %v2203, 4
        %v2206 = vshll.u32 %v2040, 16
        %v2208 = vrot.slane %v2206, 5
        %v2209 = vor.u32 %v2205, %v2208
        %v2210 = vrot.slane %v2209, 4
        %v2212 = vshll.u32 %v2056, 16
        %v2214 = vrot.slane %v2212, 5
        %v2215 = vsel %vm1321, %v2210, %v2214
        %v2217 = vshrl.u32 %v2041, 16
        %v2219 = vrot.slane %v2217, 4
        %v2220 = vshll.u32 %v2041, 16
        %v2222 = vrot.slane %v2220, 5
        %v2223 = vor.u32 %v2219, %v2222
        %v2224 = vrot.slane %v2223, 4
        %v2226 = vshll.u32 %v2057, 16
        %v2228 = vrot.slane %v2226, 5
        %v2229 = vsel %vm1321, %v2224, %v2228
        %v2231 = vshrl.u32 %v2042, 16
        %v2233 = vrot.slane %v2231, 4
        %v2234 = vshll.u32 %v2042, 16
        %v2236 = vrot.slane %v2234, 5
        %v2237 = vor.u32 %v2233, %v2236
        %v2238 = vrot.slane %v2237, 4
        %v2240 = vshll.u32 %v2058, 16
        %v2242 = vrot.slane %v2240, 5
        %v2243 = vsel %vm1321, %v2238, %v2242
        %v2245 = vshrl.u32 %v2043, 16
        %v2247 = vrot.slane %v2245, 4
        %v2248 = vshll.u32 %v2043, 16
        %v2250 = vrot.slane %v2248, 5
        %v2251 = vor.u32 %v2247, %v2250
        %v2252 = vrot.slane %v2251, 4
        %v2254 = vshll.u32 %v2059, 16
        %v2256 = vrot.slane %v2254, 5
        %v2257 = vsel %vm1321, %v2252, %v2256
        %v2259 = vshrl.u32 %v2044, 16
        %v2261 = vrot.slane %v2259, 4
        %v2262 = vshll.u32 %v2044, 16
        %v2264 = vrot.slane %v2262, 5
        %v2265 = vor.u32 %v2261, %v2264
        %v2266 = vrot.slane %v2265, 4
        %v2268 = vshll.u32 %v2060, 16
        %v2270 = vrot.slane %v2268, 5
        %v2271 = vsel %vm1321, %v2266, %v2270
        %v2273 = vshrl.u32 %v2045, 16
        %v2275 = vrot.slane %v2273, 4
        %v2276 = vshll.u32 %v2045, 16
        %v2278 = vrot.slane %v2276, 5
        %v2279 = vor.u32 %v2275, %v2278
        %v2280 = vrot.slane %v2279, 4
        %v2282 = vshll.u32 %v2061, 16
        %v2284 = vrot.slane %v2282, 5
        %v2285 = vsel %vm1321, %v2280, %v2284
        %v2286 = vld [vmem:[%s2029] sm:$0xee]
        %v2287 = vld [vmem:[%s2029 + $0x8] sm:$0xee]
        %v2288 = vld [vmem:[%s2029 + $0x20] sm:$0xee]
        %v2289 = vld [vmem:[%s2029 + $0x28] sm:$0xee]
        %v2290 = vld [vmem:[%s2029 + $0x40] sm:$0xee]
        %v2291 = vld [vmem:[%s2029 + $0x48] sm:$0xee]
        %v2292 = vld [vmem:[%s2029 + $0x60] sm:$0xee]
        %v2293 = vld [vmem:[%s2029 + $0x68] sm:$0xee]
        %v2294 = vld [vmem:[%s2029 + $0x80] sm:$0xee]
        %v2295 = vld [vmem:[%s2029 + $0x88] sm:$0xee]
        %v2296 = vld [vmem:[%s2029 + $0xa0] sm:$0xee]
        %v2297 = vld [vmem:[%s2029 + $0xa8] sm:$0xee]
        %v2298 = vld [vmem:[%s2029 + $0xc0] sm:$0xee]
        %v2299 = vld [vmem:[%s2029 + $0xc8] sm:$0xee]
        %v2300 = vld [vmem:[%s2029 + $0xe0] sm:$0xee]
        %v2301 = vld [vmem:[%s2029 + $0xe8] sm:$0xee]
        %v2334 = vrot.slane %v2286, 5
        %v2335 = vrot.slane %v2334, 4
        %v2336 = vrot.slane %v2046, 5
        %v2337 = vsel %vm1596, %v2335, %v2336
        %v2338 = vrot.slane %v2287, 5
        %v2339 = vrot.slane %v2338, 4
        %v2340 = vrot.slane %v2047, 5
        %v2341 = vsel %vm1596, %v2339, %v2340
        %v2342 = vrot.slane %v2288, 5
        %v2343 = vrot.slane %v2342, 4
        %v2344 = vrot.slane %v2048, 5
        %v2345 = vsel %vm1596, %v2343, %v2344
        %v2346 = vrot.slane %v2289, 5
        %v2347 = vrot.slane %v2346, 4
        %v2348 = vrot.slane %v2049, 5
        %v2349 = vsel %vm1596, %v2347, %v2348
        %v2350 = vrot.slane %v2290, 5
        %v2351 = vrot.slane %v2350, 4
        %v2352 = vrot.slane %v2050, 5
        %v2353 = vsel %vm1596, %v2351, %v2352
        %v2354 = vrot.slane %v2291, 5
        %v2355 = vrot.slane %v2354, 4
        %v2356 = vrot.slane %v2051, 5
        %v2357 = vsel %vm1596, %v2355, %v2356
        %v2358 = vrot.slane %v2292, 5
        %v2359 = vrot.slane %v2358, 4
        %v2360 = vrot.slane %v2052, 5
        %v2361 = vsel %vm1596, %v2359, %v2360
        %v2362 = vrot.slane %v2293, 5
        %v2363 = vrot.slane %v2362, 4
        %v2364 = vrot.slane %v2053, 5
        %v2365 = vsel %vm1596, %v2363, %v2364
        %v2366 = vrot.slane %v2294, 5
        %v2367 = vrot.slane %v2366, 4
        %v2368 = vrot.slane %v2054, 5
        %v2369 = vsel %vm1596, %v2367, %v2368
        %v2370 = vrot.slane %v2295, 5
        %v2371 = vrot.slane %v2370, 4
        %v2372 = vrot.slane %v2055, 5
        %v2373 = vsel %vm1596, %v2371, %v2372
        %v2374 = vrot.slane %v2296, 5
        %v2375 = vrot.slane %v2374, 4
        %v2376 = vrot.slane %v2056, 5
        %v2377 = vsel %vm1596, %v2375, %v2376
        %v2378 = vrot.slane %v2297, 5
        %v2379 = vrot.slane %v2378, 4
        %v2380 = vrot.slane %v2057, 5
        %v2381 = vsel %vm1596, %v2379, %v2380
        %v2382 = vrot.slane %v2298, 5
        %v2383 = vrot.slane %v2382, 4
        %v2384 = vrot.slane %v2058, 5
        %v2385 = vsel %vm1596, %v2383, %v2384
        %v2386 = vrot.slane %v2299, 5
        %v2387 = vrot.slane %v2386, 4
        %v2388 = vrot.slane %v2059, 5
        %v2389 = vsel %vm1596, %v2387, %v2388
        %v2390 = vrot.slane %v2300, 5
        %v2391 = vrot.slane %v2390, 4
        %v2392 = vrot.slane %v2060, 5
        %v2393 = vsel %vm1596, %v2391, %v2392
        %v2394 = vrot.slane %v2301, 5
        %v2395 = vrot.slane %v2394, 4
        %v2396 = vrot.slane %v2061, 5
        %v2397 = vsel %vm1596, %v2395, %v2396
        %v2414 = vunpack.c.l.b16 %v1287
        %v2415 = vunpack.c.h.b16 %v1287
        %v2416 = vunpack.c.l.b16 %v1288
        %v2417 = vunpack.c.h.b16 %v1288
        %v2418 = vunpack.c.l.b16 %v1289
        %v2419 = vunpack.c.h.b16 %v1289
        %v2420 = vunpack.c.l.b16 %v1290
        %v2421 = vunpack.c.h.b16 %v1290
        %v2422 = vunpack.c.l.b16 %v1291
        %v2423 = vunpack.c.h.b16 %v1291
        %v2424 = vunpack.c.l.b16 %v1292
        %v2425 = vunpack.c.h.b16 %v1292
        %v2426 = vunpack.c.l.b16 %v1293
        %v2427 = vunpack.c.h.b16 %v1293
        %v2428 = vunpack.c.l.b16 %v1294
        %v2429 = vunpack.c.h.b16 %v1294
        %v2430 = vunpack.c.l.b16 %v1295
        %v2431 = vunpack.c.h.b16 %v1295
        %v2432 = vunpack.c.l.b16 %v1296
        %v2433 = vunpack.c.h.b16 %v1296
        %v2434 = vunpack.c.l.b16 %v1297
        %v2435 = vunpack.c.h.b16 %v1297
        %v2436 = vunpack.c.l.b16 %v1298
        %v2437 = vunpack.c.h.b16 %v1298
        %v2438 = vunpack.c.l.b16 %v1299
        %v2439 = vunpack.c.h.b16 %v1299
        %v2440 = vunpack.c.l.b16 %v1300
        %v2441 = vunpack.c.h.b16 %v1300
        %v2442 = vunpack.c.l.b16 %v1301
        %v2443 = vunpack.c.h.b16 %v1301
        %v2444 = vunpack.c.l.b16 %v1302
        %v2445 = vunpack.c.h.b16 %v1302
        %v2446 = vpack.c.b16 %v2418, %v2414
        %v2447 = vpack.c.b16 %v2419, %v2415
        %v2448 = vpack.c.b16 %v2420, %v2416
        %v2449 = vpack.c.b16 %v2421, %v2417
        %v2450 = vpack.c.b16 %v2426, %v2422
        %v2451 = vpack.c.b16 %v2427, %v2423
        %v2452 = vpack.c.b16 %v2428, %v2424
        %v2453 = vpack.c.b16 %v2429, %v2425
        %v2454 = vpack.c.b16 %v2434, %v2430
        %v2455 = vpack.c.b16 %v2435, %v2431
        %v2456 = vpack.c.b16 %v2436, %v2432
        %v2457 = vpack.c.b16 %v2437, %v2433
        %v2458 = vpack.c.b16 %v2442, %v2438
        %v2459 = vpack.c.b16 %v2443, %v2439
        %v2460 = vpack.c.b16 %v2444, %v2440
        %v2461 = vpack.c.b16 %v2445, %v2441
        %v2478 = vunpack.c.l.b16 %v1335
        %v2479 = vunpack.c.h.b16 %v1335
        %v2480 = vunpack.c.l.b16 %v1349
        %v2481 = vunpack.c.h.b16 %v1349
        %v2482 = vunpack.c.l.b16 %v1363
        %v2483 = vunpack.c.h.b16 %v1363
        %v2484 = vunpack.c.l.b16 %v1377
        %v2485 = vunpack.c.h.b16 %v1377
        %v2486 = vunpack.c.l.b16 %v1391
        %v2487 = vunpack.c.h.b16 %v1391
        %v2488 = vunpack.c.l.b16 %v1405
        %v2489 = vunpack.c.h.b16 %v1405
        %v2490 = vunpack.c.l.b16 %v1419
        %v2491 = vunpack.c.h.b16 %v1419
        %v2492 = vunpack.c.l.b16 %v1433
        %v2493 = vunpack.c.h.b16 %v1433
        %v2494 = vunpack.c.l.b16 %v1447
        %v2495 = vunpack.c.h.b16 %v1447
        %v2496 = vunpack.c.l.b16 %v1461
        %v2497 = vunpack.c.h.b16 %v1461
        %v2498 = vunpack.c.l.b16 %v1475
        %v2499 = vunpack.c.h.b16 %v1475
        %v2500 = vunpack.c.l.b16 %v1489
        %v2501 = vunpack.c.h.b16 %v1489
        %v2502 = vunpack.c.l.b16 %v1503
        %v2503 = vunpack.c.h.b16 %v1503
        %v2504 = vunpack.c.l.b16 %v1517
        %v2505 = vunpack.c.h.b16 %v1517
        %v2506 = vunpack.c.l.b16 %v1531
        %v2507 = vunpack.c.h.b16 %v1531
        %v2508 = vunpack.c.l.b16 %v1545
        %v2509 = vunpack.c.h.b16 %v1545
        %v2510 = vpack.c.b16 %v2482, %v2478
        %v2511 = vpack.c.b16 %v2483, %v2479
        %v2512 = vpack.c.b16 %v2484, %v2480
        %v2513 = vpack.c.b16 %v2485, %v2481
        %v2514 = vpack.c.b16 %v2490, %v2486
        %v2515 = vpack.c.b16 %v2491, %v2487
        %v2516 = vpack.c.b16 %v2492, %v2488
        %v2517 = vpack.c.b16 %v2493, %v2489
        %v2518 = vpack.c.b16 %v2498, %v2494
        %v2519 = vpack.c.b16 %v2499, %v2495
        %v2520 = vpack.c.b16 %v2500, %v2496
        %v2521 = vpack.c.b16 %v2501, %v2497
        %v2522 = vpack.c.b16 %v2506, %v2502
        %v2523 = vpack.c.b16 %v2507, %v2503
        %v2524 = vpack.c.b16 %v2508, %v2504
        %v2525 = vpack.c.b16 %v2509, %v2505
        %v2542 = vunpack.c.l.b16 %v1600
        %v2543 = vunpack.c.h.b16 %v1600
        %v2544 = vunpack.c.l.b16 %v1604
        %v2545 = vunpack.c.h.b16 %v1604
        %v2546 = vunpack.c.l.b16 %v1608
        %v2547 = vunpack.c.h.b16 %v1608
        %v2548 = vunpack.c.l.b16 %v1612
        %v2549 = vunpack.c.h.b16 %v1612
        %v2550 = vunpack.c.l.b16 %v1616
        %v2551 = vunpack.c.h.b16 %v1616
        %v2552 = vunpack.c.l.b16 %v1620
        %v2553 = vunpack.c.h.b16 %v1620
        %v2554 = vunpack.c.l.b16 %v1624
        %v2555 = vunpack.c.h.b16 %v1624
        %v2556 = vunpack.c.l.b16 %v1628
        %v2557 = vunpack.c.h.b16 %v1628
        %v2558 = vunpack.c.l.b16 %v1632
        %v2559 = vunpack.c.h.b16 %v1632
        %v2560 = vunpack.c.l.b16 %v1636
        %v2561 = vunpack.c.h.b16 %v1636
        %v2562 = vunpack.c.l.b16 %v1640
        %v2563 = vunpack.c.h.b16 %v1640
        %v2564 = vunpack.c.l.b16 %v1644
        %v2565 = vunpack.c.h.b16 %v1644
        %v2566 = vunpack.c.l.b16 %v1648
        %v2567 = vunpack.c.h.b16 %v1648
        %v2568 = vunpack.c.l.b16 %v1652
        %v2569 = vunpack.c.h.b16 %v1652
        %v2570 = vunpack.c.l.b16 %v1656
        %v2571 = vunpack.c.h.b16 %v1656
        %v2572 = vunpack.c.l.b16 %v1660
        %v2573 = vunpack.c.h.b16 %v1660
        %v2574 = vpack.c.b16 %v2546, %v2542
        %v2575 = vpack.c.b16 %v2547, %v2543
        %v2576 = vpack.c.b16 %v2548, %v2544
        %v2577 = vpack.c.b16 %v2549, %v2545
        %v2578 = vpack.c.b16 %v2554, %v2550
        %v2579 = vpack.c.b16 %v2555, %v2551
        %v2580 = vpack.c.b16 %v2556, %v2552
        %v2581 = vpack.c.b16 %v2557, %v2553
        %v2582 = vpack.c.b16 %v2562, %v2558
        %v2583 = vpack.c.b16 %v2563, %v2559
        %v2584 = vpack.c.b16 %v2564, %v2560
        %v2585 = vpack.c.b16 %v2565, %v2561
        %v2586 = vpack.c.b16 %v2570, %v2566
        %v2587 = vpack.c.b16 %v2571, %v2567
        %v2588 = vpack.c.b16 %v2572, %v2568
        %v2589 = vpack.c.b16 %v2573, %v2569
        %v2622 = vunpack.c.l.b16 %v1661
        %v2623 = vunpack.c.h.b16 %v1661
        %v2624 = vunpack.c.l.b16 %v1662
        %v2625 = vunpack.c.h.b16 %v1662
        %v2626 = vunpack.c.l.b16 %v1663
        %v2627 = vunpack.c.h.b16 %v1663
        %v2628 = vunpack.c.l.b16 %v1664
        %v2629 = vunpack.c.h.b16 %v1664
        %v2630 = vunpack.c.l.b16 %v1665
        %v2631 = vunpack.c.h.b16 %v1665
        %v2632 = vunpack.c.l.b16 %v1666
        %v2633 = vunpack.c.h.b16 %v1666
        %v2634 = vunpack.c.l.b16 %v1667
        %v2635 = vunpack.c.h.b16 %v1667
        %v2636 = vunpack.c.l.b16 %v1668
        %v2637 = vunpack.c.h.b16 %v1668
        %v2638 = vunpack.c.l.b16 %v1669
        %v2639 = vunpack.c.h.b16 %v1669
        %v2640 = vunpack.c.l.b16 %v1670
        %v2641 = vunpack.c.h.b16 %v1670
        %v2642 = vunpack.c.l.b16 %v1671
        %v2643 = vunpack.c.h.b16 %v1671
        %v2644 = vunpack.c.l.b16 %v1672
        %v2645 = vunpack.c.h.b16 %v1672
        %v2646 = vunpack.c.l.b16 %v1673
        %v2647 = vunpack.c.h.b16 %v1673
        %v2648 = vunpack.c.l.b16 %v1674
        %v2649 = vunpack.c.h.b16 %v1674
        %v2650 = vunpack.c.l.b16 %v1675
        %v2651 = vunpack.c.h.b16 %v1675
        %v2652 = vunpack.c.l.b16 %v1676
        %v2653 = vunpack.c.h.b16 %v1676
        %v2654 = vpack.c.b16 %v2626, %v2622
        %v2655 = vpack.c.b16 %v2627, %v2623
        %v2656 = vpack.c.b16 %v2628, %v2624
        %v2657 = vpack.c.b16 %v2629, %v2625
        %v2658 = vpack.c.b16 %v2634, %v2630
        %v2659 = vpack.c.b16 %v2635, %v2631
        %v2660 = vpack.c.b16 %v2636, %v2632
        %v2661 = vpack.c.b16 %v2637, %v2633
        %v2662 = vpack.c.b16 %v2642, %v2638
        %v2663 = vpack.c.b16 %v2643, %v2639
        %v2664 = vpack.c.b16 %v2644, %v2640
        %v2665 = vpack.c.b16 %v2645, %v2641
        %v2666 = vpack.c.b16 %v2650, %v2646
        %v2667 = vpack.c.b16 %v2651, %v2647
        %v2668 = vpack.c.b16 %v2652, %v2648
        %v2669 = vpack.c.b16 %v2653, %v2649
        %v2686 = vunpack.c.l.b16 %v1706
        %v2687 = vunpack.c.h.b16 %v1706
        %v2688 = vunpack.c.l.b16 %v1720
        %v2689 = vunpack.c.h.b16 %v1720
        %v2690 = vunpack.c.l.b16 %v1734
        %v2691 = vunpack.c.h.b16 %v1734
        %v2692 = vunpack.c.l.b16 %v1748
        %v2693 = vunpack.c.h.b16 %v1748
        %v2694 = vunpack.c.l.b16 %v1762
        %v2695 = vunpack.c.h.b16 %v1762
        %v2696 = vunpack.c.l.b16 %v1776
        %v2697 = vunpack.c.h.b16 %v1776
        %v2698 = vunpack.c.l.b16 %v1790
        %v2699 = vunpack.c.h.b16 %v1790
        %v2700 = vunpack.c.l.b16 %v1804
        %v2701 = vunpack.c.h.b16 %v1804
        %v2702 = vunpack.c.l.b16 %v1818
        %v2703 = vunpack.c.h.b16 %v1818
        %v2704 = vunpack.c.l.b16 %v1832
        %v2705 = vunpack.c.h.b16 %v1832
        %v2706 = vunpack.c.l.b16 %v1846
        %v2707 = vunpack.c.h.b16 %v1846
        %v2708 = vunpack.c.l.b16 %v1860
        %v2709 = vunpack.c.h.b16 %v1860
        %v2710 = vunpack.c.l.b16 %v1874
        %v2711 = vunpack.c.h.b16 %v1874
        %v2712 = vunpack.c.l.b16 %v1888
        %v2713 = vunpack.c.h.b16 %v1888
        %v2714 = vunpack.c.l.b16 %v1902
        %v2715 = vunpack.c.h.b16 %v1902
        %v2716 = vunpack.c.l.b16 %v1916
        %v2717 = vunpack.c.h.b16 %v1916
        %v2718 = vpack.c.b16 %v2690, %v2686
        %v2719 = vpack.c.b16 %v2691, %v2687
        %v2720 = vpack.c.b16 %v2692, %v2688
        %v2721 = vpack.c.b16 %v2693, %v2689
        %v2722 = vpack.c.b16 %v2698, %v2694
        %v2723 = vpack.c.b16 %v2699, %v2695
        %v2724 = vpack.c.b16 %v2700, %v2696
        %v2725 = vpack.c.b16 %v2701, %v2697
        %v2726 = vpack.c.b16 %v2706, %v2702
        %v2727 = vpack.c.b16 %v2707, %v2703
        %v2728 = vpack.c.b16 %v2708, %v2704
        %v2729 = vpack.c.b16 %v2709, %v2705
        %v2730 = vpack.c.b16 %v2714, %v2710
        %v2731 = vpack.c.b16 %v2715, %v2711
        %v2732 = vpack.c.b16 %v2716, %v2712
        %v2733 = vpack.c.b16 %v2717, %v2713
        %v2750 = vunpack.c.l.b16 %v1968
        %v2751 = vunpack.c.h.b16 %v1968
        %v2752 = vunpack.c.l.b16 %v1972
        %v2753 = vunpack.c.h.b16 %v1972
        %v2754 = vunpack.c.l.b16 %v1976
        %v2755 = vunpack.c.h.b16 %v1976
        %v2756 = vunpack.c.l.b16 %v1980
        %v2757 = vunpack.c.h.b16 %v1980
        %v2758 = vunpack.c.l.b16 %v1984
        %v2759 = vunpack.c.h.b16 %v1984
        %v2760 = vunpack.c.l.b16 %v1988
        %v2761 = vunpack.c.h.b16 %v1988
        %v2762 = vunpack.c.l.b16 %v1992
        %v2763 = vunpack.c.h.b16 %v1992
        %v2764 = vunpack.c.l.b16 %v1996
        %v2765 = vunpack.c.h.b16 %v1996
        %v2766 = vunpack.c.l.b16 %v2000
        %v2767 = vunpack.c.h.b16 %v2000
        %v2768 = vunpack.c.l.b16 %v2004
        %v2769 = vunpack.c.h.b16 %v2004
        %v2770 = vunpack.c.l.b16 %v2008
        %v2771 = vunpack.c.h.b16 %v2008
        %v2772 = vunpack.c.l.b16 %v2012
        %v2773 = vunpack.c.h.b16 %v2012
        %v2774 = vunpack.c.l.b16 %v2016
        %v2775 = vunpack.c.h.b16 %v2016
        %v2776 = vunpack.c.l.b16 %v2020
        %v2777 = vunpack.c.h.b16 %v2020
        %v2778 = vunpack.c.l.b16 %v2024
        %v2779 = vunpack.c.h.b16 %v2024
        %v2780 = vunpack.c.l.b16 %v2028
        %v2781 = vunpack.c.h.b16 %v2028
        %v2782 = vpack.c.b16 %v2754, %v2750
        %v2783 = vpack.c.b16 %v2755, %v2751
        %v2784 = vpack.c.b16 %v2756, %v2752
        %v2785 = vpack.c.b16 %v2757, %v2753
        %v2786 = vpack.c.b16 %v2762, %v2758
        %v2787 = vpack.c.b16 %v2763, %v2759
        %v2788 = vpack.c.b16 %v2764, %v2760
        %v2789 = vpack.c.b16 %v2765, %v2761
        %v2790 = vpack.c.b16 %v2770, %v2766
        %v2791 = vpack.c.b16 %v2771, %v2767
        %v2792 = vpack.c.b16 %v2772, %v2768
        %v2793 = vpack.c.b16 %v2773, %v2769
        %v2794 = vpack.c.b16 %v2778, %v2774
        %v2795 = vpack.c.b16 %v2779, %v2775
        %v2796 = vpack.c.b16 %v2780, %v2776
        %v2797 = vpack.c.b16 %v2781, %v2777
        %v2830 = vunpack.c.l.b16 %v2030
        %v2831 = vunpack.c.h.b16 %v2030
        %v2832 = vunpack.c.l.b16 %v2031
        %v2833 = vunpack.c.h.b16 %v2031
        %v2834 = vunpack.c.l.b16 %v2032
        %v2835 = vunpack.c.h.b16 %v2032
        %v2836 = vunpack.c.l.b16 %v2033
        %v2837 = vunpack.c.h.b16 %v2033
        %v2838 = vunpack.c.l.b16 %v2034
        %v2839 = vunpack.c.h.b16 %v2034
        %v2840 = vunpack.c.l.b16 %v2035
        %v2841 = vunpack.c.h.b16 %v2035
        %v2842 = vunpack.c.l.b16 %v2036
        %v2843 = vunpack.c.h.b16 %v2036
        %v2844 = vunpack.c.l.b16 %v2037
        %v2845 = vunpack.c.h.b16 %v2037
        %v2846 = vunpack.c.l.b16 %v2038
        %v2847 = vunpack.c.h.b16 %v2038
        %v2848 = vunpack.c.l.b16 %v2039
        %v2849 = vunpack.c.h.b16 %v2039
        %v2850 = vunpack.c.l.b16 %v2040
        %v2851 = vunpack.c.h.b16 %v2040
        %v2852 = vunpack.c.l.b16 %v2041
        %v2853 = vunpack.c.h.b16 %v2041
        %v2854 = vunpack.c.l.b16 %v2042
        %v2855 = vunpack.c.h.b16 %v2042
        %v2856 = vunpack.c.l.b16 %v2043
        %v2857 = vunpack.c.h.b16 %v2043
        %v2858 = vunpack.c.l.b16 %v2044
        %v2859 = vunpack.c.h.b16 %v2044
        %v2860 = vunpack.c.l.b16 %v2045
        %v2861 = vunpack.c.h.b16 %v2045
        %v2862 = vpack.c.b16 %v2834, %v2830
        %v2863 = vpack.c.b16 %v2835, %v2831
        %v2864 = vpack.c.b16 %v2836, %v2832
        %v2865 = vpack.c.b16 %v2837, %v2833
        %v2866 = vpack.c.b16 %v2842, %v2838
        %v2867 = vpack.c.b16 %v2843, %v2839
        %v2868 = vpack.c.b16 %v2844, %v2840
        %v2869 = vpack.c.b16 %v2845, %v2841
        %v2870 = vpack.c.b16 %v2850, %v2846
        %v2871 = vpack.c.b16 %v2851, %v2847
        %v2872 = vpack.c.b16 %v2852, %v2848
        %v2873 = vpack.c.b16 %v2853, %v2849
        %v2874 = vpack.c.b16 %v2858, %v2854
        %v2875 = vpack.c.b16 %v2859, %v2855
        %v2876 = vpack.c.b16 %v2860, %v2856
        %v2877 = vpack.c.b16 %v2861, %v2857
        %v2894 = vunpack.c.l.b16 %v2075
        %v2895 = vunpack.c.h.b16 %v2075
        %v2896 = vunpack.c.l.b16 %v2089
        %v2897 = vunpack.c.h.b16 %v2089
        %v2898 = vunpack.c.l.b16 %v2103
        %v2899 = vunpack.c.h.b16 %v2103
        %v2900 = vunpack.c.l.b16 %v2117
        %v2901 = vunpack.c.h.b16 %v2117
        %v2902 = vunpack.c.l.b16 %v2131
        %v2903 = vunpack.c.h.b16 %v2131
        %v2904 = vunpack.c.l.b16 %v2145
        %v2905 = vunpack.c.h.b16 %v2145
        %v2906 = vunpack.c.l.b16 %v2159
        %v2907 = vunpack.c.h.b16 %v2159
        %v2908 = vunpack.c.l.b16 %v2173
        %v2909 = vunpack.c.h.b16 %v2173
        %v2910 = vunpack.c.l.b16 %v2187
        %v2911 = vunpack.c.h.b16 %v2187
        %v2912 = vunpack.c.l.b16 %v2201
        %v2913 = vunpack.c.h.b16 %v2201
        %v2914 = vunpack.c.l.b16 %v2215
        %v2915 = vunpack.c.h.b16 %v2215
        %v2916 = vunpack.c.l.b16 %v2229
        %v2917 = vunpack.c.h.b16 %v2229
        %v2918 = vunpack.c.l.b16 %v2243
        %v2919 = vunpack.c.h.b16 %v2243
        %v2920 = vunpack.c.l.b16 %v2257
        %v2921 = vunpack.c.h.b16 %v2257
        %v2922 = vunpack.c.l.b16 %v2271
        %v2923 = vunpack.c.h.b16 %v2271
        %v2924 = vunpack.c.l.b16 %v2285
        %v2925 = vunpack.c.h.b16 %v2285
        %v2926 = vpack.c.b16 %v2898, %v2894
        %v2927 = vpack.c.b16 %v2899, %v2895
        %v2928 = vpack.c.b16 %v2900, %v2896
        %v2929 = vpack.c.b16 %v2901, %v2897
        %v2930 = vpack.c.b16 %v2906, %v2902
        %v2931 = vpack.c.b16 %v2907, %v2903
        %v2932 = vpack.c.b16 %v2908, %v2904
        %v2933 = vpack.c.b16 %v2909, %v2905
        %v2934 = vpack.c.b16 %v2914, %v2910
        %v2935 = vpack.c.b16 %v2915, %v2911
        %v2936 = vpack.c.b16 %v2916, %v2912
        %v2937 = vpack.c.b16 %v2917, %v2913
        %v2938 = vpack.c.b16 %v2922, %v2918
        %v2939 = vpack.c.b16 %v2923, %v2919
        %v2940 = vpack.c.b16 %v2924, %v2920
        %v2941 = vpack.c.b16 %v2925, %v2921
        %v2958 = vunpack.c.l.b16 %v2337
        %v2959 = vunpack.c.h.b16 %v2337
        %v2960 = vunpack.c.l.b16 %v2341
        %v2961 = vunpack.c.h.b16 %v2341
        %v2962 = vunpack.c.l.b16 %v2345
        %v2963 = vunpack.c.h.b16 %v2345
        %v2964 = vunpack.c.l.b16 %v2349
        %v2965 = vunpack.c.h.b16 %v2349
        %v2966 = vunpack.c.l.b16 %v2353
        %v2967 = vunpack.c.h.b16 %v2353
        %v2968 = vunpack.c.l.b16 %v2357
        %v2969 = vunpack.c.h.b16 %v2357
        %v2970 = vunpack.c.l.b16 %v2361
        %v2971 = vunpack.c.h.b16 %v2361
        %v2972 = vunpack.c.l.b16 %v2365
        %v2973 = vunpack.c.h.b16 %v2365
        %v2974 = vunpack.c.l.b16 %v2369
        %v2975 = vunpack.c.h.b16 %v2369
        %v2976 = vunpack.c.l.b16 %v2373
        %v2977 = vunpack.c.h.b16 %v2373
        %v2978 = vunpack.c.l.b16 %v2377
        %v2979 = vunpack.c.h.b16 %v2377
        %v2980 = vunpack.c.l.b16 %v2381
        %v2981 = vunpack.c.h.b16 %v2381
        %v2982 = vunpack.c.l.b16 %v2385
        %v2983 = vunpack.c.h.b16 %v2385
        %v2984 = vunpack.c.l.b16 %v2389
        %v2985 = vunpack.c.h.b16 %v2389
        %v2986 = vunpack.c.l.b16 %v2393
        %v2987 = vunpack.c.h.b16 %v2393
        %v2988 = vunpack.c.l.b16 %v2397
        %v2989 = vunpack.c.h.b16 %v2397
        %v2990 = vpack.c.b16 %v2962, %v2958
        %v2991 = vpack.c.b16 %v2963, %v2959
        %v2992 = vpack.c.b16 %v2964, %v2960
        %v2993 = vpack.c.b16 %v2965, %v2961
        %v2994 = vpack.c.b16 %v2970, %v2966
        %v2995 = vpack.c.b16 %v2971, %v2967
        %v2996 = vpack.c.b16 %v2972, %v2968
        %v2997 = vpack.c.b16 %v2973, %v2969
        %v2998 = vpack.c.b16 %v2978, %v2974
        %v2999 = vpack.c.b16 %v2979, %v2975
        %v3000 = vpack.c.b16 %v2980, %v2976
        %v3001 = vpack.c.b16 %v2981, %v2977
        %v3002 = vpack.c.b16 %v2986, %v2982
        %v3003 = vpack.c.b16 %v2987, %v2983
        %v3004 = vpack.c.b16 %v2988, %v2984
        %v3005 = vpack.c.b16 %v2989, %v2985
        %v3022 = vld [vmem:[#allocation10] sm:$0xff]
        %v3023 = vld [vmem:[#allocation10 + $0x8] sm:$0xff]
        %v3024 = vld [vmem:[#allocation10 + $0x10] sm:$0xff]
        %v3025 = vld [vmem:[#allocation10 + $0x18] sm:$0xff]
        %v3026 = vld [vmem:[#allocation10 + $0x20] sm:$0xff]
        %v3027 = vld [vmem:[#allocation10 + $0x28] sm:$0xff]
        %v3028 = vld [vmem:[#allocation10 + $0x30] sm:$0xff]
        %v3029 = vld [vmem:[#allocation10 + $0x38] sm:$0xff]
        %v3030 = vld [vmem:[#allocation10 + $0x40] sm:$0xff]
        %v3031 = vld [vmem:[#allocation10 + $0x48] sm:$0xff]
        %v3032 = vld [vmem:[#allocation10 + $0x50] sm:$0xff]
        %v3033 = vld [vmem:[#allocation10 + $0x58] sm:$0xff]
        %v3034 = vld [vmem:[#allocation10 + $0x60] sm:$0xff]
        %v3035 = vld [vmem:[#allocation10 + $0x68] sm:$0xff]
        %v3036 = vld [vmem:[#allocation10 + $0x70] sm:$0xff]
        %v3037 = vld [vmem:[#allocation10 + $0x78] sm:$0xff]
        %v3038 = vld [vmem:[#allocation10 + $0x80] sm:$0xff]
        %v3039 = vld [vmem:[#allocation10 + $0x88] sm:$0xff]
        %v3040 = vld [vmem:[#allocation10 + $0x90] sm:$0xff]
        %v3041 = vld [vmem:[#allocation10 + $0x98] sm:$0xff]
        %v3042 = vld [vmem:[#allocation10 + $0xa0] sm:$0xff]
        %v3043 = vld [vmem:[#allocation10 + $0xa8] sm:$0xff]
        %v3044 = vld [vmem:[#allocation10 + $0xb0] sm:$0xff]
        %v3045 = vld [vmem:[#allocation10 + $0xb8] sm:$0xff]
        %v3046 = vld [vmem:[#allocation10 + $0xc0] sm:$0xff]
        %v3047 = vld [vmem:[#allocation10 + $0xc8] sm:$0xff]
        %v3048 = vld [vmem:[#allocation10 + $0xd0] sm:$0xff]
        %v3049 = vld [vmem:[#allocation10 + $0xd8] sm:$0xff]
        %v3050 = vld [vmem:[#allocation10 + $0xe0] sm:$0xff]
        %v3051 = vld [vmem:[#allocation10 + $0xe8] sm:$0xff]
        %v3052 = vld [vmem:[#allocation10 + $0xf0] sm:$0xff]
        %v3053 = vld [vmem:[#allocation10 + $0xf8] sm:$0xff]
        %v3054 = vld [vmem:[#allocation10 + $0x100] sm:$0xff]
        %v3055 = vld [vmem:[#allocation10 + $0x108] sm:$0xff]
        %v3056 = vld [vmem:[#allocation10 + $0x110] sm:$0xff]
        %v3057 = vld [vmem:[#allocation10 + $0x118] sm:$0xff]
        %v3058 = vld [vmem:[#allocation10 + $0x120] sm:$0xff]
        %v3059 = vld [vmem:[#allocation10 + $0x128] sm:$0xff]
        %v3060 = vld [vmem:[#allocation10 + $0x130] sm:$0xff]
        %v3061 = vld [vmem:[#allocation10 + $0x138] sm:$0xff]
        %v3062 = vld [vmem:[#allocation10 + $0x140] sm:$0xff]
        %v3063 = vld [vmem:[#allocation10 + $0x148] sm:$0xff]
        %v3064 = vld [vmem:[#allocation10 + $0x150] sm:$0xff]
        %v3065 = vld [vmem:[#allocation10 + $0x158] sm:$0xff]
        %v3066 = vld [vmem:[#allocation10 + $0x160] sm:$0xff]
        %v3067 = vld [vmem:[#allocation10 + $0x168] sm:$0xff]
        %v3068 = vld [vmem:[#allocation10 + $0x170] sm:$0xff]
        %v3069 = vld [vmem:[#allocation10 + $0x178] sm:$0xff]
        %v3070 = vld [vmem:[#allocation10 + $0x180] sm:$0xff]
        %v3071 = vld [vmem:[#allocation10 + $0x188] sm:$0xff]
        %v3072 = vld [vmem:[#allocation10 + $0x190] sm:$0xff]
        %v3073 = vld [vmem:[#allocation10 + $0x198] sm:$0xff]
        %v3074 = vld [vmem:[#allocation10 + $0x1a0] sm:$0xff]
        %v3075 = vld [vmem:[#allocation10 + $0x1a8] sm:$0xff]
        %v3076 = vld [vmem:[#allocation10 + $0x1b0] sm:$0xff]
        %v3077 = vld [vmem:[#allocation10 + $0x1b8] sm:$0xff]
        %v3078 = vld [vmem:[#allocation10 + $0x1c0] sm:$0xff]
        %v3079 = vld [vmem:[#allocation10 + $0x1c8] sm:$0xff]
        %v3080 = vld [vmem:[#allocation10 + $0x1d0] sm:$0xff]
        %v3081 = vld [vmem:[#allocation10 + $0x1d8] sm:$0xff]
        %v3082 = vld [vmem:[#allocation10 + $0x1e0] sm:$0xff]
        %v3083 = vld [vmem:[#allocation10 + $0x1e8] sm:$0xff]
        %v3084 = vld [vmem:[#allocation10 + $0x1f0] sm:$0xff]
        %v3085 = vld [vmem:[#allocation10 + $0x1f8] sm:$0xff]
        %v3086 = vld [vmem:[#allocation10 + $0x200] sm:$0xff]
        %v3087 = vld [vmem:[#allocation10 + $0x208] sm:$0xff]
        %v3088 = vld [vmem:[#allocation10 + $0x210] sm:$0xff]
        %v3089 = vld [vmem:[#allocation10 + $0x218] sm:$0xff]
        %v3090 = vld [vmem:[#allocation10 + $0x220] sm:$0xff]
        %v3091 = vld [vmem:[#allocation10 + $0x228] sm:$0xff]
        %v3092 = vld [vmem:[#allocation10 + $0x230] sm:$0xff]
        %v3093 = vld [vmem:[#allocation10 + $0x238] sm:$0xff]
        %v3094 = vld [vmem:[#allocation10 + $0x240] sm:$0xff]
        %v3095 = vld [vmem:[#allocation10 + $0x248] sm:$0xff]
        %v3096 = vld [vmem:[#allocation10 + $0x250] sm:$0xff]
        %v3097 = vld [vmem:[#allocation10 + $0x258] sm:$0xff]
        %v3098 = vld [vmem:[#allocation10 + $0x260] sm:$0xff]
        %v3099 = vld [vmem:[#allocation10 + $0x268] sm:$0xff]
        %v3100 = vld [vmem:[#allocation10 + $0x270] sm:$0xff]
        %v3101 = vld [vmem:[#allocation10 + $0x278] sm:$0xff]
        %v3102 = vld [vmem:[#allocation10 + $0x280] sm:$0xff]
        %v3103 = vld [vmem:[#allocation10 + $0x288] sm:$0xff]
        %v3104 = vld [vmem:[#allocation10 + $0x290] sm:$0xff]
        %v3105 = vld [vmem:[#allocation10 + $0x298] sm:$0xff]
        %v3106 = vld [vmem:[#allocation10 + $0x2a0] sm:$0xff]
        %v3107 = vld [vmem:[#allocation10 + $0x2a8] sm:$0xff]
        %v3108 = vld [vmem:[#allocation10 + $0x2b0] sm:$0xff]
        %v3109 = vld [vmem:[#allocation10 + $0x2b8] sm:$0xff]
        %v3110 = vld [vmem:[#allocation10 + $0x2c0] sm:$0xff]
        %v3111 = vld [vmem:[#allocation10 + $0x2c8] sm:$0xff]
        %v3112 = vld [vmem:[#allocation10 + $0x2d0] sm:$0xff]
        %v3113 = vld [vmem:[#allocation10 + $0x2d8] sm:$0xff]
        %v3114 = vld [vmem:[#allocation10 + $0x2e0] sm:$0xff]
        %v3115 = vld [vmem:[#allocation10 + $0x2e8] sm:$0xff]
        %v3116 = vld [vmem:[#allocation10 + $0x2f0] sm:$0xff]
        %v3117 = vld [vmem:[#allocation10 + $0x2f8] sm:$0xff]
        %v3118 = vld [vmem:[#allocation10 + $0x300] sm:$0xff]
        %v3119 = vld [vmem:[#allocation10 + $0x308] sm:$0xff]
        %v3120 = vld [vmem:[#allocation10 + $0x310] sm:$0xff]
        %v3121 = vld [vmem:[#allocation10 + $0x318] sm:$0xff]
        %v3122 = vld [vmem:[#allocation10 + $0x320] sm:$0xff]
        %v3123 = vld [vmem:[#allocation10 + $0x328] sm:$0xff]
        %v3124 = vld [vmem:[#allocation10 + $0x330] sm:$0xff]
        %v3125 = vld [vmem:[#allocation10 + $0x338] sm:$0xff]
        %v3126 = vld [vmem:[#allocation10 + $0x340] sm:$0xff]
        %v3127 = vld [vmem:[#allocation10 + $0x348] sm:$0xff]
        %v3128 = vld [vmem:[#allocation10 + $0x350] sm:$0xff]
        %v3129 = vld [vmem:[#allocation10 + $0x358] sm:$0xff]
        %v3130 = vld [vmem:[#allocation10 + $0x360] sm:$0xff]
        %v3131 = vld [vmem:[#allocation10 + $0x368] sm:$0xff]
        %v3132 = vld [vmem:[#allocation10 + $0x370] sm:$0xff]
        %v3133 = vld [vmem:[#allocation10 + $0x378] sm:$0xff]
        %v3134 = vld [vmem:[#allocation10 + $0x380] sm:$0xff]
        %v3135 = vld [vmem:[#allocation10 + $0x388] sm:$0xff]
        %v3136 = vld [vmem:[#allocation10 + $0x390] sm:$0xff]
        %v3137 = vld [vmem:[#allocation10 + $0x398] sm:$0xff]
        %v3138 = vld [vmem:[#allocation10 + $0x3a0] sm:$0xff]
        %v3139 = vld [vmem:[#allocation10 + $0x3a8] sm:$0xff]
        %v3140 = vld [vmem:[#allocation10 + $0x3b0] sm:$0xff]
        %v3141 = vld [vmem:[#allocation10 + $0x3b8] sm:$0xff]
        %v3142 = vld [vmem:[#allocation10 + $0x3c0] sm:$0xff]
        %v3143 = vld [vmem:[#allocation10 + $0x3c8] sm:$0xff]
        %v3144 = vld [vmem:[#allocation10 + $0x3d0] sm:$0xff]
        %v3145 = vld [vmem:[#allocation10 + $0x3d8] sm:$0xff]
        %v3146 = vld [vmem:[#allocation10 + $0x3e0] sm:$0xff]
        %v3147 = vld [vmem:[#allocation10 + $0x3e8] sm:$0xff]
        %v3148 = vld [vmem:[#allocation10 + $0x3f0] sm:$0xff]
        %v3149 = vld [vmem:[#allocation10 + $0x3f8] sm:$0xff]
        %v3150 = vld [vmem:[#allocation10 + $0x400] sm:$0xff]
        %v3151 = vld [vmem:[#allocation10 + $0x408] sm:$0xff]
        %v3152 = vld [vmem:[#allocation10 + $0x410] sm:$0xff]
        %v3153 = vld [vmem:[#allocation10 + $0x418] sm:$0xff]
        %v3154 = vld [vmem:[#allocation10 + $0x420] sm:$0xff]
        %v3155 = vld [vmem:[#allocation10 + $0x428] sm:$0xff]
        %v3156 = vld [vmem:[#allocation10 + $0x430] sm:$0xff]
        %v3157 = vld [vmem:[#allocation10 + $0x438] sm:$0xff]
        %v3158 = vld [vmem:[#allocation10 + $0x440] sm:$0xff]
        %v3159 = vld [vmem:[#allocation10 + $0x448] sm:$0xff]
        %v3160 = vld [vmem:[#allocation10 + $0x450] sm:$0xff]
        %v3161 = vld [vmem:[#allocation10 + $0x458] sm:$0xff]
        %v3162 = vld [vmem:[#allocation10 + $0x460] sm:$0xff]
        %v3163 = vld [vmem:[#allocation10 + $0x468] sm:$0xff]
        %v3164 = vld [vmem:[#allocation10 + $0x470] sm:$0xff]
        %v3165 = vld [vmem:[#allocation10 + $0x478] sm:$0xff]
        %v3166 = vld [vmem:[#allocation10 + $0x480] sm:$0xff]
        %v3167 = vld [vmem:[#allocation10 + $0x488] sm:$0xff]
        %v3168 = vld [vmem:[#allocation10 + $0x490] sm:$0xff]
        %v3169 = vld [vmem:[#allocation10 + $0x498] sm:$0xff]
        %v3170 = vld [vmem:[#allocation10 + $0x4a0] sm:$0xff]
        %v3171 = vld [vmem:[#allocation10 + $0x4a8] sm:$0xff]
        %v3172 = vld [vmem:[#allocation10 + $0x4b0] sm:$0xff]
        %v3173 = vld [vmem:[#allocation10 + $0x4b8] sm:$0xff]
        %v3174 = vld [vmem:[#allocation10 + $0x4c0] sm:$0xff]
        %v3175 = vld [vmem:[#allocation10 + $0x4c8] sm:$0xff]
        %v3176 = vld [vmem:[#allocation10 + $0x4d0] sm:$0xff]
        %v3177 = vld [vmem:[#allocation10 + $0x4d8] sm:$0xff]
        %v3178 = vld [vmem:[#allocation10 + $0x4e0] sm:$0xff]
        %v3179 = vld [vmem:[#allocation10 + $0x4e8] sm:$0xff]
        %v3180 = vld [vmem:[#allocation10 + $0x4f0] sm:$0xff]
        %v3181 = vld [vmem:[#allocation10 + $0x4f8] sm:$0xff]
        %v3182 = vld [vmem:[#allocation10 + $0x500] sm:$0xff]
        %v3183 = vld [vmem:[#allocation10 + $0x508] sm:$0xff]
        %v3184 = vld [vmem:[#allocation10 + $0x510] sm:$0xff]
        %v3185 = vld [vmem:[#allocation10 + $0x518] sm:$0xff]
        %v3186 = vld [vmem:[#allocation10 + $0x520] sm:$0xff]
        %v3187 = vld [vmem:[#allocation10 + $0x528] sm:$0xff]
        %v3188 = vld [vmem:[#allocation10 + $0x530] sm:$0xff]
        %v3189 = vld [vmem:[#allocation10 + $0x538] sm:$0xff]
        %v3190 = vld [vmem:[#allocation10 + $0x540] sm:$0xff]
        %v3191 = vld [vmem:[#allocation10 + $0x548] sm:$0xff]
        %v3192 = vld [vmem:[#allocation10 + $0x550] sm:$0xff]
        %v3193 = vld [vmem:[#allocation10 + $0x558] sm:$0xff]
        %v3194 = vld [vmem:[#allocation10 + $0x560] sm:$0xff]
        %v3195 = vld [vmem:[#allocation10 + $0x568] sm:$0xff]
        %v3196 = vld [vmem:[#allocation10 + $0x570] sm:$0xff]
        %v3197 = vld [vmem:[#allocation10 + $0x578] sm:$0xff]
        %v3198 = vld [vmem:[#allocation10 + $0x580] sm:$0xff]
        %v3199 = vld [vmem:[#allocation10 + $0x588] sm:$0xff]
        %v3200 = vld [vmem:[#allocation10 + $0x590] sm:$0xff]
        %v3201 = vld [vmem:[#allocation10 + $0x598] sm:$0xff]
        %v3202 = vld [vmem:[#allocation10 + $0x5a0] sm:$0xff]
        %v3203 = vld [vmem:[#allocation10 + $0x5a8] sm:$0xff]
        %v3204 = vld [vmem:[#allocation10 + $0x5b0] sm:$0xff]
        %v3205 = vld [vmem:[#allocation10 + $0x5b8] sm:$0xff]
        %v3206 = vld [vmem:[#allocation10 + $0x5c0] sm:$0xff]
        %v3207 = vld [vmem:[#allocation10 + $0x5c8] sm:$0xff]
        %v3208 = vld [vmem:[#allocation10 + $0x5d0] sm:$0xff]
        %v3209 = vld [vmem:[#allocation10 + $0x5d8] sm:$0xff]
        %v3210 = vld [vmem:[#allocation10 + $0x5e0] sm:$0xff]
        %v3211 = vld [vmem:[#allocation10 + $0x5e8] sm:$0xff]
        %v3212 = vld [vmem:[#allocation10 + $0x5f0] sm:$0xff]
        %v3213 = vld [vmem:[#allocation10 + $0x5f8] sm:$0xff]
        %v3214 = vld [vmem:[#allocation10 + $0x600] sm:$0xff]
        %v3215 = vld [vmem:[#allocation10 + $0x608] sm:$0xff]
        %v3216 = vld [vmem:[#allocation10 + $0x610] sm:$0xff]
        %v3217 = vld [vmem:[#allocation10 + $0x618] sm:$0xff]
        %v3218 = vld [vmem:[#allocation10 + $0x620] sm:$0xff]
        %v3219 = vld [vmem:[#allocation10 + $0x628] sm:$0xff]
        %v3220 = vld [vmem:[#allocation10 + $0x630] sm:$0xff]
        %v3221 = vld [vmem:[#allocation10 + $0x638] sm:$0xff]
        %v3222 = vld [vmem:[#allocation10 + $0x640] sm:$0xff]
        %v3223 = vld [vmem:[#allocation10 + $0x648] sm:$0xff]
        %v3224 = vld [vmem:[#allocation10 + $0x650] sm:$0xff]
        %v3225 = vld [vmem:[#allocation10 + $0x658] sm:$0xff]
        %v3226 = vld [vmem:[#allocation10 + $0x660] sm:$0xff]
        %v3227 = vld [vmem:[#allocation10 + $0x668] sm:$0xff]
        %v3228 = vld [vmem:[#allocation10 + $0x670] sm:$0xff]
        %v3229 = vld [vmem:[#allocation10 + $0x678] sm:$0xff]
        %v3230 = vld [vmem:[#allocation10 + $0x680] sm:$0xff]
        %v3231 = vld [vmem:[#allocation10 + $0x688] sm:$0xff]
        %v3232 = vld [vmem:[#allocation10 + $0x690] sm:$0xff]
        %v3233 = vld [vmem:[#allocation10 + $0x698] sm:$0xff]
        %v3234 = vld [vmem:[#allocation10 + $0x6a0] sm:$0xff]
        %v3235 = vld [vmem:[#allocation10 + $0x6a8] sm:$0xff]
        %v3236 = vld [vmem:[#allocation10 + $0x6b0] sm:$0xff]
        %v3237 = vld [vmem:[#allocation10 + $0x6b8] sm:$0xff]
        %v3238 = vld [vmem:[#allocation10 + $0x6c0] sm:$0xff]
        %v3239 = vld [vmem:[#allocation10 + $0x6c8] sm:$0xff]
        %v3240 = vld [vmem:[#allocation10 + $0x6d0] sm:$0xff]
        %v3241 = vld [vmem:[#allocation10 + $0x6d8] sm:$0xff]
        %v3242 = vld [vmem:[#allocation10 + $0x6e0] sm:$0xff]
        %v3243 = vld [vmem:[#allocation10 + $0x6e8] sm:$0xff]
        %v3244 = vld [vmem:[#allocation10 + $0x6f0] sm:$0xff]
        %v3245 = vld [vmem:[#allocation10 + $0x6f8] sm:$0xff]
        %v3246 = vld [vmem:[#allocation10 + $0x700] sm:$0xff]
        %v3247 = vld [vmem:[#allocation10 + $0x708] sm:$0xff]
        %v3248 = vld [vmem:[#allocation10 + $0x710] sm:$0xff]
        %v3249 = vld [vmem:[#allocation10 + $0x718] sm:$0xff]
        %v3250 = vld [vmem:[#allocation10 + $0x720] sm:$0xff]
        %v3251 = vld [vmem:[#allocation10 + $0x728] sm:$0xff]
        %v3252 = vld [vmem:[#allocation10 + $0x730] sm:$0xff]
        %v3253 = vld [vmem:[#allocation10 + $0x738] sm:$0xff]
        %v3254 = vld [vmem:[#allocation10 + $0x740] sm:$0xff]
        %v3255 = vld [vmem:[#allocation10 + $0x748] sm:$0xff]
        %v3256 = vld [vmem:[#allocation10 + $0x750] sm:$0xff]
        %v3257 = vld [vmem:[#allocation10 + $0x758] sm:$0xff]
        %v3258 = vld [vmem:[#allocation10 + $0x760] sm:$0xff]
        %v3259 = vld [vmem:[#allocation10 + $0x768] sm:$0xff]
        %v3260 = vld [vmem:[#allocation10 + $0x770] sm:$0xff]
        %v3261 = vld [vmem:[#allocation10 + $0x778] sm:$0xff]
        %v3262 = vld [vmem:[#allocation10 + $0x780] sm:$0xff]
        %v3263 = vld [vmem:[#allocation10 + $0x788] sm:$0xff]
        %v3264 = vld [vmem:[#allocation10 + $0x790] sm:$0xff]
        %v3265 = vld [vmem:[#allocation10 + $0x798] sm:$0xff]
        %v3266 = vld [vmem:[#allocation10 + $0x7a0] sm:$0xff]
        %v3267 = vld [vmem:[#allocation10 + $0x7a8] sm:$0xff]
        %v3268 = vld [vmem:[#allocation10 + $0x7b0] sm:$0xff]
        %v3269 = vld [vmem:[#allocation10 + $0x7b8] sm:$0xff]
        %v3270 = vld [vmem:[#allocation10 + $0x7c0] sm:$0xff]
        %v3271 = vld [vmem:[#allocation10 + $0x7c8] sm:$0xff]
        %v3272 = vld [vmem:[#allocation10 + $0x7d0] sm:$0xff]
        %v3273 = vld [vmem:[#allocation10 + $0x7d8] sm:$0xff]
        %v3274 = vld [vmem:[#allocation10 + $0x7e0] sm:$0xff]
        %v3275 = vld [vmem:[#allocation10 + $0x7e8] sm:$0xff]
        %v3276 = vld [vmem:[#allocation10 + $0x7f0] sm:$0xff]
        %v3277 = vld [vmem:[#allocation10 + $0x7f8] sm:$0xff]
        %v3278 = vld [vmem:[#allocation10 + $0x800] sm:$0xff]
        %v3279 = vld [vmem:[#allocation10 + $0x808] sm:$0xff]
        %v3280 = vld [vmem:[#allocation10 + $0x810] sm:$0xff]
        %v3281 = vld [vmem:[#allocation10 + $0x818] sm:$0xff]
        %v3282 = vld [vmem:[#allocation10 + $0x820] sm:$0xff]
        %v3283 = vld [vmem:[#allocation10 + $0x828] sm:$0xff]
        %v3284 = vld [vmem:[#allocation10 + $0x830] sm:$0xff]
        %v3285 = vld [vmem:[#allocation10 + $0x838] sm:$0xff]
        %v3286 = vld [vmem:[#allocation10 + $0x840] sm:$0xff]
        %v3287 = vld [vmem:[#allocation10 + $0x848] sm:$0xff]
        %v3288 = vld [vmem:[#allocation10 + $0x850] sm:$0xff]
        %v3289 = vld [vmem:[#allocation10 + $0x858] sm:$0xff]
        %v3290 = vld [vmem:[#allocation10 + $0x860] sm:$0xff]
        %v3291 = vld [vmem:[#allocation10 + $0x868] sm:$0xff]
        %v3292 = vld [vmem:[#allocation10 + $0x870] sm:$0xff]
        %v3293 = vld [vmem:[#allocation10 + $0x878] sm:$0xff]
        %v3294 = vld [vmem:[#allocation10 + $0x880] sm:$0xff]
        %v3295 = vld [vmem:[#allocation10 + $0x888] sm:$0xff]
        %v3296 = vld [vmem:[#allocation10 + $0x890] sm:$0xff]
        %v3297 = vld [vmem:[#allocation10 + $0x898] sm:$0xff]
        %v3298 = vld [vmem:[#allocation10 + $0x8a0] sm:$0xff]
        %v3299 = vld [vmem:[#allocation10 + $0x8a8] sm:$0xff]
        %v3300 = vld [vmem:[#allocation10 + $0x8b0] sm:$0xff]
        %v3301 = vld [vmem:[#allocation10 + $0x8b8] sm:$0xff]
        %v3302 = vld [vmem:[#allocation10 + $0x8c0] sm:$0xff]
        %v3303 = vld [vmem:[#allocation10 + $0x8c8] sm:$0xff]
        %v3304 = vld [vmem:[#allocation10 + $0x8d0] sm:$0xff]
        %v3305 = vld [vmem:[#allocation10 + $0x8d8] sm:$0xff]
        %v3306 = vld [vmem:[#allocation10 + $0x8e0] sm:$0xff]
        %v3307 = vld [vmem:[#allocation10 + $0x8e8] sm:$0xff]
        %v3308 = vld [vmem:[#allocation10 + $0x8f0] sm:$0xff]
        %v3309 = vld [vmem:[#allocation10 + $0x8f8] sm:$0xff]
        %v3310 = vld [vmem:[#allocation10 + $0x900] sm:$0xff]
        %v3311 = vld [vmem:[#allocation10 + $0x908] sm:$0xff]
        %v3312 = vld [vmem:[#allocation10 + $0x910] sm:$0xff]
        %v3313 = vld [vmem:[#allocation10 + $0x918] sm:$0xff]
        %v3314 = vld [vmem:[#allocation10 + $0x920] sm:$0xff]
        %v3315 = vld [vmem:[#allocation10 + $0x928] sm:$0xff]
        %v3316 = vld [vmem:[#allocation10 + $0x930] sm:$0xff]
        %v3317 = vld [vmem:[#allocation10 + $0x938] sm:$0xff]
        %v3318 = vld [vmem:[#allocation10 + $0x940] sm:$0xff]
        %v3319 = vld [vmem:[#allocation10 + $0x948] sm:$0xff]
        %v3320 = vld [vmem:[#allocation10 + $0x950] sm:$0xff]
        %v3321 = vld [vmem:[#allocation10 + $0x958] sm:$0xff]
        %v3322 = vld [vmem:[#allocation10 + $0x960] sm:$0xff]
        %v3323 = vld [vmem:[#allocation10 + $0x968] sm:$0xff]
        %v3324 = vld [vmem:[#allocation10 + $0x970] sm:$0xff]
        %v3325 = vld [vmem:[#allocation10 + $0x978] sm:$0xff]
        %v3326 = vld [vmem:[#allocation10 + $0x980] sm:$0xff]
        %v3327 = vld [vmem:[#allocation10 + $0x988] sm:$0xff]
        %v3328 = vld [vmem:[#allocation10 + $0x990] sm:$0xff]
        %v3329 = vld [vmem:[#allocation10 + $0x998] sm:$0xff]
        %v3330 = vld [vmem:[#allocation10 + $0x9a0] sm:$0xff]
        %v3331 = vld [vmem:[#allocation10 + $0x9a8] sm:$0xff]
        %v3332 = vld [vmem:[#allocation10 + $0x9b0] sm:$0xff]
        %v3333 = vld [vmem:[#allocation10 + $0x9b8] sm:$0xff]
        %v3334 = vld [vmem:[#allocation10 + $0x9c0] sm:$0xff]
        %v3335 = vld [vmem:[#allocation10 + $0x9c8] sm:$0xff]
        %v3336 = vld [vmem:[#allocation10 + $0x9d0] sm:$0xff]
        %v3337 = vld [vmem:[#allocation10 + $0x9d8] sm:$0xff]
        %v3338 = vld [vmem:[#allocation10 + $0x9e0] sm:$0xff]
        %v3339 = vld [vmem:[#allocation10 + $0x9e8] sm:$0xff]
        %v3340 = vld [vmem:[#allocation10 + $0x9f0] sm:$0xff]
        %v3341 = vld [vmem:[#allocation10 + $0x9f8] sm:$0xff]
        %v3342 = vld [vmem:[#allocation10 + $0xa00] sm:$0xff]
        %v3343 = vld [vmem:[#allocation10 + $0xa08] sm:$0xff]
        %v3344 = vld [vmem:[#allocation10 + $0xa10] sm:$0xff]
        %v3345 = vld [vmem:[#allocation10 + $0xa18] sm:$0xff]
        %v3346 = vld [vmem:[#allocation10 + $0xa20] sm:$0xff]
        %v3347 = vld [vmem:[#allocation10 + $0xa28] sm:$0xff]
        %v3348 = vld [vmem:[#allocation10 + $0xa30] sm:$0xff]
        %v3349 = vld [vmem:[#allocation10 + $0xa38] sm:$0xff]
        %v3350 = vld [vmem:[#allocation10 + $0xa40] sm:$0xff]
        %v3351 = vld [vmem:[#allocation10 + $0xa48] sm:$0xff]
        %v3352 = vld [vmem:[#allocation10 + $0xa50] sm:$0xff]
        %v3353 = vld [vmem:[#allocation10 + $0xa58] sm:$0xff]
        %v3354 = vld [vmem:[#allocation10 + $0xa60] sm:$0xff]
        %v3355 = vld [vmem:[#allocation10 + $0xa68] sm:$0xff]
        %v3356 = vld [vmem:[#allocation10 + $0xa70] sm:$0xff]
        %v3357 = vld [vmem:[#allocation10 + $0xa78] sm:$0xff]
        %v3358 = vld [vmem:[#allocation10 + $0xa80] sm:$0xff]
        %v3359 = vld [vmem:[#allocation10 + $0xa88] sm:$0xff]
        %v3360 = vld [vmem:[#allocation10 + $0xa90] sm:$0xff]
        %v3361 = vld [vmem:[#allocation10 + $0xa98] sm:$0xff]
        %v3362 = vld [vmem:[#allocation10 + $0xaa0] sm:$0xff]
        %v3363 = vld [vmem:[#allocation10 + $0xaa8] sm:$0xff]
        %v3364 = vld [vmem:[#allocation10 + $0xab0] sm:$0xff]
        %v3365 = vld [vmem:[#allocation10 + $0xab8] sm:$0xff]
        %v3366 = vld [vmem:[#allocation10 + $0xac0] sm:$0xff]
        %v3367 = vld [vmem:[#allocation10 + $0xac8] sm:$0xff]
        %v3368 = vld [vmem:[#allocation10 + $0xad0] sm:$0xff]
        %v3369 = vld [vmem:[#allocation10 + $0xad8] sm:$0xff]
        %v3370 = vld [vmem:[#allocation10 + $0xae0] sm:$0xff]
        %v3371 = vld [vmem:[#allocation10 + $0xae8] sm:$0xff]
        %v3372 = vld [vmem:[#allocation10 + $0xaf0] sm:$0xff]
        %v3373 = vld [vmem:[#allocation10 + $0xaf8] sm:$0xff]
        %v3374 = vld [vmem:[#allocation10 + $0xb00] sm:$0xff]
        %v3375 = vld [vmem:[#allocation10 + $0xb08] sm:$0xff]
        %v3376 = vld [vmem:[#allocation10 + $0xb10] sm:$0xff]
        %v3377 = vld [vmem:[#allocation10 + $0xb18] sm:$0xff]
        %v3378 = vld [vmem:[#allocation10 + $0xb20] sm:$0xff]
        %v3379 = vld [vmem:[#allocation10 + $0xb28] sm:$0xff]
        %v3380 = vld [vmem:[#allocation10 + $0xb30] sm:$0xff]
        %v3381 = vld [vmem:[#allocation10 + $0xb38] sm:$0xff]
        %v3382 = vld [vmem:[#allocation10 + $0xb40] sm:$0xff]
        %v3383 = vld [vmem:[#allocation10 + $0xb48] sm:$0xff]
        %v3384 = vld [vmem:[#allocation10 + $0xb50] sm:$0xff]
        %v3385 = vld [vmem:[#allocation10 + $0xb58] sm:$0xff]
        %v3386 = vld [vmem:[#allocation10 + $0xb60] sm:$0xff]
        %v3387 = vld [vmem:[#allocation10 + $0xb68] sm:$0xff]
        %v3388 = vld [vmem:[#allocation10 + $0xb70] sm:$0xff]
        %v3389 = vld [vmem:[#allocation10 + $0xb78] sm:$0xff]
        %v3390 = vld [vmem:[#allocation10 + $0xb80] sm:$0xff]
        %v3391 = vld [vmem:[#allocation10 + $0xb88] sm:$0xff]
        %v3392 = vld [vmem:[#allocation10 + $0xb90] sm:$0xff]
        %v3393 = vld [vmem:[#allocation10 + $0xb98] sm:$0xff]
        %v3394 = vld [vmem:[#allocation10 + $0xba0] sm:$0xff]
        %v3395 = vld [vmem:[#allocation10 + $0xba8] sm:$0xff]
        %v3396 = vld [vmem:[#allocation10 + $0xbb0] sm:$0xff]
        %v3397 = vld [vmem:[#allocation10 + $0xbb8] sm:$0xff]
        %v3398 = vld [vmem:[#allocation10 + $0xbc0] sm:$0xff]
        %v3399 = vld [vmem:[#allocation10 + $0xbc8] sm:$0xff]
        %v3400 = vld [vmem:[#allocation10 + $0xbd0] sm:$0xff]
        %v3401 = vld [vmem:[#allocation10 + $0xbd8] sm:$0xff]
        %v3402 = vld [vmem:[#allocation10 + $0xbe0] sm:$0xff]
        %v3403 = vld [vmem:[#allocation10 + $0xbe8] sm:$0xff]
        %v3404 = vld [vmem:[#allocation10 + $0xbf0] sm:$0xff]
        %v3405 = vld [vmem:[#allocation10 + $0xbf8] sm:$0xff]
        %v3406 = vld [vmem:[#allocation10 + $0xc00] sm:$0xff]
        %v3407 = vld [vmem:[#allocation10 + $0xc08] sm:$0xff]
        %v3408 = vld [vmem:[#allocation10 + $0xc10] sm:$0xff]
        %v3409 = vld [vmem:[#allocation10 + $0xc18] sm:$0xff]
        %v3410 = vld [vmem:[#allocation10 + $0xc20] sm:$0xff]
        %v3411 = vld [vmem:[#allocation10 + $0xc28] sm:$0xff]
        %v3412 = vld [vmem:[#allocation10 + $0xc30] sm:$0xff]
        %v3413 = vld [vmem:[#allocation10 + $0xc38] sm:$0xff]
        %v3414 = vld [vmem:[#allocation10 + $0xc40] sm:$0xff]
        %v3415 = vld [vmem:[#allocation10 + $0xc48] sm:$0xff]
        %v3416 = vld [vmem:[#allocation10 + $0xc50] sm:$0xff]
        %v3417 = vld [vmem:[#allocation10 + $0xc58] sm:$0xff]
        %v3418 = vld [vmem:[#allocation10 + $0xc60] sm:$0xff]
        %v3419 = vld [vmem:[#allocation10 + $0xc68] sm:$0xff]
        %v3420 = vld [vmem:[#allocation10 + $0xc70] sm:$0xff]
        %v3421 = vld [vmem:[#allocation10 + $0xc78] sm:$0xff]
        %v3422 = vld [vmem:[#allocation10 + $0xc80] sm:$0xff]
        %v3423 = vld [vmem:[#allocation10 + $0xc88] sm:$0xff]
        %v3424 = vld [vmem:[#allocation10 + $0xc90] sm:$0xff]
        %v3425 = vld [vmem:[#allocation10 + $0xc98] sm:$0xff]
        %v3426 = vld [vmem:[#allocation10 + $0xca0] sm:$0xff]
        %v3427 = vld [vmem:[#allocation10 + $0xca8] sm:$0xff]
        %v3428 = vld [vmem:[#allocation10 + $0xcb0] sm:$0xff]
        %v3429 = vld [vmem:[#allocation10 + $0xcb8] sm:$0xff]
        %v3430 = vld [vmem:[#allocation10 + $0xcc0] sm:$0xff]
        %v3431 = vld [vmem:[#allocation10 + $0xcc8] sm:$0xff]
        %v3432 = vld [vmem:[#allocation10 + $0xcd0] sm:$0xff]
        %v3433 = vld [vmem:[#allocation10 + $0xcd8] sm:$0xff]
        %v3434 = vld [vmem:[#allocation10 + $0xce0] sm:$0xff]
        %v3435 = vld [vmem:[#allocation10 + $0xce8] sm:$0xff]
        %v3436 = vld [vmem:[#allocation10 + $0xcf0] sm:$0xff]
        %v3437 = vld [vmem:[#allocation10 + $0xcf8] sm:$0xff]
        %v3438 = vld [vmem:[#allocation10 + $0xd00] sm:$0xff]
        %v3439 = vld [vmem:[#allocation10 + $0xd08] sm:$0xff]
        %v3440 = vld [vmem:[#allocation10 + $0xd10] sm:$0xff]
        %v3441 = vld [vmem:[#allocation10 + $0xd18] sm:$0xff]
        %v3442 = vld [vmem:[#allocation10 + $0xd20] sm:$0xff]
        %v3443 = vld [vmem:[#allocation10 + $0xd28] sm:$0xff]
        %v3444 = vld [vmem:[#allocation10 + $0xd30] sm:$0xff]
        %v3445 = vld [vmem:[#allocation10 + $0xd38] sm:$0xff]
        %v3446 = vld [vmem:[#allocation10 + $0xd40] sm:$0xff]
        %v3447 = vld [vmem:[#allocation10 + $0xd48] sm:$0xff]
        %v3448 = vld [vmem:[#allocation10 + $0xd50] sm:$0xff]
        %v3449 = vld [vmem:[#allocation10 + $0xd58] sm:$0xff]
        %v3450 = vld [vmem:[#allocation10 + $0xd60] sm:$0xff]
        %v3451 = vld [vmem:[#allocation10 + $0xd68] sm:$0xff]
        %v3452 = vld [vmem:[#allocation10 + $0xd70] sm:$0xff]
        %v3453 = vld [vmem:[#allocation10 + $0xd78] sm:$0xff]
        %v3454 = vld [vmem:[#allocation10 + $0xd80] sm:$0xff]
        %v3455 = vld [vmem:[#allocation10 + $0xd88] sm:$0xff]
        %v3456 = vld [vmem:[#allocation10 + $0xd90] sm:$0xff]
        %v3457 = vld [vmem:[#allocation10 + $0xd98] sm:$0xff]
        %v3458 = vld [vmem:[#allocation10 + $0xda0] sm:$0xff]
        %v3459 = vld [vmem:[#allocation10 + $0xda8] sm:$0xff]
        %v3460 = vld [vmem:[#allocation10 + $0xdb0] sm:$0xff]
        %v3461 = vld [vmem:[#allocation10 + $0xdb8] sm:$0xff]
        %v3462 = vld [vmem:[#allocation10 + $0xdc0] sm:$0xff]
        %v3463 = vld [vmem:[#allocation10 + $0xdc8] sm:$0xff]
        %v3464 = vld [vmem:[#allocation10 + $0xdd0] sm:$0xff]
        %v3465 = vld [vmem:[#allocation10 + $0xdd8] sm:$0xff]
        %v3466 = vld [vmem:[#allocation10 + $0xde0] sm:$0xff]
        %v3467 = vld [vmem:[#allocation10 + $0xde8] sm:$0xff]
        %v3468 = vld [vmem:[#allocation10 + $0xdf0] sm:$0xff]
        %v3469 = vld [vmem:[#allocation10 + $0xdf8] sm:$0xff]
        %v3470 = vld [vmem:[#allocation10 + $0xe00] sm:$0xff]
        %v3471 = vld [vmem:[#allocation10 + $0xe08] sm:$0xff]
        %v3472 = vld [vmem:[#allocation10 + $0xe10] sm:$0xff]
        %v3473 = vld [vmem:[#allocation10 + $0xe18] sm:$0xff]
        %v3474 = vld [vmem:[#allocation10 + $0xe20] sm:$0xff]
        %v3475 = vld [vmem:[#allocation10 + $0xe28] sm:$0xff]
        %v3476 = vld [vmem:[#allocation10 + $0xe30] sm:$0xff]
        %v3477 = vld [vmem:[#allocation10 + $0xe38] sm:$0xff]
        %v3478 = vld [vmem:[#allocation10 + $0xe40] sm:$0xff]
        %v3479 = vld [vmem:[#allocation10 + $0xe48] sm:$0xff]
        %v3480 = vld [vmem:[#allocation10 + $0xe50] sm:$0xff]
        %v3481 = vld [vmem:[#allocation10 + $0xe58] sm:$0xff]
        %v3482 = vld [vmem:[#allocation10 + $0xe60] sm:$0xff]
        %v3483 = vld [vmem:[#allocation10 + $0xe68] sm:$0xff]
        %v3484 = vld [vmem:[#allocation10 + $0xe70] sm:$0xff]
        %v3485 = vld [vmem:[#allocation10 + $0xe78] sm:$0xff]
        %v3486 = vld [vmem:[#allocation10 + $0xe80] sm:$0xff]
        %v3487 = vld [vmem:[#allocation10 + $0xe88] sm:$0xff]
        %v3488 = vld [vmem:[#allocation10 + $0xe90] sm:$0xff]
        %v3489 = vld [vmem:[#allocation10 + $0xe98] sm:$0xff]
        %v3490 = vld [vmem:[#allocation10 + $0xea0] sm:$0xff]
        %v3491 = vld [vmem:[#allocation10 + $0xea8] sm:$0xff]
        %v3492 = vld [vmem:[#allocation10 + $0xeb0] sm:$0xff]
        %v3493 = vld [vmem:[#allocation10 + $0xeb8] sm:$0xff]
        %v3494 = vld [vmem:[#allocation10 + $0xec0] sm:$0xff]
        %v3495 = vld [vmem:[#allocation10 + $0xec8] sm:$0xff]
        %v3496 = vld [vmem:[#allocation10 + $0xed0] sm:$0xff]
        %v3497 = vld [vmem:[#allocation10 + $0xed8] sm:$0xff]
        %v3498 = vld [vmem:[#allocation10 + $0xee0] sm:$0xff]
        %v3499 = vld [vmem:[#allocation10 + $0xee8] sm:$0xff]
        %v3500 = vld [vmem:[#allocation10 + $0xef0] sm:$0xff]
        %v3501 = vld [vmem:[#allocation10 + $0xef8] sm:$0xff]
        %v3502 = vld [vmem:[#allocation10 + $0xf00] sm:$0xff]
        %v3503 = vld [vmem:[#allocation10 + $0xf08] sm:$0xff]
        %v3504 = vld [vmem:[#allocation10 + $0xf10] sm:$0xff]
        %v3505 = vld [vmem:[#allocation10 + $0xf18] sm:$0xff]
        %v3506 = vld [vmem:[#allocation10 + $0xf20] sm:$0xff]
        %v3507 = vld [vmem:[#allocation10 + $0xf28] sm:$0xff]
        %v3508 = vld [vmem:[#allocation10 + $0xf30] sm:$0xff]
        %v3509 = vld [vmem:[#allocation10 + $0xf38] sm:$0xff]
        %v3510 = vld [vmem:[#allocation10 + $0xf40] sm:$0xff]
        %v3511 = vld [vmem:[#allocation10 + $0xf48] sm:$0xff]
        %v3512 = vld [vmem:[#allocation10 + $0xf50] sm:$0xff]
        %v3513 = vld [vmem:[#allocation10 + $0xf58] sm:$0xff]
        %v3514 = vld [vmem:[#allocation10 + $0xf60] sm:$0xff]
        %v3515 = vld [vmem:[#allocation10 + $0xf68] sm:$0xff]
        %v3516 = vld [vmem:[#allocation10 + $0xf70] sm:$0xff]
        %v3517 = vld [vmem:[#allocation10 + $0xf78] sm:$0xff]
        %v3518 = vld [vmem:[#allocation10 + $0xf80] sm:$0xff]
        %v3519 = vld [vmem:[#allocation10 + $0xf88] sm:$0xff]
        %v3520 = vld [vmem:[#allocation10 + $0xf90] sm:$0xff]
        %v3521 = vld [vmem:[#allocation10 + $0xf98] sm:$0xff]
        %v3522 = vld [vmem:[#allocation10 + $0xfa0] sm:$0xff]
        %v3523 = vld [vmem:[#allocation10 + $0xfa8] sm:$0xff]
        %v3524 = vld [vmem:[#allocation10 + $0xfb0] sm:$0xff]
        %v3525 = vld [vmem:[#allocation10 + $0xfb8] sm:$0xff]
        %v3526 = vld [vmem:[#allocation10 + $0xfc0] sm:$0xff]
        %v3527 = vld [vmem:[#allocation10 + $0xfc8] sm:$0xff]
        %v3528 = vld [vmem:[#allocation10 + $0xfd0] sm:$0xff]
        %v3529 = vld [vmem:[#allocation10 + $0xfd8] sm:$0xff]
        %v3530 = vld [vmem:[#allocation10 + $0xfe0] sm:$0xff]
        %v3531 = vld [vmem:[#allocation10 + $0xfe8] sm:$0xff]
        %v3532 = vld [vmem:[#allocation10 + $0xff0] sm:$0xff]
        %v3533 = vld [vmem:[#allocation10 + $0xff8] sm:$0xff]
        %v3534 = vld [vmem:[#allocation10 + $0x1000] sm:$0xff]
        %v3535 = vld [vmem:[#allocation10 + $0x1008] sm:$0xff]
        %v3536 = vld [vmem:[#allocation10 + $0x1010] sm:$0xff]
        %v3537 = vld [vmem:[#allocation10 + $0x1018] sm:$0xff]
        %v3538 = vld [vmem:[#allocation10 + $0x1020] sm:$0xff]
        %v3539 = vld [vmem:[#allocation10 + $0x1028] sm:$0xff]
        %v3540 = vld [vmem:[#allocation10 + $0x1030] sm:$0xff]
        %v3541 = vld [vmem:[#allocation10 + $0x1038] sm:$0xff]
        %v3542 = vld [vmem:[#allocation10 + $0x1040] sm:$0xff]
        %v3543 = vld [vmem:[#allocation10 + $0x1048] sm:$0xff]
        %v3544 = vld [vmem:[#allocation10 + $0x1050] sm:$0xff]
        %v3545 = vld [vmem:[#allocation10 + $0x1058] sm:$0xff]
        %v3546 = vld [vmem:[#allocation10 + $0x1060] sm:$0xff]
        %v3547 = vld [vmem:[#allocation10 + $0x1068] sm:$0xff]
        %v3548 = vld [vmem:[#allocation10 + $0x1070] sm:$0xff]
        %v3549 = vld [vmem:[#allocation10 + $0x1078] sm:$0xff]
        %v3550 = vld [vmem:[#allocation10 + $0x1080] sm:$0xff]
        %v3551 = vld [vmem:[#allocation10 + $0x1088] sm:$0xff]
        %v3552 = vld [vmem:[#allocation10 + $0x1090] sm:$0xff]
        %v3553 = vld [vmem:[#allocation10 + $0x1098] sm:$0xff]
        %v3554 = vld [vmem:[#allocation10 + $0x10a0] sm:$0xff]
        %v3555 = vld [vmem:[#allocation10 + $0x10a8] sm:$0xff]
        %v3556 = vld [vmem:[#allocation10 + $0x10b0] sm:$0xff]
        %v3557 = vld [vmem:[#allocation10 + $0x10b8] sm:$0xff]
        %v3558 = vld [vmem:[#allocation10 + $0x10c0] sm:$0xff]
        %v3559 = vld [vmem:[#allocation10 + $0x10c8] sm:$0xff]
        %v3560 = vld [vmem:[#allocation10 + $0x10d0] sm:$0xff]
        %v3561 = vld [vmem:[#allocation10 + $0x10d8] sm:$0xff]
        %v3562 = vld [vmem:[#allocation10 + $0x10e0] sm:$0xff]
        %v3563 = vld [vmem:[#allocation10 + $0x10e8] sm:$0xff]
        %v3564 = vld [vmem:[#allocation10 + $0x10f0] sm:$0xff]
        %v3565 = vld [vmem:[#allocation10 + $0x10f8] sm:$0xff]
        %v3566 = vld [vmem:[#allocation10 + $0x1100] sm:$0xff]
        %v3567 = vld [vmem:[#allocation10 + $0x1108] sm:$0xff]
        %v3568 = vld [vmem:[#allocation10 + $0x1110] sm:$0xff]
        %v3569 = vld [vmem:[#allocation10 + $0x1118] sm:$0xff]
        %v3570 = vld [vmem:[#allocation10 + $0x1120] sm:$0xff]
        %v3571 = vld [vmem:[#allocation10 + $0x1128] sm:$0xff]
        %v3572 = vld [vmem:[#allocation10 + $0x1130] sm:$0xff]
        %v3573 = vld [vmem:[#allocation10 + $0x1138] sm:$0xff]
        %v3574 = vld [vmem:[#allocation10 + $0x1140] sm:$0xff]
        %v3575 = vld [vmem:[#allocation10 + $0x1148] sm:$0xff]
        %v3576 = vld [vmem:[#allocation10 + $0x1150] sm:$0xff]
        %v3577 = vld [vmem:[#allocation10 + $0x1158] sm:$0xff]
        %v3578 = vld [vmem:[#allocation10 + $0x1160] sm:$0xff]
        %v3579 = vld [vmem:[#allocation10 + $0x1168] sm:$0xff]
        %v3580 = vld [vmem:[#allocation10 + $0x1170] sm:$0xff]
        %v3581 = vld [vmem:[#allocation10 + $0x1178] sm:$0xff]
        %v3582 = vld [vmem:[#allocation10 + $0x1180] sm:$0xff]
        %v3583 = vld [vmem:[#allocation10 + $0x1188] sm:$0xff]
        %v3584 = vld [vmem:[#allocation10 + $0x1190] sm:$0xff]
        %v3585 = vld [vmem:[#allocation10 + $0x1198] sm:$0xff]
        %v3586 = vld [vmem:[#allocation10 + $0x11a0] sm:$0xff]
        %v3587 = vld [vmem:[#allocation10 + $0x11a8] sm:$0xff]
        %v3588 = vld [vmem:[#allocation10 + $0x11b0] sm:$0xff]
        %v3589 = vld [vmem:[#allocation10 + $0x11b8] sm:$0xff]
        %v3590 = vld [vmem:[#allocation10 + $0x11c0] sm:$0xff]
        %v3591 = vld [vmem:[#allocation10 + $0x11c8] sm:$0xff]
        %v3592 = vld [vmem:[#allocation10 + $0x11d0] sm:$0xff]
        %v3593 = vld [vmem:[#allocation10 + $0x11d8] sm:$0xff]
        %v3594 = vld [vmem:[#allocation10 + $0x11e0] sm:$0xff]
        %v3595 = vld [vmem:[#allocation10 + $0x11e8] sm:$0xff]
        %v3596 = vld [vmem:[#allocation10 + $0x11f0] sm:$0xff]
        %v3597 = vld [vmem:[#allocation10 + $0x11f8] sm:$0xff]
        %v3598 = vld [vmem:[#allocation12] sm:$0x3]
        %v3600 = vlaneseq
        %v3601 = vshrl.u32 %v3600, 7
        %v3602 = vsub.s32 0, %v3601
        %v3603 = vrot.slane %v3598, %v3602
        %v3604 = vlaneseq
        %v3605 = vshrl.u32 %v3604, 7
        %v3606 = vsub.s32 1, %v3605
        %v3607 = vrot.slane %v3598, %v3606
        %v4186 = vunpack.c.l.b16 %v3022
        %v4187 = vunpack.c.h.b16 %v3022
        %v4188 = vunpack.c.l.b16 %v3023
        %v4189 = vunpack.c.h.b16 %v3023
        %v4190 = vunpack.c.l.b16 %v3024
        %v4191 = vunpack.c.h.b16 %v3024
        %v4192 = vunpack.c.l.b16 %v3025
        %v4193 = vunpack.c.h.b16 %v3025
        %v4194 = vunpack.c.l.b16 %v3026
        %v4195 = vunpack.c.h.b16 %v3026
        %v4196 = vunpack.c.l.b16 %v3027
        %v4197 = vunpack.c.h.b16 %v3027
        %v4198 = vunpack.c.l.b16 %v3028
        %v4199 = vunpack.c.h.b16 %v3028
        %v4200 = vunpack.c.l.b16 %v3029
        %v4201 = vunpack.c.h.b16 %v3029
        %v4202 = vunpack.c.l.b16 %v3030
        %v4203 = vunpack.c.h.b16 %v3030
        %v4204 = vunpack.c.l.b16 %v3031
        %v4205 = vunpack.c.h.b16 %v3031
        %v4206 = vunpack.c.l.b16 %v3032
        %v4207 = vunpack.c.h.b16 %v3032
        %v4208 = vunpack.c.l.b16 %v3033
        %v4209 = vunpack.c.h.b16 %v3033
        %v4210 = vunpack.c.l.b16 %v3034
        %v4211 = vunpack.c.h.b16 %v3034
        %v4212 = vunpack.c.l.b16 %v3035
        %v4213 = vunpack.c.h.b16 %v3035
        %v4214 = vunpack.c.l.b16 %v3036
        %v4215 = vunpack.c.h.b16 %v3036
        %v4216 = vunpack.c.l.b16 %v3037
        %v4217 = vunpack.c.h.b16 %v3037
        %v4218 = vunpack.c.l.b16 %v3038
        %v4219 = vunpack.c.h.b16 %v3038
        %v4220 = vunpack.c.l.b16 %v3039
        %v4221 = vunpack.c.h.b16 %v3039
        %v4222 = vunpack.c.l.b16 %v3040
        %v4223 = vunpack.c.h.b16 %v3040
        %v4224 = vunpack.c.l.b16 %v3041
        %v4225 = vunpack.c.h.b16 %v3041
        %v4226 = vunpack.c.l.b16 %v3042
        %v4227 = vunpack.c.h.b16 %v3042
        %v4228 = vunpack.c.l.b16 %v3043
        %v4229 = vunpack.c.h.b16 %v3043
        %v4230 = vunpack.c.l.b16 %v3044
        %v4231 = vunpack.c.h.b16 %v3044
        %v4232 = vunpack.c.l.b16 %v3045
        %v4233 = vunpack.c.h.b16 %v3045
        %v4234 = vunpack.c.l.b16 %v3046
        %v4235 = vunpack.c.h.b16 %v3046
        %v4236 = vunpack.c.l.b16 %v3047
        %v4237 = vunpack.c.h.b16 %v3047
        %v4238 = vunpack.c.l.b16 %v3048
        %v4239 = vunpack.c.h.b16 %v3048
        %v4240 = vunpack.c.l.b16 %v3049
        %v4241 = vunpack.c.h.b16 %v3049
        %v4242 = vunpack.c.l.b16 %v3050
        %v4243 = vunpack.c.h.b16 %v3050
        %v4244 = vunpack.c.l.b16 %v3051
        %v4245 = vunpack.c.h.b16 %v3051
        %v4246 = vunpack.c.l.b16 %v3052
        %v4247 = vunpack.c.h.b16 %v3052
        %v4248 = vunpack.c.l.b16 %v3053
        %v4249 = vunpack.c.h.b16 %v3053
        %v4250 = vunpack.c.l.b16 %v3054
        %v4251 = vunpack.c.h.b16 %v3054
        %v4252 = vunpack.c.l.b16 %v3055
        %v4253 = vunpack.c.h.b16 %v3055
        %v4254 = vunpack.c.l.b16 %v3056
        %v4255 = vunpack.c.h.b16 %v3056
        %v4256 = vunpack.c.l.b16 %v3057
        %v4257 = vunpack.c.h.b16 %v3057
        %v4258 = vunpack.c.l.b16 %v3058
        %v4259 = vunpack.c.h.b16 %v3058
        %v4260 = vunpack.c.l.b16 %v3059
        %v4261 = vunpack.c.h.b16 %v3059
        %v4262 = vunpack.c.l.b16 %v3060
        %v4263 = vunpack.c.h.b16 %v3060
        %v4264 = vunpack.c.l.b16 %v3061
        %v4265 = vunpack.c.h.b16 %v3061
        %v4266 = vunpack.c.l.b16 %v3062
        %v4267 = vunpack.c.h.b16 %v3062
        %v4268 = vunpack.c.l.b16 %v3063
        %v4269 = vunpack.c.h.b16 %v3063
        %v4270 = vunpack.c.l.b16 %v3064
        %v4271 = vunpack.c.h.b16 %v3064
        %v4272 = vunpack.c.l.b16 %v3065
        %v4273 = vunpack.c.h.b16 %v3065
        %v4274 = vunpack.c.l.b16 %v3066
        %v4275 = vunpack.c.h.b16 %v3066
        %v4276 = vunpack.c.l.b16 %v3067
        %v4277 = vunpack.c.h.b16 %v3067
        %v4278 = vunpack.c.l.b16 %v3068
        %v4279 = vunpack.c.h.b16 %v3068
        %v4280 = vunpack.c.l.b16 %v3069
        %v4281 = vunpack.c.h.b16 %v3069
        %v4282 = vunpack.c.l.b16 %v3070
        %v4283 = vunpack.c.h.b16 %v3070
        %v4284 = vunpack.c.l.b16 %v3071
        %v4285 = vunpack.c.h.b16 %v3071
        %v4286 = vunpack.c.l.b16 %v3072
        %v4287 = vunpack.c.h.b16 %v3072
        %v4288 = vunpack.c.l.b16 %v3073
        %v4289 = vunpack.c.h.b16 %v3073
        %v4290 = vunpack.c.l.b16 %v3074
        %v4291 = vunpack.c.h.b16 %v3074
        %v4292 = vunpack.c.l.b16 %v3075
        %v4293 = vunpack.c.h.b16 %v3075
        %v4294 = vunpack.c.l.b16 %v3076
        %v4295 = vunpack.c.h.b16 %v3076
        %v4296 = vunpack.c.l.b16 %v3077
        %v4297 = vunpack.c.h.b16 %v3077
        %v4298 = vunpack.c.l.b16 %v3078
        %v4299 = vunpack.c.h.b16 %v3078
        %v4300 = vunpack.c.l.b16 %v3079
        %v4301 = vunpack.c.h.b16 %v3079
        %v4302 = vunpack.c.l.b16 %v3080
        %v4303 = vunpack.c.h.b16 %v3080
        %v4304 = vunpack.c.l.b16 %v3081
        %v4305 = vunpack.c.h.b16 %v3081
        %v4306 = vunpack.c.l.b16 %v3082
        %v4307 = vunpack.c.h.b16 %v3082
        %v4308 = vunpack.c.l.b16 %v3083
        %v4309 = vunpack.c.h.b16 %v3083
        %v4310 = vunpack.c.l.b16 %v3084
        %v4311 = vunpack.c.h.b16 %v3084
        %v4312 = vunpack.c.l.b16 %v3085
        %v4313 = vunpack.c.h.b16 %v3085
        %v4314 = vunpack.c.l.b16 %v3086
        %v4315 = vunpack.c.h.b16 %v3086
        %v4316 = vunpack.c.l.b16 %v3087
        %v4317 = vunpack.c.h.b16 %v3087
        %v4318 = vunpack.c.l.b16 %v3088
        %v4319 = vunpack.c.h.b16 %v3088
        %v4320 = vunpack.c.l.b16 %v3089
        %v4321 = vunpack.c.h.b16 %v3089
        %v4322 = vunpack.c.l.b16 %v3090
        %v4323 = vunpack.c.h.b16 %v3090
        %v4324 = vunpack.c.l.b16 %v3091
        %v4325 = vunpack.c.h.b16 %v3091
        %v4326 = vunpack.c.l.b16 %v3092
        %v4327 = vunpack.c.h.b16 %v3092
        %v4328 = vunpack.c.l.b16 %v3093
        %v4329 = vunpack.c.h.b16 %v3093
        %v4330 = vunpack.c.l.b16 %v3094
        %v4331 = vunpack.c.h.b16 %v3094
        %v4332 = vunpack.c.l.b16 %v3095
        %v4333 = vunpack.c.h.b16 %v3095
        %v4334 = vunpack.c.l.b16 %v3096
        %v4335 = vunpack.c.h.b16 %v3096
        %v4336 = vunpack.c.l.b16 %v3097
        %v4337 = vunpack.c.h.b16 %v3097
        %v4338 = vunpack.c.l.b16 %v3098
        %v4339 = vunpack.c.h.b16 %v3098
        %v4340 = vunpack.c.l.b16 %v3099
        %v4341 = vunpack.c.h.b16 %v3099
        %v4342 = vunpack.c.l.b16 %v3100
        %v4343 = vunpack.c.h.b16 %v3100
        %v4344 = vunpack.c.l.b16 %v3101
        %v4345 = vunpack.c.h.b16 %v3101
        %v4346 = vunpack.c.l.b16 %v3102
        %v4347 = vunpack.c.h.b16 %v3102
        %v4348 = vunpack.c.l.b16 %v3103
        %v4349 = vunpack.c.h.b16 %v3103
        %v4350 = vunpack.c.l.b16 %v3104
        %v4351 = vunpack.c.h.b16 %v3104
        %v4352 = vunpack.c.l.b16 %v3105
        %v4353 = vunpack.c.h.b16 %v3105
        %v4354 = vunpack.c.l.b16 %v3106
        %v4355 = vunpack.c.h.b16 %v3106
        %v4356 = vunpack.c.l.b16 %v3107
        %v4357 = vunpack.c.h.b16 %v3107
        %v4358 = vunpack.c.l.b16 %v3108
        %v4359 = vunpack.c.h.b16 %v3108
        %v4360 = vunpack.c.l.b16 %v3109
        %v4361 = vunpack.c.h.b16 %v3109
        %v4362 = vunpack.c.l.b16 %v3110
        %v4363 = vunpack.c.h.b16 %v3110
        %v4364 = vunpack.c.l.b16 %v3111
        %v4365 = vunpack.c.h.b16 %v3111
        %v4366 = vunpack.c.l.b16 %v3112
        %v4367 = vunpack.c.h.b16 %v3112
        %v4368 = vunpack.c.l.b16 %v3113
        %v4369 = vunpack.c.h.b16 %v3113
        %v4370 = vunpack.c.l.b16 %v3114
        %v4371 = vunpack.c.h.b16 %v3114
        %v4372 = vunpack.c.l.b16 %v3115
        %v4373 = vunpack.c.h.b16 %v3115
        %v4374 = vunpack.c.l.b16 %v3116
        %v4375 = vunpack.c.h.b16 %v3116
        %v4376 = vunpack.c.l.b16 %v3117
        %v4377 = vunpack.c.h.b16 %v3117
        %v4378 = vunpack.c.l.b16 %v3118
        %v4379 = vunpack.c.h.b16 %v3118
        %v4380 = vunpack.c.l.b16 %v3119
        %v4381 = vunpack.c.h.b16 %v3119
        %v4382 = vunpack.c.l.b16 %v3120
        %v4383 = vunpack.c.h.b16 %v3120
        %v4384 = vunpack.c.l.b16 %v3121
        %v4385 = vunpack.c.h.b16 %v3121
        %v4386 = vunpack.c.l.b16 %v3122
        %v4387 = vunpack.c.h.b16 %v3122
        %v4388 = vunpack.c.l.b16 %v3123
        %v4389 = vunpack.c.h.b16 %v3123
        %v4390 = vunpack.c.l.b16 %v3124
        %v4391 = vunpack.c.h.b16 %v3124
        %v4392 = vunpack.c.l.b16 %v3125
        %v4393 = vunpack.c.h.b16 %v3125
        %v4394 = vunpack.c.l.b16 %v3126
        %v4395 = vunpack.c.h.b16 %v3126
        %v4396 = vunpack.c.l.b16 %v3127
        %v4397 = vunpack.c.h.b16 %v3127
        %v4398 = vunpack.c.l.b16 %v3128
        %v4399 = vunpack.c.h.b16 %v3128
        %v4400 = vunpack.c.l.b16 %v3129
        %v4401 = vunpack.c.h.b16 %v3129
        %v4402 = vunpack.c.l.b16 %v3130
        %v4403 = vunpack.c.h.b16 %v3130
        %v4404 = vunpack.c.l.b16 %v3131
        %v4405 = vunpack.c.h.b16 %v3131
        %v4406 = vunpack.c.l.b16 %v3132
        %v4407 = vunpack.c.h.b16 %v3132
        %v4408 = vunpack.c.l.b16 %v3133
        %v4409 = vunpack.c.h.b16 %v3133
        %v4410 = vunpack.c.l.b16 %v3134
        %v4411 = vunpack.c.h.b16 %v3134
        %v4412 = vunpack.c.l.b16 %v3135
        %v4413 = vunpack.c.h.b16 %v3135
        %v4414 = vunpack.c.l.b16 %v3136
        %v4415 = vunpack.c.h.b16 %v3136
        %v4416 = vunpack.c.l.b16 %v3137
        %v4417 = vunpack.c.h.b16 %v3137
        %v4418 = vunpack.c.l.b16 %v3138
        %v4419 = vunpack.c.h.b16 %v3138
        %v4420 = vunpack.c.l.b16 %v3139
        %v4421 = vunpack.c.h.b16 %v3139
        %v4422 = vunpack.c.l.b16 %v3140
        %v4423 = vunpack.c.h.b16 %v3140
        %v4424 = vunpack.c.l.b16 %v3141
        %v4425 = vunpack.c.h.b16 %v3141
        %v4426 = vunpack.c.l.b16 %v3142
        %v4427 = vunpack.c.h.b16 %v3142
        %v4428 = vunpack.c.l.b16 %v3143
        %v4429 = vunpack.c.h.b16 %v3143
        %v4430 = vunpack.c.l.b16 %v3144
        %v4431 = vunpack.c.h.b16 %v3144
        %v4432 = vunpack.c.l.b16 %v3145
        %v4433 = vunpack.c.h.b16 %v3145
        %v4434 = vunpack.c.l.b16 %v3146
        %v4435 = vunpack.c.h.b16 %v3146
        %v4436 = vunpack.c.l.b16 %v3147
        %v4437 = vunpack.c.h.b16 %v3147
        %v4438 = vunpack.c.l.b16 %v3148
        %v4439 = vunpack.c.h.b16 %v3148
        %v4440 = vunpack.c.l.b16 %v3149
        %v4441 = vunpack.c.h.b16 %v3149
        %v4442 = vunpack.c.l.b16 %v3150
        %v4443 = vunpack.c.h.b16 %v3150
        %v4444 = vunpack.c.l.b16 %v3151
        %v4445 = vunpack.c.h.b16 %v3151
        %v4446 = vunpack.c.l.b16 %v3152
        %v4447 = vunpack.c.h.b16 %v3152
        %v4448 = vunpack.c.l.b16 %v3153
        %v4449 = vunpack.c.h.b16 %v3153
        %v4450 = vunpack.c.l.b16 %v3154
        %v4451 = vunpack.c.h.b16 %v3154
        %v4452 = vunpack.c.l.b16 %v3155
        %v4453 = vunpack.c.h.b16 %v3155
        %v4454 = vunpack.c.l.b16 %v3156
        %v4455 = vunpack.c.h.b16 %v3156
        %v4456 = vunpack.c.l.b16 %v3157
        %v4457 = vunpack.c.h.b16 %v3157
        %v4458 = vunpack.c.l.b16 %v3158
        %v4459 = vunpack.c.h.b16 %v3158
        %v4460 = vunpack.c.l.b16 %v3159
        %v4461 = vunpack.c.h.b16 %v3159
        %v4462 = vunpack.c.l.b16 %v3160
        %v4463 = vunpack.c.h.b16 %v3160
        %v4464 = vunpack.c.l.b16 %v3161
        %v4465 = vunpack.c.h.b16 %v3161
        %v4466 = vunpack.c.l.b16 %v3162
        %v4467 = vunpack.c.h.b16 %v3162
        %v4468 = vunpack.c.l.b16 %v3163
        %v4469 = vunpack.c.h.b16 %v3163
        %v4470 = vunpack.c.l.b16 %v3164
        %v4471 = vunpack.c.h.b16 %v3164
        %v4472 = vunpack.c.l.b16 %v3165
        %v4473 = vunpack.c.h.b16 %v3165
        %v4474 = vunpack.c.l.b16 %v3166
        %v4475 = vunpack.c.h.b16 %v3166
        %v4476 = vunpack.c.l.b16 %v3167
        %v4477 = vunpack.c.h.b16 %v3167
        %v4478 = vunpack.c.l.b16 %v3168
        %v4479 = vunpack.c.h.b16 %v3168
        %v4480 = vunpack.c.l.b16 %v3169
        %v4481 = vunpack.c.h.b16 %v3169
        %v4482 = vunpack.c.l.b16 %v3170
        %v4483 = vunpack.c.h.b16 %v3170
        %v4484 = vunpack.c.l.b16 %v3171
        %v4485 = vunpack.c.h.b16 %v3171
        %v4486 = vunpack.c.l.b16 %v3172
        %v4487 = vunpack.c.h.b16 %v3172
        %v4488 = vunpack.c.l.b16 %v3173
        %v4489 = vunpack.c.h.b16 %v3173
        %v4490 = vunpack.c.l.b16 %v3174
        %v4491 = vunpack.c.h.b16 %v3174
        %v4492 = vunpack.c.l.b16 %v3175
        %v4493 = vunpack.c.h.b16 %v3175
        %v4494 = vunpack.c.l.b16 %v3176
        %v4495 = vunpack.c.h.b16 %v3176
        %v4496 = vunpack.c.l.b16 %v3177
        %v4497 = vunpack.c.h.b16 %v3177
        %v4498 = vunpack.c.l.b16 %v3178
        %v4499 = vunpack.c.h.b16 %v3178
        %v4500 = vunpack.c.l.b16 %v3179
        %v4501 = vunpack.c.h.b16 %v3179
        %v4502 = vunpack.c.l.b16 %v3180
        %v4503 = vunpack.c.h.b16 %v3180
        %v4504 = vunpack.c.l.b16 %v3181
        %v4505 = vunpack.c.h.b16 %v3181
        %v4506 = vunpack.c.l.b16 %v3182
        %v4507 = vunpack.c.h.b16 %v3182
        %v4508 = vunpack.c.l.b16 %v3183
        %v4509 = vunpack.c.h.b16 %v3183
        %v4510 = vunpack.c.l.b16 %v3184
        %v4511 = vunpack.c.h.b16 %v3184
        %v4512 = vunpack.c.l.b16 %v3185
        %v4513 = vunpack.c.h.b16 %v3185
        %v4514 = vunpack.c.l.b16 %v3186
        %v4515 = vunpack.c.h.b16 %v3186
        %v4516 = vunpack.c.l.b16 %v3187
        %v4517 = vunpack.c.h.b16 %v3187
        %v4518 = vunpack.c.l.b16 %v3188
        %v4519 = vunpack.c.h.b16 %v3188
        %v4520 = vunpack.c.l.b16 %v3189
        %v4521 = vunpack.c.h.b16 %v3189
        %v4522 = vunpack.c.l.b16 %v3190
        %v4523 = vunpack.c.h.b16 %v3190
        %v4524 = vunpack.c.l.b16 %v3191
        %v4525 = vunpack.c.h.b16 %v3191
        %v4526 = vunpack.c.l.b16 %v3192
        %v4527 = vunpack.c.h.b16 %v3192
        %v4528 = vunpack.c.l.b16 %v3193
        %v4529 = vunpack.c.h.b16 %v3193
        %v4530 = vunpack.c.l.b16 %v3194
        %v4531 = vunpack.c.h.b16 %v3194
        %v4532 = vunpack.c.l.b16 %v3195
        %v4533 = vunpack.c.h.b16 %v3195
        %v4534 = vunpack.c.l.b16 %v3196
        %v4535 = vunpack.c.h.b16 %v3196
        %v4536 = vunpack.c.l.b16 %v3197
        %v4537 = vunpack.c.h.b16 %v3197
        %v4538 = vunpack.c.l.b16 %v3198
        %v4539 = vunpack.c.h.b16 %v3198
        %v4540 = vunpack.c.l.b16 %v3199
        %v4541 = vunpack.c.h.b16 %v3199
        %v4542 = vunpack.c.l.b16 %v3200
        %v4543 = vunpack.c.h.b16 %v3200
        %v4544 = vunpack.c.l.b16 %v3201
        %v4545 = vunpack.c.h.b16 %v3201
        %v4546 = vunpack.c.l.b16 %v3202
        %v4547 = vunpack.c.h.b16 %v3202
        %v4548 = vunpack.c.l.b16 %v3203
        %v4549 = vunpack.c.h.b16 %v3203
        %v4550 = vunpack.c.l.b16 %v3204
        %v4551 = vunpack.c.h.b16 %v3204
        %v4552 = vunpack.c.l.b16 %v3205
        %v4553 = vunpack.c.h.b16 %v3205
        %v4554 = vunpack.c.l.b16 %v3206
        %v4555 = vunpack.c.h.b16 %v3206
        %v4556 = vunpack.c.l.b16 %v3207
        %v4557 = vunpack.c.h.b16 %v3207
        %v4558 = vunpack.c.l.b16 %v3208
        %v4559 = vunpack.c.h.b16 %v3208
        %v4560 = vunpack.c.l.b16 %v3209
        %v4561 = vunpack.c.h.b16 %v3209
        %v4562 = vunpack.c.l.b16 %v3210
        %v4563 = vunpack.c.h.b16 %v3210
        %v4564 = vunpack.c.l.b16 %v3211
        %v4565 = vunpack.c.h.b16 %v3211
        %v4566 = vunpack.c.l.b16 %v3212
        %v4567 = vunpack.c.h.b16 %v3212
        %v4568 = vunpack.c.l.b16 %v3213
        %v4569 = vunpack.c.h.b16 %v3213
        %v4570 = vunpack.c.l.b16 %v3214
        %v4571 = vunpack.c.h.b16 %v3214
        %v4572 = vunpack.c.l.b16 %v3215
        %v4573 = vunpack.c.h.b16 %v3215
        %v4574 = vunpack.c.l.b16 %v3216
        %v4575 = vunpack.c.h.b16 %v3216
        %v4576 = vunpack.c.l.b16 %v3217
        %v4577 = vunpack.c.h.b16 %v3217
        %v4578 = vunpack.c.l.b16 %v3218
        %v4579 = vunpack.c.h.b16 %v3218
        %v4580 = vunpack.c.l.b16 %v3219
        %v4581 = vunpack.c.h.b16 %v3219
        %v4582 = vunpack.c.l.b16 %v3220
        %v4583 = vunpack.c.h.b16 %v3220
        %v4584 = vunpack.c.l.b16 %v3221
        %v4585 = vunpack.c.h.b16 %v3221
        %v4586 = vunpack.c.l.b16 %v3222
        %v4587 = vunpack.c.h.b16 %v3222
        %v4588 = vunpack.c.l.b16 %v3223
        %v4589 = vunpack.c.h.b16 %v3223
        %v4590 = vunpack.c.l.b16 %v3224
        %v4591 = vunpack.c.h.b16 %v3224
        %v4592 = vunpack.c.l.b16 %v3225
        %v4593 = vunpack.c.h.b16 %v3225
        %v4594 = vunpack.c.l.b16 %v3226
        %v4595 = vunpack.c.h.b16 %v3226
        %v4596 = vunpack.c.l.b16 %v3227
        %v4597 = vunpack.c.h.b16 %v3227
        %v4598 = vunpack.c.l.b16 %v3228
        %v4599 = vunpack.c.h.b16 %v3228
        %v4600 = vunpack.c.l.b16 %v3229
        %v4601 = vunpack.c.h.b16 %v3229
        %v4602 = vunpack.c.l.b16 %v3230
        %v4603 = vunpack.c.h.b16 %v3230
        %v4604 = vunpack.c.l.b16 %v3231
        %v4605 = vunpack.c.h.b16 %v3231
        %v4606 = vunpack.c.l.b16 %v3232
        %v4607 = vunpack.c.h.b16 %v3232
        %v4608 = vunpack.c.l.b16 %v3233
        %v4609 = vunpack.c.h.b16 %v3233
        %v4610 = vunpack.c.l.b16 %v3234
        %v4611 = vunpack.c.h.b16 %v3234
        %v4612 = vunpack.c.l.b16 %v3235
        %v4613 = vunpack.c.h.b16 %v3235
        %v4614 = vunpack.c.l.b16 %v3236
        %v4615 = vunpack.c.h.b16 %v3236
        %v4616 = vunpack.c.l.b16 %v3237
        %v4617 = vunpack.c.h.b16 %v3237
        %v4618 = vunpack.c.l.b16 %v3238
        %v4619 = vunpack.c.h.b16 %v3238
        %v4620 = vunpack.c.l.b16 %v3239
        %v4621 = vunpack.c.h.b16 %v3239
        %v4622 = vunpack.c.l.b16 %v3240
        %v4623 = vunpack.c.h.b16 %v3240
        %v4624 = vunpack.c.l.b16 %v3241
        %v4625 = vunpack.c.h.b16 %v3241
        %v4626 = vunpack.c.l.b16 %v3242
        %v4627 = vunpack.c.h.b16 %v3242
        %v4628 = vunpack.c.l.b16 %v3243
        %v4629 = vunpack.c.h.b16 %v3243
        %v4630 = vunpack.c.l.b16 %v3244
        %v4631 = vunpack.c.h.b16 %v3244
        %v4632 = vunpack.c.l.b16 %v3245
        %v4633 = vunpack.c.h.b16 %v3245
        %v4634 = vunpack.c.l.b16 %v3246
        %v4635 = vunpack.c.h.b16 %v3246
        %v4636 = vunpack.c.l.b16 %v3247
        %v4637 = vunpack.c.h.b16 %v3247
        %v4638 = vunpack.c.l.b16 %v3248
        %v4639 = vunpack.c.h.b16 %v3248
        %v4640 = vunpack.c.l.b16 %v3249
        %v4641 = vunpack.c.h.b16 %v3249
        %v4642 = vunpack.c.l.b16 %v3250
        %v4643 = vunpack.c.h.b16 %v3250
        %v4644 = vunpack.c.l.b16 %v3251
        %v4645 = vunpack.c.h.b16 %v3251
        %v4646 = vunpack.c.l.b16 %v3252
        %v4647 = vunpack.c.h.b16 %v3252
        %v4648 = vunpack.c.l.b16 %v3253
        %v4649 = vunpack.c.h.b16 %v3253
        %v4650 = vunpack.c.l.b16 %v3254
        %v4651 = vunpack.c.h.b16 %v3254
        %v4652 = vunpack.c.l.b16 %v3255
        %v4653 = vunpack.c.h.b16 %v3255
        %v4654 = vunpack.c.l.b16 %v3256
        %v4655 = vunpack.c.h.b16 %v3256
        %v4656 = vunpack.c.l.b16 %v3257
        %v4657 = vunpack.c.h.b16 %v3257
        %v4658 = vunpack.c.l.b16 %v3258
        %v4659 = vunpack.c.h.b16 %v3258
        %v4660 = vunpack.c.l.b16 %v3259
        %v4661 = vunpack.c.h.b16 %v3259
        %v4662 = vunpack.c.l.b16 %v3260
        %v4663 = vunpack.c.h.b16 %v3260
        %v4664 = vunpack.c.l.b16 %v3261
        %v4665 = vunpack.c.h.b16 %v3261
        %v4666 = vunpack.c.l.b16 %v3262
        %v4667 = vunpack.c.h.b16 %v3262
        %v4668 = vunpack.c.l.b16 %v3263
        %v4669 = vunpack.c.h.b16 %v3263
        %v4670 = vunpack.c.l.b16 %v3264
        %v4671 = vunpack.c.h.b16 %v3264
        %v4672 = vunpack.c.l.b16 %v3265
        %v4673 = vunpack.c.h.b16 %v3265
        %v4674 = vunpack.c.l.b16 %v3266
        %v4675 = vunpack.c.h.b16 %v3266
        %v4676 = vunpack.c.l.b16 %v3267
        %v4677 = vunpack.c.h.b16 %v3267
        %v4678 = vunpack.c.l.b16 %v3268
        %v4679 = vunpack.c.h.b16 %v3268
        %v4680 = vunpack.c.l.b16 %v3269
        %v4681 = vunpack.c.h.b16 %v3269
        %v4682 = vunpack.c.l.b16 %v3270
        %v4683 = vunpack.c.h.b16 %v3270
        %v4684 = vunpack.c.l.b16 %v3271
        %v4685 = vunpack.c.h.b16 %v3271
        %v4686 = vunpack.c.l.b16 %v3272
        %v4687 = vunpack.c.h.b16 %v3272
        %v4688 = vunpack.c.l.b16 %v3273
        %v4689 = vunpack.c.h.b16 %v3273
        %v4690 = vunpack.c.l.b16 %v3274
        %v4691 = vunpack.c.h.b16 %v3274
        %v4692 = vunpack.c.l.b16 %v3275
        %v4693 = vunpack.c.h.b16 %v3275
        %v4694 = vunpack.c.l.b16 %v3276
        %v4695 = vunpack.c.h.b16 %v3276
        %v4696 = vunpack.c.l.b16 %v3277
        %v4697 = vunpack.c.h.b16 %v3277
        %v4698 = vunpack.c.l.b16 %v3278
        %v4699 = vunpack.c.h.b16 %v3278
        %v4700 = vunpack.c.l.b16 %v3279
        %v4701 = vunpack.c.h.b16 %v3279
        %v4702 = vunpack.c.l.b16 %v3280
        %v4703 = vunpack.c.h.b16 %v3280
        %v4704 = vunpack.c.l.b16 %v3281
        %v4705 = vunpack.c.h.b16 %v3281
        %v4706 = vunpack.c.l.b16 %v3282
        %v4707 = vunpack.c.h.b16 %v3282
        %v4708 = vunpack.c.l.b16 %v3283
        %v4709 = vunpack.c.h.b16 %v3283
        %v4710 = vunpack.c.l.b16 %v3284
        %v4711 = vunpack.c.h.b16 %v3284
        %v4712 = vunpack.c.l.b16 %v3285
        %v4713 = vunpack.c.h.b16 %v3285
        %v4714 = vunpack.c.l.b16 %v3286
        %v4715 = vunpack.c.h.b16 %v3286
        %v4716 = vunpack.c.l.b16 %v3287
        %v4717 = vunpack.c.h.b16 %v3287
        %v4718 = vunpack.c.l.b16 %v3288
        %v4719 = vunpack.c.h.b16 %v3288
        %v4720 = vunpack.c.l.b16 %v3289
        %v4721 = vunpack.c.h.b16 %v3289
        %v4722 = vunpack.c.l.b16 %v3290
        %v4723 = vunpack.c.h.b16 %v3290
        %v4724 = vunpack.c.l.b16 %v3291
        %v4725 = vunpack.c.h.b16 %v3291
        %v4726 = vunpack.c.l.b16 %v3292
        %v4727 = vunpack.c.h.b16 %v3292
        %v4728 = vunpack.c.l.b16 %v3293
        %v4729 = vunpack.c.h.b16 %v3293
        %v4730 = vunpack.c.l.b16 %v3294
        %v4731 = vunpack.c.h.b16 %v3294
        %v4732 = vunpack.c.l.b16 %v3295
        %v4733 = vunpack.c.h.b16 %v3295
        %v4734 = vunpack.c.l.b16 %v3296
        %v4735 = vunpack.c.h.b16 %v3296
        %v4736 = vunpack.c.l.b16 %v3297
        %v4737 = vunpack.c.h.b16 %v3297
        %v4738 = vunpack.c.l.b16 %v3298
        %v4739 = vunpack.c.h.b16 %v3298
        %v4740 = vunpack.c.l.b16 %v3299
        %v4741 = vunpack.c.h.b16 %v3299
        %v4742 = vunpack.c.l.b16 %v3300
        %v4743 = vunpack.c.h.b16 %v3300
        %v4744 = vunpack.c.l.b16 %v3301
        %v4745 = vunpack.c.h.b16 %v3301
        %v4746 = vunpack.c.l.b16 %v3302
        %v4747 = vunpack.c.h.b16 %v3302
        %v4748 = vunpack.c.l.b16 %v3303
        %v4749 = vunpack.c.h.b16 %v3303
        %v4750 = vunpack.c.l.b16 %v3304
        %v4751 = vunpack.c.h.b16 %v3304
        %v4752 = vunpack.c.l.b16 %v3305
        %v4753 = vunpack.c.h.b16 %v3305
        %v4754 = vunpack.c.l.b16 %v3306
        %v4755 = vunpack.c.h.b16 %v3306
        %v4756 = vunpack.c.l.b16 %v3307
        %v4757 = vunpack.c.h.b16 %v3307
        %v4758 = vunpack.c.l.b16 %v3308
        %v4759 = vunpack.c.h.b16 %v3308
        %v4760 = vunpack.c.l.b16 %v3309
        %v4761 = vunpack.c.h.b16 %v3309
        %v4762 = vunpack.c.l.b16 %v3310
        %v4763 = vunpack.c.h.b16 %v3310
        %v4764 = vunpack.c.l.b16 %v3311
        %v4765 = vunpack.c.h.b16 %v3311
        %v4766 = vunpack.c.l.b16 %v3312
        %v4767 = vunpack.c.h.b16 %v3312
        %v4768 = vunpack.c.l.b16 %v3313
        %v4769 = vunpack.c.h.b16 %v3313
        %v4770 = vunpack.c.l.b16 %v3314
        %v4771 = vunpack.c.h.b16 %v3314
        %v4772 = vunpack.c.l.b16 %v3315
        %v4773 = vunpack.c.h.b16 %v3315
        %v4774 = vunpack.c.l.b16 %v3316
        %v4775 = vunpack.c.h.b16 %v3316
        %v4776 = vunpack.c.l.b16 %v3317
        %v4777 = vunpack.c.h.b16 %v3317
        %v4778 = vunpack.c.l.b16 %v3318
        %v4779 = vunpack.c.h.b16 %v3318
        %v4780 = vunpack.c.l.b16 %v3319
        %v4781 = vunpack.c.h.b16 %v3319
        %v4782 = vunpack.c.l.b16 %v3320
        %v4783 = vunpack.c.h.b16 %v3320
        %v4784 = vunpack.c.l.b16 %v3321
        %v4785 = vunpack.c.h.b16 %v3321
        %v4786 = vunpack.c.l.b16 %v3322
        %v4787 = vunpack.c.h.b16 %v3322
        %v4788 = vunpack.c.l.b16 %v3323
        %v4789 = vunpack.c.h.b16 %v3323
        %v4790 = vunpack.c.l.b16 %v3324
        %v4791 = vunpack.c.h.b16 %v3324
        %v4792 = vunpack.c.l.b16 %v3325
        %v4793 = vunpack.c.h.b16 %v3325
        %v4794 = vunpack.c.l.b16 %v3326
        %v4795 = vunpack.c.h.b16 %v3326
        %v4796 = vunpack.c.l.b16 %v3327
        %v4797 = vunpack.c.h.b16 %v3327
        %v4798 = vunpack.c.l.b16 %v3328
        %v4799 = vunpack.c.h.b16 %v3328
        %v4800 = vunpack.c.l.b16 %v3329
        %v4801 = vunpack.c.h.b16 %v3329
        %v4802 = vunpack.c.l.b16 %v3330
        %v4803 = vunpack.c.h.b16 %v3330
        %v4804 = vunpack.c.l.b16 %v3331
        %v4805 = vunpack.c.h.b16 %v3331
        %v4806 = vunpack.c.l.b16 %v3332
        %v4807 = vunpack.c.h.b16 %v3332
        %v4808 = vunpack.c.l.b16 %v3333
        %v4809 = vunpack.c.h.b16 %v3333
        %v4810 = vunpack.c.l.b16 %v3334
        %v4811 = vunpack.c.h.b16 %v3334
        %v4812 = vunpack.c.l.b16 %v3335
        %v4813 = vunpack.c.h.b16 %v3335
        %v4814 = vunpack.c.l.b16 %v3336
        %v4815 = vunpack.c.h.b16 %v3336
        %v4816 = vunpack.c.l.b16 %v3337
        %v4817 = vunpack.c.h.b16 %v3337
        %v4818 = vunpack.c.l.b16 %v3338
        %v4819 = vunpack.c.h.b16 %v3338
        %v4820 = vunpack.c.l.b16 %v3339
        %v4821 = vunpack.c.h.b16 %v3339
        %v4822 = vunpack.c.l.b16 %v3340
        %v4823 = vunpack.c.h.b16 %v3340
        %v4824 = vunpack.c.l.b16 %v3341
        %v4825 = vunpack.c.h.b16 %v3341
        %v4826 = vunpack.c.l.b16 %v3342
        %v4827 = vunpack.c.h.b16 %v3342
        %v4828 = vunpack.c.l.b16 %v3343
        %v4829 = vunpack.c.h.b16 %v3343
        %v4830 = vunpack.c.l.b16 %v3344
        %v4831 = vunpack.c.h.b16 %v3344
        %v4832 = vunpack.c.l.b16 %v3345
        %v4833 = vunpack.c.h.b16 %v3345
        %v4834 = vunpack.c.l.b16 %v3346
        %v4835 = vunpack.c.h.b16 %v3346
        %v4836 = vunpack.c.l.b16 %v3347
        %v4837 = vunpack.c.h.b16 %v3347
        %v4838 = vunpack.c.l.b16 %v3348
        %v4839 = vunpack.c.h.b16 %v3348
        %v4840 = vunpack.c.l.b16 %v3349
        %v4841 = vunpack.c.h.b16 %v3349
        %v4842 = vunpack.c.l.b16 %v3350
        %v4843 = vunpack.c.h.b16 %v3350
        %v4844 = vunpack.c.l.b16 %v3351
        %v4845 = vunpack.c.h.b16 %v3351
        %v4846 = vunpack.c.l.b16 %v3352
        %v4847 = vunpack.c.h.b16 %v3352
        %v4848 = vunpack.c.l.b16 %v3353
        %v4849 = vunpack.c.h.b16 %v3353
        %v4850 = vunpack.c.l.b16 %v3354
        %v4851 = vunpack.c.h.b16 %v3354
        %v4852 = vunpack.c.l.b16 %v3355
        %v4853 = vunpack.c.h.b16 %v3355
        %v4854 = vunpack.c.l.b16 %v3356
        %v4855 = vunpack.c.h.b16 %v3356
        %v4856 = vunpack.c.l.b16 %v3357
        %v4857 = vunpack.c.h.b16 %v3357
        %v4858 = vunpack.c.l.b16 %v3358
        %v4859 = vunpack.c.h.b16 %v3358
        %v4860 = vunpack.c.l.b16 %v3359
        %v4861 = vunpack.c.h.b16 %v3359
        %v4862 = vunpack.c.l.b16 %v3360
        %v4863 = vunpack.c.h.b16 %v3360
        %v4864 = vunpack.c.l.b16 %v3361
        %v4865 = vunpack.c.h.b16 %v3361
        %v4866 = vunpack.c.l.b16 %v3362
        %v4867 = vunpack.c.h.b16 %v3362
        %v4868 = vunpack.c.l.b16 %v3363
        %v4869 = vunpack.c.h.b16 %v3363
        %v4870 = vunpack.c.l.b16 %v3364
        %v4871 = vunpack.c.h.b16 %v3364
        %v4872 = vunpack.c.l.b16 %v3365
        %v4873 = vunpack.c.h.b16 %v3365
        %v4874 = vunpack.c.l.b16 %v3366
        %v4875 = vunpack.c.h.b16 %v3366
        %v4876 = vunpack.c.l.b16 %v3367
        %v4877 = vunpack.c.h.b16 %v3367
        %v4878 = vunpack.c.l.b16 %v3368
        %v4879 = vunpack.c.h.b16 %v3368
        %v4880 = vunpack.c.l.b16 %v3369
        %v4881 = vunpack.c.h.b16 %v3369
        %v4882 = vunpack.c.l.b16 %v3370
        %v4883 = vunpack.c.h.b16 %v3370
        %v4884 = vunpack.c.l.b16 %v3371
        %v4885 = vunpack.c.h.b16 %v3371
        %v4886 = vunpack.c.l.b16 %v3372
        %v4887 = vunpack.c.h.b16 %v3372
        %v4888 = vunpack.c.l.b16 %v3373
        %v4889 = vunpack.c.h.b16 %v3373
        %v4890 = vunpack.c.l.b16 %v3374
        %v4891 = vunpack.c.h.b16 %v3374
        %v4892 = vunpack.c.l.b16 %v3375
        %v4893 = vunpack.c.h.b16 %v3375
        %v4894 = vunpack.c.l.b16 %v3376
        %v4895 = vunpack.c.h.b16 %v3376
        %v4896 = vunpack.c.l.b16 %v3377
        %v4897 = vunpack.c.h.b16 %v3377
        %v4898 = vunpack.c.l.b16 %v3378
        %v4899 = vunpack.c.h.b16 %v3378
        %v4900 = vunpack.c.l.b16 %v3379
        %v4901 = vunpack.c.h.b16 %v3379
        %v4902 = vunpack.c.l.b16 %v3380
        %v4903 = vunpack.c.h.b16 %v3380
        %v4904 = vunpack.c.l.b16 %v3381
        %v4905 = vunpack.c.h.b16 %v3381
        %v4906 = vunpack.c.l.b16 %v3382
        %v4907 = vunpack.c.h.b16 %v3382
        %v4908 = vunpack.c.l.b16 %v3383
        %v4909 = vunpack.c.h.b16 %v3383
        %v4910 = vunpack.c.l.b16 %v3384
        %v4911 = vunpack.c.h.b16 %v3384
        %v4912 = vunpack.c.l.b16 %v3385
        %v4913 = vunpack.c.h.b16 %v3385
        %v4914 = vunpack.c.l.b16 %v3386
        %v4915 = vunpack.c.h.b16 %v3386
        %v4916 = vunpack.c.l.b16 %v3387
        %v4917 = vunpack.c.h.b16 %v3387
        %v4918 = vunpack.c.l.b16 %v3388
        %v4919 = vunpack.c.h.b16 %v3388
        %v4920 = vunpack.c.l.b16 %v3389
        %v4921 = vunpack.c.h.b16 %v3389
        %v4922 = vunpack.c.l.b16 %v3390
        %v4923 = vunpack.c.h.b16 %v3390
        %v4924 = vunpack.c.l.b16 %v3391
        %v4925 = vunpack.c.h.b16 %v3391
        %v4926 = vunpack.c.l.b16 %v3392
        %v4927 = vunpack.c.h.b16 %v3392
        %v4928 = vunpack.c.l.b16 %v3393
        %v4929 = vunpack.c.h.b16 %v3393
        %v4930 = vunpack.c.l.b16 %v3394
        %v4931 = vunpack.c.h.b16 %v3394
        %v4932 = vunpack.c.l.b16 %v3395
        %v4933 = vunpack.c.h.b16 %v3395
        %v4934 = vunpack.c.l.b16 %v3396
        %v4935 = vunpack.c.h.b16 %v3396
        %v4936 = vunpack.c.l.b16 %v3397
        %v4937 = vunpack.c.h.b16 %v3397
        %v4938 = vunpack.c.l.b16 %v3398
        %v4939 = vunpack.c.h.b16 %v3398
        %v4940 = vunpack.c.l.b16 %v3399
        %v4941 = vunpack.c.h.b16 %v3399
        %v4942 = vunpack.c.l.b16 %v3400
        %v4943 = vunpack.c.h.b16 %v3400
        %v4944 = vunpack.c.l.b16 %v3401
        %v4945 = vunpack.c.h.b16 %v3401
        %v4946 = vunpack.c.l.b16 %v3402
        %v4947 = vunpack.c.h.b16 %v3402
        %v4948 = vunpack.c.l.b16 %v3403
        %v4949 = vunpack.c.h.b16 %v3403
        %v4950 = vunpack.c.l.b16 %v3404
        %v4951 = vunpack.c.h.b16 %v3404
        %v4952 = vunpack.c.l.b16 %v3405
        %v4953 = vunpack.c.h.b16 %v3405
        %v4954 = vunpack.c.l.b16 %v3406
        %v4955 = vunpack.c.h.b16 %v3406
        %v4956 = vunpack.c.l.b16 %v3407
        %v4957 = vunpack.c.h.b16 %v3407
        %v4958 = vunpack.c.l.b16 %v3408
        %v4959 = vunpack.c.h.b16 %v3408
        %v4960 = vunpack.c.l.b16 %v3409
        %v4961 = vunpack.c.h.b16 %v3409
        %v4962 = vunpack.c.l.b16 %v3410
        %v4963 = vunpack.c.h.b16 %v3410
        %v4964 = vunpack.c.l.b16 %v3411
        %v4965 = vunpack.c.h.b16 %v3411
        %v4966 = vunpack.c.l.b16 %v3412
        %v4967 = vunpack.c.h.b16 %v3412
        %v4968 = vunpack.c.l.b16 %v3413
        %v4969 = vunpack.c.h.b16 %v3413
        %v4970 = vunpack.c.l.b16 %v3414
        %v4971 = vunpack.c.h.b16 %v3414
        %v4972 = vunpack.c.l.b16 %v3415
        %v4973 = vunpack.c.h.b16 %v3415
        %v4974 = vunpack.c.l.b16 %v3416
        %v4975 = vunpack.c.h.b16 %v3416
        %v4976 = vunpack.c.l.b16 %v3417
        %v4977 = vunpack.c.h.b16 %v3417
        %v4978 = vunpack.c.l.b16 %v3418
        %v4979 = vunpack.c.h.b16 %v3418
        %v4980 = vunpack.c.l.b16 %v3419
        %v4981 = vunpack.c.h.b16 %v3419
        %v4982 = vunpack.c.l.b16 %v3420
        %v4983 = vunpack.c.h.b16 %v3420
        %v4984 = vunpack.c.l.b16 %v3421
        %v4985 = vunpack.c.h.b16 %v3421
        %v4986 = vunpack.c.l.b16 %v3422
        %v4987 = vunpack.c.h.b16 %v3422
        %v4988 = vunpack.c.l.b16 %v3423
        %v4989 = vunpack.c.h.b16 %v3423
        %v4990 = vunpack.c.l.b16 %v3424
        %v4991 = vunpack.c.h.b16 %v3424
        %v4992 = vunpack.c.l.b16 %v3425
        %v4993 = vunpack.c.h.b16 %v3425
        %v4994 = vunpack.c.l.b16 %v3426
        %v4995 = vunpack.c.h.b16 %v3426
        %v4996 = vunpack.c.l.b16 %v3427
        %v4997 = vunpack.c.h.b16 %v3427
        %v4998 = vunpack.c.l.b16 %v3428
        %v4999 = vunpack.c.h.b16 %v3428
        %v5000 = vunpack.c.l.b16 %v3429
        %v5001 = vunpack.c.h.b16 %v3429
        %v5002 = vunpack.c.l.b16 %v3430
        %v5003 = vunpack.c.h.b16 %v3430
        %v5004 = vunpack.c.l.b16 %v3431
        %v5005 = vunpack.c.h.b16 %v3431
        %v5006 = vunpack.c.l.b16 %v3432
        %v5007 = vunpack.c.h.b16 %v3432
        %v5008 = vunpack.c.l.b16 %v3433
        %v5009 = vunpack.c.h.b16 %v3433
        %v5010 = vunpack.c.l.b16 %v3434
        %v5011 = vunpack.c.h.b16 %v3434
        %v5012 = vunpack.c.l.b16 %v3435
        %v5013 = vunpack.c.h.b16 %v3435
        %v5014 = vunpack.c.l.b16 %v3436
        %v5015 = vunpack.c.h.b16 %v3436
        %v5016 = vunpack.c.l.b16 %v3437
        %v5017 = vunpack.c.h.b16 %v3437
        %v5018 = vunpack.c.l.b16 %v3438
        %v5019 = vunpack.c.h.b16 %v3438
        %v5020 = vunpack.c.l.b16 %v3439
        %v5021 = vunpack.c.h.b16 %v3439
        %v5022 = vunpack.c.l.b16 %v3440
        %v5023 = vunpack.c.h.b16 %v3440
        %v5024 = vunpack.c.l.b16 %v3441
        %v5025 = vunpack.c.h.b16 %v3441
        %v5026 = vunpack.c.l.b16 %v3442
        %v5027 = vunpack.c.h.b16 %v3442
        %v5028 = vunpack.c.l.b16 %v3443
        %v5029 = vunpack.c.h.b16 %v3443
        %v5030 = vunpack.c.l.b16 %v3444
        %v5031 = vunpack.c.h.b16 %v3444
        %v5032 = vunpack.c.l.b16 %v3445
        %v5033 = vunpack.c.h.b16 %v3445
        %v5034 = vunpack.c.l.b16 %v3446
        %v5035 = vunpack.c.h.b16 %v3446
        %v5036 = vunpack.c.l.b16 %v3447
        %v5037 = vunpack.c.h.b16 %v3447
        %v5038 = vunpack.c.l.b16 %v3448
        %v5039 = vunpack.c.h.b16 %v3448
        %v5040 = vunpack.c.l.b16 %v3449
        %v5041 = vunpack.c.h.b16 %v3449
        %v5042 = vunpack.c.l.b16 %v3450
        %v5043 = vunpack.c.h.b16 %v3450
        %v5044 = vunpack.c.l.b16 %v3451
        %v5045 = vunpack.c.h.b16 %v3451
        %v5046 = vunpack.c.l.b16 %v3452
        %v5047 = vunpack.c.h.b16 %v3452
        %v5048 = vunpack.c.l.b16 %v3453
        %v5049 = vunpack.c.h.b16 %v3453
        %v5050 = vunpack.c.l.b16 %v3454
        %v5051 = vunpack.c.h.b16 %v3454
        %v5052 = vunpack.c.l.b16 %v3455
        %v5053 = vunpack.c.h.b16 %v3455
        %v5054 = vunpack.c.l.b16 %v3456
        %v5055 = vunpack.c.h.b16 %v3456
        %v5056 = vunpack.c.l.b16 %v3457
        %v5057 = vunpack.c.h.b16 %v3457
        %v5058 = vunpack.c.l.b16 %v3458
        %v5059 = vunpack.c.h.b16 %v3458
        %v5060 = vunpack.c.l.b16 %v3459
        %v5061 = vunpack.c.h.b16 %v3459
        %v5062 = vunpack.c.l.b16 %v3460
        %v5063 = vunpack.c.h.b16 %v3460
        %v5064 = vunpack.c.l.b16 %v3461
        %v5065 = vunpack.c.h.b16 %v3461
        %v5066 = vunpack.c.l.b16 %v3462
        %v5067 = vunpack.c.h.b16 %v3462
        %v5068 = vunpack.c.l.b16 %v3463
        %v5069 = vunpack.c.h.b16 %v3463
        %v5070 = vunpack.c.l.b16 %v3464
        %v5071 = vunpack.c.h.b16 %v3464
        %v5072 = vunpack.c.l.b16 %v3465
        %v5073 = vunpack.c.h.b16 %v3465
        %v5074 = vunpack.c.l.b16 %v3466
        %v5075 = vunpack.c.h.b16 %v3466
        %v5076 = vunpack.c.l.b16 %v3467
        %v5077 = vunpack.c.h.b16 %v3467
        %v5078 = vunpack.c.l.b16 %v3468
        %v5079 = vunpack.c.h.b16 %v3468
        %v5080 = vunpack.c.l.b16 %v3469
        %v5081 = vunpack.c.h.b16 %v3469
        %v5082 = vunpack.c.l.b16 %v3470
        %v5083 = vunpack.c.h.b16 %v3470
        %v5084 = vunpack.c.l.b16 %v3471
        %v5085 = vunpack.c.h.b16 %v3471
        %v5086 = vunpack.c.l.b16 %v3472
        %v5087 = vunpack.c.h.b16 %v3472
        %v5088 = vunpack.c.l.b16 %v3473
        %v5089 = vunpack.c.h.b16 %v3473
        %v5090 = vunpack.c.l.b16 %v3474
        %v5091 = vunpack.c.h.b16 %v3474
        %v5092 = vunpack.c.l.b16 %v3475
        %v5093 = vunpack.c.h.b16 %v3475
        %v5094 = vunpack.c.l.b16 %v3476
        %v5095 = vunpack.c.h.b16 %v3476
        %v5096 = vunpack.c.l.b16 %v3477
        %v5097 = vunpack.c.h.b16 %v3477
        %v5098 = vunpack.c.l.b16 %v3478
        %v5099 = vunpack.c.h.b16 %v3478
        %v5100 = vunpack.c.l.b16 %v3479
        %v5101 = vunpack.c.h.b16 %v3479
        %v5102 = vunpack.c.l.b16 %v3480
        %v5103 = vunpack.c.h.b16 %v3480
        %v5104 = vunpack.c.l.b16 %v3481
        %v5105 = vunpack.c.h.b16 %v3481
        %v5106 = vunpack.c.l.b16 %v3482
        %v5107 = vunpack.c.h.b16 %v3482
        %v5108 = vunpack.c.l.b16 %v3483
        %v5109 = vunpack.c.h.b16 %v3483
        %v5110 = vunpack.c.l.b16 %v3484
        %v5111 = vunpack.c.h.b16 %v3484
        %v5112 = vunpack.c.l.b16 %v3485
        %v5113 = vunpack.c.h.b16 %v3485
        %v5114 = vunpack.c.l.b16 %v3486
        %v5115 = vunpack.c.h.b16 %v3486
        %v5116 = vunpack.c.l.b16 %v3487
        %v5117 = vunpack.c.h.b16 %v3487
        %v5118 = vunpack.c.l.b16 %v3488
        %v5119 = vunpack.c.h.b16 %v3488
        %v5120 = vunpack.c.l.b16 %v3489
        %v5121 = vunpack.c.h.b16 %v3489
        %v5122 = vunpack.c.l.b16 %v3490
        %v5123 = vunpack.c.h.b16 %v3490
        %v5124 = vunpack.c.l.b16 %v3491
        %v5125 = vunpack.c.h.b16 %v3491
        %v5126 = vunpack.c.l.b16 %v3492
        %v5127 = vunpack.c.h.b16 %v3492
        %v5128 = vunpack.c.l.b16 %v3493
        %v5129 = vunpack.c.h.b16 %v3493
        %v5130 = vunpack.c.l.b16 %v3494
        %v5131 = vunpack.c.h.b16 %v3494
        %v5132 = vunpack.c.l.b16 %v3495
        %v5133 = vunpack.c.h.b16 %v3495
        %v5134 = vunpack.c.l.b16 %v3496
        %v5135 = vunpack.c.h.b16 %v3496
        %v5136 = vunpack.c.l.b16 %v3497
        %v5137 = vunpack.c.h.b16 %v3497
        %v5138 = vunpack.c.l.b16 %v3498
        %v5139 = vunpack.c.h.b16 %v3498
        %v5140 = vunpack.c.l.b16 %v3499
        %v5141 = vunpack.c.h.b16 %v3499
        %v5142 = vunpack.c.l.b16 %v3500
        %v5143 = vunpack.c.h.b16 %v3500
        %v5144 = vunpack.c.l.b16 %v3501
        %v5145 = vunpack.c.h.b16 %v3501
        %v5146 = vunpack.c.l.b16 %v3502
        %v5147 = vunpack.c.h.b16 %v3502
        %v5148 = vunpack.c.l.b16 %v3503
        %v5149 = vunpack.c.h.b16 %v3503
        %v5150 = vunpack.c.l.b16 %v3504
        %v5151 = vunpack.c.h.b16 %v3504
        %v5152 = vunpack.c.l.b16 %v3505
        %v5153 = vunpack.c.h.b16 %v3505
        %v5154 = vunpack.c.l.b16 %v3506
        %v5155 = vunpack.c.h.b16 %v3506
        %v5156 = vunpack.c.l.b16 %v3507
        %v5157 = vunpack.c.h.b16 %v3507
        %v5158 = vunpack.c.l.b16 %v3508
        %v5159 = vunpack.c.h.b16 %v3508
        %v5160 = vunpack.c.l.b16 %v3509
        %v5161 = vunpack.c.h.b16 %v3509
        %v5162 = vunpack.c.l.b16 %v3510
        %v5163 = vunpack.c.h.b16 %v3510
        %v5164 = vunpack.c.l.b16 %v3511
        %v5165 = vunpack.c.h.b16 %v3511
        %v5166 = vunpack.c.l.b16 %v3512
        %v5167 = vunpack.c.h.b16 %v3512
        %v5168 = vunpack.c.l.b16 %v3513
        %v5169 = vunpack.c.h.b16 %v3513
        %v5170 = vunpack.c.l.b16 %v3514
        %v5171 = vunpack.c.h.b16 %v3514
        %v5172 = vunpack.c.l.b16 %v3515
        %v5173 = vunpack.c.h.b16 %v3515
        %v5174 = vunpack.c.l.b16 %v3516
        %v5175 = vunpack.c.h.b16 %v3516
        %v5176 = vunpack.c.l.b16 %v3517
        %v5177 = vunpack.c.h.b16 %v3517
        %v5178 = vunpack.c.l.b16 %v3518
        %v5179 = vunpack.c.h.b16 %v3518
        %v5180 = vunpack.c.l.b16 %v3519
        %v5181 = vunpack.c.h.b16 %v3519
        %v5182 = vunpack.c.l.b16 %v3520
        %v5183 = vunpack.c.h.b16 %v3520
        %v5184 = vunpack.c.l.b16 %v3521
        %v5185 = vunpack.c.h.b16 %v3521
        %v5186 = vunpack.c.l.b16 %v3522
        %v5187 = vunpack.c.h.b16 %v3522
        %v5188 = vunpack.c.l.b16 %v3523
        %v5189 = vunpack.c.h.b16 %v3523
        %v5190 = vunpack.c.l.b16 %v3524
        %v5191 = vunpack.c.h.b16 %v3524
        %v5192 = vunpack.c.l.b16 %v3525
        %v5193 = vunpack.c.h.b16 %v3525
        %v5194 = vunpack.c.l.b16 %v3526
        %v5195 = vunpack.c.h.b16 %v3526
        %v5196 = vunpack.c.l.b16 %v3527
        %v5197 = vunpack.c.h.b16 %v3527
        %v5198 = vunpack.c.l.b16 %v3528
        %v5199 = vunpack.c.h.b16 %v3528
        %v5200 = vunpack.c.l.b16 %v3529
        %v5201 = vunpack.c.h.b16 %v3529
        %v5202 = vunpack.c.l.b16 %v3530
        %v5203 = vunpack.c.h.b16 %v3530
        %v5204 = vunpack.c.l.b16 %v3531
        %v5205 = vunpack.c.h.b16 %v3531
        %v5206 = vunpack.c.l.b16 %v3532
        %v5207 = vunpack.c.h.b16 %v3532
        %v5208 = vunpack.c.l.b16 %v3533
        %v5209 = vunpack.c.h.b16 %v3533
        %v5210 = vunpack.c.l.b16 %v3534
        %v5211 = vunpack.c.h.b16 %v3534
        %v5212 = vunpack.c.l.b16 %v3535
        %v5213 = vunpack.c.h.b16 %v3535
        %v5214 = vunpack.c.l.b16 %v3536
        %v5215 = vunpack.c.h.b16 %v3536
        %v5216 = vunpack.c.l.b16 %v3537
        %v5217 = vunpack.c.h.b16 %v3537
        %v5218 = vunpack.c.l.b16 %v3538
        %v5219 = vunpack.c.h.b16 %v3538
        %v5220 = vunpack.c.l.b16 %v3539
        %v5221 = vunpack.c.h.b16 %v3539
        %v5222 = vunpack.c.l.b16 %v3540
        %v5223 = vunpack.c.h.b16 %v3540
        %v5224 = vunpack.c.l.b16 %v3541
        %v5225 = vunpack.c.h.b16 %v3541
        %v5226 = vunpack.c.l.b16 %v3542
        %v5227 = vunpack.c.h.b16 %v3542
        %v5228 = vunpack.c.l.b16 %v3543
        %v5229 = vunpack.c.h.b16 %v3543
        %v5230 = vunpack.c.l.b16 %v3544
        %v5231 = vunpack.c.h.b16 %v3544
        %v5232 = vunpack.c.l.b16 %v3545
        %v5233 = vunpack.c.h.b16 %v3545
        %v5234 = vunpack.c.l.b16 %v3546
        %v5235 = vunpack.c.h.b16 %v3546
        %v5236 = vunpack.c.l.b16 %v3547
        %v5237 = vunpack.c.h.b16 %v3547
        %v5238 = vunpack.c.l.b16 %v3548
        %v5239 = vunpack.c.h.b16 %v3548
        %v5240 = vunpack.c.l.b16 %v3549
        %v5241 = vunpack.c.h.b16 %v3549
        %v5242 = vunpack.c.l.b16 %v3550
        %v5243 = vunpack.c.h.b16 %v3550
        %v5244 = vunpack.c.l.b16 %v3551
        %v5245 = vunpack.c.h.b16 %v3551
        %v5246 = vunpack.c.l.b16 %v3552
        %v5247 = vunpack.c.h.b16 %v3552
        %v5248 = vunpack.c.l.b16 %v3553
        %v5249 = vunpack.c.h.b16 %v3553
        %v5250 = vunpack.c.l.b16 %v3554
        %v5251 = vunpack.c.h.b16 %v3554
        %v5252 = vunpack.c.l.b16 %v3555
        %v5253 = vunpack.c.h.b16 %v3555
        %v5254 = vunpack.c.l.b16 %v3556
        %v5255 = vunpack.c.h.b16 %v3556
        %v5256 = vunpack.c.l.b16 %v3557
        %v5257 = vunpack.c.h.b16 %v3557
        %v5258 = vunpack.c.l.b16 %v3558
        %v5259 = vunpack.c.h.b16 %v3558
        %v5260 = vunpack.c.l.b16 %v3559
        %v5261 = vunpack.c.h.b16 %v3559
        %v5262 = vunpack.c.l.b16 %v3560
        %v5263 = vunpack.c.h.b16 %v3560
        %v5264 = vunpack.c.l.b16 %v3561
        %v5265 = vunpack.c.h.b16 %v3561
        %v5266 = vunpack.c.l.b16 %v3562
        %v5267 = vunpack.c.h.b16 %v3562
        %v5268 = vunpack.c.l.b16 %v3563
        %v5269 = vunpack.c.h.b16 %v3563
        %v5270 = vunpack.c.l.b16 %v3564
        %v5271 = vunpack.c.h.b16 %v3564
        %v5272 = vunpack.c.l.b16 %v3565
        %v5273 = vunpack.c.h.b16 %v3565
        %v5274 = vunpack.c.l.b16 %v3566
        %v5275 = vunpack.c.h.b16 %v3566
        %v5276 = vunpack.c.l.b16 %v3567
        %v5277 = vunpack.c.h.b16 %v3567
        %v5278 = vunpack.c.l.b16 %v3568
        %v5279 = vunpack.c.h.b16 %v3568
        %v5280 = vunpack.c.l.b16 %v3569
        %v5281 = vunpack.c.h.b16 %v3569
        %v5282 = vunpack.c.l.b16 %v3570
        %v5283 = vunpack.c.h.b16 %v3570
        %v5284 = vunpack.c.l.b16 %v3571
        %v5285 = vunpack.c.h.b16 %v3571
        %v5286 = vunpack.c.l.b16 %v3572
        %v5287 = vunpack.c.h.b16 %v3572
        %v5288 = vunpack.c.l.b16 %v3573
        %v5289 = vunpack.c.h.b16 %v3573
        %v5290 = vunpack.c.l.b16 %v3574
        %v5291 = vunpack.c.h.b16 %v3574
        %v5292 = vunpack.c.l.b16 %v3575
        %v5293 = vunpack.c.h.b16 %v3575
        %v5294 = vunpack.c.l.b16 %v3576
        %v5295 = vunpack.c.h.b16 %v3576
        %v5296 = vunpack.c.l.b16 %v3577
        %v5297 = vunpack.c.h.b16 %v3577
        %v5298 = vunpack.c.l.b16 %v3578
        %v5299 = vunpack.c.h.b16 %v3578
        %v5300 = vunpack.c.l.b16 %v3579
        %v5301 = vunpack.c.h.b16 %v3579
        %v5302 = vunpack.c.l.b16 %v3580
        %v5303 = vunpack.c.h.b16 %v3580
        %v5304 = vunpack.c.l.b16 %v3581
        %v5305 = vunpack.c.h.b16 %v3581
        %v5306 = vunpack.c.l.b16 %v3582
        %v5307 = vunpack.c.h.b16 %v3582
        %v5308 = vunpack.c.l.b16 %v3583
        %v5309 = vunpack.c.h.b16 %v3583
        %v5310 = vunpack.c.l.b16 %v3584
        %v5311 = vunpack.c.h.b16 %v3584
        %v5312 = vunpack.c.l.b16 %v3585
        %v5313 = vunpack.c.h.b16 %v3585
        %v5314 = vunpack.c.l.b16 %v3586
        %v5315 = vunpack.c.h.b16 %v3586
        %v5316 = vunpack.c.l.b16 %v3587
        %v5317 = vunpack.c.h.b16 %v3587
        %v5318 = vunpack.c.l.b16 %v3588
        %v5319 = vunpack.c.h.b16 %v3588
        %v5320 = vunpack.c.l.b16 %v3589
        %v5321 = vunpack.c.h.b16 %v3589
        %v5322 = vunpack.c.l.b16 %v3590
        %v5323 = vunpack.c.h.b16 %v3590
        %v5324 = vunpack.c.l.b16 %v3591
        %v5325 = vunpack.c.h.b16 %v3591
        %v5326 = vunpack.c.l.b16 %v3592
        %v5327 = vunpack.c.h.b16 %v3592
        %v5328 = vunpack.c.l.b16 %v3593
        %v5329 = vunpack.c.h.b16 %v3593
        %v5330 = vunpack.c.l.b16 %v3594
        %v5331 = vunpack.c.h.b16 %v3594
        %v5332 = vunpack.c.l.b16 %v3595
        %v5333 = vunpack.c.h.b16 %v3595
        %v5334 = vunpack.c.l.b16 %v3596
        %v5335 = vunpack.c.h.b16 %v3596
        %v5336 = vunpack.c.l.b16 %v3597
        %v5337 = vunpack.c.h.b16 %v3597
        %v5338 = vpack.c.b16 %v4188, %v4186
        %v5339 = vpack.c.b16 %v4189, %v4187
        %v5340 = vpack.c.b16 %v4192, %v4190
        %v5341 = vpack.c.b16 %v4193, %v4191
        %v5342 = vpack.c.b16 %v4196, %v4194
        %v5343 = vpack.c.b16 %v4197, %v4195
        %v5344 = vpack.c.b16 %v4200, %v4198
        %v5345 = vpack.c.b16 %v4201, %v4199
        %v5346 = vpack.c.b16 %v4204, %v4202
        %v5347 = vpack.c.b16 %v4205, %v4203
        %v5348 = vpack.c.b16 %v4208, %v4206
        %v5349 = vpack.c.b16 %v4209, %v4207
        %v5350 = vpack.c.b16 %v4212, %v4210
        %v5351 = vpack.c.b16 %v4213, %v4211
        %v5352 = vpack.c.b16 %v4216, %v4214
        %v5353 = vpack.c.b16 %v4217, %v4215
        %v5354 = vpack.c.b16 %v4220, %v4218
        %v5355 = vpack.c.b16 %v4221, %v4219
        %v5356 = vpack.c.b16 %v4224, %v4222
        %v5357 = vpack.c.b16 %v4225, %v4223
        %v5358 = vpack.c.b16 %v4228, %v4226
        %v5359 = vpack.c.b16 %v4229, %v4227
        %v5360 = vpack.c.b16 %v4232, %v4230
        %v5361 = vpack.c.b16 %v4233, %v4231
        %v5362 = vpack.c.b16 %v4236, %v4234
        %v5363 = vpack.c.b16 %v4237, %v4235
        %v5364 = vpack.c.b16 %v4240, %v4238
        %v5365 = vpack.c.b16 %v4241, %v4239
        %v5366 = vpack.c.b16 %v4244, %v4242
        %v5367 = vpack.c.b16 %v4245, %v4243
        %v5368 = vpack.c.b16 %v4248, %v4246
        %v5369 = vpack.c.b16 %v4249, %v4247
        %v5370 = vpack.c.b16 %v4252, %v4250
        %v5371 = vpack.c.b16 %v4253, %v4251
        %v5372 = vpack.c.b16 %v4256, %v4254
        %v5373 = vpack.c.b16 %v4257, %v4255
        %v5374 = vpack.c.b16 %v4260, %v4258
        %v5375 = vpack.c.b16 %v4261, %v4259
        %v5376 = vpack.c.b16 %v4264, %v4262
        %v5377 = vpack.c.b16 %v4265, %v4263
        %v5378 = vpack.c.b16 %v4268, %v4266
        %v5379 = vpack.c.b16 %v4269, %v4267
        %v5380 = vpack.c.b16 %v4272, %v4270
        %v5381 = vpack.c.b16 %v4273, %v4271
        %v5382 = vpack.c.b16 %v4276, %v4274
        %v5383 = vpack.c.b16 %v4277, %v4275
        %v5384 = vpack.c.b16 %v4280, %v4278
        %v5385 = vpack.c.b16 %v4281, %v4279
        %v5386 = vpack.c.b16 %v4284, %v4282
        %v5387 = vpack.c.b16 %v4285, %v4283
        %v5388 = vpack.c.b16 %v4288, %v4286
        %v5389 = vpack.c.b16 %v4289, %v4287
        %v5390 = vpack.c.b16 %v4292, %v4290
        %v5391 = vpack.c.b16 %v4293, %v4291
        %v5392 = vpack.c.b16 %v4296, %v4294
        %v5393 = vpack.c.b16 %v4297, %v4295
        %v5394 = vpack.c.b16 %v4300, %v4298
        %v5395 = vpack.c.b16 %v4301, %v4299
        %v5396 = vpack.c.b16 %v4304, %v4302
        %v5397 = vpack.c.b16 %v4305, %v4303
        %v5398 = vpack.c.b16 %v4308, %v4306
        %v5399 = vpack.c.b16 %v4309, %v4307
        %v5400 = vpack.c.b16 %v4312, %v4310
        %v5401 = vpack.c.b16 %v4313, %v4311
        %v5402 = vpack.c.b16 %v4316, %v4314
        %v5403 = vpack.c.b16 %v4317, %v4315
        %v5404 = vpack.c.b16 %v4320, %v4318
        %v5405 = vpack.c.b16 %v4321, %v4319
        %v5406 = vpack.c.b16 %v4324, %v4322
        %v5407 = vpack.c.b16 %v4325, %v4323
        %v5408 = vpack.c.b16 %v4328, %v4326
        %v5409 = vpack.c.b16 %v4329, %v4327
        %v5410 = vpack.c.b16 %v4332, %v4330
        %v5411 = vpack.c.b16 %v4333, %v4331
        %v5412 = vpack.c.b16 %v4336, %v4334
        %v5413 = vpack.c.b16 %v4337, %v4335
        %v5414 = vpack.c.b16 %v4340, %v4338
        %v5415 = vpack.c.b16 %v4341, %v4339
        %v5416 = vpack.c.b16 %v4344, %v4342
        %v5417 = vpack.c.b16 %v4345, %v4343
        %v5418 = vpack.c.b16 %v4348, %v4346
        %v5419 = vpack.c.b16 %v4349, %v4347
        %v5420 = vpack.c.b16 %v4352, %v4350
        %v5421 = vpack.c.b16 %v4353, %v4351
        %v5422 = vpack.c.b16 %v4356, %v4354
        %v5423 = vpack.c.b16 %v4357, %v4355
        %v5424 = vpack.c.b16 %v4360, %v4358
        %v5425 = vpack.c.b16 %v4361, %v4359
        %v5426 = vpack.c.b16 %v4364, %v4362
        %v5427 = vpack.c.b16 %v4365, %v4363
        %v5428 = vpack.c.b16 %v4368, %v4366
        %v5429 = vpack.c.b16 %v4369, %v4367
        %v5430 = vpack.c.b16 %v4372, %v4370
        %v5431 = vpack.c.b16 %v4373, %v4371
        %v5432 = vpack.c.b16 %v4376, %v4374
        %v5433 = vpack.c.b16 %v4377, %v4375
        %v5434 = vpack.c.b16 %v4380, %v4378
        %v5435 = vpack.c.b16 %v4381, %v4379
        %v5436 = vpack.c.b16 %v4384, %v4382
        %v5437 = vpack.c.b16 %v4385, %v4383
        %v5438 = vpack.c.b16 %v4388, %v4386
        %v5439 = vpack.c.b16 %v4389, %v4387
        %v5440 = vpack.c.b16 %v4392, %v4390
        %v5441 = vpack.c.b16 %v4393, %v4391
        %v5442 = vpack.c.b16 %v4396, %v4394
        %v5443 = vpack.c.b16 %v4397, %v4395
        %v5444 = vpack.c.b16 %v4400, %v4398
        %v5445 = vpack.c.b16 %v4401, %v4399
        %v5446 = vpack.c.b16 %v4404, %v4402
        %v5447 = vpack.c.b16 %v4405, %v4403
        %v5448 = vpack.c.b16 %v4408, %v4406
        %v5449 = vpack.c.b16 %v4409, %v4407
        %v5450 = vpack.c.b16 %v4412, %v4410
        %v5451 = vpack.c.b16 %v4413, %v4411
        %v5452 = vpack.c.b16 %v4416, %v4414
        %v5453 = vpack.c.b16 %v4417, %v4415
        %v5454 = vpack.c.b16 %v4420, %v4418
        %v5455 = vpack.c.b16 %v4421, %v4419
        %v5456 = vpack.c.b16 %v4424, %v4422
        %v5457 = vpack.c.b16 %v4425, %v4423
        %v5458 = vpack.c.b16 %v4428, %v4426
        %v5459 = vpack.c.b16 %v4429, %v4427
        %v5460 = vpack.c.b16 %v4432, %v4430
        %v5461 = vpack.c.b16 %v4433, %v4431
        %v5462 = vpack.c.b16 %v4436, %v4434
        %v5463 = vpack.c.b16 %v4437, %v4435
        %v5464 = vpack.c.b16 %v4440, %v4438
        %v5465 = vpack.c.b16 %v4441, %v4439
        %v5466 = vpack.c.b16 %v4444, %v4442
        %v5467 = vpack.c.b16 %v4445, %v4443
        %v5468 = vpack.c.b16 %v4448, %v4446
        %v5469 = vpack.c.b16 %v4449, %v4447
        %v5470 = vpack.c.b16 %v4452, %v4450
        %v5471 = vpack.c.b16 %v4453, %v4451
        %v5472 = vpack.c.b16 %v4456, %v4454
        %v5473 = vpack.c.b16 %v4457, %v4455
        %v5474 = vpack.c.b16 %v4460, %v4458
        %v5475 = vpack.c.b16 %v4461, %v4459
        %v5476 = vpack.c.b16 %v4464, %v4462
        %v5477 = vpack.c.b16 %v4465, %v4463
        %v5478 = vpack.c.b16 %v4468, %v4466
        %v5479 = vpack.c.b16 %v4469, %v4467
        %v5480 = vpack.c.b16 %v4472, %v4470
        %v5481 = vpack.c.b16 %v4473, %v4471
        %v5482 = vpack.c.b16 %v4476, %v4474
        %v5483 = vpack.c.b16 %v4477, %v4475
        %v5484 = vpack.c.b16 %v4480, %v4478
        %v5485 = vpack.c.b16 %v4481, %v4479
        %v5486 = vpack.c.b16 %v4484, %v4482
        %v5487 = vpack.c.b16 %v4485, %v4483
        %v5488 = vpack.c.b16 %v4488, %v4486
        %v5489 = vpack.c.b16 %v4489, %v4487
        %v5490 = vpack.c.b16 %v4492, %v4490
        %v5491 = vpack.c.b16 %v4493, %v4491
        %v5492 = vpack.c.b16 %v4496, %v4494
        %v5493 = vpack.c.b16 %v4497, %v4495
        %v5494 = vpack.c.b16 %v4500, %v4498
        %v5495 = vpack.c.b16 %v4501, %v4499
        %v5496 = vpack.c.b16 %v4504, %v4502
        %v5497 = vpack.c.b16 %v4505, %v4503
        %v5498 = vpack.c.b16 %v4508, %v4506
        %v5499 = vpack.c.b16 %v4509, %v4507
        %v5500 = vpack.c.b16 %v4512, %v4510
        %v5501 = vpack.c.b16 %v4513, %v4511
        %v5502 = vpack.c.b16 %v4516, %v4514
        %v5503 = vpack.c.b16 %v4517, %v4515
        %v5504 = vpack.c.b16 %v4520, %v4518
        %v5505 = vpack.c.b16 %v4521, %v4519
        %v5506 = vpack.c.b16 %v4524, %v4522
        %v5507 = vpack.c.b16 %v4525, %v4523
        %v5508 = vpack.c.b16 %v4528, %v4526
        %v5509 = vpack.c.b16 %v4529, %v4527
        %v5510 = vpack.c.b16 %v4532, %v4530
        %v5511 = vpack.c.b16 %v4533, %v4531
        %v5512 = vpack.c.b16 %v4536, %v4534
        %v5513 = vpack.c.b16 %v4537, %v4535
        %v5514 = vpack.c.b16 %v4540, %v4538
        %v5515 = vpack.c.b16 %v4541, %v4539
        %v5516 = vpack.c.b16 %v4544, %v4542
        %v5517 = vpack.c.b16 %v4545, %v4543
        %v5518 = vpack.c.b16 %v4548, %v4546
        %v5519 = vpack.c.b16 %v4549, %v4547
        %v5520 = vpack.c.b16 %v4552, %v4550
        %v5521 = vpack.c.b16 %v4553, %v4551
        %v5522 = vpack.c.b16 %v4556, %v4554
        %v5523 = vpack.c.b16 %v4557, %v4555
        %v5524 = vpack.c.b16 %v4560, %v4558
        %v5525 = vpack.c.b16 %v4561, %v4559
        %v5526 = vpack.c.b16 %v4564, %v4562
        %v5527 = vpack.c.b16 %v4565, %v4563
        %v5528 = vpack.c.b16 %v4568, %v4566
        %v5529 = vpack.c.b16 %v4569, %v4567
        %v5530 = vpack.c.b16 %v4572, %v4570
        %v5531 = vpack.c.b16 %v4573, %v4571
        %v5532 = vpack.c.b16 %v4576, %v4574
        %v5533 = vpack.c.b16 %v4577, %v4575
        %v5534 = vpack.c.b16 %v4580, %v4578
        %v5535 = vpack.c.b16 %v4581, %v4579
        %v5536 = vpack.c.b16 %v4584, %v4582
        %v5537 = vpack.c.b16 %v4585, %v4583
        %v5538 = vpack.c.b16 %v4588, %v4586
        %v5539 = vpack.c.b16 %v4589, %v4587
        %v5540 = vpack.c.b16 %v4592, %v4590
        %v5541 = vpack.c.b16 %v4593, %v4591
        %v5542 = vpack.c.b16 %v4596, %v4594
        %v5543 = vpack.c.b16 %v4597, %v4595
        %v5544 = vpack.c.b16 %v4600, %v4598
        %v5545 = vpack.c.b16 %v4601, %v4599
        %v5546 = vpack.c.b16 %v4604, %v4602
        %v5547 = vpack.c.b16 %v4605, %v4603
        %v5548 = vpack.c.b16 %v4608, %v4606
        %v5549 = vpack.c.b16 %v4609, %v4607
        %v5550 = vpack.c.b16 %v4612, %v4610
        %v5551 = vpack.c.b16 %v4613, %v4611
        %v5552 = vpack.c.b16 %v4616, %v4614
        %v5553 = vpack.c.b16 %v4617, %v4615
        %v5554 = vpack.c.b16 %v4620, %v4618
        %v5555 = vpack.c.b16 %v4621, %v4619
        %v5556 = vpack.c.b16 %v4624, %v4622
        %v5557 = vpack.c.b16 %v4625, %v4623
        %v5558 = vpack.c.b16 %v4628, %v4626
        %v5559 = vpack.c.b16 %v4629, %v4627
        %v5560 = vpack.c.b16 %v4632, %v4630
        %v5561 = vpack.c.b16 %v4633, %v4631
        %v5562 = vpack.c.b16 %v4636, %v4634
        %v5563 = vpack.c.b16 %v4637, %v4635
        %v5564 = vpack.c.b16 %v4640, %v4638
        %v5565 = vpack.c.b16 %v4641, %v4639
        %v5566 = vpack.c.b16 %v4644, %v4642
        %v5567 = vpack.c.b16 %v4645, %v4643
        %v5568 = vpack.c.b16 %v4648, %v4646
        %v5569 = vpack.c.b16 %v4649, %v4647
        %v5570 = vpack.c.b16 %v4652, %v4650
        %v5571 = vpack.c.b16 %v4653, %v4651
        %v5572 = vpack.c.b16 %v4656, %v4654
        %v5573 = vpack.c.b16 %v4657, %v4655
        %v5574 = vpack.c.b16 %v4660, %v4658
        %v5575 = vpack.c.b16 %v4661, %v4659
        %v5576 = vpack.c.b16 %v4664, %v4662
        %v5577 = vpack.c.b16 %v4665, %v4663
        %v5578 = vpack.c.b16 %v4668, %v4666
        %v5579 = vpack.c.b16 %v4669, %v4667
        %v5580 = vpack.c.b16 %v4672, %v4670
        %v5581 = vpack.c.b16 %v4673, %v4671
        %v5582 = vpack.c.b16 %v4676, %v4674
        %v5583 = vpack.c.b16 %v4677, %v4675
        %v5584 = vpack.c.b16 %v4680, %v4678
        %v5585 = vpack.c.b16 %v4681, %v4679
        %v5586 = vpack.c.b16 %v4684, %v4682
        %v5587 = vpack.c.b16 %v4685, %v4683
        %v5588 = vpack.c.b16 %v4688, %v4686
        %v5589 = vpack.c.b16 %v4689, %v4687
        %v5590 = vpack.c.b16 %v4692, %v4690
        %v5591 = vpack.c.b16 %v4693, %v4691
        %v5592 = vpack.c.b16 %v4696, %v4694
        %v5593 = vpack.c.b16 %v4697, %v4695
        %v5594 = vpack.c.b16 %v4700, %v4698
        %v5595 = vpack.c.b16 %v4701, %v4699
        %v5596 = vpack.c.b16 %v4704, %v4702
        %v5597 = vpack.c.b16 %v4705, %v4703
        %v5598 = vpack.c.b16 %v4708, %v4706
        %v5599 = vpack.c.b16 %v4709, %v4707
        %v5600 = vpack.c.b16 %v4712, %v4710
        %v5601 = vpack.c.b16 %v4713, %v4711
        %v5602 = vpack.c.b16 %v4716, %v4714
        %v5603 = vpack.c.b16 %v4717, %v4715
        %v5604 = vpack.c.b16 %v4720, %v4718
        %v5605 = vpack.c.b16 %v4721, %v4719
        %v5606 = vpack.c.b16 %v4724, %v4722
        %v5607 = vpack.c.b16 %v4725, %v4723
        %v5608 = vpack.c.b16 %v4728, %v4726
        %v5609 = vpack.c.b16 %v4729, %v4727
        %v5610 = vpack.c.b16 %v4732, %v4730
        %v5611 = vpack.c.b16 %v4733, %v4731
        %v5612 = vpack.c.b16 %v4736, %v4734
        %v5613 = vpack.c.b16 %v4737, %v4735
        %v5614 = vpack.c.b16 %v4740, %v4738
        %v5615 = vpack.c.b16 %v4741, %v4739
        %v5616 = vpack.c.b16 %v4744, %v4742
        %v5617 = vpack.c.b16 %v4745, %v4743
        %v5618 = vpack.c.b16 %v4748, %v4746
        %v5619 = vpack.c.b16 %v4749, %v4747
        %v5620 = vpack.c.b16 %v4752, %v4750
        %v5621 = vpack.c.b16 %v4753, %v4751
        %v5622 = vpack.c.b16 %v4756, %v4754
        %v5623 = vpack.c.b16 %v4757, %v4755
        %v5624 = vpack.c.b16 %v4760, %v4758
        %v5625 = vpack.c.b16 %v4761, %v4759
        %v5626 = vpack.c.b16 %v4764, %v4762
        %v5627 = vpack.c.b16 %v4765, %v4763
        %v5628 = vpack.c.b16 %v4768, %v4766
        %v5629 = vpack.c.b16 %v4769, %v4767
        %v5630 = vpack.c.b16 %v4772, %v4770
        %v5631 = vpack.c.b16 %v4773, %v4771
        %v5632 = vpack.c.b16 %v4776, %v4774
        %v5633 = vpack.c.b16 %v4777, %v4775
        %v5634 = vpack.c.b16 %v4780, %v4778
        %v5635 = vpack.c.b16 %v4781, %v4779
        %v5636 = vpack.c.b16 %v4784, %v4782
        %v5637 = vpack.c.b16 %v4785, %v4783
        %v5638 = vpack.c.b16 %v4788, %v4786
        %v5639 = vpack.c.b16 %v4789, %v4787
        %v5640 = vpack.c.b16 %v4792, %v4790
        %v5641 = vpack.c.b16 %v4793, %v4791
        %v5642 = vpack.c.b16 %v4796, %v4794
        %v5643 = vpack.c.b16 %v4797, %v4795
        %v5644 = vpack.c.b16 %v4800, %v4798
        %v5645 = vpack.c.b16 %v4801, %v4799
        %v5646 = vpack.c.b16 %v4804, %v4802
        %v5647 = vpack.c.b16 %v4805, %v4803
        %v5648 = vpack.c.b16 %v4808, %v4806
        %v5649 = vpack.c.b16 %v4809, %v4807
        %v5650 = vpack.c.b16 %v4812, %v4810
        %v5651 = vpack.c.b16 %v4813, %v4811
        %v5652 = vpack.c.b16 %v4816, %v4814
        %v5653 = vpack.c.b16 %v4817, %v4815
        %v5654 = vpack.c.b16 %v4820, %v4818
        %v5655 = vpack.c.b16 %v4821, %v4819
        %v5656 = vpack.c.b16 %v4824, %v4822
        %v5657 = vpack.c.b16 %v4825, %v4823
        %v5658 = vpack.c.b16 %v4828, %v4826
        %v5659 = vpack.c.b16 %v4829, %v4827
        %v5660 = vpack.c.b16 %v4832, %v4830
        %v5661 = vpack.c.b16 %v4833, %v4831
        %v5662 = vpack.c.b16 %v4836, %v4834
        %v5663 = vpack.c.b16 %v4837, %v4835
        %v5664 = vpack.c.b16 %v4840, %v4838
        %v5665 = vpack.c.b16 %v4841, %v4839
        %v5666 = vpack.c.b16 %v4844, %v4842
        %v5667 = vpack.c.b16 %v4845, %v4843
        %v5668 = vpack.c.b16 %v4848, %v4846
        %v5669 = vpack.c.b16 %v4849, %v4847
        %v5670 = vpack.c.b16 %v4852, %v4850
        %v5671 = vpack.c.b16 %v4853, %v4851
        %v5672 = vpack.c.b16 %v4856, %v4854
        %v5673 = vpack.c.b16 %v4857, %v4855
        %v5674 = vpack.c.b16 %v4860, %v4858
        %v5675 = vpack.c.b16 %v4861, %v4859
        %v5676 = vpack.c.b16 %v4864, %v4862
        %v5677 = vpack.c.b16 %v4865, %v4863
        %v5678 = vpack.c.b16 %v4868, %v4866
        %v5679 = vpack.c.b16 %v4869, %v4867
        %v5680 = vpack.c.b16 %v4872, %v4870
        %v5681 = vpack.c.b16 %v4873, %v4871
        %v5682 = vpack.c.b16 %v4876, %v4874
        %v5683 = vpack.c.b16 %v4877, %v4875
        %v5684 = vpack.c.b16 %v4880, %v4878
        %v5685 = vpack.c.b16 %v4881, %v4879
        %v5686 = vpack.c.b16 %v4884, %v4882
        %v5687 = vpack.c.b16 %v4885, %v4883
        %v5688 = vpack.c.b16 %v4888, %v4886
        %v5689 = vpack.c.b16 %v4889, %v4887
        %v5690 = vpack.c.b16 %v4892, %v4890
        %v5691 = vpack.c.b16 %v4893, %v4891
        %v5692 = vpack.c.b16 %v4896, %v4894
        %v5693 = vpack.c.b16 %v4897, %v4895
        %v5694 = vpack.c.b16 %v4900, %v4898
        %v5695 = vpack.c.b16 %v4901, %v4899
        %v5696 = vpack.c.b16 %v4904, %v4902
        %v5697 = vpack.c.b16 %v4905, %v4903
        %v5698 = vpack.c.b16 %v4908, %v4906
        %v5699 = vpack.c.b16 %v4909, %v4907
        %v5700 = vpack.c.b16 %v4912, %v4910
        %v5701 = vpack.c.b16 %v4913, %v4911
        %v5702 = vpack.c.b16 %v4916, %v4914
        %v5703 = vpack.c.b16 %v4917, %v4915
        %v5704 = vpack.c.b16 %v4920, %v4918
        %v5705 = vpack.c.b16 %v4921, %v4919
        %v5706 = vpack.c.b16 %v4924, %v4922
        %v5707 = vpack.c.b16 %v4925, %v4923
        %v5708 = vpack.c.b16 %v4928, %v4926
        %v5709 = vpack.c.b16 %v4929, %v4927
        %v5710 = vpack.c.b16 %v4932, %v4930
        %v5711 = vpack.c.b16 %v4933, %v4931
        %v5712 = vpack.c.b16 %v4936, %v4934
        %v5713 = vpack.c.b16 %v4937, %v4935
        %v5714 = vpack.c.b16 %v4940, %v4938
        %v5715 = vpack.c.b16 %v4941, %v4939
        %v5716 = vpack.c.b16 %v4944, %v4942
        %v5717 = vpack.c.b16 %v4945, %v4943
        %v5718 = vpack.c.b16 %v4948, %v4946
        %v5719 = vpack.c.b16 %v4949, %v4947
        %v5720 = vpack.c.b16 %v4952, %v4950
        %v5721 = vpack.c.b16 %v4953, %v4951
        %v5722 = vpack.c.b16 %v4956, %v4954
        %v5723 = vpack.c.b16 %v4957, %v4955
        %v5724 = vpack.c.b16 %v4960, %v4958
        %v5725 = vpack.c.b16 %v4961, %v4959
        %v5726 = vpack.c.b16 %v4964, %v4962
        %v5727 = vpack.c.b16 %v4965, %v4963
        %v5728 = vpack.c.b16 %v4968, %v4966
        %v5729 = vpack.c.b16 %v4969, %v4967
        %v5730 = vpack.c.b16 %v4972, %v4970
        %v5731 = vpack.c.b16 %v4973, %v4971
        %v5732 = vpack.c.b16 %v4976, %v4974
        %v5733 = vpack.c.b16 %v4977, %v4975
        %v5734 = vpack.c.b16 %v4980, %v4978
        %v5735 = vpack.c.b16 %v4981, %v4979
        %v5736 = vpack.c.b16 %v4984, %v4982
        %v5737 = vpack.c.b16 %v4985, %v4983
        %v5738 = vpack.c.b16 %v4988, %v4986
        %v5739 = vpack.c.b16 %v4989, %v4987
        %v5740 = vpack.c.b16 %v4992, %v4990
        %v5741 = vpack.c.b16 %v4993, %v4991
        %v5742 = vpack.c.b16 %v4996, %v4994
        %v5743 = vpack.c.b16 %v4997, %v4995
        %v5744 = vpack.c.b16 %v5000, %v4998
        %v5745 = vpack.c.b16 %v5001, %v4999
        %v5746 = vpack.c.b16 %v5004, %v5002
        %v5747 = vpack.c.b16 %v5005, %v5003
        %v5748 = vpack.c.b16 %v5008, %v5006
        %v5749 = vpack.c.b16 %v5009, %v5007
        %v5750 = vpack.c.b16 %v5012, %v5010
        %v5751 = vpack.c.b16 %v5013, %v5011
        %v5752 = vpack.c.b16 %v5016, %v5014
        %v5753 = vpack.c.b16 %v5017, %v5015
        %v5754 = vpack.c.b16 %v5020, %v5018
        %v5755 = vpack.c.b16 %v5021, %v5019
        %v5756 = vpack.c.b16 %v5024, %v5022
        %v5757 = vpack.c.b16 %v5025, %v5023
        %v5758 = vpack.c.b16 %v5028, %v5026
        %v5759 = vpack.c.b16 %v5029, %v5027
        %v5760 = vpack.c.b16 %v5032, %v5030
        %v5761 = vpack.c.b16 %v5033, %v5031
        %v5762 = vpack.c.b16 %v5036, %v5034
        %v5763 = vpack.c.b16 %v5037, %v5035
        %v5764 = vpack.c.b16 %v5040, %v5038
        %v5765 = vpack.c.b16 %v5041, %v5039
        %v5766 = vpack.c.b16 %v5044, %v5042
        %v5767 = vpack.c.b16 %v5045, %v5043
        %v5768 = vpack.c.b16 %v5048, %v5046
        %v5769 = vpack.c.b16 %v5049, %v5047
        %v5770 = vpack.c.b16 %v5052, %v5050
        %v5771 = vpack.c.b16 %v5053, %v5051
        %v5772 = vpack.c.b16 %v5056, %v5054
        %v5773 = vpack.c.b16 %v5057, %v5055
        %v5774 = vpack.c.b16 %v5060, %v5058
        %v5775 = vpack.c.b16 %v5061, %v5059
        %v5776 = vpack.c.b16 %v5064, %v5062
        %v5777 = vpack.c.b16 %v5065, %v5063
        %v5778 = vpack.c.b16 %v5068, %v5066
        %v5779 = vpack.c.b16 %v5069, %v5067
        %v5780 = vpack.c.b16 %v5072, %v5070
        %v5781 = vpack.c.b16 %v5073, %v5071
        %v5782 = vpack.c.b16 %v5076, %v5074
        %v5783 = vpack.c.b16 %v5077, %v5075
        %v5784 = vpack.c.b16 %v5080, %v5078
        %v5785 = vpack.c.b16 %v5081, %v5079
        %v5786 = vpack.c.b16 %v5084, %v5082
        %v5787 = vpack.c.b16 %v5085, %v5083
        %v5788 = vpack.c.b16 %v5088, %v5086
        %v5789 = vpack.c.b16 %v5089, %v5087
        %v5790 = vpack.c.b16 %v5092, %v5090
        %v5791 = vpack.c.b16 %v5093, %v5091
        %v5792 = vpack.c.b16 %v5096, %v5094
        %v5793 = vpack.c.b16 %v5097, %v5095
        %v5794 = vpack.c.b16 %v5100, %v5098
        %v5795 = vpack.c.b16 %v5101, %v5099
        %v5796 = vpack.c.b16 %v5104, %v5102
        %v5797 = vpack.c.b16 %v5105, %v5103
        %v5798 = vpack.c.b16 %v5108, %v5106
        %v5799 = vpack.c.b16 %v5109, %v5107
        %v5800 = vpack.c.b16 %v5112, %v5110
        %v5801 = vpack.c.b16 %v5113, %v5111
        %v5802 = vpack.c.b16 %v5116, %v5114
        %v5803 = vpack.c.b16 %v5117, %v5115
        %v5804 = vpack.c.b16 %v5120, %v5118
        %v5805 = vpack.c.b16 %v5121, %v5119
        %v5806 = vpack.c.b16 %v5124, %v5122
        %v5807 = vpack.c.b16 %v5125, %v5123
        %v5808 = vpack.c.b16 %v5128, %v5126
        %v5809 = vpack.c.b16 %v5129, %v5127
        %v5810 = vpack.c.b16 %v5132, %v5130
        %v5811 = vpack.c.b16 %v5133, %v5131
        %v5812 = vpack.c.b16 %v5136, %v5134
        %v5813 = vpack.c.b16 %v5137, %v5135
        %v5814 = vpack.c.b16 %v5140, %v5138
        %v5815 = vpack.c.b16 %v5141, %v5139
        %v5816 = vpack.c.b16 %v5144, %v5142
        %v5817 = vpack.c.b16 %v5145, %v5143
        %v5818 = vpack.c.b16 %v5148, %v5146
        %v5819 = vpack.c.b16 %v5149, %v5147
        %v5820 = vpack.c.b16 %v5152, %v5150
        %v5821 = vpack.c.b16 %v5153, %v5151
        %v5822 = vpack.c.b16 %v5156, %v5154
        %v5823 = vpack.c.b16 %v5157, %v5155
        %v5824 = vpack.c.b16 %v5160, %v5158
        %v5825 = vpack.c.b16 %v5161, %v5159
        %v5826 = vpack.c.b16 %v5164, %v5162
        %v5827 = vpack.c.b16 %v5165, %v5163
        %v5828 = vpack.c.b16 %v5168, %v5166
        %v5829 = vpack.c.b16 %v5169, %v5167
        %v5830 = vpack.c.b16 %v5172, %v5170
        %v5831 = vpack.c.b16 %v5173, %v5171
        %v5832 = vpack.c.b16 %v5176, %v5174
        %v5833 = vpack.c.b16 %v5177, %v5175
        %v5834 = vpack.c.b16 %v5180, %v5178
        %v5835 = vpack.c.b16 %v5181, %v5179
        %v5836 = vpack.c.b16 %v5184, %v5182
        %v5837 = vpack.c.b16 %v5185, %v5183
        %v5838 = vpack.c.b16 %v5188, %v5186
        %v5839 = vpack.c.b16 %v5189, %v5187
        %v5840 = vpack.c.b16 %v5192, %v5190
        %v5841 = vpack.c.b16 %v5193, %v5191
        %v5842 = vpack.c.b16 %v5196, %v5194
        %v5843 = vpack.c.b16 %v5197, %v5195
        %v5844 = vpack.c.b16 %v5200, %v5198
        %v5845 = vpack.c.b16 %v5201, %v5199
        %v5846 = vpack.c.b16 %v5204, %v5202
        %v5847 = vpack.c.b16 %v5205, %v5203
        %v5848 = vpack.c.b16 %v5208, %v5206
        %v5849 = vpack.c.b16 %v5209, %v5207
        %v5850 = vpack.c.b16 %v5212, %v5210
        %v5851 = vpack.c.b16 %v5213, %v5211
        %v5852 = vpack.c.b16 %v5216, %v5214
        %v5853 = vpack.c.b16 %v5217, %v5215
        %v5854 = vpack.c.b16 %v5220, %v5218
        %v5855 = vpack.c.b16 %v5221, %v5219
        %v5856 = vpack.c.b16 %v5224, %v5222
        %v5857 = vpack.c.b16 %v5225, %v5223
        %v5858 = vpack.c.b16 %v5228, %v5226
        %v5859 = vpack.c.b16 %v5229, %v5227
        %v5860 = vpack.c.b16 %v5232, %v5230
        %v5861 = vpack.c.b16 %v5233, %v5231
        %v5862 = vpack.c.b16 %v5236, %v5234
        %v5863 = vpack.c.b16 %v5237, %v5235
        %v5864 = vpack.c.b16 %v5240, %v5238
        %v5865 = vpack.c.b16 %v5241, %v5239
        %v5866 = vpack.c.b16 %v5244, %v5242
        %v5867 = vpack.c.b16 %v5245, %v5243
        %v5868 = vpack.c.b16 %v5248, %v5246
        %v5869 = vpack.c.b16 %v5249, %v5247
        %v5870 = vpack.c.b16 %v5252, %v5250
        %v5871 = vpack.c.b16 %v5253, %v5251
        %v5872 = vpack.c.b16 %v5256, %v5254
        %v5873 = vpack.c.b16 %v5257, %v5255
        %v5874 = vpack.c.b16 %v5260, %v5258
        %v5875 = vpack.c.b16 %v5261, %v5259
        %v5876 = vpack.c.b16 %v5264, %v5262
        %v5877 = vpack.c.b16 %v5265, %v5263
        %v5878 = vpack.c.b16 %v5268, %v5266
        %v5879 = vpack.c.b16 %v5269, %v5267
        %v5880 = vpack.c.b16 %v5272, %v5270
        %v5881 = vpack.c.b16 %v5273, %v5271
        %v5882 = vpack.c.b16 %v5276, %v5274
        %v5883 = vpack.c.b16 %v5277, %v5275
        %v5884 = vpack.c.b16 %v5280, %v5278
        %v5885 = vpack.c.b16 %v5281, %v5279
        %v5886 = vpack.c.b16 %v5284, %v5282
        %v5887 = vpack.c.b16 %v5285, %v5283
        %v5888 = vpack.c.b16 %v5288, %v5286
        %v5889 = vpack.c.b16 %v5289, %v5287
        %v5890 = vpack.c.b16 %v5292, %v5290
        %v5891 = vpack.c.b16 %v5293, %v5291
        %v5892 = vpack.c.b16 %v5296, %v5294
        %v5893 = vpack.c.b16 %v5297, %v5295
        %v5894 = vpack.c.b16 %v5300, %v5298
        %v5895 = vpack.c.b16 %v5301, %v5299
        %v5896 = vpack.c.b16 %v5304, %v5302
        %v5897 = vpack.c.b16 %v5305, %v5303
        %v5898 = vpack.c.b16 %v5308, %v5306
        %v5899 = vpack.c.b16 %v5309, %v5307
        %v5900 = vpack.c.b16 %v5312, %v5310
        %v5901 = vpack.c.b16 %v5313, %v5311
        %v5902 = vpack.c.b16 %v5316, %v5314
        %v5903 = vpack.c.b16 %v5317, %v5315
        %v5904 = vpack.c.b16 %v5320, %v5318
        %v5905 = vpack.c.b16 %v5321, %v5319
        %v5906 = vpack.c.b16 %v5324, %v5322
        %v5907 = vpack.c.b16 %v5325, %v5323
        %v5908 = vpack.c.b16 %v5328, %v5326
        %v5909 = vpack.c.b16 %v5329, %v5327
        %v5910 = vpack.c.b16 %v5332, %v5330
        %v5911 = vpack.c.b16 %v5333, %v5331
        %v5912 = vpack.c.b16 %v5336, %v5334
        %v5913 = vpack.c.b16 %v5337, %v5335
        %6490 = vmatprep.subr.bf16.mxu0 %v5353
        %6491 = vmatpush1.bf16.msra.mxu0 %v5352
        %6492 = vmatprep.subr.bf16.mxu0 %v5351
        %6493 = vmatpush1.bf16.msra.mxu0 %v5350
        %6494 = vmatprep.subr.bf16.mxu0 %v5349
        %6495 = vmatpush1.bf16.msra.mxu0 %v5348
        %6496 = vmatprep.subr.bf16.mxu0 %v5347
        %6497 = vmatpush1.bf16.msra.mxu0 %v5346
        %6498 = vmatprep.subr.bf16.mxu0 %v5345
        %6499 = vmatpush1.bf16.msra.mxu0 %v5344
        %6500 = vmatprep.subr.bf16.mxu0 %v5343
        %6501 = vmatpush1.bf16.msra.mxu0 %v5342
        %6502 = vmatprep.subr.bf16.mxu0 %v5341
        %6503 = vmatpush1.bf16.msra.mxu0 %v5340
        %6504 = vmatprep.subr.bf16.mxu0 %v5339
        %6505 = vmatpush1.bf16.msra.mxu0 %v5338
        %6506 = vmatprep.subr.bf16.mxu0 %v5369
        %6507 = vmatpush2.bf16.msra.mxu0 %v5368
        %6508 = vmatprep.subr.bf16.mxu0 %v5367
        %6509 = vmatpush2.bf16.msra.mxu0 %v5366
        %6510 = vmatprep.subr.bf16.mxu0 %v5365
        %6511 = vmatpush2.bf16.msra.mxu0 %v5364
        %6512 = vmatprep.subr.bf16.mxu0 %v5363
        %6513 = vmatpush2.bf16.msra.mxu0 %v5362
        %6514 = vmatprep.subr.bf16.mxu0 %v5361
        %6515 = vmatpush2.bf16.msra.mxu0 %v5360
        %6516 = vmatprep.subr.bf16.mxu0 %v5359
        %6517 = vmatpush2.bf16.msra.mxu0 %v5358
        %6518 = vmatprep.subr.bf16.mxu0 %v5357
        %6519 = vmatpush2.bf16.msra.mxu0 %v5356
        %6520 = vmatprep.subr.bf16.mxu0 %v5355
        %6521 = vmatpush2.bf16.msra.mxu0 %v5354
        %6522 = vmatprep.mubr.bf16.mxu0 %v2447
        %6523 = vmatmul.mubr.bf16.gmra.mxu0 %v2446
        %v6524 = vpop.f32.mrf.mxu0
        %v6525 = vadd.f32 %v3603, %v6524
        %v6526 = vpop.f32.mrf.mxu0
        %v6527 = vadd.f32 %v3607, %v6526
        %v6528 = vpop.f32.mrf.mxu0
        %v6529 = vadd.f32 %v3603, %v6528
        %v6530 = vpop.f32.mrf.mxu0
        %v6531 = vadd.f32 %v3607, %v6530
        %6532 = vmatprep.mubr.bf16.mxu0 %v2451
        %6533 = vmatmul.mubr.bf16.gmra.mxu0 %v2450
        %v6534 = vpop.f32.mrf.mxu0
        %v6535 = vadd.f32 %v3603, %v6534
        %v6536 = vpop.f32.mrf.mxu0
        %v6537 = vadd.f32 %v3607, %v6536
        %v6538 = vpop.f32.mrf.mxu0
        %v6539 = vadd.f32 %v3603, %v6538
        %v6540 = vpop.f32.mrf.mxu0
        %v6541 = vadd.f32 %v3607, %v6540
        %6542 = vmatprep.mubr.bf16.mxu0 %v2455
        %6543 = vmatmul.mubr.bf16.gmra.mxu0 %v2454
        %v6544 = vpop.f32.mrf.mxu0
        %v6545 = vadd.f32 %v3603, %v6544
        %v6546 = vpop.f32.mrf.mxu0
        %v6547 = vadd.f32 %v3607, %v6546
        %v6548 = vpop.f32.mrf.mxu0
        %v6549 = vadd.f32 %v3603, %v6548
        %v6550 = vpop.f32.mrf.mxu0
        %v6551 = vadd.f32 %v3607, %v6550
        %6552 = vmatprep.mubr.bf16.mxu0 %v2459
        %6553 = vmatmul.mubr.bf16.gmra.mxu0 %v2458
        %v6554 = vpop.f32.mrf.mxu0
        %v6555 = vadd.f32 %v3603, %v6554
        %v6556 = vpop.f32.mrf.mxu0
        %v6557 = vadd.f32 %v3607, %v6556
        %v6558 = vpop.f32.mrf.mxu0
        %v6559 = vadd.f32 %v3603, %v6558
        %v6560 = vpop.f32.mrf.mxu0
        %v6561 = vadd.f32 %v3607, %v6560
        %6562 = vdwg.mxu0
        %6563 = vmatprep.subr.bf16.mxu0 %v5385
        %6564 = vmatpush1.bf16.msra.mxu0 %v5384
        %6565 = vmatprep.subr.bf16.mxu0 %v5383
        %6566 = vmatpush1.bf16.msra.mxu0 %v5382
        %6567 = vmatprep.subr.bf16.mxu0 %v5381
        %6568 = vmatpush1.bf16.msra.mxu0 %v5380
        %6569 = vmatprep.subr.bf16.mxu0 %v5379
        %6570 = vmatpush1.bf16.msra.mxu0 %v5378
        %6571 = vmatprep.subr.bf16.mxu0 %v5377
        %6572 = vmatpush1.bf16.msra.mxu0 %v5376
        %6573 = vmatprep.subr.bf16.mxu0 %v5375
        %6574 = vmatpush1.bf16.msra.mxu0 %v5374
        %6575 = vmatprep.subr.bf16.mxu0 %v5373
        %6576 = vmatpush1.bf16.msra.mxu0 %v5372
        %6577 = vmatprep.subr.bf16.mxu0 %v5371
        %6578 = vmatpush1.bf16.msra.mxu0 %v5370
        %6579 = vmatprep.subr.bf16.mxu0 %v5401
        %6580 = vmatpush2.bf16.msra.mxu0 %v5400
        %6581 = vmatprep.subr.bf16.mxu0 %v5399
        %6582 = vmatpush2.bf16.msra.mxu0 %v5398
        %6583 = vmatprep.subr.bf16.mxu0 %v5397
        %6584 = vmatpush2.bf16.msra.mxu0 %v5396
        %6585 = vmatprep.subr.bf16.mxu0 %v5395
        %6586 = vmatpush2.bf16.msra.mxu0 %v5394
        %6587 = vmatprep.subr.bf16.mxu0 %v5393
        %6588 = vmatpush2.bf16.msra.mxu0 %v5392
        %6589 = vmatprep.subr.bf16.mxu0 %v5391
        %6590 = vmatpush2.bf16.msra.mxu0 %v5390
        %6591 = vmatprep.subr.bf16.mxu0 %v5389
        %6592 = vmatpush2.bf16.msra.mxu0 %v5388
        %6593 = vmatprep.subr.bf16.mxu0 %v5387
        %6594 = vmatpush2.bf16.msra.mxu0 %v5386
        %6595 = vmatprep.mubr.bf16.mxu0 %v2449
        %6596 = vmatmul.mubr.bf16.gmra.mxu0 %v2448
        %v6597 = vpop.f32.mrf.mxu0
        %v6598 = vadd.f32 %v6525, %v6597
        %v6599 = vpop.f32.mrf.mxu0
        %v6600 = vadd.f32 %v6527, %v6599
        %v6601 = vpop.f32.mrf.mxu0
        %v6602 = vadd.f32 %v6529, %v6601
        %v6603 = vpop.f32.mrf.mxu0
        %v6604 = vadd.f32 %v6531, %v6603
        %6605 = vmatprep.mubr.bf16.mxu0 %v2453
        %6606 = vmatmul.mubr.bf16.gmra.mxu0 %v2452
        %v6607 = vpop.f32.mrf.mxu0
        %v6608 = vadd.f32 %v6535, %v6607
        %v6609 = vpop.f32.mrf.mxu0
        %v6610 = vadd.f32 %v6537, %v6609
        %v6611 = vpop.f32.mrf.mxu0
        %v6612 = vadd.f32 %v6539, %v6611
        %v6613 = vpop.f32.mrf.mxu0
        %v6614 = vadd.f32 %v6541, %v6613
        %6615 = vmatprep.mubr.bf16.mxu0 %v2457
        %6616 = vmatmul.mubr.bf16.gmra.mxu0 %v2456
        %v6617 = vpop.f32.mrf.mxu0
        %v6618 = vadd.f32 %v6545, %v6617
        %v6619 = vpop.f32.mrf.mxu0
        %v6620 = vadd.f32 %v6547, %v6619
        %v6621 = vpop.f32.mrf.mxu0
        %v6622 = vadd.f32 %v6549, %v6621
        %v6623 = vpop.f32.mrf.mxu0
        %v6624 = vadd.f32 %v6551, %v6623
        %6625 = vmatprep.mubr.bf16.mxu0 %v2461
        %6626 = vmatmul.mubr.bf16.gmra.mxu0 %v2460
        %v6627 = vpop.f32.mrf.mxu0
        %v6628 = vadd.f32 %v6555, %v6627
        %v6629 = vpop.f32.mrf.mxu0
        %v6630 = vadd.f32 %v6557, %v6629
        %v6631 = vpop.f32.mrf.mxu0
        %v6632 = vadd.f32 %v6559, %v6631
        %v6633 = vpop.f32.mrf.mxu0
        %v6634 = vadd.f32 %v6561, %v6633
        %6635 = vdwg.mxu0
        %6636 = vmatprep.subr.bf16.mxu0 %v5417
        %6637 = vmatpush1.bf16.msra.mxu0 %v5416
        %6638 = vmatprep.subr.bf16.mxu0 %v5415
        %6639 = vmatpush1.bf16.msra.mxu0 %v5414
        %6640 = vmatprep.subr.bf16.mxu0 %v5413
        %6641 = vmatpush1.bf16.msra.mxu0 %v5412
        %6642 = vmatprep.subr.bf16.mxu0 %v5411
        %6643 = vmatpush1.bf16.msra.mxu0 %v5410
        %6644 = vmatprep.subr.bf16.mxu0 %v5409
        %6645 = vmatpush1.bf16.msra.mxu0 %v5408
        %6646 = vmatprep.subr.bf16.mxu0 %v5407
        %6647 = vmatpush1.bf16.msra.mxu0 %v5406
        %6648 = vmatprep.subr.bf16.mxu0 %v5405
        %6649 = vmatpush1.bf16.msra.mxu0 %v5404
        %6650 = vmatprep.subr.bf16.mxu0 %v5403
        %6651 = vmatpush1.bf16.msra.mxu0 %v5402
        %6652 = vmatprep.subr.bf16.mxu0 %v5433
        %6653 = vmatpush2.bf16.msra.mxu0 %v5432
        %6654 = vmatprep.subr.bf16.mxu0 %v5431
        %6655 = vmatpush2.bf16.msra.mxu0 %v5430
        %6656 = vmatprep.subr.bf16.mxu0 %v5429
        %6657 = vmatpush2.bf16.msra.mxu0 %v5428
        %6658 = vmatprep.subr.bf16.mxu0 %v5427
        %6659 = vmatpush2.bf16.msra.mxu0 %v5426
        %6660 = vmatprep.subr.bf16.mxu0 %v5425
        %6661 = vmatpush2.bf16.msra.mxu0 %v5424
        %6662 = vmatprep.subr.bf16.mxu0 %v5423
        %6663 = vmatpush2.bf16.msra.mxu0 %v5422
        %6664 = vmatprep.subr.bf16.mxu0 %v5421
        %6665 = vmatpush2.bf16.msra.mxu0 %v5420
        %6666 = vmatprep.subr.bf16.mxu0 %v5419
        %6667 = vmatpush2.bf16.msra.mxu0 %v5418
        %6668 = vmatprep.mubr.bf16.mxu0 %v2511
        %6669 = vmatmul.mubr.bf16.gmra.mxu0 %v2510
        %v6670 = vpop.f32.mrf.mxu0
        %v6671 = vadd.f32 %v6598, %v6670
        %v6672 = vpop.f32.mrf.mxu0
        %v6673 = vadd.f32 %v6600, %v6672
        %v6674 = vpop.f32.mrf.mxu0
        %v6675 = vadd.f32 %v6602, %v6674
        %v6676 = vpop.f32.mrf.mxu0
        %v6677 = vadd.f32 %v6604, %v6676
        %6678 = vmatprep.mubr.bf16.mxu0 %v2515
        %6679 = vmatmul.mubr.bf16.gmra.mxu0 %v2514
        %v6680 = vpop.f32.mrf.mxu0
        %v6681 = vadd.f32 %v6608, %v6680
        %v6682 = vpop.f32.mrf.mxu0
        %v6683 = vadd.f32 %v6610, %v6682
        %v6684 = vpop.f32.mrf.mxu0
        %v6685 = vadd.f32 %v6612, %v6684
        %v6686 = vpop.f32.mrf.mxu0
        %v6687 = vadd.f32 %v6614, %v6686
        %6688 = vmatprep.mubr.bf16.mxu0 %v2519
        %6689 = vmatmul.mubr.bf16.gmra.mxu0 %v2518
        %v6690 = vpop.f32.mrf.mxu0
        %v6691 = vadd.f32 %v6618, %v6690
        %v6692 = vpop.f32.mrf.mxu0
        %v6693 = vadd.f32 %v6620, %v6692
        %v6694 = vpop.f32.mrf.mxu0
        %v6695 = vadd.f32 %v6622, %v6694
        %v6696 = vpop.f32.mrf.mxu0
        %v6697 = vadd.f32 %v6624, %v6696
        %6698 = vmatprep.mubr.bf16.mxu0 %v2523
        %6699 = vmatmul.mubr.bf16.gmra.mxu0 %v2522
        %v6700 = vpop.f32.mrf.mxu0
        %v6701 = vadd.f32 %v6628, %v6700
        %v6702 = vpop.f32.mrf.mxu0
        %v6703 = vadd.f32 %v6630, %v6702
        %v6704 = vpop.f32.mrf.mxu0
        %v6705 = vadd.f32 %v6632, %v6704
        %v6706 = vpop.f32.mrf.mxu0
        %v6707 = vadd.f32 %v6634, %v6706
        %6708 = vdwg.mxu0
        %6709 = vmatprep.subr.bf16.mxu0 %v5449
        %6710 = vmatpush1.bf16.msra.mxu0 %v5448
        %6711 = vmatprep.subr.bf16.mxu0 %v5447
        %6712 = vmatpush1.bf16.msra.mxu0 %v5446
        %6713 = vmatprep.subr.bf16.mxu0 %v5445
        %6714 = vmatpush1.bf16.msra.mxu0 %v5444
        %6715 = vmatprep.subr.bf16.mxu0 %v5443
        %6716 = vmatpush1.bf16.msra.mxu0 %v5442
        %6717 = vmatprep.subr.bf16.mxu0 %v5441
        %6718 = vmatpush1.bf16.msra.mxu0 %v5440
        %6719 = vmatprep.subr.bf16.mxu0 %v5439
        %6720 = vmatpush1.bf16.msra.mxu0 %v5438
        %6721 = vmatprep.subr.bf16.mxu0 %v5437
        %6722 = vmatpush1.bf16.msra.mxu0 %v5436
        %6723 = vmatprep.subr.bf16.mxu0 %v5435
        %6724 = vmatpush1.bf16.msra.mxu0 %v5434
        %6725 = vmatprep.subr.bf16.mxu0 %v5465
        %6726 = vmatpush2.bf16.msra.mxu0 %v5464
        %6727 = vmatprep.subr.bf16.mxu0 %v5463
        %6728 = vmatpush2.bf16.msra.mxu0 %v5462
        %6729 = vmatprep.subr.bf16.mxu0 %v5461
        %6730 = vmatpush2.bf16.msra.mxu0 %v5460
        %6731 = vmatprep.subr.bf16.mxu0 %v5459
        %6732 = vmatpush2.bf16.msra.mxu0 %v5458
        %6733 = vmatprep.subr.bf16.mxu0 %v5457
        %6734 = vmatpush2.bf16.msra.mxu0 %v5456
        %6735 = vmatprep.subr.bf16.mxu0 %v5455
        %6736 = vmatpush2.bf16.msra.mxu0 %v5454
        %6737 = vmatprep.subr.bf16.mxu0 %v5453
        %6738 = vmatpush2.bf16.msra.mxu0 %v5452
        %6739 = vmatprep.subr.bf16.mxu0 %v5451
        %6740 = vmatpush2.bf16.msra.mxu0 %v5450
        %6741 = vmatprep.mubr.bf16.mxu0 %v2513
        %6742 = vmatmul.mubr.bf16.gmra.mxu0 %v2512
        %v6743 = vpop.f32.mrf.mxu0
        %v6744 = vadd.f32 %v6671, %v6743
        %v6745 = vpop.f32.mrf.mxu0
        %v6746 = vadd.f32 %v6673, %v6745
        %v6747 = vpop.f32.mrf.mxu0
        %v6748 = vadd.f32 %v6675, %v6747
        %v6749 = vpop.f32.mrf.mxu0
        %v6750 = vadd.f32 %v6677, %v6749
        %6751 = vmatprep.mubr.bf16.mxu0 %v2517
        %6752 = vmatmul.mubr.bf16.gmra.mxu0 %v2516
        %v6753 = vpop.f32.mrf.mxu0
        %v6754 = vadd.f32 %v6681, %v6753
        %v6755 = vpop.f32.mrf.mxu0
        %v6756 = vadd.f32 %v6683, %v6755
        %v6757 = vpop.f32.mrf.mxu0
        %v6758 = vadd.f32 %v6685, %v6757
        %v6759 = vpop.f32.mrf.mxu0
        %v6760 = vadd.f32 %v6687, %v6759
        %6761 = vmatprep.mubr.bf16.mxu0 %v2521
        %6762 = vmatmul.mubr.bf16.gmra.mxu0 %v2520
        %v6763 = vpop.f32.mrf.mxu0
        %v6764 = vadd.f32 %v6691, %v6763
        %v6765 = vpop.f32.mrf.mxu0
        %v6766 = vadd.f32 %v6693, %v6765
        %v6767 = vpop.f32.mrf.mxu0
        %v6768 = vadd.f32 %v6695, %v6767
        %v6769 = vpop.f32.mrf.mxu0
        %v6770 = vadd.f32 %v6697, %v6769
        %6771 = vmatprep.mubr.bf16.mxu0 %v2525
        %6772 = vmatmul.mubr.bf16.gmra.mxu0 %v2524
        %v6773 = vpop.f32.mrf.mxu0
        %v6774 = vadd.f32 %v6701, %v6773
        %v6775 = vpop.f32.mrf.mxu0
        %v6776 = vadd.f32 %v6703, %v6775
        %v6777 = vpop.f32.mrf.mxu0
        %v6778 = vadd.f32 %v6705, %v6777
        %v6779 = vpop.f32.mrf.mxu0
        %v6780 = vadd.f32 %v6707, %v6779
        %6781 = vdwg.mxu0
        %6782 = vmatprep.subr.bf16.mxu0 %v5481
        %6783 = vmatpush1.bf16.msra.mxu0 %v5480
        %6784 = vmatprep.subr.bf16.mxu0 %v5479
        %6785 = vmatpush1.bf16.msra.mxu0 %v5478
        %6786 = vmatprep.subr.bf16.mxu0 %v5477
        %6787 = vmatpush1.bf16.msra.mxu0 %v5476
        %6788 = vmatprep.subr.bf16.mxu0 %v5475
        %6789 = vmatpush1.bf16.msra.mxu0 %v5474
        %6790 = vmatprep.subr.bf16.mxu0 %v5473
        %6791 = vmatpush1.bf16.msra.mxu0 %v5472
        %6792 = vmatprep.subr.bf16.mxu0 %v5471
        %6793 = vmatpush1.bf16.msra.mxu0 %v5470
        %6794 = vmatprep.subr.bf16.mxu0 %v5469
        %6795 = vmatpush1.bf16.msra.mxu0 %v5468
        %6796 = vmatprep.subr.bf16.mxu0 %v5467
        %6797 = vmatpush1.bf16.msra.mxu0 %v5466
        %6798 = vmatprep.subr.bf16.mxu0 %v5497
        %6799 = vmatpush2.bf16.msra.mxu0 %v5496
        %6800 = vmatprep.subr.bf16.mxu0 %v5495
        %6801 = vmatpush2.bf16.msra.mxu0 %v5494
        %6802 = vmatprep.subr.bf16.mxu0 %v5493
        %6803 = vmatpush2.bf16.msra.mxu0 %v5492
        %6804 = vmatprep.subr.bf16.mxu0 %v5491
        %6805 = vmatpush2.bf16.msra.mxu0 %v5490
        %6806 = vmatprep.subr.bf16.mxu0 %v5489
        %6807 = vmatpush2.bf16.msra.mxu0 %v5488
        %6808 = vmatprep.subr.bf16.mxu0 %v5487
        %6809 = vmatpush2.bf16.msra.mxu0 %v5486
        %6810 = vmatprep.subr.bf16.mxu0 %v5485
        %6811 = vmatpush2.bf16.msra.mxu0 %v5484
        %6812 = vmatprep.subr.bf16.mxu0 %v5483
        %6813 = vmatpush2.bf16.msra.mxu0 %v5482
        %6814 = vmatprep.mubr.bf16.mxu0 %v2575
        %6815 = vmatmul.mubr.bf16.gmra.mxu0 %v2574
        %v6816 = vpop.f32.mrf.mxu0
        %v6817 = vadd.f32 %v6744, %v6816
        %v6818 = vpop.f32.mrf.mxu0
        %v6819 = vadd.f32 %v6746, %v6818
        %v6820 = vpop.f32.mrf.mxu0
        %v6821 = vadd.f32 %v6748, %v6820
        %v6822 = vpop.f32.mrf.mxu0
        %v6823 = vadd.f32 %v6750, %v6822
        %6824 = vmatprep.mubr.bf16.mxu0 %v2579
        %6825 = vmatmul.mubr.bf16.gmra.mxu0 %v2578
        %v6826 = vpop.f32.mrf.mxu0
        %v6827 = vadd.f32 %v6754, %v6826
        %v6828 = vpop.f32.mrf.mxu0
        %v6829 = vadd.f32 %v6756, %v6828
        %v6830 = vpop.f32.mrf.mxu0
        %v6831 = vadd.f32 %v6758, %v6830
        %v6832 = vpop.f32.mrf.mxu0
        %v6833 = vadd.f32 %v6760, %v6832
        %6834 = vmatprep.mubr.bf16.mxu0 %v2583
        %6835 = vmatmul.mubr.bf16.gmra.mxu0 %v2582
        %v6836 = vpop.f32.mrf.mxu0
        %v6837 = vadd.f32 %v6764, %v6836
        %v6838 = vpop.f32.mrf.mxu0
        %v6839 = vadd.f32 %v6766, %v6838
        %v6840 = vpop.f32.mrf.mxu0
        %v6841 = vadd.f32 %v6768, %v6840
        %v6842 = vpop.f32.mrf.mxu0
        %v6843 = vadd.f32 %v6770, %v6842
        %6844 = vmatprep.mubr.bf16.mxu0 %v2587
        %6845 = vmatmul.mubr.bf16.gmra.mxu0 %v2586
        %v6846 = vpop.f32.mrf.mxu0
        %v6847 = vadd.f32 %v6774, %v6846
        %v6848 = vpop.f32.mrf.mxu0
        %v6849 = vadd.f32 %v6776, %v6848
        %v6850 = vpop.f32.mrf.mxu0
        %v6851 = vadd.f32 %v6778, %v6850
        %v6852 = vpop.f32.mrf.mxu0
        %v6853 = vadd.f32 %v6780, %v6852
        %6854 = vdwg.mxu0
        %6855 = vmatprep.subr.bf16.mxu0 %v5513
        %6856 = vmatpush1.bf16.msra.mxu0 %v5512
        %6857 = vmatprep.subr.bf16.mxu0 %v5511
        %6858 = vmatpush1.bf16.msra.mxu0 %v5510
        %6859 = vmatprep.subr.bf16.mxu0 %v5509
        %6860 = vmatpush1.bf16.msra.mxu0 %v5508
        %6861 = vmatprep.subr.bf16.mxu0 %v5507
        %6862 = vmatpush1.bf16.msra.mxu0 %v5506
        %6863 = vmatprep.subr.bf16.mxu0 %v5505
        %6864 = vmatpush1.bf16.msra.mxu0 %v5504
        %6865 = vmatprep.subr.bf16.mxu0 %v5503
        %6866 = vmatpush1.bf16.msra.mxu0 %v5502
        %6867 = vmatprep.subr.bf16.mxu0 %v5501
        %6868 = vmatpush1.bf16.msra.mxu0 %v5500
        %6869 = vmatprep.subr.bf16.mxu0 %v5499
        %6870 = vmatpush1.bf16.msra.mxu0 %v5498
        %6871 = vmatprep.subr.bf16.mxu0 %v5529
        %6872 = vmatpush2.bf16.msra.mxu0 %v5528
        %6873 = vmatprep.subr.bf16.mxu0 %v5527
        %6874 = vmatpush2.bf16.msra.mxu0 %v5526
        %6875 = vmatprep.subr.bf16.mxu0 %v5525
        %6876 = vmatpush2.bf16.msra.mxu0 %v5524
        %6877 = vmatprep.subr.bf16.mxu0 %v5523
        %6878 = vmatpush2.bf16.msra.mxu0 %v5522
        %6879 = vmatprep.subr.bf16.mxu0 %v5521
        %6880 = vmatpush2.bf16.msra.mxu0 %v5520
        %6881 = vmatprep.subr.bf16.mxu0 %v5519
        %6882 = vmatpush2.bf16.msra.mxu0 %v5518
        %6883 = vmatprep.subr.bf16.mxu0 %v5517
        %6884 = vmatpush2.bf16.msra.mxu0 %v5516
        %6885 = vmatprep.subr.bf16.mxu0 %v5515
        %6886 = vmatpush2.bf16.msra.mxu0 %v5514
        %6887 = vmatprep.mubr.bf16.mxu0 %v2577
        %6888 = vmatmul.mubr.bf16.gmra.mxu0 %v2576
        %v6889 = vpop.f32.mrf.mxu0
        %v6890 = vadd.f32 %v6817, %v6889
        %v6891 = vpop.f32.mrf.mxu0
        %v6892 = vadd.f32 %v6819, %v6891
        %v6893 = vpop.f32.mrf.mxu0
        %v6894 = vadd.f32 %v6821, %v6893
        %v6895 = vpop.f32.mrf.mxu0
        %v6896 = vadd.f32 %v6823, %v6895
        %6897 = vmatprep.mubr.bf16.mxu0 %v2581
        %6898 = vmatmul.mubr.bf16.gmra.mxu0 %v2580
        %v6899 = vpop.f32.mrf.mxu0
        %v6900 = vadd.f32 %v6827, %v6899
        %v6901 = vpop.f32.mrf.mxu0
        %v6902 = vadd.f32 %v6829, %v6901
        %v6903 = vpop.f32.mrf.mxu0
        %v6904 = vadd.f32 %v6831, %v6903
        %v6905 = vpop.f32.mrf.mxu0
        %v6906 = vadd.f32 %v6833, %v6905
        %6907 = vmatprep.mubr.bf16.mxu0 %v2585
        %6908 = vmatmul.mubr.bf16.gmra.mxu0 %v2584
        %v6909 = vpop.f32.mrf.mxu0
        %v6910 = vadd.f32 %v6837, %v6909
        %v6911 = vpop.f32.mrf.mxu0
        %v6912 = vadd.f32 %v6839, %v6911
        %v6913 = vpop.f32.mrf.mxu0
        %v6914 = vadd.f32 %v6841, %v6913
        %v6915 = vpop.f32.mrf.mxu0
        %v6916 = vadd.f32 %v6843, %v6915
        %6917 = vmatprep.mubr.bf16.mxu0 %v2589
        %6918 = vmatmul.mubr.bf16.gmra.mxu0 %v2588
        %v6919 = vpop.f32.mrf.mxu0
        %v6920 = vadd.f32 %v6847, %v6919
        %v6921 = vpop.f32.mrf.mxu0
        %v6922 = vadd.f32 %v6849, %v6921
        %v6923 = vpop.f32.mrf.mxu0
        %v6924 = vadd.f32 %v6851, %v6923
        %v6925 = vpop.f32.mrf.mxu0
        %v6926 = vadd.f32 %v6853, %v6925
        %6927 = vdwg.mxu0
        %6928 = vmatprep.subr.bf16.mxu0 %v5545
        %6929 = vmatpush1.bf16.msra.mxu0 %v5544
        %6930 = vmatprep.subr.bf16.mxu0 %v5543
        %6931 = vmatpush1.bf16.msra.mxu0 %v5542
        %6932 = vmatprep.subr.bf16.mxu0 %v5541
        %6933 = vmatpush1.bf16.msra.mxu0 %v5540
        %6934 = vmatprep.subr.bf16.mxu0 %v5539
        %6935 = vmatpush1.bf16.msra.mxu0 %v5538
        %6936 = vmatprep.subr.bf16.mxu0 %v5537
        %6937 = vmatpush1.bf16.msra.mxu0 %v5536
        %6938 = vmatprep.subr.bf16.mxu0 %v5535
        %6939 = vmatpush1.bf16.msra.mxu0 %v5534
        %6940 = vmatprep.subr.bf16.mxu0 %v5533
        %6941 = vmatpush1.bf16.msra.mxu0 %v5532
        %6942 = vmatprep.subr.bf16.mxu0 %v5531
        %6943 = vmatpush1.bf16.msra.mxu0 %v5530
        %6944 = vmatprep.subr.bf16.mxu0 %v5561
        %6945 = vmatpush2.bf16.msra.mxu0 %v5560
        %6946 = vmatprep.subr.bf16.mxu0 %v5559
        %6947 = vmatpush2.bf16.msra.mxu0 %v5558
        %6948 = vmatprep.subr.bf16.mxu0 %v5557
        %6949 = vmatpush2.bf16.msra.mxu0 %v5556
        %6950 = vmatprep.subr.bf16.mxu0 %v5555
        %6951 = vmatpush2.bf16.msra.mxu0 %v5554
        %6952 = vmatprep.subr.bf16.mxu0 %v5553
        %6953 = vmatpush2.bf16.msra.mxu0 %v5552
        %6954 = vmatprep.subr.bf16.mxu0 %v5551
        %6955 = vmatpush2.bf16.msra.mxu0 %v5550
        %6956 = vmatprep.subr.bf16.mxu0 %v5549
        %6957 = vmatpush2.bf16.msra.mxu0 %v5548
        %6958 = vmatprep.subr.bf16.mxu0 %v5547
        %6959 = vmatpush2.bf16.msra.mxu0 %v5546
        %6960 = vmatprep.mubr.bf16.mxu0 %v2655
        %6961 = vmatmul.mubr.bf16.gmra.mxu0 %v2654
        %v6962 = vpop.f32.mrf.mxu0
        %v6963 = vadd.f32 %v6890, %v6962
        %v6964 = vpop.f32.mrf.mxu0
        %v6965 = vadd.f32 %v6892, %v6964
        %v6966 = vpop.f32.mrf.mxu0
        %v6967 = vadd.f32 %v6894, %v6966
        %v6968 = vpop.f32.mrf.mxu0
        %v6969 = vadd.f32 %v6896, %v6968
        %6970 = vmatprep.mubr.bf16.mxu0 %v2659
        %6971 = vmatmul.mubr.bf16.gmra.mxu0 %v2658
        %v6972 = vpop.f32.mrf.mxu0
        %v6973 = vadd.f32 %v6900, %v6972
        %v6974 = vpop.f32.mrf.mxu0
        %v6975 = vadd.f32 %v6902, %v6974
        %v6976 = vpop.f32.mrf.mxu0
        %v6977 = vadd.f32 %v6904, %v6976
        %v6978 = vpop.f32.mrf.mxu0
        %v6979 = vadd.f32 %v6906, %v6978
        %6980 = vmatprep.mubr.bf16.mxu0 %v2663
        %6981 = vmatmul.mubr.bf16.gmra.mxu0 %v2662
        %v6982 = vpop.f32.mrf.mxu0
        %v6983 = vadd.f32 %v6910, %v6982
        %v6984 = vpop.f32.mrf.mxu0
        %v6985 = vadd.f32 %v6912, %v6984
        %v6986 = vpop.f32.mrf.mxu0
        %v6987 = vadd.f32 %v6914, %v6986
        %v6988 = vpop.f32.mrf.mxu0
        %v6989 = vadd.f32 %v6916, %v6988
        %6990 = vmatprep.mubr.bf16.mxu0 %v2667
        %6991 = vmatmul.mubr.bf16.gmra.mxu0 %v2666
        %v6992 = vpop.f32.mrf.mxu0
        %v6993 = vadd.f32 %v6920, %v6992
        %v6994 = vpop.f32.mrf.mxu0
        %v6995 = vadd.f32 %v6922, %v6994
        %v6996 = vpop.f32.mrf.mxu0
        %v6997 = vadd.f32 %v6924, %v6996
        %v6998 = vpop.f32.mrf.mxu0
        %v6999 = vadd.f32 %v6926, %v6998
        %7000 = vdwg.mxu0
        %7001 = vmatprep.subr.bf16.mxu0 %v5577
        %7002 = vmatpush1.bf16.msra.mxu0 %v5576
        %7003 = vmatprep.subr.bf16.mxu0 %v5575
        %7004 = vmatpush1.bf16.msra.mxu0 %v5574
        %7005 = vmatprep.subr.bf16.mxu0 %v5573
        %7006 = vmatpush1.bf16.msra.mxu0 %v5572
        %7007 = vmatprep.subr.bf16.mxu0 %v5571
        %7008 = vmatpush1.bf16.msra.mxu0 %v5570
        %7009 = vmatprep.subr.bf16.mxu0 %v5569
        %7010 = vmatpush1.bf16.msra.mxu0 %v5568
        %7011 = vmatprep.subr.bf16.mxu0 %v5567
        %7012 = vmatpush1.bf16.msra.mxu0 %v5566
        %7013 = vmatprep.subr.bf16.mxu0 %v5565
        %7014 = vmatpush1.bf16.msra.mxu0 %v5564
        %7015 = vmatprep.subr.bf16.mxu0 %v5563
        %7016 = vmatpush1.bf16.msra.mxu0 %v5562
        %7017 = vmatprep.subr.bf16.mxu0 %v5593
        %7018 = vmatpush2.bf16.msra.mxu0 %v5592
        %7019 = vmatprep.subr.bf16.mxu0 %v5591
        %7020 = vmatpush2.bf16.msra.mxu0 %v5590
        %7021 = vmatprep.subr.bf16.mxu0 %v5589
        %7022 = vmatpush2.bf16.msra.mxu0 %v5588
        %7023 = vmatprep.subr.bf16.mxu0 %v5587
        %7024 = vmatpush2.bf16.msra.mxu0 %v5586
        %7025 = vmatprep.subr.bf16.mxu0 %v5585
        %7026 = vmatpush2.bf16.msra.mxu0 %v5584
        %7027 = vmatprep.subr.bf16.mxu0 %v5583
        %7028 = vmatpush2.bf16.msra.mxu0 %v5582
        %7029 = vmatprep.subr.bf16.mxu0 %v5581
        %7030 = vmatpush2.bf16.msra.mxu0 %v5580
        %7031 = vmatprep.subr.bf16.mxu0 %v5579
        %7032 = vmatpush2.bf16.msra.mxu0 %v5578
        %7033 = vmatprep.mubr.bf16.mxu0 %v2657
        %7034 = vmatmul.mubr.bf16.gmra.mxu0 %v2656
        %v7035 = vpop.f32.mrf.mxu0
        %v7036 = vadd.f32 %v6963, %v7035
        %v7037 = vpop.f32.mrf.mxu0
        %v7038 = vadd.f32 %v6965, %v7037
        %v7039 = vpop.f32.mrf.mxu0
        %v7040 = vadd.f32 %v6967, %v7039
        %v7041 = vpop.f32.mrf.mxu0
        %v7042 = vadd.f32 %v6969, %v7041
        %7043 = vmatprep.mubr.bf16.mxu0 %v2661
        %7044 = vmatmul.mubr.bf16.gmra.mxu0 %v2660
        %v7045 = vpop.f32.mrf.mxu0
        %v7046 = vadd.f32 %v6973, %v7045
        %v7047 = vpop.f32.mrf.mxu0
        %v7048 = vadd.f32 %v6975, %v7047
        %v7049 = vpop.f32.mrf.mxu0
        %v7050 = vadd.f32 %v6977, %v7049
        %v7051 = vpop.f32.mrf.mxu0
        %v7052 = vadd.f32 %v6979, %v7051
        %7053 = vmatprep.mubr.bf16.mxu0 %v2665
        %7054 = vmatmul.mubr.bf16.gmra.mxu0 %v2664
        %v7055 = vpop.f32.mrf.mxu0
        %v7056 = vadd.f32 %v6983, %v7055
        %v7057 = vpop.f32.mrf.mxu0
        %v7058 = vadd.f32 %v6985, %v7057
        %v7059 = vpop.f32.mrf.mxu0
        %v7060 = vadd.f32 %v6987, %v7059
        %v7061 = vpop.f32.mrf.mxu0
        %v7062 = vadd.f32 %v6989, %v7061
        %7063 = vmatprep.mubr.bf16.mxu0 %v2669
        %7064 = vmatmul.mubr.bf16.gmra.mxu0 %v2668
        %v7065 = vpop.f32.mrf.mxu0
        %v7066 = vadd.f32 %v6993, %v7065
        %v7067 = vpop.f32.mrf.mxu0
        %v7068 = vadd.f32 %v6995, %v7067
        %v7069 = vpop.f32.mrf.mxu0
        %v7070 = vadd.f32 %v6997, %v7069
        %v7071 = vpop.f32.mrf.mxu0
        %v7072 = vadd.f32 %v6999, %v7071
        %7073 = vdwg.mxu0
        %7074 = vmatprep.subr.bf16.mxu0 %v5609
        %7075 = vmatpush1.bf16.msra.mxu0 %v5608
        %7076 = vmatprep.subr.bf16.mxu0 %v5607
        %7077 = vmatpush1.bf16.msra.mxu0 %v5606
        %7078 = vmatprep.subr.bf16.mxu0 %v5605
        %7079 = vmatpush1.bf16.msra.mxu0 %v5604
        %7080 = vmatprep.subr.bf16.mxu0 %v5603
        %7081 = vmatpush1.bf16.msra.mxu0 %v5602
        %7082 = vmatprep.subr.bf16.mxu0 %v5601
        %7083 = vmatpush1.bf16.msra.mxu0 %v5600
        %7084 = vmatprep.subr.bf16.mxu0 %v5599
        %7085 = vmatpush1.bf16.msra.mxu0 %v5598
        %7086 = vmatprep.subr.bf16.mxu0 %v5597
        %7087 = vmatpush1.bf16.msra.mxu0 %v5596
        %7088 = vmatprep.subr.bf16.mxu0 %v5595
        %7089 = vmatpush1.bf16.msra.mxu0 %v5594
        %7090 = vmatprep.subr.bf16.mxu0 %v5625
        %7091 = vmatpush2.bf16.msra.mxu0 %v5624
        %7092 = vmatprep.subr.bf16.mxu0 %v5623
        %7093 = vmatpush2.bf16.msra.mxu0 %v5622
        %7094 = vmatprep.subr.bf16.mxu0 %v5621
        %7095 = vmatpush2.bf16.msra.mxu0 %v5620
        %7096 = vmatprep.subr.bf16.mxu0 %v5619
        %7097 = vmatpush2.bf16.msra.mxu0 %v5618
        %7098 = vmatprep.subr.bf16.mxu0 %v5617
        %7099 = vmatpush2.bf16.msra.mxu0 %v5616
        %7100 = vmatprep.subr.bf16.mxu0 %v5615
        %7101 = vmatpush2.bf16.msra.mxu0 %v5614
        %7102 = vmatprep.subr.bf16.mxu0 %v5613
        %7103 = vmatpush2.bf16.msra.mxu0 %v5612
        %7104 = vmatprep.subr.bf16.mxu0 %v5611
        %7105 = vmatpush2.bf16.msra.mxu0 %v5610
        %7106 = vmatprep.mubr.bf16.mxu0 %v2719
        %7107 = vmatmul.mubr.bf16.gmra.mxu0 %v2718
        %v7108 = vpop.f32.mrf.mxu0
        %v7109 = vadd.f32 %v7036, %v7108
        %v7110 = vpop.f32.mrf.mxu0
        %v7111 = vadd.f32 %v7038, %v7110
        %v7112 = vpop.f32.mrf.mxu0
        %v7113 = vadd.f32 %v7040, %v7112
        %v7114 = vpop.f32.mrf.mxu0
        %v7115 = vadd.f32 %v7042, %v7114
        %7116 = vmatprep.mubr.bf16.mxu0 %v2723
        %7117 = vmatmul.mubr.bf16.gmra.mxu0 %v2722
        %v7118 = vpop.f32.mrf.mxu0
        %v7119 = vadd.f32 %v7046, %v7118
        %v7120 = vpop.f32.mrf.mxu0
        %v7121 = vadd.f32 %v7048, %v7120
        %v7122 = vpop.f32.mrf.mxu0
        %v7123 = vadd.f32 %v7050, %v7122
        %v7124 = vpop.f32.mrf.mxu0
        %v7125 = vadd.f32 %v7052, %v7124
        %7126 = vmatprep.mubr.bf16.mxu0 %v2727
        %7127 = vmatmul.mubr.bf16.gmra.mxu0 %v2726
        %v7128 = vpop.f32.mrf.mxu0
        %v7129 = vadd.f32 %v7056, %v7128
        %v7130 = vpop.f32.mrf.mxu0
        %v7131 = vadd.f32 %v7058, %v7130
        %v7132 = vpop.f32.mrf.mxu0
        %v7133 = vadd.f32 %v7060, %v7132
        %v7134 = vpop.f32.mrf.mxu0
        %v7135 = vadd.f32 %v7062, %v7134
        %7136 = vmatprep.mubr.bf16.mxu0 %v2731
        %7137 = vmatmul.mubr.bf16.gmra.mxu0 %v2730
        %v7138 = vpop.f32.mrf.mxu0
        %v7139 = vadd.f32 %v7066, %v7138
        %v7140 = vpop.f32.mrf.mxu0
        %v7141 = vadd.f32 %v7068, %v7140
        %v7142 = vpop.f32.mrf.mxu0
        %v7143 = vadd.f32 %v7070, %v7142
        %v7144 = vpop.f32.mrf.mxu0
        %v7145 = vadd.f32 %v7072, %v7144
        %7146 = vdwg.mxu0
        %7147 = vmatprep.subr.bf16.mxu0 %v5641
        %7148 = vmatpush1.bf16.msra.mxu0 %v5640
        %7149 = vmatprep.subr.bf16.mxu0 %v5639
        %7150 = vmatpush1.bf16.msra.mxu0 %v5638
        %7151 = vmatprep.subr.bf16.mxu0 %v5637
        %7152 = vmatpush1.bf16.msra.mxu0 %v5636
        %7153 = vmatprep.subr.bf16.mxu0 %v5635
        %7154 = vmatpush1.bf16.msra.mxu0 %v5634
        %7155 = vmatprep.subr.bf16.mxu0 %v5633
        %7156 = vmatpush1.bf16.msra.mxu0 %v5632
        %7157 = vmatprep.subr.bf16.mxu0 %v5631
        %7158 = vmatpush1.bf16.msra.mxu0 %v5630
        %7159 = vmatprep.subr.bf16.mxu0 %v5629
        %7160 = vmatpush1.bf16.msra.mxu0 %v5628
        %7161 = vmatprep.subr.bf16.mxu0 %v5627
        %7162 = vmatpush1.bf16.msra.mxu0 %v5626
        %7163 = vmatprep.subr.bf16.mxu0 %v5657
        %7164 = vmatpush2.bf16.msra.mxu0 %v5656
        %7165 = vmatprep.subr.bf16.mxu0 %v5655
        %7166 = vmatpush2.bf16.msra.mxu0 %v5654
        %7167 = vmatprep.subr.bf16.mxu0 %v5653
        %7168 = vmatpush2.bf16.msra.mxu0 %v5652
        %7169 = vmatprep.subr.bf16.mxu0 %v5651
        %7170 = vmatpush2.bf16.msra.mxu0 %v5650
        %7171 = vmatprep.subr.bf16.mxu0 %v5649
        %7172 = vmatpush2.bf16.msra.mxu0 %v5648
        %7173 = vmatprep.subr.bf16.mxu0 %v5647
        %7174 = vmatpush2.bf16.msra.mxu0 %v5646
        %7175 = vmatprep.subr.bf16.mxu0 %v5645
        %7176 = vmatpush2.bf16.msra.mxu0 %v5644
        %7177 = vmatprep.subr.bf16.mxu0 %v5643
        %7178 = vmatpush2.bf16.msra.mxu0 %v5642
        %7179 = vmatprep.mubr.bf16.mxu0 %v2721
        %7180 = vmatmul.mubr.bf16.gmra.mxu0 %v2720
        %v7181 = vpop.f32.mrf.mxu0
        %v7182 = vadd.f32 %v7109, %v7181
        %v7183 = vpop.f32.mrf.mxu0
        %v7184 = vadd.f32 %v7111, %v7183
        %v7185 = vpop.f32.mrf.mxu0
        %v7186 = vadd.f32 %v7113, %v7185
        %v7187 = vpop.f32.mrf.mxu0
        %v7188 = vadd.f32 %v7115, %v7187
        %7189 = vmatprep.mubr.bf16.mxu0 %v2725
        %7190 = vmatmul.mubr.bf16.gmra.mxu0 %v2724
        %v7191 = vpop.f32.mrf.mxu0
        %v7192 = vadd.f32 %v7119, %v7191
        %v7193 = vpop.f32.mrf.mxu0
        %v7194 = vadd.f32 %v7121, %v7193
        %v7195 = vpop.f32.mrf.mxu0
        %v7196 = vadd.f32 %v7123, %v7195
        %v7197 = vpop.f32.mrf.mxu0
        %v7198 = vadd.f32 %v7125, %v7197
        %7199 = vmatprep.mubr.bf16.mxu0 %v2729
        %7200 = vmatmul.mubr.bf16.gmra.mxu0 %v2728
        %v7201 = vpop.f32.mrf.mxu0
        %v7202 = vadd.f32 %v7129, %v7201
        %v7203 = vpop.f32.mrf.mxu0
        %v7204 = vadd.f32 %v7131, %v7203
        %v7205 = vpop.f32.mrf.mxu0
        %v7206 = vadd.f32 %v7133, %v7205
        %v7207 = vpop.f32.mrf.mxu0
        %v7208 = vadd.f32 %v7135, %v7207
        %7209 = vmatprep.mubr.bf16.mxu0 %v2733
        %7210 = vmatmul.mubr.bf16.gmra.mxu0 %v2732
        %v7211 = vpop.f32.mrf.mxu0
        %v7212 = vadd.f32 %v7139, %v7211
        %v7213 = vpop.f32.mrf.mxu0
        %v7214 = vadd.f32 %v7141, %v7213
        %v7215 = vpop.f32.mrf.mxu0
        %v7216 = vadd.f32 %v7143, %v7215
        %v7217 = vpop.f32.mrf.mxu0
        %v7218 = vadd.f32 %v7145, %v7217
        %7219 = vdwg.mxu0
        %7220 = vmatprep.subr.bf16.mxu0 %v5673
        %7221 = vmatpush1.bf16.msra.mxu0 %v5672
        %7222 = vmatprep.subr.bf16.mxu0 %v5671
        %7223 = vmatpush1.bf16.msra.mxu0 %v5670
        %7224 = vmatprep.subr.bf16.mxu0 %v5669
        %7225 = vmatpush1.bf16.msra.mxu0 %v5668
        %7226 = vmatprep.subr.bf16.mxu0 %v5667
        %7227 = vmatpush1.bf16.msra.mxu0 %v5666
        %7228 = vmatprep.subr.bf16.mxu0 %v5665
        %7229 = vmatpush1.bf16.msra.mxu0 %v5664
        %7230 = vmatprep.subr.bf16.mxu0 %v5663
        %7231 = vmatpush1.bf16.msra.mxu0 %v5662
        %7232 = vmatprep.subr.bf16.mxu0 %v5661
        %7233 = vmatpush1.bf16.msra.mxu0 %v5660
        %7234 = vmatprep.subr.bf16.mxu0 %v5659
        %7235 = vmatpush1.bf16.msra.mxu0 %v5658
        %7236 = vmatprep.subr.bf16.mxu0 %v5689
        %7237 = vmatpush2.bf16.msra.mxu0 %v5688
        %7238 = vmatprep.subr.bf16.mxu0 %v5687
        %7239 = vmatpush2.bf16.msra.mxu0 %v5686
        %7240 = vmatprep.subr.bf16.mxu0 %v5685
        %7241 = vmatpush2.bf16.msra.mxu0 %v5684
        %7242 = vmatprep.subr.bf16.mxu0 %v5683
        %7243 = vmatpush2.bf16.msra.mxu0 %v5682
        %7244 = vmatprep.subr.bf16.mxu0 %v5681
        %7245 = vmatpush2.bf16.msra.mxu0 %v5680
        %7246 = vmatprep.subr.bf16.mxu0 %v5679
        %7247 = vmatpush2.bf16.msra.mxu0 %v5678
        %7248 = vmatprep.subr.bf16.mxu0 %v5677
        %7249 = vmatpush2.bf16.msra.mxu0 %v5676
        %7250 = vmatprep.subr.bf16.mxu0 %v5675
        %7251 = vmatpush2.bf16.msra.mxu0 %v5674
        %7252 = vmatprep.mubr.bf16.mxu0 %v2783
        %7253 = vmatmul.mubr.bf16.gmra.mxu0 %v2782
        %v7254 = vpop.f32.mrf.mxu0
        %v7255 = vadd.f32 %v7182, %v7254
        %v7256 = vpop.f32.mrf.mxu0
        %v7257 = vadd.f32 %v7184, %v7256
        %v7258 = vpop.f32.mrf.mxu0
        %v7259 = vadd.f32 %v7186, %v7258
        %v7260 = vpop.f32.mrf.mxu0
        %v7261 = vadd.f32 %v7188, %v7260
        %7262 = vmatprep.mubr.bf16.mxu0 %v2787
        %7263 = vmatmul.mubr.bf16.gmra.mxu0 %v2786
        %v7264 = vpop.f32.mrf.mxu0
        %v7265 = vadd.f32 %v7192, %v7264
        %v7266 = vpop.f32.mrf.mxu0
        %v7267 = vadd.f32 %v7194, %v7266
        %v7268 = vpop.f32.mrf.mxu0
        %v7269 = vadd.f32 %v7196, %v7268
        %v7270 = vpop.f32.mrf.mxu0
        %v7271 = vadd.f32 %v7198, %v7270
        %7272 = vmatprep.mubr.bf16.mxu0 %v2791
        %7273 = vmatmul.mubr.bf16.gmra.mxu0 %v2790
        %v7274 = vpop.f32.mrf.mxu0
        %v7275 = vadd.f32 %v7202, %v7274
        %v7276 = vpop.f32.mrf.mxu0
        %v7277 = vadd.f32 %v7204, %v7276
        %v7278 = vpop.f32.mrf.mxu0
        %v7279 = vadd.f32 %v7206, %v7278
        %v7280 = vpop.f32.mrf.mxu0
        %v7281 = vadd.f32 %v7208, %v7280
        %7282 = vmatprep.mubr.bf16.mxu0 %v2795
        %7283 = vmatmul.mubr.bf16.gmra.mxu0 %v2794
        %v7284 = vpop.f32.mrf.mxu0
        %v7285 = vadd.f32 %v7212, %v7284
        %v7286 = vpop.f32.mrf.mxu0
        %v7287 = vadd.f32 %v7214, %v7286
        %v7288 = vpop.f32.mrf.mxu0
        %v7289 = vadd.f32 %v7216, %v7288
        %v7290 = vpop.f32.mrf.mxu0
        %v7291 = vadd.f32 %v7218, %v7290
        %7292 = vdwg.mxu0
        %7293 = vmatprep.subr.bf16.mxu0 %v5705
        %7294 = vmatpush1.bf16.msra.mxu0 %v5704
        %7295 = vmatprep.subr.bf16.mxu0 %v5703
        %7296 = vmatpush1.bf16.msra.mxu0 %v5702
        %7297 = vmatprep.subr.bf16.mxu0 %v5701
        %7298 = vmatpush1.bf16.msra.mxu0 %v5700
        %7299 = vmatprep.subr.bf16.mxu0 %v5699
        %7300 = vmatpush1.bf16.msra.mxu0 %v5698
        %7301 = vmatprep.subr.bf16.mxu0 %v5697
        %7302 = vmatpush1.bf16.msra.mxu0 %v5696
        %7303 = vmatprep.subr.bf16.mxu0 %v5695
        %7304 = vmatpush1.bf16.msra.mxu0 %v5694
        %7305 = vmatprep.subr.bf16.mxu0 %v5693
        %7306 = vmatpush1.bf16.msra.mxu0 %v5692
        %7307 = vmatprep.subr.bf16.mxu0 %v5691
        %7308 = vmatpush1.bf16.msra.mxu0 %v5690
        %7309 = vmatprep.subr.bf16.mxu0 %v5721
        %7310 = vmatpush2.bf16.msra.mxu0 %v5720
        %7311 = vmatprep.subr.bf16.mxu0 %v5719
        %7312 = vmatpush2.bf16.msra.mxu0 %v5718
        %7313 = vmatprep.subr.bf16.mxu0 %v5717
        %7314 = vmatpush2.bf16.msra.mxu0 %v5716
        %7315 = vmatprep.subr.bf16.mxu0 %v5715
        %7316 = vmatpush2.bf16.msra.mxu0 %v5714
        %7317 = vmatprep.subr.bf16.mxu0 %v5713
        %7318 = vmatpush2.bf16.msra.mxu0 %v5712
        %7319 = vmatprep.subr.bf16.mxu0 %v5711
        %7320 = vmatpush2.bf16.msra.mxu0 %v5710
        %7321 = vmatprep.subr.bf16.mxu0 %v5709
        %7322 = vmatpush2.bf16.msra.mxu0 %v5708
        %7323 = vmatprep.subr.bf16.mxu0 %v5707
        %7324 = vmatpush2.bf16.msra.mxu0 %v5706
        %7325 = vmatprep.mubr.bf16.mxu0 %v2785
        %7326 = vmatmul.mubr.bf16.gmra.mxu0 %v2784
        %v7327 = vpop.f32.mrf.mxu0
        %v7328 = vadd.f32 %v7255, %v7327
        %v7329 = vpop.f32.mrf.mxu0
        %v7330 = vadd.f32 %v7257, %v7329
        %v7331 = vpop.f32.mrf.mxu0
        %v7332 = vadd.f32 %v7259, %v7331
        %v7333 = vpop.f32.mrf.mxu0
        %v7334 = vadd.f32 %v7261, %v7333
        %7335 = vmatprep.mubr.bf16.mxu0 %v2789
        %7336 = vmatmul.mubr.bf16.gmra.mxu0 %v2788
        %v7337 = vpop.f32.mrf.mxu0
        %v7338 = vadd.f32 %v7265, %v7337
        %v7339 = vpop.f32.mrf.mxu0
        %v7340 = vadd.f32 %v7267, %v7339
        %v7341 = vpop.f32.mrf.mxu0
        %v7342 = vadd.f32 %v7269, %v7341
        %v7343 = vpop.f32.mrf.mxu0
        %v7344 = vadd.f32 %v7271, %v7343
        %7345 = vmatprep.mubr.bf16.mxu0 %v2793
        %7346 = vmatmul.mubr.bf16.gmra.mxu0 %v2792
        %v7347 = vpop.f32.mrf.mxu0
        %v7348 = vadd.f32 %v7275, %v7347
        %v7349 = vpop.f32.mrf.mxu0
        %v7350 = vadd.f32 %v7277, %v7349
        %v7351 = vpop.f32.mrf.mxu0
        %v7352 = vadd.f32 %v7279, %v7351
        %v7353 = vpop.f32.mrf.mxu0
        %v7354 = vadd.f32 %v7281, %v7353
        %7355 = vmatprep.mubr.bf16.mxu0 %v2797
        %7356 = vmatmul.mubr.bf16.gmra.mxu0 %v2796
        %v7357 = vpop.f32.mrf.mxu0
        %v7358 = vadd.f32 %v7285, %v7357
        %v7359 = vpop.f32.mrf.mxu0
        %v7360 = vadd.f32 %v7287, %v7359
        %v7361 = vpop.f32.mrf.mxu0
        %v7362 = vadd.f32 %v7289, %v7361
        %v7363 = vpop.f32.mrf.mxu0
        %v7364 = vadd.f32 %v7291, %v7363
        %7365 = vdwg.mxu0
        %7366 = vmatprep.subr.bf16.mxu0 %v5737
        %7367 = vmatpush1.bf16.msra.mxu0 %v5736
        %7368 = vmatprep.subr.bf16.mxu0 %v5735
        %7369 = vmatpush1.bf16.msra.mxu0 %v5734
        %7370 = vmatprep.subr.bf16.mxu0 %v5733
        %7371 = vmatpush1.bf16.msra.mxu0 %v5732
        %7372 = vmatprep.subr.bf16.mxu0 %v5731
        %7373 = vmatpush1.bf16.msra.mxu0 %v5730
        %7374 = vmatprep.subr.bf16.mxu0 %v5729
        %7375 = vmatpush1.bf16.msra.mxu0 %v5728
        %7376 = vmatprep.subr.bf16.mxu0 %v5727
        %7377 = vmatpush1.bf16.msra.mxu0 %v5726
        %7378 = vmatprep.subr.bf16.mxu0 %v5725
        %7379 = vmatpush1.bf16.msra.mxu0 %v5724
        %7380 = vmatprep.subr.bf16.mxu0 %v5723
        %7381 = vmatpush1.bf16.msra.mxu0 %v5722
        %7382 = vmatprep.subr.bf16.mxu0 %v5753
        %7383 = vmatpush2.bf16.msra.mxu0 %v5752
        %7384 = vmatprep.subr.bf16.mxu0 %v5751
        %7385 = vmatpush2.bf16.msra.mxu0 %v5750
        %7386 = vmatprep.subr.bf16.mxu0 %v5749
        %7387 = vmatpush2.bf16.msra.mxu0 %v5748
        %7388 = vmatprep.subr.bf16.mxu0 %v5747
        %7389 = vmatpush2.bf16.msra.mxu0 %v5746
        %7390 = vmatprep.subr.bf16.mxu0 %v5745
        %7391 = vmatpush2.bf16.msra.mxu0 %v5744
        %7392 = vmatprep.subr.bf16.mxu0 %v5743
        %7393 = vmatpush2.bf16.msra.mxu0 %v5742
        %7394 = vmatprep.subr.bf16.mxu0 %v5741
        %7395 = vmatpush2.bf16.msra.mxu0 %v5740
        %7396 = vmatprep.subr.bf16.mxu0 %v5739
        %7397 = vmatpush2.bf16.msra.mxu0 %v5738
        %7398 = vmatprep.mubr.bf16.mxu0 %v2863
        %7399 = vmatmul.mubr.bf16.gmra.mxu0 %v2862
        %v7400 = vpop.f32.mrf.mxu0
        %v7401 = vadd.f32 %v7328, %v7400
        %v7402 = vpop.f32.mrf.mxu0
        %v7403 = vadd.f32 %v7330, %v7402
        %v7404 = vpop.f32.mrf.mxu0
        %v7405 = vadd.f32 %v7332, %v7404
        %v7406 = vpop.f32.mrf.mxu0
        %v7407 = vadd.f32 %v7334, %v7406
        %7408 = vmatprep.mubr.bf16.mxu0 %v2867
        %7409 = vmatmul.mubr.bf16.gmra.mxu0 %v2866
        %v7410 = vpop.f32.mrf.mxu0
        %v7411 = vadd.f32 %v7338, %v7410
        %v7412 = vpop.f32.mrf.mxu0
        %v7413 = vadd.f32 %v7340, %v7412
        %v7414 = vpop.f32.mrf.mxu0
        %v7415 = vadd.f32 %v7342, %v7414
        %v7416 = vpop.f32.mrf.mxu0
        %v7417 = vadd.f32 %v7344, %v7416
        %7418 = vmatprep.mubr.bf16.mxu0 %v2871
        %7419 = vmatmul.mubr.bf16.gmra.mxu0 %v2870
        %v7420 = vpop.f32.mrf.mxu0
        %v7421 = vadd.f32 %v7348, %v7420
        %v7422 = vpop.f32.mrf.mxu0
        %v7423 = vadd.f32 %v7350, %v7422
        %v7424 = vpop.f32.mrf.mxu0
        %v7425 = vadd.f32 %v7352, %v7424
        %v7426 = vpop.f32.mrf.mxu0
        %v7427 = vadd.f32 %v7354, %v7426
        %7428 = vmatprep.mubr.bf16.mxu0 %v2875
        %7429 = vmatmul.mubr.bf16.gmra.mxu0 %v2874
        %v7430 = vpop.f32.mrf.mxu0
        %v7431 = vadd.f32 %v7358, %v7430
        %v7432 = vpop.f32.mrf.mxu0
        %v7433 = vadd.f32 %v7360, %v7432
        %v7434 = vpop.f32.mrf.mxu0
        %v7435 = vadd.f32 %v7362, %v7434
        %v7436 = vpop.f32.mrf.mxu0
        %v7437 = vadd.f32 %v7364, %v7436
        %7438 = vdwg.mxu0
        %7439 = vmatprep.subr.bf16.mxu0 %v5769
        %7440 = vmatpush1.bf16.msra.mxu0 %v5768
        %7441 = vmatprep.subr.bf16.mxu0 %v5767
        %7442 = vmatpush1.bf16.msra.mxu0 %v5766
        %7443 = vmatprep.subr.bf16.mxu0 %v5765
        %7444 = vmatpush1.bf16.msra.mxu0 %v5764
        %7445 = vmatprep.subr.bf16.mxu0 %v5763
        %7446 = vmatpush1.bf16.msra.mxu0 %v5762
        %7447 = vmatprep.subr.bf16.mxu0 %v5761
        %7448 = vmatpush1.bf16.msra.mxu0 %v5760
        %7449 = vmatprep.subr.bf16.mxu0 %v5759
        %7450 = vmatpush1.bf16.msra.mxu0 %v5758
        %7451 = vmatprep.subr.bf16.mxu0 %v5757
        %7452 = vmatpush1.bf16.msra.mxu0 %v5756
        %7453 = vmatprep.subr.bf16.mxu0 %v5755
        %7454 = vmatpush1.bf16.msra.mxu0 %v5754
        %7455 = vmatprep.subr.bf16.mxu0 %v5785
        %7456 = vmatpush2.bf16.msra.mxu0 %v5784
        %7457 = vmatprep.subr.bf16.mxu0 %v5783
        %7458 = vmatpush2.bf16.msra.mxu0 %v5782
        %7459 = vmatprep.subr.bf16.mxu0 %v5781
        %7460 = vmatpush2.bf16.msra.mxu0 %v5780
        %7461 = vmatprep.subr.bf16.mxu0 %v5779
        %7462 = vmatpush2.bf16.msra.mxu0 %v5778
        %7463 = vmatprep.subr.bf16.mxu0 %v5777
        %7464 = vmatpush2.bf16.msra.mxu0 %v5776
        %7465 = vmatprep.subr.bf16.mxu0 %v5775
        %7466 = vmatpush2.bf16.msra.mxu0 %v5774
        %7467 = vmatprep.subr.bf16.mxu0 %v5773
        %7468 = vmatpush2.bf16.msra.mxu0 %v5772
        %7469 = vmatprep.subr.bf16.mxu0 %v5771
        %7470 = vmatpush2.bf16.msra.mxu0 %v5770
        %7471 = vmatprep.mubr.bf16.mxu0 %v2865
        %7472 = vmatmul.mubr.bf16.gmra.mxu0 %v2864
        %v7473 = vpop.f32.mrf.mxu0
        %v7474 = vadd.f32 %v7401, %v7473
        %v7475 = vpop.f32.mrf.mxu0
        %v7476 = vadd.f32 %v7403, %v7475
        %v7477 = vpop.f32.mrf.mxu0
        %v7478 = vadd.f32 %v7405, %v7477
        %v7479 = vpop.f32.mrf.mxu0
        %v7480 = vadd.f32 %v7407, %v7479
        %7481 = vmatprep.mubr.bf16.mxu0 %v2869
        %7482 = vmatmul.mubr.bf16.gmra.mxu0 %v2868
        %v7483 = vpop.f32.mrf.mxu0
        %v7484 = vadd.f32 %v7411, %v7483
        %v7485 = vpop.f32.mrf.mxu0
        %v7486 = vadd.f32 %v7413, %v7485
        %v7487 = vpop.f32.mrf.mxu0
        %v7488 = vadd.f32 %v7415, %v7487
        %v7489 = vpop.f32.mrf.mxu0
        %v7490 = vadd.f32 %v7417, %v7489
        %7491 = vmatprep.mubr.bf16.mxu0 %v2873
        %7492 = vmatmul.mubr.bf16.gmra.mxu0 %v2872
        %v7493 = vpop.f32.mrf.mxu0
        %v7494 = vadd.f32 %v7421, %v7493
        %v7495 = vpop.f32.mrf.mxu0
        %v7496 = vadd.f32 %v7423, %v7495
        %v7497 = vpop.f32.mrf.mxu0
        %v7498 = vadd.f32 %v7425, %v7497
        %v7499 = vpop.f32.mrf.mxu0
        %v7500 = vadd.f32 %v7427, %v7499
        %7501 = vmatprep.mubr.bf16.mxu0 %v2877
        %7502 = vmatmul.mubr.bf16.gmra.mxu0 %v2876
        %v7503 = vpop.f32.mrf.mxu0
        %v7504 = vadd.f32 %v7431, %v7503
        %v7505 = vpop.f32.mrf.mxu0
        %v7506 = vadd.f32 %v7433, %v7505
        %v7507 = vpop.f32.mrf.mxu0
        %v7508 = vadd.f32 %v7435, %v7507
        %v7509 = vpop.f32.mrf.mxu0
        %v7510 = vadd.f32 %v7437, %v7509
        %7511 = vdwg.mxu0
        %7512 = vmatprep.subr.bf16.mxu0 %v5801
        %7513 = vmatpush1.bf16.msra.mxu0 %v5800
        %7514 = vmatprep.subr.bf16.mxu0 %v5799
        %7515 = vmatpush1.bf16.msra.mxu0 %v5798
        %7516 = vmatprep.subr.bf16.mxu0 %v5797
        %7517 = vmatpush1.bf16.msra.mxu0 %v5796
        %7518 = vmatprep.subr.bf16.mxu0 %v5795
        %7519 = vmatpush1.bf16.msra.mxu0 %v5794
        %7520 = vmatprep.subr.bf16.mxu0 %v5793
        %7521 = vmatpush1.bf16.msra.mxu0 %v5792
        %7522 = vmatprep.subr.bf16.mxu0 %v5791
        %7523 = vmatpush1.bf16.msra.mxu0 %v5790
        %7524 = vmatprep.subr.bf16.mxu0 %v5789
        %7525 = vmatpush1.bf16.msra.mxu0 %v5788
        %7526 = vmatprep.subr.bf16.mxu0 %v5787
        %7527 = vmatpush1.bf16.msra.mxu0 %v5786
        %7528 = vmatprep.subr.bf16.mxu0 %v5817
        %7529 = vmatpush2.bf16.msra.mxu0 %v5816
        %7530 = vmatprep.subr.bf16.mxu0 %v5815
        %7531 = vmatpush2.bf16.msra.mxu0 %v5814
        %7532 = vmatprep.subr.bf16.mxu0 %v5813
        %7533 = vmatpush2.bf16.msra.mxu0 %v5812
        %7534 = vmatprep.subr.bf16.mxu0 %v5811
        %7535 = vmatpush2.bf16.msra.mxu0 %v5810
        %7536 = vmatprep.subr.bf16.mxu0 %v5809
        %7537 = vmatpush2.bf16.msra.mxu0 %v5808
        %7538 = vmatprep.subr.bf16.mxu0 %v5807
        %7539 = vmatpush2.bf16.msra.mxu0 %v5806
        %7540 = vmatprep.subr.bf16.mxu0 %v5805
        %7541 = vmatpush2.bf16.msra.mxu0 %v5804
        %7542 = vmatprep.subr.bf16.mxu0 %v5803
        %7543 = vmatpush2.bf16.msra.mxu0 %v5802
        %7544 = vmatprep.mubr.bf16.mxu0 %v2927
        %7545 = vmatmul.mubr.bf16.gmra.mxu0 %v2926
        %v7546 = vpop.f32.mrf.mxu0
        %v7547 = vadd.f32 %v7474, %v7546
        %v7548 = vpop.f32.mrf.mxu0
        %v7549 = vadd.f32 %v7476, %v7548
        %v7550 = vpop.f32.mrf.mxu0
        %v7551 = vadd.f32 %v7478, %v7550
        %v7552 = vpop.f32.mrf.mxu0
        %v7553 = vadd.f32 %v7480, %v7552
        %7554 = vmatprep.mubr.bf16.mxu0 %v2931
        %7555 = vmatmul.mubr.bf16.gmra.mxu0 %v2930
        %v7556 = vpop.f32.mrf.mxu0
        %v7557 = vadd.f32 %v7484, %v7556
        %v7558 = vpop.f32.mrf.mxu0
        %v7559 = vadd.f32 %v7486, %v7558
        %v7560 = vpop.f32.mrf.mxu0
        %v7561 = vadd.f32 %v7488, %v7560
        %v7562 = vpop.f32.mrf.mxu0
        %v7563 = vadd.f32 %v7490, %v7562
        %7564 = vmatprep.mubr.bf16.mxu0 %v2935
        %7565 = vmatmul.mubr.bf16.gmra.mxu0 %v2934
        %v7566 = vpop.f32.mrf.mxu0
        %v7567 = vadd.f32 %v7494, %v7566
        %v7568 = vpop.f32.mrf.mxu0
        %v7569 = vadd.f32 %v7496, %v7568
        %v7570 = vpop.f32.mrf.mxu0
        %v7571 = vadd.f32 %v7498, %v7570
        %v7572 = vpop.f32.mrf.mxu0
        %v7573 = vadd.f32 %v7500, %v7572
        %7574 = vmatprep.mubr.bf16.mxu0 %v2939
        %7575 = vmatmul.mubr.bf16.gmra.mxu0 %v2938
        %v7576 = vpop.f32.mrf.mxu0
        %v7577 = vadd.f32 %v7504, %v7576
        %v7578 = vpop.f32.mrf.mxu0
        %v7579 = vadd.f32 %v7506, %v7578
        %v7580 = vpop.f32.mrf.mxu0
        %v7581 = vadd.f32 %v7508, %v7580
        %v7582 = vpop.f32.mrf.mxu0
        %v7583 = vadd.f32 %v7510, %v7582
        %7584 = vdwg.mxu0
        %7585 = vmatprep.subr.bf16.mxu0 %v5833
        %7586 = vmatpush1.bf16.msra.mxu0 %v5832
        %7587 = vmatprep.subr.bf16.mxu0 %v5831
        %7588 = vmatpush1.bf16.msra.mxu0 %v5830
        %7589 = vmatprep.subr.bf16.mxu0 %v5829
        %7590 = vmatpush1.bf16.msra.mxu0 %v5828
        %7591 = vmatprep.subr.bf16.mxu0 %v5827
        %7592 = vmatpush1.bf16.msra.mxu0 %v5826
        %7593 = vmatprep.subr.bf16.mxu0 %v5825
        %7594 = vmatpush1.bf16.msra.mxu0 %v5824
        %7595 = vmatprep.subr.bf16.mxu0 %v5823
        %7596 = vmatpush1.bf16.msra.mxu0 %v5822
        %7597 = vmatprep.subr.bf16.mxu0 %v5821
        %7598 = vmatpush1.bf16.msra.mxu0 %v5820
        %7599 = vmatprep.subr.bf16.mxu0 %v5819
        %7600 = vmatpush1.bf16.msra.mxu0 %v5818
        %7601 = vmatprep.subr.bf16.mxu0 %v5849
        %7602 = vmatpush2.bf16.msra.mxu0 %v5848
        %7603 = vmatprep.subr.bf16.mxu0 %v5847
        %7604 = vmatpush2.bf16.msra.mxu0 %v5846
        %7605 = vmatprep.subr.bf16.mxu0 %v5845
        %7606 = vmatpush2.bf16.msra.mxu0 %v5844
        %7607 = vmatprep.subr.bf16.mxu0 %v5843
        %7608 = vmatpush2.bf16.msra.mxu0 %v5842
        %7609 = vmatprep.subr.bf16.mxu0 %v5841
        %7610 = vmatpush2.bf16.msra.mxu0 %v5840
        %7611 = vmatprep.subr.bf16.mxu0 %v5839
        %7612 = vmatpush2.bf16.msra.mxu0 %v5838
        %7613 = vmatprep.subr.bf16.mxu0 %v5837
        %7614 = vmatpush2.bf16.msra.mxu0 %v5836
        %7615 = vmatprep.subr.bf16.mxu0 %v5835
        %7616 = vmatpush2.bf16.msra.mxu0 %v5834
        %7617 = vmatprep.mubr.bf16.mxu0 %v2929
        %7618 = vmatmul.mubr.bf16.gmra.mxu0 %v2928
        %v7619 = vpop.f32.mrf.mxu0
        %v7620 = vadd.f32 %v7547, %v7619
        %v7621 = vpop.f32.mrf.mxu0
        %v7622 = vadd.f32 %v7549, %v7621
        %v7623 = vpop.f32.mrf.mxu0
        %v7624 = vadd.f32 %v7551, %v7623
        %v7625 = vpop.f32.mrf.mxu0
        %v7626 = vadd.f32 %v7553, %v7625
        %7627 = vmatprep.mubr.bf16.mxu0 %v2933
        %7628 = vmatmul.mubr.bf16.gmra.mxu0 %v2932
        %v7629 = vpop.f32.mrf.mxu0
        %v7630 = vadd.f32 %v7557, %v7629
        %v7631 = vpop.f32.mrf.mxu0
        %v7632 = vadd.f32 %v7559, %v7631
        %v7633 = vpop.f32.mrf.mxu0
        %v7634 = vadd.f32 %v7561, %v7633
        %v7635 = vpop.f32.mrf.mxu0
        %v7636 = vadd.f32 %v7563, %v7635
        %7637 = vmatprep.mubr.bf16.mxu0 %v2937
        %7638 = vmatmul.mubr.bf16.gmra.mxu0 %v2936
        %v7639 = vpop.f32.mrf.mxu0
        %v7640 = vadd.f32 %v7567, %v7639
        %v7641 = vpop.f32.mrf.mxu0
        %v7642 = vadd.f32 %v7569, %v7641
        %v7643 = vpop.f32.mrf.mxu0
        %v7644 = vadd.f32 %v7571, %v7643
        %v7645 = vpop.f32.mrf.mxu0
        %v7646 = vadd.f32 %v7573, %v7645
        %7647 = vmatprep.mubr.bf16.mxu0 %v2941
        %7648 = vmatmul.mubr.bf16.gmra.mxu0 %v2940
        %v7649 = vpop.f32.mrf.mxu0
        %v7650 = vadd.f32 %v7577, %v7649
        %v7651 = vpop.f32.mrf.mxu0
        %v7652 = vadd.f32 %v7579, %v7651
        %v7653 = vpop.f32.mrf.mxu0
        %v7654 = vadd.f32 %v7581, %v7653
        %v7655 = vpop.f32.mrf.mxu0
        %v7656 = vadd.f32 %v7583, %v7655
        %7657 = vdwg.mxu0
        %7658 = vmatprep.subr.bf16.mxu0 %v5865
        %7659 = vmatpush1.bf16.msra.mxu0 %v5864
        %7660 = vmatprep.subr.bf16.mxu0 %v5863
        %7661 = vmatpush1.bf16.msra.mxu0 %v5862
        %7662 = vmatprep.subr.bf16.mxu0 %v5861
        %7663 = vmatpush1.bf16.msra.mxu0 %v5860
        %7664 = vmatprep.subr.bf16.mxu0 %v5859
        %7665 = vmatpush1.bf16.msra.mxu0 %v5858
        %7666 = vmatprep.subr.bf16.mxu0 %v5857
        %7667 = vmatpush1.bf16.msra.mxu0 %v5856
        %7668 = vmatprep.subr.bf16.mxu0 %v5855
        %7669 = vmatpush1.bf16.msra.mxu0 %v5854
        %7670 = vmatprep.subr.bf16.mxu0 %v5853
        %7671 = vmatpush1.bf16.msra.mxu0 %v5852
        %7672 = vmatprep.subr.bf16.mxu0 %v5851
        %7673 = vmatpush1.bf16.msra.mxu0 %v5850
        %7674 = vmatprep.subr.bf16.mxu0 %v5881
        %7675 = vmatpush2.bf16.msra.mxu0 %v5880
        %7676 = vmatprep.subr.bf16.mxu0 %v5879
        %7677 = vmatpush2.bf16.msra.mxu0 %v5878
        %7678 = vmatprep.subr.bf16.mxu0 %v5877
        %7679 = vmatpush2.bf16.msra.mxu0 %v5876
        %7680 = vmatprep.subr.bf16.mxu0 %v5875
        %7681 = vmatpush2.bf16.msra.mxu0 %v5874
        %7682 = vmatprep.subr.bf16.mxu0 %v5873
        %7683 = vmatpush2.bf16.msra.mxu0 %v5872
        %7684 = vmatprep.subr.bf16.mxu0 %v5871
        %7685 = vmatpush2.bf16.msra.mxu0 %v5870
        %7686 = vmatprep.subr.bf16.mxu0 %v5869
        %7687 = vmatpush2.bf16.msra.mxu0 %v5868
        %7688 = vmatprep.subr.bf16.mxu0 %v5867
        %7689 = vmatpush2.bf16.msra.mxu0 %v5866
        %7690 = vmatprep.mubr.bf16.mxu0 %v2991
        %7691 = vmatmul.mubr.bf16.gmra.mxu0 %v2990
        %v7692 = vpop.f32.mrf.mxu0
        %v7693 = vadd.f32 %v7620, %v7692
        %v7694 = vpop.f32.mrf.mxu0
        %v7695 = vadd.f32 %v7622, %v7694
        %v7696 = vpop.f32.mrf.mxu0
        %v7697 = vadd.f32 %v7624, %v7696
        %v7698 = vpop.f32.mrf.mxu0
        %v7699 = vadd.f32 %v7626, %v7698
        %7700 = vmatprep.mubr.bf16.mxu0 %v2995
        %7701 = vmatmul.mubr.bf16.gmra.mxu0 %v2994
        %v7702 = vpop.f32.mrf.mxu0
        %v7703 = vadd.f32 %v7630, %v7702
        %v7704 = vpop.f32.mrf.mxu0
        %v7705 = vadd.f32 %v7632, %v7704
        %v7706 = vpop.f32.mrf.mxu0
        %v7707 = vadd.f32 %v7634, %v7706
        %v7708 = vpop.f32.mrf.mxu0
        %v7709 = vadd.f32 %v7636, %v7708
        %7710 = vmatprep.mubr.bf16.mxu0 %v2999
        %7711 = vmatmul.mubr.bf16.gmra.mxu0 %v2998
        %v7712 = vpop.f32.mrf.mxu0
        %v7713 = vadd.f32 %v7640, %v7712
        %v7714 = vpop.f32.mrf.mxu0
        %v7715 = vadd.f32 %v7642, %v7714
        %v7716 = vpop.f32.mrf.mxu0
        %v7717 = vadd.f32 %v7644, %v7716
        %v7718 = vpop.f32.mrf.mxu0
        %v7719 = vadd.f32 %v7646, %v7718
        %7720 = vmatprep.mubr.bf16.mxu0 %v3003
        %7721 = vmatmul.mubr.bf16.gmra.mxu0 %v3002
        %v7722 = vpop.f32.mrf.mxu0
        %v7723 = vadd.f32 %v7650, %v7722
        %v7724 = vpop.f32.mrf.mxu0
        %v7725 = vadd.f32 %v7652, %v7724
        %v7726 = vpop.f32.mrf.mxu0
        %v7727 = vadd.f32 %v7654, %v7726
        %v7728 = vpop.f32.mrf.mxu0
        %v7729 = vadd.f32 %v7656, %v7728
        %7730 = vdwg.mxu0
        %7731 = vmatprep.subr.bf16.mxu0 %v5897
        %7732 = vmatpush1.bf16.msra.mxu0 %v5896
        %7733 = vmatprep.subr.bf16.mxu0 %v5895
        %7734 = vmatpush1.bf16.msra.mxu0 %v5894
        %7735 = vmatprep.subr.bf16.mxu0 %v5893
        %7736 = vmatpush1.bf16.msra.mxu0 %v5892
        %7737 = vmatprep.subr.bf16.mxu0 %v5891
        %7738 = vmatpush1.bf16.msra.mxu0 %v5890
        %7739 = vmatprep.subr.bf16.mxu0 %v5889
        %7740 = vmatpush1.bf16.msra.mxu0 %v5888
        %7741 = vmatprep.subr.bf16.mxu0 %v5887
        %7742 = vmatpush1.bf16.msra.mxu0 %v5886
        %7743 = vmatprep.subr.bf16.mxu0 %v5885
        %7744 = vmatpush1.bf16.msra.mxu0 %v5884
        %7745 = vmatprep.subr.bf16.mxu0 %v5883
        %7746 = vmatpush1.bf16.msra.mxu0 %v5882
        %7747 = vmatprep.subr.bf16.mxu0 %v5913
        %7748 = vmatpush2.bf16.msra.mxu0 %v5912
        %7749 = vmatprep.subr.bf16.mxu0 %v5911
        %7750 = vmatpush2.bf16.msra.mxu0 %v5910
        %7751 = vmatprep.subr.bf16.mxu0 %v5909
        %7752 = vmatpush2.bf16.msra.mxu0 %v5908
        %7753 = vmatprep.subr.bf16.mxu0 %v5907
        %7754 = vmatpush2.bf16.msra.mxu0 %v5906
        %7755 = vmatprep.subr.bf16.mxu0 %v5905
        %7756 = vmatpush2.bf16.msra.mxu0 %v5904
        %7757 = vmatprep.subr.bf16.mxu0 %v5903
        %7758 = vmatpush2.bf16.msra.mxu0 %v5902
        %7759 = vmatprep.subr.bf16.mxu0 %v5901
        %7760 = vmatpush2.bf16.msra.mxu0 %v5900
        %7761 = vmatprep.subr.bf16.mxu0 %v5899
        %7762 = vmatpush2.bf16.msra.mxu0 %v5898
        %7763 = vmatprep.mubr.bf16.mxu0 %v2993
        %7764 = vmatmul.mubr.bf16.gmra.mxu0 %v2992
        %v7765 = vpop.f32.mrf.mxu0
        %v7766 = vadd.f32 %v7693, %v7765
        %v7767 = vpop.f32.mrf.mxu0
        %v7768 = vadd.f32 %v7695, %v7767
        %v7769 = vpop.f32.mrf.mxu0
        %v7770 = vadd.f32 %v7697, %v7769
        %v7771 = vpop.f32.mrf.mxu0
        %v7772 = vadd.f32 %v7699, %v7771
        %7773 = vmatprep.mubr.bf16.mxu0 %v2997
        %7774 = vmatmul.mubr.bf16.gmra.mxu0 %v2996
        %v7775 = vpop.f32.mrf.mxu0
        %v7776 = vadd.f32 %v7703, %v7775
        %v7777 = vpop.f32.mrf.mxu0
        %v7778 = vadd.f32 %v7705, %v7777
        %v7779 = vpop.f32.mrf.mxu0
        %v7780 = vadd.f32 %v7707, %v7779
        %v7781 = vpop.f32.mrf.mxu0
        %v7782 = vadd.f32 %v7709, %v7781
        %7783 = vmatprep.mubr.bf16.mxu0 %v3001
        %7784 = vmatmul.mubr.bf16.gmra.mxu0 %v3000
        %v7785 = vpop.f32.mrf.mxu0
        %v7786 = vadd.f32 %v7713, %v7785
        %v7787 = vpop.f32.mrf.mxu0
        %v7788 = vadd.f32 %v7715, %v7787
        %v7789 = vpop.f32.mrf.mxu0
        %v7790 = vadd.f32 %v7717, %v7789
        %v7791 = vpop.f32.mrf.mxu0
        %v7792 = vadd.f32 %v7719, %v7791
        %7793 = vmatprep.mubr.bf16.mxu0 %v3005
        %7794 = vmatmul.mubr.bf16.gmra.mxu0 %v3004
        %v7795 = vpop.f32.mrf.mxu0
        %v7796 = vadd.f32 %v7723, %v7795
        %v7797 = vpop.f32.mrf.mxu0
        %v7798 = vadd.f32 %v7725, %v7797
        %v7799 = vpop.f32.mrf.mxu0
        %v7800 = vadd.f32 %v7727, %v7799
        %v7801 = vpop.f32.mrf.mxu0
        %v7802 = vadd.f32 %v7729, %v7801
        %7803 = vdwg.mxu0
        %v7804 = vmax.f32 %v7766, 0.0
        %v7805 = vmax.f32 %v7768, 0.0
        %v7806 = vmax.f32 %v7770, 0.0
        %v7807 = vmax.f32 %v7772, 0.0
        %v7808 = vmax.f32 %v7776, 0.0
        %v7809 = vmax.f32 %v7778, 0.0
        %v7810 = vmax.f32 %v7780, 0.0
        %v7811 = vmax.f32 %v7782, 0.0
        %v7812 = vmax.f32 %v7786, 0.0
        %v7813 = vmax.f32 %v7788, 0.0
        %v7814 = vmax.f32 %v7790, 0.0
        %v7815 = vmax.f32 %v7792, 0.0
        %v7816 = vmax.f32 %v7796, 0.0
        %v7817 = vmax.f32 %v7798, 0.0
        %v7818 = vmax.f32 %v7800, 0.0
        %v7819 = vmax.f32 %v7802, 0.0
        %v7820 = vpack.c.bf16 %v7804, %v7804
        %v7821 = vpack.c.bf16 %v7805, %v7805
        %v7822 = vpack.c.bf16 %v7806, %v7806
        %v7823 = vpack.c.bf16 %v7807, %v7807
        %v7824 = vpack.c.bf16 %v7808, %v7808
        %v7825 = vpack.c.bf16 %v7809, %v7809
        %v7826 = vpack.c.bf16 %v7810, %v7810
        %v7827 = vpack.c.bf16 %v7811, %v7811
        %v7828 = vpack.c.bf16 %v7812, %v7812
        %v7829 = vpack.c.bf16 %v7813, %v7813
        %v7830 = vpack.c.bf16 %v7814, %v7814
        %v7831 = vpack.c.bf16 %v7815, %v7815
        %v7832 = vpack.c.bf16 %v7816, %v7816
        %v7833 = vpack.c.bf16 %v7817, %v7817
        %v7834 = vpack.c.bf16 %v7818, %v7818
        %v7835 = vpack.c.bf16 %v7819, %v7819
        %v7852 = vunpack.c.l.b16 %v7820
        %v7853 = vunpack.c.l.b16 %v7821
        %v7854 = vunpack.c.l.b16 %v7822
        %v7855 = vunpack.c.l.b16 %v7823
        %v7856 = vunpack.c.l.b16 %v7824
        %v7857 = vunpack.c.l.b16 %v7825
        %v7858 = vunpack.c.l.b16 %v7826
        %v7859 = vunpack.c.l.b16 %v7827
        %v7860 = vunpack.c.l.b16 %v7828
        %v7861 = vunpack.c.l.b16 %v7829
        %v7862 = vunpack.c.l.b16 %v7830
        %v7863 = vunpack.c.l.b16 %v7831
        %v7864 = vunpack.c.l.b16 %v7832
        %v7865 = vunpack.c.l.b16 %v7833
        %v7866 = vunpack.c.l.b16 %v7834
        %v7867 = vunpack.c.l.b16 %v7835
        %v7868 = vpack.c.b16 %v7853, %v7852
        %v7869 = vpack.c.b16 %v7855, %v7854
        %v7870 = vpack.c.b16 %v7857, %v7856
        %v7871 = vpack.c.b16 %v7859, %v7858
        %v7872 = vpack.c.b16 %v7861, %v7860
        %v7873 = vpack.c.b16 %v7863, %v7862
        %v7874 = vpack.c.b16 %v7865, %v7864
        %v7875 = vpack.c.b16 %v7867, %v7866
        %v7877 = vshrl.u32 %v7868, 16
        %v7879 = vrot.slane %v7877, 7
        %v7880 = vshll.u32 %v7868, 16
        %v7882 = vor.u32 %v7879, %v7880
        %v7883 = vrot.slane %v7879, 4
        %v7885 = vshrl.u32 %v7869, 16
        %v7887 = vrot.slane %v7885, 7
        %v7888 = vshll.u32 %v7869, 16
        %v7890 = vor.u32 %v7887, %v7888
        %v7891 = vrot.slane %v7887, 4
        %v7893 = vshrl.u32 %v7870, 16
        %v7895 = vrot.slane %v7893, 7
        %v7896 = vshll.u32 %v7870, 16
        %v7898 = vor.u32 %v7895, %v7896
        %v7899 = vrot.slane %v7895, 4
        %v7901 = vshrl.u32 %v7871, 16
        %v7903 = vrot.slane %v7901, 7
        %v7904 = vshll.u32 %v7871, 16
        %v7906 = vor.u32 %v7903, %v7904
        %v7907 = vrot.slane %v7903, 4
        %v7909 = vshrl.u32 %v7872, 16
        %v7911 = vrot.slane %v7909, 7
        %v7912 = vshll.u32 %v7872, 16
        %v7914 = vor.u32 %v7911, %v7912
        %v7915 = vrot.slane %v7911, 4
        %v7917 = vshrl.u32 %v7873, 16
        %v7919 = vrot.slane %v7917, 7
        %v7920 = vshll.u32 %v7873, 16
        %v7922 = vor.u32 %v7919, %v7920
        %v7923 = vrot.slane %v7919, 4
        %v7925 = vshrl.u32 %v7874, 16
        %v7927 = vrot.slane %v7925, 7
        %v7928 = vshll.u32 %v7874, 16
        %v7930 = vor.u32 %v7927, %v7928
        %v7931 = vrot.slane %v7927, 4
        %v7933 = vshrl.u32 %v7875, 16
        %v7935 = vrot.slane %v7933, 7
        %v7936 = vshll.u32 %v7875, 16
        %v7938 = vor.u32 %v7935, %v7936
        %v7939 = vrot.slane %v7935, 4
        %s7956 = scalar_lea.vmem [#allocation3], 16
        %v7957 = vld [vmem:[%s7956] sm:$0xff]
        %v7958 = vsel %vm1190, %v7882, %v7957
        %7959 = vst [vmem:[%s7956] sm:$0xff] %v7958
        %v7960 = vld [vmem:[%s7956 + $0x8] sm:$0x11]
        %v7961 = vsel %vm472, %v7883, %v7960
        %7962 = vst [vmem:[%s7956 + $0x8] sm:$0x11] %v7961
        %v7963 = vld [vmem:[%s7956 + $0x10] sm:$0xff]
        %v7964 = vsel %vm1190, %v7890, %v7963
        %7965 = vst [vmem:[%s7956 + $0x10] sm:$0xff] %v7964
        %v7966 = vld [vmem:[%s7956 + $0x18] sm:$0x11]
        %v7967 = vsel %vm472, %v7891, %v7966
        %7968 = vst [vmem:[%s7956 + $0x18] sm:$0x11] %v7967
        %v7969 = vld [vmem:[%s7956 + $0x20] sm:$0xff]
        %v7970 = vsel %vm1190, %v7898, %v7969
        %7971 = vst [vmem:[%s7956 + $0x20] sm:$0xff] %v7970
        %v7972 = vld [vmem:[%s7956 + $0x28] sm:$0x11]
        %v7973 = vsel %vm472, %v7899, %v7972
        %7974 = vst [vmem:[%s7956 + $0x28] sm:$0x11] %v7973
        %v7975 = vld [vmem:[%s7956 + $0x30] sm:$0xff]
        %v7976 = vsel %vm1190, %v7906, %v7975
        %7977 = vst [vmem:[%s7956 + $0x30] sm:$0xff] %v7976
        %v7978 = vld [vmem:[%s7956 + $0x38] sm:$0x11]
        %v7979 = vsel %vm472, %v7907, %v7978
        %7980 = vst [vmem:[%s7956 + $0x38] sm:$0x11] %v7979
        %v7981 = vld [vmem:[%s7956 + $0x40] sm:$0xff]
        %v7982 = vsel %vm1190, %v7914, %v7981
        %7983 = vst [vmem:[%s7956 + $0x40] sm:$0xff] %v7982
        %v7984 = vld [vmem:[%s7956 + $0x48] sm:$0x11]
        %v7985 = vsel %vm472, %v7915, %v7984
        %7986 = vst [vmem:[%s7956 + $0x48] sm:$0x11] %v7985
        %v7987 = vld [vmem:[%s7956 + $0x50] sm:$0xff]
        %v7988 = vsel %vm1190, %v7922, %v7987
        %7989 = vst [vmem:[%s7956 + $0x50] sm:$0xff] %v7988
        %v7990 = vld [vmem:[%s7956 + $0x58] sm:$0x11]
        %v7991 = vsel %vm472, %v7923, %v7990
        %7992 = vst [vmem:[%s7956 + $0x58] sm:$0x11] %v7991
        %v7993 = vld [vmem:[%s7956 + $0x60] sm:$0xff]
        %v7994 = vsel %vm1190, %v7930, %v7993
        %7995 = vst [vmem:[%s7956 + $0x60] sm:$0xff] %v7994
        %v7996 = vld [vmem:[%s7956 + $0x68] sm:$0x11]
        %v7997 = vsel %vm472, %v7931, %v7996
        %7998 = vst [vmem:[%s7956 + $0x68] sm:$0x11] %v7997
        %v7999 = vld [vmem:[%s7956 + $0x70] sm:$0xff]
        %v8000 = vsel %vm1190, %v7938, %v7999
        %8001 = vst [vmem:[%s7956 + $0x70] sm:$0xff] %v8000
        %v8002 = vld [vmem:[%s7956 + $0x78] sm:$0x11]
        %v8003 = vsel %vm472, %v7939, %v8002
        %8004 = vst [vmem:[%s7956 + $0x78] sm:$0x11] %v8003
        %v8005 = vld [vmem:[#allocation3] sm:$0xff]
        %v8006 = vld [vmem:[#allocation3 + $0x10] sm:$0xff]
        %v8007 = vld [vmem:[#allocation3 + $0x20] sm:$0xff]
        %v8008 = vld [vmem:[#allocation3 + $0x30] sm:$0xff]
        %v8009 = vld [vmem:[#allocation3 + $0x40] sm:$0xff]
        %v8010 = vld [vmem:[#allocation3 + $0x50] sm:$0xff]
        %v8011 = vld [vmem:[#allocation3 + $0x60] sm:$0xff]
        %v8012 = vld [vmem:[#allocation3 + $0x70] sm:$0xff]
        %v8013 = vld [vmem:[#allocation3 + $0x8] sm:$0x11]
        %v8014 = vld [vmem:[#allocation3 + $0x18] sm:$0x11]
        %v8015 = vld [vmem:[#allocation3 + $0x28] sm:$0x11]
        %v8016 = vld [vmem:[#allocation3 + $0x38] sm:$0x11]
        %v8017 = vld [vmem:[#allocation3 + $0x48] sm:$0x11]
        %v8018 = vld [vmem:[#allocation3 + $0x58] sm:$0x11]
        %v8019 = vld [vmem:[#allocation3 + $0x68] sm:$0x11]
        %v8020 = vld [vmem:[#allocation3 + $0x78] sm:$0x11]
        %v8022 = vshrl.u32 %v8005, 16
        %v8024 = vrot.slane %v8022, 4
        %v8025 = vshll.u32 %v8005, 16
        %v8027 = vrot.slane %v8025, 5
        %v8028 = vor.u32 %v8024, %v8027
        %v8029 = vrot.slane %v8028, 4
        %v8031 = vshll.u32 %v8013, 16
        %v8033 = vrot.slane %v8031, 5
        %v8034 = vsel %vm1321, %v8029, %v8033
        %v8036 = vshrl.u32 %v8006, 16
        %v8038 = vrot.slane %v8036, 4
        %v8039 = vshll.u32 %v8006, 16
        %v8041 = vrot.slane %v8039, 5
        %v8042 = vor.u32 %v8038, %v8041
        %v8043 = vrot.slane %v8042, 4
        %v8045 = vshll.u32 %v8014, 16
        %v8047 = vrot.slane %v8045, 5
        %v8048 = vsel %vm1321, %v8043, %v8047
        %v8050 = vshrl.u32 %v8007, 16
        %v8052 = vrot.slane %v8050, 4
        %v8053 = vshll.u32 %v8007, 16
        %v8055 = vrot.slane %v8053, 5
        %v8056 = vor.u32 %v8052, %v8055
        %v8057 = vrot.slane %v8056, 4
        %v8059 = vshll.u32 %v8015, 16
        %v8061 = vrot.slane %v8059, 5
        %v8062 = vsel %vm1321, %v8057, %v8061
        %v8064 = vshrl.u32 %v8008, 16
        %v8066 = vrot.slane %v8064, 4
        %v8067 = vshll.u32 %v8008, 16
        %v8069 = vrot.slane %v8067, 5
        %v8070 = vor.u32 %v8066, %v8069
        %v8071 = vrot.slane %v8070, 4
        %v8073 = vshll.u32 %v8016, 16
        %v8075 = vrot.slane %v8073, 5
        %v8076 = vsel %vm1321, %v8071, %v8075
        %v8078 = vshrl.u32 %v8009, 16
        %v8080 = vrot.slane %v8078, 4
        %v8081 = vshll.u32 %v8009, 16
        %v8083 = vrot.slane %v8081, 5
        %v8084 = vor.u32 %v8080, %v8083
        %v8085 = vrot.slane %v8084, 4
        %v8087 = vshll.u32 %v8017, 16
        %v8089 = vrot.slane %v8087, 5
        %v8090 = vsel %vm1321, %v8085, %v8089
        %v8092 = vshrl.u32 %v8010, 16
        %v8094 = vrot.slane %v8092, 4
        %v8095 = vshll.u32 %v8010, 16
        %v8097 = vrot.slane %v8095, 5
        %v8098 = vor.u32 %v8094, %v8097
        %v8099 = vrot.slane %v8098, 4
        %v8101 = vshll.u32 %v8018, 16
        %v8103 = vrot.slane %v8101, 5
        %v8104 = vsel %vm1321, %v8099, %v8103
        %v8106 = vshrl.u32 %v8011, 16
        %v8108 = vrot.slane %v8106, 4
        %v8109 = vshll.u32 %v8011, 16
        %v8111 = vrot.slane %v8109, 5
        %v8112 = vor.u32 %v8108, %v8111
        %v8113 = vrot.slane %v8112, 4
        %v8115 = vshll.u32 %v8019, 16
        %v8117 = vrot.slane %v8115, 5
        %v8118 = vsel %vm1321, %v8113, %v8117
        %v8120 = vshrl.u32 %v8012, 16
        %v8122 = vrot.slane %v8120, 4
        %v8123 = vshll.u32 %v8012, 16
        %v8125 = vrot.slane %v8123, 5
        %v8126 = vor.u32 %v8122, %v8125
        %v8127 = vrot.slane %v8126, 4
        %v8129 = vshll.u32 %v8020, 16
        %v8131 = vrot.slane %v8129, 5
        %v8132 = vsel %vm1321, %v8127, %v8131
        %v8133 = vld [vmem:[#allocation3] sm:$0xee]
        %v8134 = vld [vmem:[#allocation3 + $0x10] sm:$0xee]
        %v8135 = vld [vmem:[#allocation3 + $0x20] sm:$0xee]
        %v8136 = vld [vmem:[#allocation3 + $0x30] sm:$0xee]
        %v8137 = vld [vmem:[#allocation3 + $0x40] sm:$0xee]
        %v8138 = vld [vmem:[#allocation3 + $0x50] sm:$0xee]
        %v8139 = vld [vmem:[#allocation3 + $0x60] sm:$0xee]
        %v8140 = vld [vmem:[#allocation3 + $0x70] sm:$0xee]
        %v8157 = vrot.slane %v8133, 5
        %v8158 = vrot.slane %v8157, 4
        %v8159 = vrot.slane %v8013, 5
        %v8160 = vsel %vm1596, %v8158, %v8159
        %v8161 = vrot.slane %v8134, 5
        %v8162 = vrot.slane %v8161, 4
        %v8163 = vrot.slane %v8014, 5
        %v8164 = vsel %vm1596, %v8162, %v8163
        %v8165 = vrot.slane %v8135, 5
        %v8166 = vrot.slane %v8165, 4
        %v8167 = vrot.slane %v8015, 5
        %v8168 = vsel %vm1596, %v8166, %v8167
        %v8169 = vrot.slane %v8136, 5
        %v8170 = vrot.slane %v8169, 4
        %v8171 = vrot.slane %v8016, 5
        %v8172 = vsel %vm1596, %v8170, %v8171
        %v8173 = vrot.slane %v8137, 5
        %v8174 = vrot.slane %v8173, 4
        %v8175 = vrot.slane %v8017, 5
        %v8176 = vsel %vm1596, %v8174, %v8175
        %v8177 = vrot.slane %v8138, 5
        %v8178 = vrot.slane %v8177, 4
        %v8179 = vrot.slane %v8018, 5
        %v8180 = vsel %vm1596, %v8178, %v8179
        %v8181 = vrot.slane %v8139, 5
        %v8182 = vrot.slane %v8181, 4
        %v8183 = vrot.slane %v8019, 5
        %v8184 = vsel %vm1596, %v8182, %v8183
        %v8185 = vrot.slane %v8140, 5
        %v8186 = vrot.slane %v8185, 4
        %v8187 = vrot.slane %v8020, 5
        %v8188 = vsel %vm1596, %v8186, %v8187
        %v8189 = vld [vmem:[%s7956] sm:$0xff]
        %v8190 = vld [vmem:[%s7956 + $0x10] sm:$0xff]
        %v8191 = vld [vmem:[%s7956 + $0x20] sm:$0xff]
        %v8192 = vld [vmem:[%s7956 + $0x30] sm:$0xff]
        %v8193 = vld [vmem:[%s7956 + $0x40] sm:$0xff]
        %v8194 = vld [vmem:[%s7956 + $0x50] sm:$0xff]
        %v8195 = vld [vmem:[%s7956 + $0x60] sm:$0xff]
        %v8196 = vld [vmem:[%s7956 + $0x70] sm:$0xff]
        %v8197 = vld [vmem:[%s7956 + $0x8] sm:$0x11]
        %v8198 = vld [vmem:[%s7956 + $0x18] sm:$0x11]
        %v8199 = vld [vmem:[%s7956 + $0x28] sm:$0x11]
        %v8200 = vld [vmem:[%s7956 + $0x38] sm:$0x11]
        %v8201 = vld [vmem:[%s7956 + $0x48] sm:$0x11]
        %v8202 = vld [vmem:[%s7956 + $0x58] sm:$0x11]
        %v8203 = vld [vmem:[%s7956 + $0x68] sm:$0x11]
        %v8204 = vld [vmem:[%s7956 + $0x78] sm:$0x11]
        %v8206 = vshrl.u32 %v8189, 16
        %v8208 = vrot.slane %v8206, 4
        %v8209 = vshll.u32 %v8189, 16
        %v8211 = vrot.slane %v8209, 5
        %v8212 = vor.u32 %v8208, %v8211
        %v8213 = vrot.slane %v8212, 4
        %v8215 = vshll.u32 %v8197, 16
        %v8217 = vrot.slane %v8215, 5
        %v8218 = vsel %vm1321, %v8213, %v8217
        %v8220 = vshrl.u32 %v8190, 16
        %v8222 = vrot.slane %v8220, 4
        %v8223 = vshll.u32 %v8190, 16
        %v8225 = vrot.slane %v8223, 5
        %v8226 = vor.u32 %v8222, %v8225
        %v8227 = vrot.slane %v8226, 4
        %v8229 = vshll.u32 %v8198, 16
        %v8231 = vrot.slane %v8229, 5
        %v8232 = vsel %vm1321, %v8227, %v8231
        %v8234 = vshrl.u32 %v8191, 16
        %v8236 = vrot.slane %v8234, 4
        %v8237 = vshll.u32 %v8191, 16
        %v8239 = vrot.slane %v8237, 5
        %v8240 = vor.u32 %v8236, %v8239
        %v8241 = vrot.slane %v8240, 4
        %v8243 = vshll.u32 %v8199, 16
        %v8245 = vrot.slane %v8243, 5
        %v8246 = vsel %vm1321, %v8241, %v8245
        %v8248 = vshrl.u32 %v8192, 16
        %v8250 = vrot.slane %v8248, 4
        %v8251 = vshll.u32 %v8192, 16
        %v8253 = vrot.slane %v8251, 5
        %v8254 = vor.u32 %v8250, %v8253
        %v8255 = vrot.slane %v8254, 4
        %v8257 = vshll.u32 %v8200, 16
        %v8259 = vrot.slane %v8257, 5
        %v8260 = vsel %vm1321, %v8255, %v8259
        %v8262 = vshrl.u32 %v8193, 16
        %v8264 = vrot.slane %v8262, 4
        %v8265 = vshll.u32 %v8193, 16
        %v8267 = vrot.slane %v8265, 5
        %v8268 = vor.u32 %v8264, %v8267
        %v8269 = vrot.slane %v8268, 4
        %v8271 = vshll.u32 %v8201, 16
        %v8273 = vrot.slane %v8271, 5
        %v8274 = vsel %vm1321, %v8269, %v8273
        %v8276 = vshrl.u32 %v8194, 16
        %v8278 = vrot.slane %v8276, 4
        %v8279 = vshll.u32 %v8194, 16
        %v8281 = vrot.slane %v8279, 5
        %v8282 = vor.u32 %v8278, %v8281
        %v8283 = vrot.slane %v8282, 4
        %v8285 = vshll.u32 %v8202, 16
        %v8287 = vrot.slane %v8285, 5
        %v8288 = vsel %vm1321, %v8283, %v8287
        %v8290 = vshrl.u32 %v8195, 16
        %v8292 = vrot.slane %v8290, 4
        %v8293 = vshll.u32 %v8195, 16
        %v8295 = vrot.slane %v8293, 5
        %v8296 = vor.u32 %v8292, %v8295
        %v8297 = vrot.slane %v8296, 4
        %v8299 = vshll.u32 %v8203, 16
        %v8301 = vrot.slane %v8299, 5
        %v8302 = vsel %vm1321, %v8297, %v8301
        %v8304 = vshrl.u32 %v8196, 16
        %v8306 = vrot.slane %v8304, 4
        %v8307 = vshll.u32 %v8196, 16
        %v8309 = vrot.slane %v8307, 5
        %v8310 = vor.u32 %v8306, %v8309
        %v8311 = vrot.slane %v8310, 4
        %v8313 = vshll.u32 %v8204, 16
        %v8315 = vrot.slane %v8313, 5
        %v8316 = vsel %vm1321, %v8311, %v8315
        %v8317 = vld [vmem:[%s7956] sm:$0xee]
        %v8318 = vld [vmem:[%s7956 + $0x10] sm:$0xee]
        %v8319 = vld [vmem:[%s7956 + $0x20] sm:$0xee]
        %v8320 = vld [vmem:[%s7956 + $0x30] sm:$0xee]
        %v8321 = vld [vmem:[%s7956 + $0x40] sm:$0xee]
        %v8322 = vld [vmem:[%s7956 + $0x50] sm:$0xee]
        %v8323 = vld [vmem:[%s7956 + $0x60] sm:$0xee]
        %v8324 = vld [vmem:[%s7956 + $0x70] sm:$0xee]
        %v8341 = vrot.slane %v8317, 5
        %v8342 = vrot.slane %v8341, 4
        %v8343 = vrot.slane %v8197, 5
        %v8344 = vsel %vm1596, %v8342, %v8343
        %v8345 = vrot.slane %v8318, 5
        %v8346 = vrot.slane %v8345, 4
        %v8347 = vrot.slane %v8198, 5
        %v8348 = vsel %vm1596, %v8346, %v8347
        %v8349 = vrot.slane %v8319, 5
        %v8350 = vrot.slane %v8349, 4
        %v8351 = vrot.slane %v8199, 5
        %v8352 = vsel %vm1596, %v8350, %v8351
        %v8353 = vrot.slane %v8320, 5
        %v8354 = vrot.slane %v8353, 4
        %v8355 = vrot.slane %v8200, 5
        %v8356 = vsel %vm1596, %v8354, %v8355
        %v8357 = vrot.slane %v8321, 5
        %v8358 = vrot.slane %v8357, 4
        %v8359 = vrot.slane %v8201, 5
        %v8360 = vsel %vm1596, %v8358, %v8359
        %v8361 = vrot.slane %v8322, 5
        %v8362 = vrot.slane %v8361, 4
        %v8363 = vrot.slane %v8202, 5
        %v8364 = vsel %vm1596, %v8362, %v8363
        %v8365 = vrot.slane %v8323, 5
        %v8366 = vrot.slane %v8365, 4
        %v8367 = vrot.slane %v8203, 5
        %v8368 = vsel %vm1596, %v8366, %v8367
        %v8369 = vrot.slane %v8324, 5
        %v8370 = vrot.slane %v8369, 4
        %v8371 = vrot.slane %v8204, 5
        %v8372 = vsel %vm1596, %v8370, %v8371
        %s8373 = scalar_lea.vmem [#allocation3], 32
        %v8374 = vld [vmem:[%s8373] sm:$0xff]
        %v8375 = vld [vmem:[%s8373 + $0x10] sm:$0xff]
        %v8376 = vld [vmem:[%s8373 + $0x20] sm:$0xff]
        %v8377 = vld [vmem:[%s8373 + $0x30] sm:$0xff]
        %v8378 = vld [vmem:[%s8373 + $0x40] sm:$0xff]
        %v8379 = vld [vmem:[%s8373 + $0x50] sm:$0xff]
        %v8380 = vld [vmem:[%s8373 + $0x60] sm:$0xff]
        %v8381 = vld [vmem:[%s8373 + $0x70] sm:$0xff]
        %v8382 = vld [vmem:[%s8373 + $0x8] sm:$0x11]
        %v8383 = vld [vmem:[%s8373 + $0x18] sm:$0x11]
        %v8384 = vld [vmem:[%s8373 + $0x28] sm:$0x11]
        %v8385 = vld [vmem:[%s8373 + $0x38] sm:$0x11]
        %v8386 = vld [vmem:[%s8373 + $0x48] sm:$0x11]
        %v8387 = vld [vmem:[%s8373 + $0x58] sm:$0x11]
        %v8388 = vld [vmem:[%s8373 + $0x68] sm:$0x11]
        %v8389 = vld [vmem:[%s8373 + $0x78] sm:$0x11]
        %v8391 = vshrl.u32 %v8374, 16
        %v8393 = vrot.slane %v8391, 4
        %v8394 = vshll.u32 %v8374, 16
        %v8396 = vrot.slane %v8394, 5
        %v8397 = vor.u32 %v8393, %v8396
        %v8398 = vrot.slane %v8397, 4
        %v8400 = vshll.u32 %v8382, 16
        %v8402 = vrot.slane %v8400, 5
        %v8403 = vsel %vm1321, %v8398, %v8402
        %v8405 = vshrl.u32 %v8375, 16
        %v8407 = vrot.slane %v8405, 4
        %v8408 = vshll.u32 %v8375, 16
        %v8410 = vrot.slane %v8408, 5
        %v8411 = vor.u32 %v8407, %v8410
        %v8412 = vrot.slane %v8411, 4
        %v8414 = vshll.u32 %v8383, 16
        %v8416 = vrot.slane %v8414, 5
        %v8417 = vsel %vm1321, %v8412, %v8416
        %v8419 = vshrl.u32 %v8376, 16
        %v8421 = vrot.slane %v8419, 4
        %v8422 = vshll.u32 %v8376, 16
        %v8424 = vrot.slane %v8422, 5
        %v8425 = vor.u32 %v8421, %v8424
        %v8426 = vrot.slane %v8425, 4
        %v8428 = vshll.u32 %v8384, 16
        %v8430 = vrot.slane %v8428, 5
        %v8431 = vsel %vm1321, %v8426, %v8430
        %v8433 = vshrl.u32 %v8377, 16
        %v8435 = vrot.slane %v8433, 4
        %v8436 = vshll.u32 %v8377, 16
        %v8438 = vrot.slane %v8436, 5
        %v8439 = vor.u32 %v8435, %v8438
        %v8440 = vrot.slane %v8439, 4
        %v8442 = vshll.u32 %v8385, 16
        %v8444 = vrot.slane %v8442, 5
        %v8445 = vsel %vm1321, %v8440, %v8444
        %v8447 = vshrl.u32 %v8378, 16
        %v8449 = vrot.slane %v8447, 4
        %v8450 = vshll.u32 %v8378, 16
        %v8452 = vrot.slane %v8450, 5
        %v8453 = vor.u32 %v8449, %v8452
        %v8454 = vrot.slane %v8453, 4
        %v8456 = vshll.u32 %v8386, 16
        %v8458 = vrot.slane %v8456, 5
        %v8459 = vsel %vm1321, %v8454, %v8458
        %v8461 = vshrl.u32 %v8379, 16
        %v8463 = vrot.slane %v8461, 4
        %v8464 = vshll.u32 %v8379, 16
        %v8466 = vrot.slane %v8464, 5
        %v8467 = vor.u32 %v8463, %v8466
        %v8468 = vrot.slane %v8467, 4
        %v8470 = vshll.u32 %v8387, 16
        %v8472 = vrot.slane %v8470, 5
        %v8473 = vsel %vm1321, %v8468, %v8472
        %v8475 = vshrl.u32 %v8380, 16
        %v8477 = vrot.slane %v8475, 4
        %v8478 = vshll.u32 %v8380, 16
        %v8480 = vrot.slane %v8478, 5
        %v8481 = vor.u32 %v8477, %v8480
        %v8482 = vrot.slane %v8481, 4
        %v8484 = vshll.u32 %v8388, 16
        %v8486 = vrot.slane %v8484, 5
        %v8487 = vsel %vm1321, %v8482, %v8486
        %v8489 = vshrl.u32 %v8381, 16
        %v8491 = vrot.slane %v8489, 4
        %v8492 = vshll.u32 %v8381, 16
        %v8494 = vrot.slane %v8492, 5
        %v8495 = vor.u32 %v8491, %v8494
        %v8496 = vrot.slane %v8495, 4
        %v8498 = vshll.u32 %v8389, 16
        %v8500 = vrot.slane %v8498, 5
        %v8501 = vsel %vm1321, %v8496, %v8500
        %v8502 = vld [vmem:[%s8373] sm:$0xee]
        %v8503 = vld [vmem:[%s8373 + $0x10] sm:$0xee]
        %v8504 = vld [vmem:[%s8373 + $0x20] sm:$0xee]
        %v8505 = vld [vmem:[%s8373 + $0x30] sm:$0xee]
        %v8506 = vld [vmem:[%s8373 + $0x40] sm:$0xee]
        %v8507 = vld [vmem:[%s8373 + $0x50] sm:$0xee]
        %v8508 = vld [vmem:[%s8373 + $0x60] sm:$0xee]
        %v8509 = vld [vmem:[%s8373 + $0x70] sm:$0xee]
        %v8526 = vrot.slane %v8502, 5
        %v8527 = vrot.slane %v8526, 4
        %v8528 = vrot.slane %v8382, 5
        %v8529 = vsel %vm1596, %v8527, %v8528
        %v8530 = vrot.slane %v8503, 5
        %v8531 = vrot.slane %v8530, 4
        %v8532 = vrot.slane %v8383, 5
        %v8533 = vsel %vm1596, %v8531, %v8532
        %v8534 = vrot.slane %v8504, 5
        %v8535 = vrot.slane %v8534, 4
        %v8536 = vrot.slane %v8384, 5
        %v8537 = vsel %vm1596, %v8535, %v8536
        %v8538 = vrot.slane %v8505, 5
        %v8539 = vrot.slane %v8538, 4
        %v8540 = vrot.slane %v8385, 5
        %v8541 = vsel %vm1596, %v8539, %v8540
        %v8542 = vrot.slane %v8506, 5
        %v8543 = vrot.slane %v8542, 4
        %v8544 = vrot.slane %v8386, 5
        %v8545 = vsel %vm1596, %v8543, %v8544
        %v8546 = vrot.slane %v8507, 5
        %v8547 = vrot.slane %v8546, 4
        %v8548 = vrot.slane %v8387, 5
        %v8549 = vsel %vm1596, %v8547, %v8548
        %v8550 = vrot.slane %v8508, 5
        %v8551 = vrot.slane %v8550, 4
        %v8552 = vrot.slane %v8388, 5
        %v8553 = vsel %vm1596, %v8551, %v8552
        %v8554 = vrot.slane %v8509, 5
        %v8555 = vrot.slane %v8554, 4
        %v8556 = vrot.slane %v8389, 5
        %v8557 = vsel %vm1596, %v8555, %v8556
        %v8566 = vunpack.c.l.b16 %v8005
        %v8567 = vunpack.c.h.b16 %v8005
        %v8568 = vunpack.c.l.b16 %v8006
        %v8569 = vunpack.c.h.b16 %v8006
        %v8570 = vunpack.c.l.b16 %v8007
        %v8571 = vunpack.c.h.b16 %v8007
        %v8572 = vunpack.c.l.b16 %v8008
        %v8573 = vunpack.c.h.b16 %v8008
        %v8574 = vunpack.c.l.b16 %v8009
        %v8575 = vunpack.c.h.b16 %v8009
        %v8576 = vunpack.c.l.b16 %v8010
        %v8577 = vunpack.c.h.b16 %v8010
        %v8578 = vunpack.c.l.b16 %v8011
        %v8579 = vunpack.c.h.b16 %v8011
        %v8580 = vunpack.c.l.b16 %v8012
        %v8581 = vunpack.c.h.b16 %v8012
        %v8582 = vpack.c.b16 %v8568, %v8566
        %v8583 = vpack.c.b16 %v8569, %v8567
        %v8584 = vpack.c.b16 %v8572, %v8570
        %v8585 = vpack.c.b16 %v8573, %v8571
        %v8586 = vpack.c.b16 %v8576, %v8574
        %v8587 = vpack.c.b16 %v8577, %v8575
        %v8588 = vpack.c.b16 %v8580, %v8578
        %v8589 = vpack.c.b16 %v8581, %v8579
        %v8598 = vunpack.c.l.b16 %v8034
        %v8599 = vunpack.c.h.b16 %v8034
        %v8600 = vunpack.c.l.b16 %v8048
        %v8601 = vunpack.c.h.b16 %v8048
        %v8602 = vunpack.c.l.b16 %v8062
        %v8603 = vunpack.c.h.b16 %v8062
        %v8604 = vunpack.c.l.b16 %v8076
        %v8605 = vunpack.c.h.b16 %v8076
        %v8606 = vunpack.c.l.b16 %v8090
        %v8607 = vunpack.c.h.b16 %v8090
        %v8608 = vunpack.c.l.b16 %v8104
        %v8609 = vunpack.c.h.b16 %v8104
        %v8610 = vunpack.c.l.b16 %v8118
        %v8611 = vunpack.c.h.b16 %v8118
        %v8612 = vunpack.c.l.b16 %v8132
        %v8613 = vunpack.c.h.b16 %v8132
        %v8614 = vpack.c.b16 %v8600, %v8598
        %v8615 = vpack.c.b16 %v8601, %v8599
        %v8616 = vpack.c.b16 %v8604, %v8602
        %v8617 = vpack.c.b16 %v8605, %v8603
        %v8618 = vpack.c.b16 %v8608, %v8606
        %v8619 = vpack.c.b16 %v8609, %v8607
        %v8620 = vpack.c.b16 %v8612, %v8610
        %v8621 = vpack.c.b16 %v8613, %v8611
        %v8630 = vunpack.c.l.b16 %v8160
        %v8631 = vunpack.c.h.b16 %v8160
        %v8632 = vunpack.c.l.b16 %v8164
        %v8633 = vunpack.c.h.b16 %v8164
        %v8634 = vunpack.c.l.b16 %v8168
        %v8635 = vunpack.c.h.b16 %v8168
        %v8636 = vunpack.c.l.b16 %v8172
        %v8637 = vunpack.c.h.b16 %v8172
        %v8638 = vunpack.c.l.b16 %v8176
        %v8639 = vunpack.c.h.b16 %v8176
        %v8640 = vunpack.c.l.b16 %v8180
        %v8641 = vunpack.c.h.b16 %v8180
        %v8642 = vunpack.c.l.b16 %v8184
        %v8643 = vunpack.c.h.b16 %v8184
        %v8644 = vunpack.c.l.b16 %v8188
        %v8645 = vunpack.c.h.b16 %v8188
        %v8646 = vpack.c.b16 %v8632, %v8630
        %v8647 = vpack.c.b16 %v8633, %v8631
        %v8648 = vpack.c.b16 %v8636, %v8634
        %v8649 = vpack.c.b16 %v8637, %v8635
        %v8650 = vpack.c.b16 %v8640, %v8638
        %v8651 = vpack.c.b16 %v8641, %v8639
        %v8652 = vpack.c.b16 %v8644, %v8642
        %v8653 = vpack.c.b16 %v8645, %v8643
        %v8670 = vunpack.c.l.b16 %v8189
        %v8671 = vunpack.c.h.b16 %v8189
        %v8672 = vunpack.c.l.b16 %v8190
        %v8673 = vunpack.c.h.b16 %v8190
        %v8674 = vunpack.c.l.b16 %v8191
        %v8675 = vunpack.c.h.b16 %v8191
        %v8676 = vunpack.c.l.b16 %v8192
        %v8677 = vunpack.c.h.b16 %v8192
        %v8678 = vunpack.c.l.b16 %v8193
        %v8679 = vunpack.c.h.b16 %v8193
        %v8680 = vunpack.c.l.b16 %v8194
        %v8681 = vunpack.c.h.b16 %v8194
        %v8682 = vunpack.c.l.b16 %v8195
        %v8683 = vunpack.c.h.b16 %v8195
        %v8684 = vunpack.c.l.b16 %v8196
        %v8685 = vunpack.c.h.b16 %v8196
        %v8686 = vpack.c.b16 %v8672, %v8670
        %v8687 = vpack.c.b16 %v8673, %v8671
        %v8688 = vpack.c.b16 %v8676, %v8674
        %v8689 = vpack.c.b16 %v8677, %v8675
        %v8690 = vpack.c.b16 %v8680, %v8678
        %v8691 = vpack.c.b16 %v8681, %v8679
        %v8692 = vpack.c.b16 %v8684, %v8682
        %v8693 = vpack.c.b16 %v8685, %v8683
        %v8702 = vunpack.c.l.b16 %v8218
        %v8703 = vunpack.c.h.b16 %v8218
        %v8704 = vunpack.c.l.b16 %v8232
        %v8705 = vunpack.c.h.b16 %v8232
        %v8706 = vunpack.c.l.b16 %v8246
        %v8707 = vunpack.c.h.b16 %v8246
        %v8708 = vunpack.c.l.b16 %v8260
        %v8709 = vunpack.c.h.b16 %v8260
        %v8710 = vunpack.c.l.b16 %v8274
        %v8711 = vunpack.c.h.b16 %v8274
        %v8712 = vunpack.c.l.b16 %v8288
        %v8713 = vunpack.c.h.b16 %v8288
        %v8714 = vunpack.c.l.b16 %v8302
        %v8715 = vunpack.c.h.b16 %v8302
        %v8716 = vunpack.c.l.b16 %v8316
        %v8717 = vunpack.c.h.b16 %v8316
        %v8718 = vpack.c.b16 %v8704, %v8702
        %v8719 = vpack.c.b16 %v8705, %v8703
        %v8720 = vpack.c.b16 %v8708, %v8706
        %v8721 = vpack.c.b16 %v8709, %v8707
        %v8722 = vpack.c.b16 %v8712, %v8710
        %v8723 = vpack.c.b16 %v8713, %v8711
        %v8724 = vpack.c.b16 %v8716, %v8714
        %v8725 = vpack.c.b16 %v8717, %v8715
        %v8734 = vunpack.c.l.b16 %v8344
        %v8735 = vunpack.c.h.b16 %v8344
        %v8736 = vunpack.c.l.b16 %v8348
        %v8737 = vunpack.c.h.b16 %v8348
        %v8738 = vunpack.c.l.b16 %v8352
        %v8739 = vunpack.c.h.b16 %v8352
        %v8740 = vunpack.c.l.b16 %v8356
        %v8741 = vunpack.c.h.b16 %v8356
        %v8742 = vunpack.c.l.b16 %v8360
        %v8743 = vunpack.c.h.b16 %v8360
        %v8744 = vunpack.c.l.b16 %v8364
        %v8745 = vunpack.c.h.b16 %v8364
        %v8746 = vunpack.c.l.b16 %v8368
        %v8747 = vunpack.c.h.b16 %v8368
        %v8748 = vunpack.c.l.b16 %v8372
        %v8749 = vunpack.c.h.b16 %v8372
        %v8750 = vpack.c.b16 %v8736, %v8734
        %v8751 = vpack.c.b16 %v8737, %v8735
        %v8752 = vpack.c.b16 %v8740, %v8738
        %v8753 = vpack.c.b16 %v8741, %v8739
        %v8754 = vpack.c.b16 %v8744, %v8742
        %v8755 = vpack.c.b16 %v8745, %v8743
        %v8756 = vpack.c.b16 %v8748, %v8746
        %v8757 = vpack.c.b16 %v8749, %v8747
        %v8774 = vunpack.c.l.b16 %v8374
        %v8775 = vunpack.c.h.b16 %v8374
        %v8776 = vunpack.c.l.b16 %v8375
        %v8777 = vunpack.c.h.b16 %v8375
        %v8778 = vunpack.c.l.b16 %v8376
        %v8779 = vunpack.c.h.b16 %v8376
        %v8780 = vunpack.c.l.b16 %v8377
        %v8781 = vunpack.c.h.b16 %v8377
        %v8782 = vunpack.c.l.b16 %v8378
        %v8783 = vunpack.c.h.b16 %v8378
        %v8784 = vunpack.c.l.b16 %v8379
        %v8785 = vunpack.c.h.b16 %v8379
        %v8786 = vunpack.c.l.b16 %v8380
        %v8787 = vunpack.c.h.b16 %v8380
        %v8788 = vunpack.c.l.b16 %v8381
        %v8789 = vunpack.c.h.b16 %v8381
        %v8790 = vpack.c.b16 %v8776, %v8774
        %v8791 = vpack.c.b16 %v8777, %v8775
        %v8792 = vpack.c.b16 %v8780, %v8778
        %v8793 = vpack.c.b16 %v8781, %v8779
        %v8794 = vpack.c.b16 %v8784, %v8782
        %v8795 = vpack.c.b16 %v8785, %v8783
        %v8796 = vpack.c.b16 %v8788, %v8786
        %v8797 = vpack.c.b16 %v8789, %v8787
        %v8806 = vunpack.c.l.b16 %v8403
        %v8807 = vunpack.c.h.b16 %v8403
        %v8808 = vunpack.c.l.b16 %v8417
        %v8809 = vunpack.c.h.b16 %v8417
        %v8810 = vunpack.c.l.b16 %v8431
        %v8811 = vunpack.c.h.b16 %v8431
        %v8812 = vunpack.c.l.b16 %v8445
        %v8813 = vunpack.c.h.b16 %v8445
        %v8814 = vunpack.c.l.b16 %v8459
        %v8815 = vunpack.c.h.b16 %v8459
        %v8816 = vunpack.c.l.b16 %v8473
        %v8817 = vunpack.c.h.b16 %v8473
        %v8818 = vunpack.c.l.b16 %v8487
        %v8819 = vunpack.c.h.b16 %v8487
        %v8820 = vunpack.c.l.b16 %v8501
        %v8821 = vunpack.c.h.b16 %v8501
        %v8822 = vpack.c.b16 %v8808, %v8806
        %v8823 = vpack.c.b16 %v8809, %v8807
        %v8824 = vpack.c.b16 %v8812, %v8810
        %v8825 = vpack.c.b16 %v8813, %v8811
        %v8826 = vpack.c.b16 %v8816, %v8814
        %v8827 = vpack.c.b16 %v8817, %v8815
        %v8828 = vpack.c.b16 %v8820, %v8818
        %v8829 = vpack.c.b16 %v8821, %v8819
        %v8838 = vunpack.c.l.b16 %v8529
        %v8839 = vunpack.c.h.b16 %v8529
        %v8840 = vunpack.c.l.b16 %v8533
        %v8841 = vunpack.c.h.b16 %v8533
        %v8842 = vunpack.c.l.b16 %v8537
        %v8843 = vunpack.c.h.b16 %v8537
        %v8844 = vunpack.c.l.b16 %v8541
        %v8845 = vunpack.c.h.b16 %v8541
        %v8846 = vunpack.c.l.b16 %v8545
        %v8847 = vunpack.c.h.b16 %v8545
        %v8848 = vunpack.c.l.b16 %v8549
        %v8849 = vunpack.c.h.b16 %v8549
        %v8850 = vunpack.c.l.b16 %v8553
        %v8851 = vunpack.c.h.b16 %v8553
        %v8852 = vunpack.c.l.b16 %v8557
        %v8853 = vunpack.c.h.b16 %v8557
        %v8854 = vpack.c.b16 %v8840, %v8838
        %v8855 = vpack.c.b16 %v8841, %v8839
        %v8856 = vpack.c.b16 %v8844, %v8842
        %v8857 = vpack.c.b16 %v8845, %v8843
        %v8858 = vpack.c.b16 %v8848, %v8846
        %v8859 = vpack.c.b16 %v8849, %v8847
        %v8860 = vpack.c.b16 %v8852, %v8850
        %v8861 = vpack.c.b16 %v8853, %v8851
        %v8870 = vld [vmem:[#allocation13] sm:$0xff]
        %v8871 = vld [vmem:[#allocation13 + $0x8] sm:$0xff]
        %v8872 = vld [vmem:[#allocation13 + $0x10] sm:$0xff]
        %v8873 = vld [vmem:[#allocation13 + $0x18] sm:$0xff]
        %v8874 = vld [vmem:[#allocation13 + $0x20] sm:$0xff]
        %v8875 = vld [vmem:[#allocation13 + $0x28] sm:$0xff]
        %v8876 = vld [vmem:[#allocation13 + $0x30] sm:$0xff]
        %v8877 = vld [vmem:[#allocation13 + $0x38] sm:$0xff]
        %v8878 = vld [vmem:[#allocation13 + $0x40] sm:$0xff]
        %v8879 = vld [vmem:[#allocation13 + $0x48] sm:$0xff]
        %v8880 = vld [vmem:[#allocation13 + $0x50] sm:$0xff]
        %v8881 = vld [vmem:[#allocation13 + $0x58] sm:$0xff]
        %v8882 = vld [vmem:[#allocation13 + $0x60] sm:$0xff]
        %v8883 = vld [vmem:[#allocation13 + $0x68] sm:$0xff]
        %v8884 = vld [vmem:[#allocation13 + $0x70] sm:$0xff]
        %v8885 = vld [vmem:[#allocation13 + $0x78] sm:$0xff]
        %v8886 = vld [vmem:[#allocation13 + $0x80] sm:$0xff]
        %v8887 = vld [vmem:[#allocation13 + $0x88] sm:$0xff]
        %v8888 = vld [vmem:[#allocation13 + $0x90] sm:$0xff]
        %v8889 = vld [vmem:[#allocation13 + $0x98] sm:$0xff]
        %v8890 = vld [vmem:[#allocation13 + $0xa0] sm:$0xff]
        %v8891 = vld [vmem:[#allocation13 + $0xa8] sm:$0xff]
        %v8892 = vld [vmem:[#allocation13 + $0xb0] sm:$0xff]
        %v8893 = vld [vmem:[#allocation13 + $0xb8] sm:$0xff]
        %v8894 = vld [vmem:[#allocation13 + $0xc0] sm:$0xff]
        %v8895 = vld [vmem:[#allocation13 + $0xc8] sm:$0xff]
        %v8896 = vld [vmem:[#allocation13 + $0xd0] sm:$0xff]
        %v8897 = vld [vmem:[#allocation13 + $0xd8] sm:$0xff]
        %v8898 = vld [vmem:[#allocation13 + $0xe0] sm:$0xff]
        %v8899 = vld [vmem:[#allocation13 + $0xe8] sm:$0xff]
        %v8900 = vld [vmem:[#allocation13 + $0xf0] sm:$0xff]
        %v8901 = vld [vmem:[#allocation13 + $0xf8] sm:$0xff]
        %v8902 = vld [vmem:[#allocation13 + $0x100] sm:$0xff]
        %v8903 = vld [vmem:[#allocation13 + $0x108] sm:$0xff]
        %v8904 = vld [vmem:[#allocation13 + $0x110] sm:$0xff]
        %v8905 = vld [vmem:[#allocation13 + $0x118] sm:$0xff]
        %v8906 = vld [vmem:[#allocation13 + $0x120] sm:$0xff]
        %v8907 = vld [vmem:[#allocation13 + $0x128] sm:$0xff]
        %v8908 = vld [vmem:[#allocation13 + $0x130] sm:$0xff]
        %v8909 = vld [vmem:[#allocation13 + $0x138] sm:$0xff]
        %v8910 = vld [vmem:[#allocation13 + $0x140] sm:$0xff]
        %v8911 = vld [vmem:[#allocation13 + $0x148] sm:$0xff]
        %v8912 = vld [vmem:[#allocation13 + $0x150] sm:$0xff]
        %v8913 = vld [vmem:[#allocation13 + $0x158] sm:$0xff]
        %v8914 = vld [vmem:[#allocation13 + $0x160] sm:$0xff]
        %v8915 = vld [vmem:[#allocation13 + $0x168] sm:$0xff]
        %v8916 = vld [vmem:[#allocation13 + $0x170] sm:$0xff]
        %v8917 = vld [vmem:[#allocation13 + $0x178] sm:$0xff]
        %v8918 = vld [vmem:[#allocation13 + $0x180] sm:$0xff]
        %v8919 = vld [vmem:[#allocation13 + $0x188] sm:$0xff]
        %v8920 = vld [vmem:[#allocation13 + $0x190] sm:$0xff]
        %v8921 = vld [vmem:[#allocation13 + $0x198] sm:$0xff]
        %v8922 = vld [vmem:[#allocation13 + $0x1a0] sm:$0xff]
        %v8923 = vld [vmem:[#allocation13 + $0x1a8] sm:$0xff]
        %v8924 = vld [vmem:[#allocation13 + $0x1b0] sm:$0xff]
        %v8925 = vld [vmem:[#allocation13 + $0x1b8] sm:$0xff]
        %v8926 = vld [vmem:[#allocation13 + $0x1c0] sm:$0xff]
        %v8927 = vld [vmem:[#allocation13 + $0x1c8] sm:$0xff]
        %v8928 = vld [vmem:[#allocation13 + $0x1d0] sm:$0xff]
        %v8929 = vld [vmem:[#allocation13 + $0x1d8] sm:$0xff]
        %v8930 = vld [vmem:[#allocation13 + $0x1e0] sm:$0xff]
        %v8931 = vld [vmem:[#allocation13 + $0x1e8] sm:$0xff]
        %v8932 = vld [vmem:[#allocation13 + $0x1f0] sm:$0xff]
        %v8933 = vld [vmem:[#allocation13 + $0x1f8] sm:$0xff]
        %v8934 = vld [vmem:[#allocation13 + $0x200] sm:$0xff]
        %v8935 = vld [vmem:[#allocation13 + $0x208] sm:$0xff]
        %v8936 = vld [vmem:[#allocation13 + $0x210] sm:$0xff]
        %v8937 = vld [vmem:[#allocation13 + $0x218] sm:$0xff]
        %v8938 = vld [vmem:[#allocation13 + $0x220] sm:$0xff]
        %v8939 = vld [vmem:[#allocation13 + $0x228] sm:$0xff]
        %v8940 = vld [vmem:[#allocation13 + $0x230] sm:$0xff]
        %v8941 = vld [vmem:[#allocation13 + $0x238] sm:$0xff]
        %v8942 = vld [vmem:[#allocation13 + $0x240] sm:$0xff]
        %v8943 = vld [vmem:[#allocation13 + $0x248] sm:$0xff]
        %v8944 = vld [vmem:[#allocation13 + $0x250] sm:$0xff]
        %v8945 = vld [vmem:[#allocation13 + $0x258] sm:$0xff]
        %v8946 = vld [vmem:[#allocation13 + $0x260] sm:$0xff]
        %v8947 = vld [vmem:[#allocation13 + $0x268] sm:$0xff]
        %v8948 = vld [vmem:[#allocation13 + $0x270] sm:$0xff]
        %v8949 = vld [vmem:[#allocation13 + $0x278] sm:$0xff]
        %v8950 = vld [vmem:[#allocation13 + $0x280] sm:$0xff]
        %v8951 = vld [vmem:[#allocation13 + $0x288] sm:$0xff]
        %v8952 = vld [vmem:[#allocation13 + $0x290] sm:$0xff]
        %v8953 = vld [vmem:[#allocation13 + $0x298] sm:$0xff]
        %v8954 = vld [vmem:[#allocation13 + $0x2a0] sm:$0xff]
        %v8955 = vld [vmem:[#allocation13 + $0x2a8] sm:$0xff]
        %v8956 = vld [vmem:[#allocation13 + $0x2b0] sm:$0xff]
        %v8957 = vld [vmem:[#allocation13 + $0x2b8] sm:$0xff]
        %v8958 = vld [vmem:[#allocation13 + $0x2c0] sm:$0xff]
        %v8959 = vld [vmem:[#allocation13 + $0x2c8] sm:$0xff]
        %v8960 = vld [vmem:[#allocation13 + $0x2d0] sm:$0xff]
        %v8961 = vld [vmem:[#allocation13 + $0x2d8] sm:$0xff]
        %v8962 = vld [vmem:[#allocation13 + $0x2e0] sm:$0xff]
        %v8963 = vld [vmem:[#allocation13 + $0x2e8] sm:$0xff]
        %v8964 = vld [vmem:[#allocation13 + $0x2f0] sm:$0xff]
        %v8965 = vld [vmem:[#allocation13 + $0x2f8] sm:$0xff]
        %v8966 = vld [vmem:[#allocation13 + $0x300] sm:$0xff]
        %v8967 = vld [vmem:[#allocation13 + $0x308] sm:$0xff]
        %v8968 = vld [vmem:[#allocation13 + $0x310] sm:$0xff]
        %v8969 = vld [vmem:[#allocation13 + $0x318] sm:$0xff]
        %v8970 = vld [vmem:[#allocation13 + $0x320] sm:$0xff]
        %v8971 = vld [vmem:[#allocation13 + $0x328] sm:$0xff]
        %v8972 = vld [vmem:[#allocation13 + $0x330] sm:$0xff]
        %v8973 = vld [vmem:[#allocation13 + $0x338] sm:$0xff]
        %v8974 = vld [vmem:[#allocation13 + $0x340] sm:$0xff]
        %v8975 = vld [vmem:[#allocation13 + $0x348] sm:$0xff]
        %v8976 = vld [vmem:[#allocation13 + $0x350] sm:$0xff]
        %v8977 = vld [vmem:[#allocation13 + $0x358] sm:$0xff]
        %v8978 = vld [vmem:[#allocation13 + $0x360] sm:$0xff]
        %v8979 = vld [vmem:[#allocation13 + $0x368] sm:$0xff]
        %v8980 = vld [vmem:[#allocation13 + $0x370] sm:$0xff]
        %v8981 = vld [vmem:[#allocation13 + $0x378] sm:$0xff]
        %v8982 = vld [vmem:[#allocation13 + $0x380] sm:$0xff]
        %v8983 = vld [vmem:[#allocation13 + $0x388] sm:$0xff]
        %v8984 = vld [vmem:[#allocation13 + $0x390] sm:$0xff]
        %v8985 = vld [vmem:[#allocation13 + $0x398] sm:$0xff]
        %v8986 = vld [vmem:[#allocation13 + $0x3a0] sm:$0xff]
        %v8987 = vld [vmem:[#allocation13 + $0x3a8] sm:$0xff]
        %v8988 = vld [vmem:[#allocation13 + $0x3b0] sm:$0xff]
        %v8989 = vld [vmem:[#allocation13 + $0x3b8] sm:$0xff]
        %v8990 = vld [vmem:[#allocation13 + $0x3c0] sm:$0xff]
        %v8991 = vld [vmem:[#allocation13 + $0x3c8] sm:$0xff]
        %v8992 = vld [vmem:[#allocation13 + $0x3d0] sm:$0xff]
        %v8993 = vld [vmem:[#allocation13 + $0x3d8] sm:$0xff]
        %v8994 = vld [vmem:[#allocation13 + $0x3e0] sm:$0xff]
        %v8995 = vld [vmem:[#allocation13 + $0x3e8] sm:$0xff]
        %v8996 = vld [vmem:[#allocation13 + $0x3f0] sm:$0xff]
        %v8997 = vld [vmem:[#allocation13 + $0x3f8] sm:$0xff]
        %v8998 = vld [vmem:[#allocation13 + $0x400] sm:$0xff]
        %v8999 = vld [vmem:[#allocation13 + $0x408] sm:$0xff]
        %v9000 = vld [vmem:[#allocation13 + $0x410] sm:$0xff]
        %v9001 = vld [vmem:[#allocation13 + $0x418] sm:$0xff]
        %v9002 = vld [vmem:[#allocation13 + $0x420] sm:$0xff]
        %v9003 = vld [vmem:[#allocation13 + $0x428] sm:$0xff]
        %v9004 = vld [vmem:[#allocation13 + $0x430] sm:$0xff]
        %v9005 = vld [vmem:[#allocation13 + $0x438] sm:$0xff]
        %v9006 = vld [vmem:[#allocation13 + $0x440] sm:$0xff]
        %v9007 = vld [vmem:[#allocation13 + $0x448] sm:$0xff]
        %v9008 = vld [vmem:[#allocation13 + $0x450] sm:$0xff]
        %v9009 = vld [vmem:[#allocation13 + $0x458] sm:$0xff]
        %v9010 = vld [vmem:[#allocation13 + $0x460] sm:$0xff]
        %v9011 = vld [vmem:[#allocation13 + $0x468] sm:$0xff]
        %v9012 = vld [vmem:[#allocation13 + $0x470] sm:$0xff]
        %v9013 = vld [vmem:[#allocation13 + $0x478] sm:$0xff]
        %v9014 = vld [vmem:[#allocation13 + $0x480] sm:$0xff]
        %v9015 = vld [vmem:[#allocation13 + $0x488] sm:$0xff]
        %v9016 = vld [vmem:[#allocation13 + $0x490] sm:$0xff]
        %v9017 = vld [vmem:[#allocation13 + $0x498] sm:$0xff]
        %v9018 = vld [vmem:[#allocation13 + $0x4a0] sm:$0xff]
        %v9019 = vld [vmem:[#allocation13 + $0x4a8] sm:$0xff]
        %v9020 = vld [vmem:[#allocation13 + $0x4b0] sm:$0xff]
        %v9021 = vld [vmem:[#allocation13 + $0x4b8] sm:$0xff]
        %v9022 = vld [vmem:[#allocation13 + $0x4c0] sm:$0xff]
        %v9023 = vld [vmem:[#allocation13 + $0x4c8] sm:$0xff]
        %v9024 = vld [vmem:[#allocation13 + $0x4d0] sm:$0xff]
        %v9025 = vld [vmem:[#allocation13 + $0x4d8] sm:$0xff]
        %v9026 = vld [vmem:[#allocation13 + $0x4e0] sm:$0xff]
        %v9027 = vld [vmem:[#allocation13 + $0x4e8] sm:$0xff]
        %v9028 = vld [vmem:[#allocation13 + $0x4f0] sm:$0xff]
        %v9029 = vld [vmem:[#allocation13 + $0x4f8] sm:$0xff]
        %v9030 = vld [vmem:[#allocation13 + $0x500] sm:$0xff]
        %v9031 = vld [vmem:[#allocation13 + $0x508] sm:$0xff]
        %v9032 = vld [vmem:[#allocation13 + $0x510] sm:$0xff]
        %v9033 = vld [vmem:[#allocation13 + $0x518] sm:$0xff]
        %v9034 = vld [vmem:[#allocation13 + $0x520] sm:$0xff]
        %v9035 = vld [vmem:[#allocation13 + $0x528] sm:$0xff]
        %v9036 = vld [vmem:[#allocation13 + $0x530] sm:$0xff]
        %v9037 = vld [vmem:[#allocation13 + $0x538] sm:$0xff]
        %v9038 = vld [vmem:[#allocation13 + $0x540] sm:$0xff]
        %v9039 = vld [vmem:[#allocation13 + $0x548] sm:$0xff]
        %v9040 = vld [vmem:[#allocation13 + $0x550] sm:$0xff]
        %v9041 = vld [vmem:[#allocation13 + $0x558] sm:$0xff]
        %v9042 = vld [vmem:[#allocation13 + $0x560] sm:$0xff]
        %v9043 = vld [vmem:[#allocation13 + $0x568] sm:$0xff]
        %v9044 = vld [vmem:[#allocation13 + $0x570] sm:$0xff]
        %v9045 = vld [vmem:[#allocation13 + $0x578] sm:$0xff]
        %v9046 = vld [vmem:[#allocation13 + $0x580] sm:$0xff]
        %v9047 = vld [vmem:[#allocation13 + $0x588] sm:$0xff]
        %v9048 = vld [vmem:[#allocation13 + $0x590] sm:$0xff]
        %v9049 = vld [vmem:[#allocation13 + $0x598] sm:$0xff]
        %v9050 = vld [vmem:[#allocation13 + $0x5a0] sm:$0xff]
        %v9051 = vld [vmem:[#allocation13 + $0x5a8] sm:$0xff]
        %v9052 = vld [vmem:[#allocation13 + $0x5b0] sm:$0xff]
        %v9053 = vld [vmem:[#allocation13 + $0x5b8] sm:$0xff]
        %v9054 = vld [vmem:[#allocation13 + $0x5c0] sm:$0xff]
        %v9055 = vld [vmem:[#allocation13 + $0x5c8] sm:$0xff]
        %v9056 = vld [vmem:[#allocation13 + $0x5d0] sm:$0xff]
        %v9057 = vld [vmem:[#allocation13 + $0x5d8] sm:$0xff]
        %v9058 = vld [vmem:[#allocation13 + $0x5e0] sm:$0xff]
        %v9059 = vld [vmem:[#allocation13 + $0x5e8] sm:$0xff]
        %v9060 = vld [vmem:[#allocation13 + $0x5f0] sm:$0xff]
        %v9061 = vld [vmem:[#allocation13 + $0x5f8] sm:$0xff]
        %v9062 = vld [vmem:[#allocation13 + $0x600] sm:$0xff]
        %v9063 = vld [vmem:[#allocation13 + $0x608] sm:$0xff]
        %v9064 = vld [vmem:[#allocation13 + $0x610] sm:$0xff]
        %v9065 = vld [vmem:[#allocation13 + $0x618] sm:$0xff]
        %v9066 = vld [vmem:[#allocation13 + $0x620] sm:$0xff]
        %v9067 = vld [vmem:[#allocation13 + $0x628] sm:$0xff]
        %v9068 = vld [vmem:[#allocation13 + $0x630] sm:$0xff]
        %v9069 = vld [vmem:[#allocation13 + $0x638] sm:$0xff]
        %v9070 = vld [vmem:[#allocation13 + $0x640] sm:$0xff]
        %v9071 = vld [vmem:[#allocation13 + $0x648] sm:$0xff]
        %v9072 = vld [vmem:[#allocation13 + $0x650] sm:$0xff]
        %v9073 = vld [vmem:[#allocation13 + $0x658] sm:$0xff]
        %v9074 = vld [vmem:[#allocation13 + $0x660] sm:$0xff]
        %v9075 = vld [vmem:[#allocation13 + $0x668] sm:$0xff]
        %v9076 = vld [vmem:[#allocation13 + $0x670] sm:$0xff]
        %v9077 = vld [vmem:[#allocation13 + $0x678] sm:$0xff]
        %v9078 = vld [vmem:[#allocation13 + $0x680] sm:$0xff]
        %v9079 = vld [vmem:[#allocation13 + $0x688] sm:$0xff]
        %v9080 = vld [vmem:[#allocation13 + $0x690] sm:$0xff]
        %v9081 = vld [vmem:[#allocation13 + $0x698] sm:$0xff]
        %v9082 = vld [vmem:[#allocation13 + $0x6a0] sm:$0xff]
        %v9083 = vld [vmem:[#allocation13 + $0x6a8] sm:$0xff]
        %v9084 = vld [vmem:[#allocation13 + $0x6b0] sm:$0xff]
        %v9085 = vld [vmem:[#allocation13 + $0x6b8] sm:$0xff]
        %v9086 = vld [vmem:[#allocation13 + $0x6c0] sm:$0xff]
        %v9087 = vld [vmem:[#allocation13 + $0x6c8] sm:$0xff]
        %v9088 = vld [vmem:[#allocation13 + $0x6d0] sm:$0xff]
        %v9089 = vld [vmem:[#allocation13 + $0x6d8] sm:$0xff]
        %v9090 = vld [vmem:[#allocation13 + $0x6e0] sm:$0xff]
        %v9091 = vld [vmem:[#allocation13 + $0x6e8] sm:$0xff]
        %v9092 = vld [vmem:[#allocation13 + $0x6f0] sm:$0xff]
        %v9093 = vld [vmem:[#allocation13 + $0x6f8] sm:$0xff]
        %v9094 = vld [vmem:[#allocation13 + $0x700] sm:$0xff]
        %v9095 = vld [vmem:[#allocation13 + $0x708] sm:$0xff]
        %v9096 = vld [vmem:[#allocation13 + $0x710] sm:$0xff]
        %v9097 = vld [vmem:[#allocation13 + $0x718] sm:$0xff]
        %v9098 = vld [vmem:[#allocation13 + $0x720] sm:$0xff]
        %v9099 = vld [vmem:[#allocation13 + $0x728] sm:$0xff]
        %v9100 = vld [vmem:[#allocation13 + $0x730] sm:$0xff]
        %v9101 = vld [vmem:[#allocation13 + $0x738] sm:$0xff]
        %v9102 = vld [vmem:[#allocation13 + $0x740] sm:$0xff]
        %v9103 = vld [vmem:[#allocation13 + $0x748] sm:$0xff]
        %v9104 = vld [vmem:[#allocation13 + $0x750] sm:$0xff]
        %v9105 = vld [vmem:[#allocation13 + $0x758] sm:$0xff]
        %v9106 = vld [vmem:[#allocation13 + $0x760] sm:$0xff]
        %v9107 = vld [vmem:[#allocation13 + $0x768] sm:$0xff]
        %v9108 = vld [vmem:[#allocation13 + $0x770] sm:$0xff]
        %v9109 = vld [vmem:[#allocation13 + $0x778] sm:$0xff]
        %v9110 = vld [vmem:[#allocation13 + $0x780] sm:$0xff]
        %v9111 = vld [vmem:[#allocation13 + $0x788] sm:$0xff]
        %v9112 = vld [vmem:[#allocation13 + $0x790] sm:$0xff]
        %v9113 = vld [vmem:[#allocation13 + $0x798] sm:$0xff]
        %v9114 = vld [vmem:[#allocation13 + $0x7a0] sm:$0xff]
        %v9115 = vld [vmem:[#allocation13 + $0x7a8] sm:$0xff]
        %v9116 = vld [vmem:[#allocation13 + $0x7b0] sm:$0xff]
        %v9117 = vld [vmem:[#allocation13 + $0x7b8] sm:$0xff]
        %v9118 = vld [vmem:[#allocation13 + $0x7c0] sm:$0xff]
        %v9119 = vld [vmem:[#allocation13 + $0x7c8] sm:$0xff]
        %v9120 = vld [vmem:[#allocation13 + $0x7d0] sm:$0xff]
        %v9121 = vld [vmem:[#allocation13 + $0x7d8] sm:$0xff]
        %v9122 = vld [vmem:[#allocation13 + $0x7e0] sm:$0xff]
        %v9123 = vld [vmem:[#allocation13 + $0x7e8] sm:$0xff]
        %v9124 = vld [vmem:[#allocation13 + $0x7f0] sm:$0xff]
        %v9125 = vld [vmem:[#allocation13 + $0x7f8] sm:$0xff]
        %v9126 = vld [vmem:[#allocation13 + $0x800] sm:$0xff]
        %v9127 = vld [vmem:[#allocation13 + $0x808] sm:$0xff]
        %v9128 = vld [vmem:[#allocation13 + $0x810] sm:$0xff]
        %v9129 = vld [vmem:[#allocation13 + $0x818] sm:$0xff]
        %v9130 = vld [vmem:[#allocation13 + $0x820] sm:$0xff]
        %v9131 = vld [vmem:[#allocation13 + $0x828] sm:$0xff]
        %v9132 = vld [vmem:[#allocation13 + $0x830] sm:$0xff]
        %v9133 = vld [vmem:[#allocation13 + $0x838] sm:$0xff]
        %v9134 = vld [vmem:[#allocation13 + $0x840] sm:$0xff]
        %v9135 = vld [vmem:[#allocation13 + $0x848] sm:$0xff]
        %v9136 = vld [vmem:[#allocation13 + $0x850] sm:$0xff]
        %v9137 = vld [vmem:[#allocation13 + $0x858] sm:$0xff]
        %v9138 = vld [vmem:[#allocation13 + $0x860] sm:$0xff]
        %v9139 = vld [vmem:[#allocation13 + $0x868] sm:$0xff]
        %v9140 = vld [vmem:[#allocation13 + $0x870] sm:$0xff]
        %v9141 = vld [vmem:[#allocation13 + $0x878] sm:$0xff]
        %v9142 = vld [vmem:[#allocation13 + $0x880] sm:$0xff]
        %v9143 = vld [vmem:[#allocation13 + $0x888] sm:$0xff]
        %v9144 = vld [vmem:[#allocation13 + $0x890] sm:$0xff]
        %v9145 = vld [vmem:[#allocation13 + $0x898] sm:$0xff]
        %v9146 = vld [vmem:[#allocation13 + $0x8a0] sm:$0xff]
        %v9147 = vld [vmem:[#allocation13 + $0x8a8] sm:$0xff]
        %v9148 = vld [vmem:[#allocation13 + $0x8b0] sm:$0xff]
        %v9149 = vld [vmem:[#allocation13 + $0x8b8] sm:$0xff]
        %v9150 = vld [vmem:[#allocation13 + $0x8c0] sm:$0xff]
        %v9151 = vld [vmem:[#allocation13 + $0x8c8] sm:$0xff]
        %v9152 = vld [vmem:[#allocation13 + $0x8d0] sm:$0xff]
        %v9153 = vld [vmem:[#allocation13 + $0x8d8] sm:$0xff]
        %v9154 = vld [vmem:[#allocation13 + $0x8e0] sm:$0xff]
        %v9155 = vld [vmem:[#allocation13 + $0x8e8] sm:$0xff]
        %v9156 = vld [vmem:[#allocation13 + $0x8f0] sm:$0xff]
        %v9157 = vld [vmem:[#allocation13 + $0x8f8] sm:$0xff]
        %v9158 = vld [vmem:[#allocation15] sm:$0x3]
        %v9160 = vlaneseq
        %v9161 = vshrl.u32 %v9160, 7
        %v9162 = vsub.s32 0, %v9161
        %v9163 = vrot.slane %v9158, %v9162
        %v9164 = vlaneseq
        %v9165 = vshrl.u32 %v9164, 7
        %v9166 = vsub.s32 1, %v9165
        %v9167 = vrot.slane %v9158, %v9166
        %v9458 = vunpack.c.l.b16 %v8870
        %v9459 = vunpack.c.h.b16 %v8870
        %v9460 = vunpack.c.l.b16 %v8871
        %v9461 = vunpack.c.h.b16 %v8871
        %v9462 = vunpack.c.l.b16 %v8872
        %v9463 = vunpack.c.h.b16 %v8872
        %v9464 = vunpack.c.l.b16 %v8873
        %v9465 = vunpack.c.h.b16 %v8873
        %v9466 = vunpack.c.l.b16 %v8874
        %v9467 = vunpack.c.h.b16 %v8874
        %v9468 = vunpack.c.l.b16 %v8875
        %v9469 = vunpack.c.h.b16 %v8875
        %v9470 = vunpack.c.l.b16 %v8876
        %v9471 = vunpack.c.h.b16 %v8876
        %v9472 = vunpack.c.l.b16 %v8877
        %v9473 = vunpack.c.h.b16 %v8877
        %v9474 = vunpack.c.l.b16 %v8878
        %v9475 = vunpack.c.h.b16 %v8878
        %v9476 = vunpack.c.l.b16 %v8879
        %v9477 = vunpack.c.h.b16 %v8879
        %v9478 = vunpack.c.l.b16 %v8880
        %v9479 = vunpack.c.h.b16 %v8880
        %v9480 = vunpack.c.l.b16 %v8881
        %v9481 = vunpack.c.h.b16 %v8881
        %v9482 = vunpack.c.l.b16 %v8882
        %v9483 = vunpack.c.h.b16 %v8882
        %v9484 = vunpack.c.l.b16 %v8883
        %v9485 = vunpack.c.h.b16 %v8883
        %v9486 = vunpack.c.l.b16 %v8884
        %v9487 = vunpack.c.h.b16 %v8884
        %v9488 = vunpack.c.l.b16 %v8885
        %v9489 = vunpack.c.h.b16 %v8885
        %v9490 = vunpack.c.l.b16 %v8886
        %v9491 = vunpack.c.h.b16 %v8886
        %v9492 = vunpack.c.l.b16 %v8887
        %v9493 = vunpack.c.h.b16 %v8887
        %v9494 = vunpack.c.l.b16 %v8888
        %v9495 = vunpack.c.h.b16 %v8888
        %v9496 = vunpack.c.l.b16 %v8889
        %v9497 = vunpack.c.h.b16 %v8889
        %v9498 = vunpack.c.l.b16 %v8890
        %v9499 = vunpack.c.h.b16 %v8890
        %v9500 = vunpack.c.l.b16 %v8891
        %v9501 = vunpack.c.h.b16 %v8891
        %v9502 = vunpack.c.l.b16 %v8892
        %v9503 = vunpack.c.h.b16 %v8892
        %v9504 = vunpack.c.l.b16 %v8893
        %v9505 = vunpack.c.h.b16 %v8893
        %v9506 = vunpack.c.l.b16 %v8894
        %v9507 = vunpack.c.h.b16 %v8894
        %v9508 = vunpack.c.l.b16 %v8895
        %v9509 = vunpack.c.h.b16 %v8895
        %v9510 = vunpack.c.l.b16 %v8896
        %v9511 = vunpack.c.h.b16 %v8896
        %v9512 = vunpack.c.l.b16 %v8897
        %v9513 = vunpack.c.h.b16 %v8897
        %v9514 = vunpack.c.l.b16 %v8898
        %v9515 = vunpack.c.h.b16 %v8898
        %v9516 = vunpack.c.l.b16 %v8899
        %v9517 = vunpack.c.h.b16 %v8899
        %v9518 = vunpack.c.l.b16 %v8900
        %v9519 = vunpack.c.h.b16 %v8900
        %v9520 = vunpack.c.l.b16 %v8901
        %v9521 = vunpack.c.h.b16 %v8901
        %v9522 = vunpack.c.l.b16 %v8902
        %v9523 = vunpack.c.h.b16 %v8902
        %v9524 = vunpack.c.l.b16 %v8903
        %v9525 = vunpack.c.h.b16 %v8903
        %v9526 = vunpack.c.l.b16 %v8904
        %v9527 = vunpack.c.h.b16 %v8904
        %v9528 = vunpack.c.l.b16 %v8905
        %v9529 = vunpack.c.h.b16 %v8905
        %v9530 = vunpack.c.l.b16 %v8906
        %v9531 = vunpack.c.h.b16 %v8906
        %v9532 = vunpack.c.l.b16 %v8907
        %v9533 = vunpack.c.h.b16 %v8907
        %v9534 = vunpack.c.l.b16 %v8908
        %v9535 = vunpack.c.h.b16 %v8908
        %v9536 = vunpack.c.l.b16 %v8909
        %v9537 = vunpack.c.h.b16 %v8909
        %v9538 = vunpack.c.l.b16 %v8910
        %v9539 = vunpack.c.h.b16 %v8910
        %v9540 = vunpack.c.l.b16 %v8911
        %v9541 = vunpack.c.h.b16 %v8911
        %v9542 = vunpack.c.l.b16 %v8912
        %v9543 = vunpack.c.h.b16 %v8912
        %v9544 = vunpack.c.l.b16 %v8913
        %v9545 = vunpack.c.h.b16 %v8913
        %v9546 = vunpack.c.l.b16 %v8914
        %v9547 = vunpack.c.h.b16 %v8914
        %v9548 = vunpack.c.l.b16 %v8915
        %v9549 = vunpack.c.h.b16 %v8915
        %v9550 = vunpack.c.l.b16 %v8916
        %v9551 = vunpack.c.h.b16 %v8916
        %v9552 = vunpack.c.l.b16 %v8917
        %v9553 = vunpack.c.h.b16 %v8917
        %v9554 = vunpack.c.l.b16 %v8918
        %v9555 = vunpack.c.h.b16 %v8918
        %v9556 = vunpack.c.l.b16 %v8919
        %v9557 = vunpack.c.h.b16 %v8919
        %v9558 = vunpack.c.l.b16 %v8920
        %v9559 = vunpack.c.h.b16 %v8920
        %v9560 = vunpack.c.l.b16 %v8921
        %v9561 = vunpack.c.h.b16 %v8921
        %v9562 = vunpack.c.l.b16 %v8922
        %v9563 = vunpack.c.h.b16 %v8922
        %v9564 = vunpack.c.l.b16 %v8923
        %v9565 = vunpack.c.h.b16 %v8923
        %v9566 = vunpack.c.l.b16 %v8924
        %v9567 = vunpack.c.h.b16 %v8924
        %v9568 = vunpack.c.l.b16 %v8925
        %v9569 = vunpack.c.h.b16 %v8925
        %v9570 = vunpack.c.l.b16 %v8926
        %v9571 = vunpack.c.h.b16 %v8926
        %v9572 = vunpack.c.l.b16 %v8927
        %v9573 = vunpack.c.h.b16 %v8927
        %v9574 = vunpack.c.l.b16 %v8928
        %v9575 = vunpack.c.h.b16 %v8928
        %v9576 = vunpack.c.l.b16 %v8929
        %v9577 = vunpack.c.h.b16 %v8929
        %v9578 = vunpack.c.l.b16 %v8930
        %v9579 = vunpack.c.h.b16 %v8930
        %v9580 = vunpack.c.l.b16 %v8931
        %v9581 = vunpack.c.h.b16 %v8931
        %v9582 = vunpack.c.l.b16 %v8932
        %v9583 = vunpack.c.h.b16 %v8932
        %v9584 = vunpack.c.l.b16 %v8933
        %v9585 = vunpack.c.h.b16 %v8933
        %v9586 = vunpack.c.l.b16 %v8934
        %v9587 = vunpack.c.h.b16 %v8934
        %v9588 = vunpack.c.l.b16 %v8935
        %v9589 = vunpack.c.h.b16 %v8935
        %v9590 = vunpack.c.l.b16 %v8936
        %v9591 = vunpack.c.h.b16 %v8936
        %v9592 = vunpack.c.l.b16 %v8937
        %v9593 = vunpack.c.h.b16 %v8937
        %v9594 = vunpack.c.l.b16 %v8938
        %v9595 = vunpack.c.h.b16 %v8938
        %v9596 = vunpack.c.l.b16 %v8939
        %v9597 = vunpack.c.h.b16 %v8939
        %v9598 = vunpack.c.l.b16 %v8940
        %v9599 = vunpack.c.h.b16 %v8940
        %v9600 = vunpack.c.l.b16 %v8941
        %v9601 = vunpack.c.h.b16 %v8941
        %v9602 = vunpack.c.l.b16 %v8942
        %v9603 = vunpack.c.h.b16 %v8942
        %v9604 = vunpack.c.l.b16 %v8943
        %v9605 = vunpack.c.h.b16 %v8943
        %v9606 = vunpack.c.l.b16 %v8944
        %v9607 = vunpack.c.h.b16 %v8944
        %v9608 = vunpack.c.l.b16 %v8945
        %v9609 = vunpack.c.h.b16 %v8945
        %v9610 = vunpack.c.l.b16 %v8946
        %v9611 = vunpack.c.h.b16 %v8946
        %v9612 = vunpack.c.l.b16 %v8947
        %v9613 = vunpack.c.h.b16 %v8947
        %v9614 = vunpack.c.l.b16 %v8948
        %v9615 = vunpack.c.h.b16 %v8948
        %v9616 = vunpack.c.l.b16 %v8949
        %v9617 = vunpack.c.h.b16 %v8949
        %v9618 = vunpack.c.l.b16 %v8950
        %v9619 = vunpack.c.h.b16 %v8950
        %v9620 = vunpack.c.l.b16 %v8951
        %v9621 = vunpack.c.h.b16 %v8951
        %v9622 = vunpack.c.l.b16 %v8952
        %v9623 = vunpack.c.h.b16 %v8952
        %v9624 = vunpack.c.l.b16 %v8953
        %v9625 = vunpack.c.h.b16 %v8953
        %v9626 = vunpack.c.l.b16 %v8954
        %v9627 = vunpack.c.h.b16 %v8954
        %v9628 = vunpack.c.l.b16 %v8955
        %v9629 = vunpack.c.h.b16 %v8955
        %v9630 = vunpack.c.l.b16 %v8956
        %v9631 = vunpack.c.h.b16 %v8956
        %v9632 = vunpack.c.l.b16 %v8957
        %v9633 = vunpack.c.h.b16 %v8957
        %v9634 = vunpack.c.l.b16 %v8958
        %v9635 = vunpack.c.h.b16 %v8958
        %v9636 = vunpack.c.l.b16 %v8959
        %v9637 = vunpack.c.h.b16 %v8959
        %v9638 = vunpack.c.l.b16 %v8960
        %v9639 = vunpack.c.h.b16 %v8960
        %v9640 = vunpack.c.l.b16 %v8961
        %v9641 = vunpack.c.h.b16 %v8961
        %v9642 = vunpack.c.l.b16 %v8962
        %v9643 = vunpack.c.h.b16 %v8962
        %v9644 = vunpack.c.l.b16 %v8963
        %v9645 = vunpack.c.h.b16 %v8963
        %v9646 = vunpack.c.l.b16 %v8964
        %v9647 = vunpack.c.h.b16 %v8964
        %v9648 = vunpack.c.l.b16 %v8965
        %v9649 = vunpack.c.h.b16 %v8965
        %v9650 = vunpack.c.l.b16 %v8966
        %v9651 = vunpack.c.h.b16 %v8966
        %v9652 = vunpack.c.l.b16 %v8967
        %v9653 = vunpack.c.h.b16 %v8967
        %v9654 = vunpack.c.l.b16 %v8968
        %v9655 = vunpack.c.h.b16 %v8968
        %v9656 = vunpack.c.l.b16 %v8969
        %v9657 = vunpack.c.h.b16 %v8969
        %v9658 = vunpack.c.l.b16 %v8970
        %v9659 = vunpack.c.h.b16 %v8970
        %v9660 = vunpack.c.l.b16 %v8971
        %v9661 = vunpack.c.h.b16 %v8971
        %v9662 = vunpack.c.l.b16 %v8972
        %v9663 = vunpack.c.h.b16 %v8972
        %v9664 = vunpack.c.l.b16 %v8973
        %v9665 = vunpack.c.h.b16 %v8973
        %v9666 = vunpack.c.l.b16 %v8974
        %v9667 = vunpack.c.h.b16 %v8974
        %v9668 = vunpack.c.l.b16 %v8975
        %v9669 = vunpack.c.h.b16 %v8975
        %v9670 = vunpack.c.l.b16 %v8976
        %v9671 = vunpack.c.h.b16 %v8976
        %v9672 = vunpack.c.l.b16 %v8977
        %v9673 = vunpack.c.h.b16 %v8977
        %v9674 = vunpack.c.l.b16 %v8978
        %v9675 = vunpack.c.h.b16 %v8978
        %v9676 = vunpack.c.l.b16 %v8979
        %v9677 = vunpack.c.h.b16 %v8979
        %v9678 = vunpack.c.l.b16 %v8980
        %v9679 = vunpack.c.h.b16 %v8980
        %v9680 = vunpack.c.l.b16 %v8981
        %v9681 = vunpack.c.h.b16 %v8981
        %v9682 = vunpack.c.l.b16 %v8982
        %v9683 = vunpack.c.h.b16 %v8982
        %v9684 = vunpack.c.l.b16 %v8983
        %v9685 = vunpack.c.h.b16 %v8983
        %v9686 = vunpack.c.l.b16 %v8984
        %v9687 = vunpack.c.h.b16 %v8984
        %v9688 = vunpack.c.l.b16 %v8985
        %v9689 = vunpack.c.h.b16 %v8985
        %v9690 = vunpack.c.l.b16 %v8986
        %v9691 = vunpack.c.h.b16 %v8986
        %v9692 = vunpack.c.l.b16 %v8987
        %v9693 = vunpack.c.h.b16 %v8987
        %v9694 = vunpack.c.l.b16 %v8988
        %v9695 = vunpack.c.h.b16 %v8988
        %v9696 = vunpack.c.l.b16 %v8989
        %v9697 = vunpack.c.h.b16 %v8989
        %v9698 = vunpack.c.l.b16 %v8990
        %v9699 = vunpack.c.h.b16 %v8990
        %v9700 = vunpack.c.l.b16 %v8991
        %v9701 = vunpack.c.h.b16 %v8991
        %v9702 = vunpack.c.l.b16 %v8992
        %v9703 = vunpack.c.h.b16 %v8992
        %v9704 = vunpack.c.l.b16 %v8993
        %v9705 = vunpack.c.h.b16 %v8993
        %v9706 = vunpack.c.l.b16 %v8994
        %v9707 = vunpack.c.h.b16 %v8994
        %v9708 = vunpack.c.l.b16 %v8995
        %v9709 = vunpack.c.h.b16 %v8995
        %v9710 = vunpack.c.l.b16 %v8996
        %v9711 = vunpack.c.h.b16 %v8996
        %v9712 = vunpack.c.l.b16 %v8997
        %v9713 = vunpack.c.h.b16 %v8997
        %v9714 = vunpack.c.l.b16 %v8998
        %v9715 = vunpack.c.h.b16 %v8998
        %v9716 = vunpack.c.l.b16 %v8999
        %v9717 = vunpack.c.h.b16 %v8999
        %v9718 = vunpack.c.l.b16 %v9000
        %v9719 = vunpack.c.h.b16 %v9000
        %v9720 = vunpack.c.l.b16 %v9001
        %v9721 = vunpack.c.h.b16 %v9001
        %v9722 = vunpack.c.l.b16 %v9002
        %v9723 = vunpack.c.h.b16 %v9002
        %v9724 = vunpack.c.l.b16 %v9003
        %v9725 = vunpack.c.h.b16 %v9003
        %v9726 = vunpack.c.l.b16 %v9004
        %v9727 = vunpack.c.h.b16 %v9004
        %v9728 = vunpack.c.l.b16 %v9005
        %v9729 = vunpack.c.h.b16 %v9005
        %v9730 = vunpack.c.l.b16 %v9006
        %v9731 = vunpack.c.h.b16 %v9006
        %v9732 = vunpack.c.l.b16 %v9007
        %v9733 = vunpack.c.h.b16 %v9007
        %v9734 = vunpack.c.l.b16 %v9008
        %v9735 = vunpack.c.h.b16 %v9008
        %v9736 = vunpack.c.l.b16 %v9009
        %v9737 = vunpack.c.h.b16 %v9009
        %v9738 = vunpack.c.l.b16 %v9010
        %v9739 = vunpack.c.h.b16 %v9010
        %v9740 = vunpack.c.l.b16 %v9011
        %v9741 = vunpack.c.h.b16 %v9011
        %v9742 = vunpack.c.l.b16 %v9012
        %v9743 = vunpack.c.h.b16 %v9012
        %v9744 = vunpack.c.l.b16 %v9013
        %v9745 = vunpack.c.h.b16 %v9013
        %v9746 = vunpack.c.l.b16 %v9014
        %v9747 = vunpack.c.h.b16 %v9014
        %v9748 = vunpack.c.l.b16 %v9015
        %v9749 = vunpack.c.h.b16 %v9015
        %v9750 = vunpack.c.l.b16 %v9016
        %v9751 = vunpack.c.h.b16 %v9016
        %v9752 = vunpack.c.l.b16 %v9017
        %v9753 = vunpack.c.h.b16 %v9017
        %v9754 = vunpack.c.l.b16 %v9018
        %v9755 = vunpack.c.h.b16 %v9018
        %v9756 = vunpack.c.l.b16 %v9019
        %v9757 = vunpack.c.h.b16 %v9019
        %v9758 = vunpack.c.l.b16 %v9020
        %v9759 = vunpack.c.h.b16 %v9020
        %v9760 = vunpack.c.l.b16 %v9021
        %v9761 = vunpack.c.h.b16 %v9021
        %v9762 = vunpack.c.l.b16 %v9022
        %v9763 = vunpack.c.h.b16 %v9022
        %v9764 = vunpack.c.l.b16 %v9023
        %v9765 = vunpack.c.h.b16 %v9023
        %v9766 = vunpack.c.l.b16 %v9024
        %v9767 = vunpack.c.h.b16 %v9024
        %v9768 = vunpack.c.l.b16 %v9025
        %v9769 = vunpack.c.h.b16 %v9025
        %v9770 = vunpack.c.l.b16 %v9026
        %v9771 = vunpack.c.h.b16 %v9026
        %v9772 = vunpack.c.l.b16 %v9027
        %v9773 = vunpack.c.h.b16 %v9027
        %v9774 = vunpack.c.l.b16 %v9028
        %v9775 = vunpack.c.h.b16 %v9028
        %v9776 = vunpack.c.l.b16 %v9029
        %v9777 = vunpack.c.h.b16 %v9029
        %v9778 = vunpack.c.l.b16 %v9030
        %v9779 = vunpack.c.h.b16 %v9030
        %v9780 = vunpack.c.l.b16 %v9031
        %v9781 = vunpack.c.h.b16 %v9031
        %v9782 = vunpack.c.l.b16 %v9032
        %v9783 = vunpack.c.h.b16 %v9032
        %v9784 = vunpack.c.l.b16 %v9033
        %v9785 = vunpack.c.h.b16 %v9033
        %v9786 = vunpack.c.l.b16 %v9034
        %v9787 = vunpack.c.h.b16 %v9034
        %v9788 = vunpack.c.l.b16 %v9035
        %v9789 = vunpack.c.h.b16 %v9035
        %v9790 = vunpack.c.l.b16 %v9036
        %v9791 = vunpack.c.h.b16 %v9036
        %v9792 = vunpack.c.l.b16 %v9037
        %v9793 = vunpack.c.h.b16 %v9037
        %v9794 = vunpack.c.l.b16 %v9038
        %v9795 = vunpack.c.h.b16 %v9038
        %v9796 = vunpack.c.l.b16 %v9039
        %v9797 = vunpack.c.h.b16 %v9039
        %v9798 = vunpack.c.l.b16 %v9040
        %v9799 = vunpack.c.h.b16 %v9040
        %v9800 = vunpack.c.l.b16 %v9041
        %v9801 = vunpack.c.h.b16 %v9041
        %v9802 = vunpack.c.l.b16 %v9042
        %v9803 = vunpack.c.h.b16 %v9042
        %v9804 = vunpack.c.l.b16 %v9043
        %v9805 = vunpack.c.h.b16 %v9043
        %v9806 = vunpack.c.l.b16 %v9044
        %v9807 = vunpack.c.h.b16 %v9044
        %v9808 = vunpack.c.l.b16 %v9045
        %v9809 = vunpack.c.h.b16 %v9045
        %v9810 = vunpack.c.l.b16 %v9046
        %v9811 = vunpack.c.h.b16 %v9046
        %v9812 = vunpack.c.l.b16 %v9047
        %v9813 = vunpack.c.h.b16 %v9047
        %v9814 = vunpack.c.l.b16 %v9048
        %v9815 = vunpack.c.h.b16 %v9048
        %v9816 = vunpack.c.l.b16 %v9049
        %v9817 = vunpack.c.h.b16 %v9049
        %v9818 = vunpack.c.l.b16 %v9050
        %v9819 = vunpack.c.h.b16 %v9050
        %v9820 = vunpack.c.l.b16 %v9051
        %v9821 = vunpack.c.h.b16 %v9051
        %v9822 = vunpack.c.l.b16 %v9052
        %v9823 = vunpack.c.h.b16 %v9052
        %v9824 = vunpack.c.l.b16 %v9053
        %v9825 = vunpack.c.h.b16 %v9053
        %v9826 = vunpack.c.l.b16 %v9054
        %v9827 = vunpack.c.h.b16 %v9054
        %v9828 = vunpack.c.l.b16 %v9055
        %v9829 = vunpack.c.h.b16 %v9055
        %v9830 = vunpack.c.l.b16 %v9056
        %v9831 = vunpack.c.h.b16 %v9056
        %v9832 = vunpack.c.l.b16 %v9057
        %v9833 = vunpack.c.h.b16 %v9057
        %v9834 = vunpack.c.l.b16 %v9058
        %v9835 = vunpack.c.h.b16 %v9058
        %v9836 = vunpack.c.l.b16 %v9059
        %v9837 = vunpack.c.h.b16 %v9059
        %v9838 = vunpack.c.l.b16 %v9060
        %v9839 = vunpack.c.h.b16 %v9060
        %v9840 = vunpack.c.l.b16 %v9061
        %v9841 = vunpack.c.h.b16 %v9061
        %v9842 = vunpack.c.l.b16 %v9062
        %v9843 = vunpack.c.h.b16 %v9062
        %v9844 = vunpack.c.l.b16 %v9063
        %v9845 = vunpack.c.h.b16 %v9063
        %v9846 = vunpack.c.l.b16 %v9064
        %v9847 = vunpack.c.h.b16 %v9064
        %v9848 = vunpack.c.l.b16 %v9065
        %v9849 = vunpack.c.h.b16 %v9065
        %v9850 = vunpack.c.l.b16 %v9066
        %v9851 = vunpack.c.h.b16 %v9066
        %v9852 = vunpack.c.l.b16 %v9067
        %v9853 = vunpack.c.h.b16 %v9067
        %v9854 = vunpack.c.l.b16 %v9068
        %v9855 = vunpack.c.h.b16 %v9068
        %v9856 = vunpack.c.l.b16 %v9069
        %v9857 = vunpack.c.h.b16 %v9069
        %v9858 = vunpack.c.l.b16 %v9070
        %v9859 = vunpack.c.h.b16 %v9070
        %v9860 = vunpack.c.l.b16 %v9071
        %v9861 = vunpack.c.h.b16 %v9071
        %v9862 = vunpack.c.l.b16 %v9072
        %v9863 = vunpack.c.h.b16 %v9072
        %v9864 = vunpack.c.l.b16 %v9073
        %v9865 = vunpack.c.h.b16 %v9073
        %v9866 = vunpack.c.l.b16 %v9074
        %v9867 = vunpack.c.h.b16 %v9074
        %v9868 = vunpack.c.l.b16 %v9075
        %v9869 = vunpack.c.h.b16 %v9075
        %v9870 = vunpack.c.l.b16 %v9076
        %v9871 = vunpack.c.h.b16 %v9076
        %v9872 = vunpack.c.l.b16 %v9077
        %v9873 = vunpack.c.h.b16 %v9077
        %v9874 = vunpack.c.l.b16 %v9078
        %v9875 = vunpack.c.h.b16 %v9078
        %v9876 = vunpack.c.l.b16 %v9079
        %v9877 = vunpack.c.h.b16 %v9079
        %v9878 = vunpack.c.l.b16 %v9080
        %v9879 = vunpack.c.h.b16 %v9080
        %v9880 = vunpack.c.l.b16 %v9081
        %v9881 = vunpack.c.h.b16 %v9081
        %v9882 = vunpack.c.l.b16 %v9082
        %v9883 = vunpack.c.h.b16 %v9082
        %v9884 = vunpack.c.l.b16 %v9083
        %v9885 = vunpack.c.h.b16 %v9083
        %v9886 = vunpack.c.l.b16 %v9084
        %v9887 = vunpack.c.h.b16 %v9084
        %v9888 = vunpack.c.l.b16 %v9085
        %v9889 = vunpack.c.h.b16 %v9085
        %v9890 = vunpack.c.l.b16 %v9086
        %v9891 = vunpack.c.h.b16 %v9086
        %v9892 = vunpack.c.l.b16 %v9087
        %v9893 = vunpack.c.h.b16 %v9087
        %v9894 = vunpack.c.l.b16 %v9088
        %v9895 = vunpack.c.h.b16 %v9088
        %v9896 = vunpack.c.l.b16 %v9089
        %v9897 = vunpack.c.h.b16 %v9089
        %v9898 = vunpack.c.l.b16 %v9090
        %v9899 = vunpack.c.h.b16 %v9090
        %v9900 = vunpack.c.l.b16 %v9091
        %v9901 = vunpack.c.h.b16 %v9091
        %v9902 = vunpack.c.l.b16 %v9092
        %v9903 = vunpack.c.h.b16 %v9092
        %v9904 = vunpack.c.l.b16 %v9093
        %v9905 = vunpack.c.h.b16 %v9093
        %v9906 = vunpack.c.l.b16 %v9094
        %v9907 = vunpack.c.h.b16 %v9094
        %v9908 = vunpack.c.l.b16 %v9095
        %v9909 = vunpack.c.h.b16 %v9095
        %v9910 = vunpack.c.l.b16 %v9096
        %v9911 = vunpack.c.h.b16 %v9096
        %v9912 = vunpack.c.l.b16 %v9097
        %v9913 = vunpack.c.h.b16 %v9097
        %v9914 = vunpack.c.l.b16 %v9098
        %v9915 = vunpack.c.h.b16 %v9098
        %v9916 = vunpack.c.l.b16 %v9099
        %v9917 = vunpack.c.h.b16 %v9099
        %v9918 = vunpack.c.l.b16 %v9100
        %v9919 = vunpack.c.h.b16 %v9100
        %v9920 = vunpack.c.l.b16 %v9101
        %v9921 = vunpack.c.h.b16 %v9101
        %v9922 = vunpack.c.l.b16 %v9102
        %v9923 = vunpack.c.h.b16 %v9102
        %v9924 = vunpack.c.l.b16 %v9103
        %v9925 = vunpack.c.h.b16 %v9103
        %v9926 = vunpack.c.l.b16 %v9104
        %v9927 = vunpack.c.h.b16 %v9104
        %v9928 = vunpack.c.l.b16 %v9105
        %v9929 = vunpack.c.h.b16 %v9105
        %v9930 = vunpack.c.l.b16 %v9106
        %v9931 = vunpack.c.h.b16 %v9106
        %v9932 = vunpack.c.l.b16 %v9107
        %v9933 = vunpack.c.h.b16 %v9107
        %v9934 = vunpack.c.l.b16 %v9108
        %v9935 = vunpack.c.h.b16 %v9108
        %v9936 = vunpack.c.l.b16 %v9109
        %v9937 = vunpack.c.h.b16 %v9109
        %v9938 = vunpack.c.l.b16 %v9110
        %v9939 = vunpack.c.h.b16 %v9110
        %v9940 = vunpack.c.l.b16 %v9111
        %v9941 = vunpack.c.h.b16 %v9111
        %v9942 = vunpack.c.l.b16 %v9112
        %v9943 = vunpack.c.h.b16 %v9112
        %v9944 = vunpack.c.l.b16 %v9113
        %v9945 = vunpack.c.h.b16 %v9113
        %v9946 = vunpack.c.l.b16 %v9114
        %v9947 = vunpack.c.h.b16 %v9114
        %v9948 = vunpack.c.l.b16 %v9115
        %v9949 = vunpack.c.h.b16 %v9115
        %v9950 = vunpack.c.l.b16 %v9116
        %v9951 = vunpack.c.h.b16 %v9116
        %v9952 = vunpack.c.l.b16 %v9117
        %v9953 = vunpack.c.h.b16 %v9117
        %v9954 = vunpack.c.l.b16 %v9118
        %v9955 = vunpack.c.h.b16 %v9118
        %v9956 = vunpack.c.l.b16 %v9119
        %v9957 = vunpack.c.h.b16 %v9119
        %v9958 = vunpack.c.l.b16 %v9120
        %v9959 = vunpack.c.h.b16 %v9120
        %v9960 = vunpack.c.l.b16 %v9121
        %v9961 = vunpack.c.h.b16 %v9121
        %v9962 = vunpack.c.l.b16 %v9122
        %v9963 = vunpack.c.h.b16 %v9122
        %v9964 = vunpack.c.l.b16 %v9123
        %v9965 = vunpack.c.h.b16 %v9123
        %v9966 = vunpack.c.l.b16 %v9124
        %v9967 = vunpack.c.h.b16 %v9124
        %v9968 = vunpack.c.l.b16 %v9125
        %v9969 = vunpack.c.h.b16 %v9125
        %v9970 = vunpack.c.l.b16 %v9126
        %v9971 = vunpack.c.h.b16 %v9126
        %v9972 = vunpack.c.l.b16 %v9127
        %v9973 = vunpack.c.h.b16 %v9127
        %v9974 = vunpack.c.l.b16 %v9128
        %v9975 = vunpack.c.h.b16 %v9128
        %v9976 = vunpack.c.l.b16 %v9129
        %v9977 = vunpack.c.h.b16 %v9129
        %v9978 = vunpack.c.l.b16 %v9130
        %v9979 = vunpack.c.h.b16 %v9130
        %v9980 = vunpack.c.l.b16 %v9131
        %v9981 = vunpack.c.h.b16 %v9131
        %v9982 = vunpack.c.l.b16 %v9132
        %v9983 = vunpack.c.h.b16 %v9132
        %v9984 = vunpack.c.l.b16 %v9133
        %v9985 = vunpack.c.h.b16 %v9133
        %v9986 = vunpack.c.l.b16 %v9134
        %v9987 = vunpack.c.h.b16 %v9134
        %v9988 = vunpack.c.l.b16 %v9135
        %v9989 = vunpack.c.h.b16 %v9135
        %v9990 = vunpack.c.l.b16 %v9136
        %v9991 = vunpack.c.h.b16 %v9136
        %v9992 = vunpack.c.l.b16 %v9137
        %v9993 = vunpack.c.h.b16 %v9137
        %v9994 = vunpack.c.l.b16 %v9138
        %v9995 = vunpack.c.h.b16 %v9138
        %v9996 = vunpack.c.l.b16 %v9139
        %v9997 = vunpack.c.h.b16 %v9139
        %v9998 = vunpack.c.l.b16 %v9140
        %v9999 = vunpack.c.h.b16 %v9140
        %v10000 = vunpack.c.l.b16 %v9141
        %v10001 = vunpack.c.h.b16 %v9141
        %v10002 = vunpack.c.l.b16 %v9142
        %v10003 = vunpack.c.h.b16 %v9142
        %v10004 = vunpack.c.l.b16 %v9143
        %v10005 = vunpack.c.h.b16 %v9143
        %v10006 = vunpack.c.l.b16 %v9144
        %v10007 = vunpack.c.h.b16 %v9144
        %v10008 = vunpack.c.l.b16 %v9145
        %v10009 = vunpack.c.h.b16 %v9145
        %v10010 = vunpack.c.l.b16 %v9146
        %v10011 = vunpack.c.h.b16 %v9146
        %v10012 = vunpack.c.l.b16 %v9147
        %v10013 = vunpack.c.h.b16 %v9147
        %v10014 = vunpack.c.l.b16 %v9148
        %v10015 = vunpack.c.h.b16 %v9148
        %v10016 = vunpack.c.l.b16 %v9149
        %v10017 = vunpack.c.h.b16 %v9149
        %v10018 = vunpack.c.l.b16 %v9150
        %v10019 = vunpack.c.h.b16 %v9150
        %v10020 = vunpack.c.l.b16 %v9151
        %v10021 = vunpack.c.h.b16 %v9151
        %v10022 = vunpack.c.l.b16 %v9152
        %v10023 = vunpack.c.h.b16 %v9152
        %v10024 = vunpack.c.l.b16 %v9153
        %v10025 = vunpack.c.h.b16 %v9153
        %v10026 = vunpack.c.l.b16 %v9154
        %v10027 = vunpack.c.h.b16 %v9154
        %v10028 = vunpack.c.l.b16 %v9155
        %v10029 = vunpack.c.h.b16 %v9155
        %v10030 = vunpack.c.l.b16 %v9156
        %v10031 = vunpack.c.h.b16 %v9156
        %v10032 = vunpack.c.l.b16 %v9157
        %v10033 = vunpack.c.h.b16 %v9157
        %v10034 = vpack.c.b16 %v9460, %v9458
        %v10035 = vpack.c.b16 %v9461, %v9459
        %v10036 = vpack.c.b16 %v9464, %v9462
        %v10037 = vpack.c.b16 %v9465, %v9463
        %v10038 = vpack.c.b16 %v9468, %v9466
        %v10039 = vpack.c.b16 %v9469, %v9467
        %v10040 = vpack.c.b16 %v9472, %v9470
        %v10041 = vpack.c.b16 %v9473, %v9471
        %v10042 = vpack.c.b16 %v9476, %v9474
        %v10043 = vpack.c.b16 %v9477, %v9475
        %v10044 = vpack.c.b16 %v9480, %v9478
        %v10045 = vpack.c.b16 %v9481, %v9479
        %v10046 = vpack.c.b16 %v9484, %v9482
        %v10047 = vpack.c.b16 %v9485, %v9483
        %v10048 = vpack.c.b16 %v9488, %v9486
        %v10049 = vpack.c.b16 %v9489, %v9487
        %v10050 = vpack.c.b16 %v9492, %v9490
        %v10051 = vpack.c.b16 %v9493, %v9491
        %v10052 = vpack.c.b16 %v9496, %v9494
        %v10053 = vpack.c.b16 %v9497, %v9495
        %v10054 = vpack.c.b16 %v9500, %v9498
        %v10055 = vpack.c.b16 %v9501, %v9499
        %v10056 = vpack.c.b16 %v9504, %v9502
        %v10057 = vpack.c.b16 %v9505, %v9503
        %v10058 = vpack.c.b16 %v9508, %v9506
        %v10059 = vpack.c.b16 %v9509, %v9507
        %v10060 = vpack.c.b16 %v9512, %v9510
        %v10061 = vpack.c.b16 %v9513, %v9511
        %v10062 = vpack.c.b16 %v9516, %v9514
        %v10063 = vpack.c.b16 %v9517, %v9515
        %v10064 = vpack.c.b16 %v9520, %v9518
        %v10065 = vpack.c.b16 %v9521, %v9519
        %v10066 = vpack.c.b16 %v9524, %v9522
        %v10067 = vpack.c.b16 %v9525, %v9523
        %v10068 = vpack.c.b16 %v9528, %v9526
        %v10069 = vpack.c.b16 %v9529, %v9527
        %v10070 = vpack.c.b16 %v9532, %v9530
        %v10071 = vpack.c.b16 %v9533, %v9531
        %v10072 = vpack.c.b16 %v9536, %v9534
        %v10073 = vpack.c.b16 %v9537, %v9535
        %v10074 = vpack.c.b16 %v9540, %v9538
        %v10075 = vpack.c.b16 %v9541, %v9539
        %v10076 = vpack.c.b16 %v9544, %v9542
        %v10077 = vpack.c.b16 %v9545, %v9543
        %v10078 = vpack.c.b16 %v9548, %v9546
        %v10079 = vpack.c.b16 %v9549, %v9547
        %v10080 = vpack.c.b16 %v9552, %v9550
        %v10081 = vpack.c.b16 %v9553, %v9551
        %v10082 = vpack.c.b16 %v9556, %v9554
        %v10083 = vpack.c.b16 %v9557, %v9555
        %v10084 = vpack.c.b16 %v9560, %v9558
        %v10085 = vpack.c.b16 %v9561, %v9559
        %v10086 = vpack.c.b16 %v9564, %v9562
        %v10087 = vpack.c.b16 %v9565, %v9563
        %v10088 = vpack.c.b16 %v9568, %v9566
        %v10089 = vpack.c.b16 %v9569, %v9567
        %v10090 = vpack.c.b16 %v9572, %v9570
        %v10091 = vpack.c.b16 %v9573, %v9571
        %v10092 = vpack.c.b16 %v9576, %v9574
        %v10093 = vpack.c.b16 %v9577, %v9575
        %v10094 = vpack.c.b16 %v9580, %v9578
        %v10095 = vpack.c.b16 %v9581, %v9579
        %v10096 = vpack.c.b16 %v9584, %v9582
        %v10097 = vpack.c.b16 %v9585, %v9583
        %v10098 = vpack.c.b16 %v9588, %v9586
        %v10099 = vpack.c.b16 %v9589, %v9587
        %v10100 = vpack.c.b16 %v9592, %v9590
        %v10101 = vpack.c.b16 %v9593, %v9591
        %v10102 = vpack.c.b16 %v9596, %v9594
        %v10103 = vpack.c.b16 %v9597, %v9595
        %v10104 = vpack.c.b16 %v9600, %v9598
        %v10105 = vpack.c.b16 %v9601, %v9599
        %v10106 = vpack.c.b16 %v9604, %v9602
        %v10107 = vpack.c.b16 %v9605, %v9603
        %v10108 = vpack.c.b16 %v9608, %v9606
        %v10109 = vpack.c.b16 %v9609, %v9607
        %v10110 = vpack.c.b16 %v9612, %v9610
        %v10111 = vpack.c.b16 %v9613, %v9611
        %v10112 = vpack.c.b16 %v9616, %v9614
        %v10113 = vpack.c.b16 %v9617, %v9615
        %v10114 = vpack.c.b16 %v9620, %v9618
        %v10115 = vpack.c.b16 %v9621, %v9619
        %v10116 = vpack.c.b16 %v9624, %v9622
        %v10117 = vpack.c.b16 %v9625, %v9623
        %v10118 = vpack.c.b16 %v9628, %v9626
        %v10119 = vpack.c.b16 %v9629, %v9627
        %v10120 = vpack.c.b16 %v9632, %v9630
        %v10121 = vpack.c.b16 %v9633, %v9631
        %v10122 = vpack.c.b16 %v9636, %v9634
        %v10123 = vpack.c.b16 %v9637, %v9635
        %v10124 = vpack.c.b16 %v9640, %v9638
        %v10125 = vpack.c.b16 %v9641, %v9639
        %v10126 = vpack.c.b16 %v9644, %v9642
        %v10127 = vpack.c.b16 %v9645, %v9643
        %v10128 = vpack.c.b16 %v9648, %v9646
        %v10129 = vpack.c.b16 %v9649, %v9647
        %v10130 = vpack.c.b16 %v9652, %v9650
        %v10131 = vpack.c.b16 %v9653, %v9651
        %v10132 = vpack.c.b16 %v9656, %v9654
        %v10133 = vpack.c.b16 %v9657, %v9655
        %v10134 = vpack.c.b16 %v9660, %v9658
        %v10135 = vpack.c.b16 %v9661, %v9659
        %v10136 = vpack.c.b16 %v9664, %v9662
        %v10137 = vpack.c.b16 %v9665, %v9663
        %v10138 = vpack.c.b16 %v9668, %v9666
        %v10139 = vpack.c.b16 %v9669, %v9667
        %v10140 = vpack.c.b16 %v9672, %v9670
        %v10141 = vpack.c.b16 %v9673, %v9671
        %v10142 = vpack.c.b16 %v9676, %v9674
        %v10143 = vpack.c.b16 %v9677, %v9675
        %v10144 = vpack.c.b16 %v9680, %v9678
        %v10145 = vpack.c.b16 %v9681, %v9679
        %v10146 = vpack.c.b16 %v9684, %v9682
        %v10147 = vpack.c.b16 %v9685, %v9683
        %v10148 = vpack.c.b16 %v9688, %v9686
        %v10149 = vpack.c.b16 %v9689, %v9687
        %v10150 = vpack.c.b16 %v9692, %v9690
        %v10151 = vpack.c.b16 %v9693, %v9691
        %v10152 = vpack.c.b16 %v9696, %v9694
        %v10153 = vpack.c.b16 %v9697, %v9695
        %v10154 = vpack.c.b16 %v9700, %v9698
        %v10155 = vpack.c.b16 %v9701, %v9699
        %v10156 = vpack.c.b16 %v9704, %v9702
        %v10157 = vpack.c.b16 %v9705, %v9703
        %v10158 = vpack.c.b16 %v9708, %v9706
        %v10159 = vpack.c.b16 %v9709, %v9707
        %v10160 = vpack.c.b16 %v9712, %v9710
        %v10161 = vpack.c.b16 %v9713, %v9711
        %v10162 = vpack.c.b16 %v9716, %v9714
        %v10163 = vpack.c.b16 %v9717, %v9715
        %v10164 = vpack.c.b16 %v9720, %v9718
        %v10165 = vpack.c.b16 %v9721, %v9719
        %v10166 = vpack.c.b16 %v9724, %v9722
        %v10167 = vpack.c.b16 %v9725, %v9723
        %v10168 = vpack.c.b16 %v9728, %v9726
        %v10169 = vpack.c.b16 %v9729, %v9727
        %v10170 = vpack.c.b16 %v9732, %v9730
        %v10171 = vpack.c.b16 %v9733, %v9731
        %v10172 = vpack.c.b16 %v9736, %v9734
        %v10173 = vpack.c.b16 %v9737, %v9735
        %v10174 = vpack.c.b16 %v9740, %v9738
        %v10175 = vpack.c.b16 %v9741, %v9739
        %v10176 = vpack.c.b16 %v9744, %v9742
        %v10177 = vpack.c.b16 %v9745, %v9743
        %v10178 = vpack.c.b16 %v9748, %v9746
        %v10179 = vpack.c.b16 %v9749, %v9747
        %v10180 = vpack.c.b16 %v9752, %v9750
        %v10181 = vpack.c.b16 %v9753, %v9751
        %v10182 = vpack.c.b16 %v9756, %v9754
        %v10183 = vpack.c.b16 %v9757, %v9755
        %v10184 = vpack.c.b16 %v9760, %v9758
        %v10185 = vpack.c.b16 %v9761, %v9759
        %v10186 = vpack.c.b16 %v9764, %v9762
        %v10187 = vpack.c.b16 %v9765, %v9763
        %v10188 = vpack.c.b16 %v9768, %v9766
        %v10189 = vpack.c.b16 %v9769, %v9767
        %v10190 = vpack.c.b16 %v9772, %v9770
        %v10191 = vpack.c.b16 %v9773, %v9771
        %v10192 = vpack.c.b16 %v9776, %v9774
        %v10193 = vpack.c.b16 %v9777, %v9775
        %v10194 = vpack.c.b16 %v9780, %v9778
        %v10195 = vpack.c.b16 %v9781, %v9779
        %v10196 = vpack.c.b16 %v9784, %v9782
        %v10197 = vpack.c.b16 %v9785, %v9783
        %v10198 = vpack.c.b16 %v9788, %v9786
        %v10199 = vpack.c.b16 %v9789, %v9787
        %v10200 = vpack.c.b16 %v9792, %v9790
        %v10201 = vpack.c.b16 %v9793, %v9791
        %v10202 = vpack.c.b16 %v9796, %v9794
        %v10203 = vpack.c.b16 %v9797, %v9795
        %v10204 = vpack.c.b16 %v9800, %v9798
        %v10205 = vpack.c.b16 %v9801, %v9799
        %v10206 = vpack.c.b16 %v9804, %v9802
        %v10207 = vpack.c.b16 %v9805, %v9803
        %v10208 = vpack.c.b16 %v9808, %v9806
        %v10209 = vpack.c.b16 %v9809, %v9807
        %v10210 = vpack.c.b16 %v9812, %v9810
        %v10211 = vpack.c.b16 %v9813, %v9811
        %v10212 = vpack.c.b16 %v9816, %v9814
        %v10213 = vpack.c.b16 %v9817, %v9815
        %v10214 = vpack.c.b16 %v9820, %v9818
        %v10215 = vpack.c.b16 %v9821, %v9819
        %v10216 = vpack.c.b16 %v9824, %v9822
        %v10217 = vpack.c.b16 %v9825, %v9823
        %v10218 = vpack.c.b16 %v9828, %v9826
        %v10219 = vpack.c.b16 %v9829, %v9827
        %v10220 = vpack.c.b16 %v9832, %v9830
        %v10221 = vpack.c.b16 %v9833, %v9831
        %v10222 = vpack.c.b16 %v9836, %v9834
        %v10223 = vpack.c.b16 %v9837, %v9835
        %v10224 = vpack.c.b16 %v9840, %v9838
        %v10225 = vpack.c.b16 %v9841, %v9839
        %v10226 = vpack.c.b16 %v9844, %v9842
        %v10227 = vpack.c.b16 %v9845, %v9843
        %v10228 = vpack.c.b16 %v9848, %v9846
        %v10229 = vpack.c.b16 %v9849, %v9847
        %v10230 = vpack.c.b16 %v9852, %v9850
        %v10231 = vpack.c.b16 %v9853, %v9851
        %v10232 = vpack.c.b16 %v9856, %v9854
        %v10233 = vpack.c.b16 %v9857, %v9855
        %v10234 = vpack.c.b16 %v9860, %v9858
        %v10235 = vpack.c.b16 %v9861, %v9859
        %v10236 = vpack.c.b16 %v9864, %v9862
        %v10237 = vpack.c.b16 %v9865, %v9863
        %v10238 = vpack.c.b16 %v9868, %v9866
        %v10239 = vpack.c.b16 %v9869, %v9867
        %v10240 = vpack.c.b16 %v9872, %v9870
        %v10241 = vpack.c.b16 %v9873, %v9871
        %v10242 = vpack.c.b16 %v9876, %v9874
        %v10243 = vpack.c.b16 %v9877, %v9875
        %v10244 = vpack.c.b16 %v9880, %v9878
        %v10245 = vpack.c.b16 %v9881, %v9879
        %v10246 = vpack.c.b16 %v9884, %v9882
        %v10247 = vpack.c.b16 %v9885, %v9883
        %v10248 = vpack.c.b16 %v9888, %v9886
        %v10249 = vpack.c.b16 %v9889, %v9887
        %v10250 = vpack.c.b16 %v9892, %v9890
        %v10251 = vpack.c.b16 %v9893, %v9891
        %v10252 = vpack.c.b16 %v9896, %v9894
        %v10253 = vpack.c.b16 %v9897, %v9895
        %v10254 = vpack.c.b16 %v9900, %v9898
        %v10255 = vpack.c.b16 %v9901, %v9899
        %v10256 = vpack.c.b16 %v9904, %v9902
        %v10257 = vpack.c.b16 %v9905, %v9903
        %v10258 = vpack.c.b16 %v9908, %v9906
        %v10259 = vpack.c.b16 %v9909, %v9907
        %v10260 = vpack.c.b16 %v9912, %v9910
        %v10261 = vpack.c.b16 %v9913, %v9911
        %v10262 = vpack.c.b16 %v9916, %v9914
        %v10263 = vpack.c.b16 %v9917, %v9915
        %v10264 = vpack.c.b16 %v9920, %v9918
        %v10265 = vpack.c.b16 %v9921, %v9919
        %v10266 = vpack.c.b16 %v9924, %v9922
        %v10267 = vpack.c.b16 %v9925, %v9923
        %v10268 = vpack.c.b16 %v9928, %v9926
        %v10269 = vpack.c.b16 %v9929, %v9927
        %v10270 = vpack.c.b16 %v9932, %v9930
        %v10271 = vpack.c.b16 %v9933, %v9931
        %v10272 = vpack.c.b16 %v9936, %v9934
        %v10273 = vpack.c.b16 %v9937, %v9935
        %v10274 = vpack.c.b16 %v9940, %v9938
        %v10275 = vpack.c.b16 %v9941, %v9939
        %v10276 = vpack.c.b16 %v9944, %v9942
        %v10277 = vpack.c.b16 %v9945, %v9943
        %v10278 = vpack.c.b16 %v9948, %v9946
        %v10279 = vpack.c.b16 %v9949, %v9947
        %v10280 = vpack.c.b16 %v9952, %v9950
        %v10281 = vpack.c.b16 %v9953, %v9951
        %v10282 = vpack.c.b16 %v9956, %v9954
        %v10283 = vpack.c.b16 %v9957, %v9955
        %v10284 = vpack.c.b16 %v9960, %v9958
        %v10285 = vpack.c.b16 %v9961, %v9959
        %v10286 = vpack.c.b16 %v9964, %v9962
        %v10287 = vpack.c.b16 %v9965, %v9963
        %v10288 = vpack.c.b16 %v9968, %v9966
        %v10289 = vpack.c.b16 %v9969, %v9967
        %v10290 = vpack.c.b16 %v9972, %v9970
        %v10291 = vpack.c.b16 %v9973, %v9971
        %v10292 = vpack.c.b16 %v9976, %v9974
        %v10293 = vpack.c.b16 %v9977, %v9975
        %v10294 = vpack.c.b16 %v9980, %v9978
        %v10295 = vpack.c.b16 %v9981, %v9979
        %v10296 = vpack.c.b16 %v9984, %v9982
        %v10297 = vpack.c.b16 %v9985, %v9983
        %v10298 = vpack.c.b16 %v9988, %v9986
        %v10299 = vpack.c.b16 %v9989, %v9987
        %v10300 = vpack.c.b16 %v9992, %v9990
        %v10301 = vpack.c.b16 %v9993, %v9991
        %v10302 = vpack.c.b16 %v9996, %v9994
        %v10303 = vpack.c.b16 %v9997, %v9995
        %v10304 = vpack.c.b16 %v10000, %v9998
        %v10305 = vpack.c.b16 %v10001, %v9999
        %v10306 = vpack.c.b16 %v10004, %v10002
        %v10307 = vpack.c.b16 %v10005, %v10003
        %v10308 = vpack.c.b16 %v10008, %v10006
        %v10309 = vpack.c.b16 %v10009, %v10007
        %v10310 = vpack.c.b16 %v10012, %v10010
        %v10311 = vpack.c.b16 %v10013, %v10011
        %v10312 = vpack.c.b16 %v10016, %v10014
        %v10313 = vpack.c.b16 %v10017, %v10015
        %v10314 = vpack.c.b16 %v10020, %v10018
        %v10315 = vpack.c.b16 %v10021, %v10019
        %v10316 = vpack.c.b16 %v10024, %v10022
        %v10317 = vpack.c.b16 %v10025, %v10023
        %v10318 = vpack.c.b16 %v10028, %v10026
        %v10319 = vpack.c.b16 %v10029, %v10027
        %v10320 = vpack.c.b16 %v10032, %v10030
        %v10321 = vpack.c.b16 %v10033, %v10031
        %10610 = vmatprep.subr.bf16.mxu0 %v10049
        %10611 = vmatpush1.bf16.msra.mxu0 %v10048
        %10612 = vmatprep.subr.bf16.mxu0 %v10047
        %10613 = vmatpush1.bf16.msra.mxu0 %v10046
        %10614 = vmatprep.subr.bf16.mxu0 %v10045
        %10615 = vmatpush1.bf16.msra.mxu0 %v10044
        %10616 = vmatprep.subr.bf16.mxu0 %v10043
        %10617 = vmatpush1.bf16.msra.mxu0 %v10042
        %10618 = vmatprep.subr.bf16.mxu0 %v10041
        %10619 = vmatpush1.bf16.msra.mxu0 %v10040
        %10620 = vmatprep.subr.bf16.mxu0 %v10039
        %10621 = vmatpush1.bf16.msra.mxu0 %v10038
        %10622 = vmatprep.subr.bf16.mxu0 %v10037
        %10623 = vmatpush1.bf16.msra.mxu0 %v10036
        %10624 = vmatprep.subr.bf16.mxu0 %v10035
        %10625 = vmatpush1.bf16.msra.mxu0 %v10034
        %10626 = vmatprep.subr.bf16.mxu0 %v10065
        %10627 = vmatpush2.bf16.msra.mxu0 %v10064
        %10628 = vmatprep.subr.bf16.mxu0 %v10063
        %10629 = vmatpush2.bf16.msra.mxu0 %v10062
        %10630 = vmatprep.subr.bf16.mxu0 %v10061
        %10631 = vmatpush2.bf16.msra.mxu0 %v10060
        %10632 = vmatprep.subr.bf16.mxu0 %v10059
        %10633 = vmatpush2.bf16.msra.mxu0 %v10058
        %10634 = vmatprep.subr.bf16.mxu0 %v10057
        %10635 = vmatpush2.bf16.msra.mxu0 %v10056
        %10636 = vmatprep.subr.bf16.mxu0 %v10055
        %10637 = vmatpush2.bf16.msra.mxu0 %v10054
        %10638 = vmatprep.subr.bf16.mxu0 %v10053
        %10639 = vmatpush2.bf16.msra.mxu0 %v10052
        %10640 = vmatprep.subr.bf16.mxu0 %v10051
        %10641 = vmatpush2.bf16.msra.mxu0 %v10050
        %10642 = vmatprep.mubr.bf16.mxu0 %v8583
        %10643 = vmatmul.mubr.bf16.gmra.mxu0 %v8582
        %v10644 = vpop.f32.mrf.mxu0
        %v10645 = vadd.f32 %v9163, %v10644
        %v10646 = vpop.f32.mrf.mxu0
        %v10647 = vadd.f32 %v9167, %v10646
        %v10648 = vpop.f32.mrf.mxu0
        %v10649 = vadd.f32 %v9163, %v10648
        %v10650 = vpop.f32.mrf.mxu0
        %v10651 = vadd.f32 %v9167, %v10650
        %10652 = vmatprep.mubr.bf16.mxu0 %v8585
        %10653 = vmatmul.mubr.bf16.gmra.mxu0 %v8584
        %v10654 = vpop.f32.mrf.mxu0
        %v10655 = vadd.f32 %v9163, %v10654
        %v10656 = vpop.f32.mrf.mxu0
        %v10657 = vadd.f32 %v9167, %v10656
        %v10658 = vpop.f32.mrf.mxu0
        %v10659 = vadd.f32 %v9163, %v10658
        %v10660 = vpop.f32.mrf.mxu0
        %v10661 = vadd.f32 %v9167, %v10660
        %10662 = vmatprep.mubr.bf16.mxu0 %v8587
        %10663 = vmatmul.mubr.bf16.gmra.mxu0 %v8586
        %v10664 = vpop.f32.mrf.mxu0
        %v10665 = vadd.f32 %v9163, %v10664
        %v10666 = vpop.f32.mrf.mxu0
        %v10667 = vadd.f32 %v9167, %v10666
        %v10668 = vpop.f32.mrf.mxu0
        %v10669 = vadd.f32 %v9163, %v10668
        %v10670 = vpop.f32.mrf.mxu0
        %v10671 = vadd.f32 %v9167, %v10670
        %10672 = vmatprep.mubr.bf16.mxu0 %v8589
        %10673 = vmatmul.mubr.bf16.gmra.mxu0 %v8588
        %v10674 = vpop.f32.mrf.mxu0
        %v10675 = vadd.f32 %v9163, %v10674
        %v10676 = vpop.f32.mrf.mxu0
        %v10677 = vadd.f32 %v9167, %v10676
        %v10678 = vpop.f32.mrf.mxu0
        %v10679 = vadd.f32 %v9163, %v10678
        %v10680 = vpop.f32.mrf.mxu0
        %v10681 = vadd.f32 %v9167, %v10680
        %10682 = vdwg.mxu0
        %10683 = vmatprep.subr.bf16.mxu0 %v10081
        %10684 = vmatpush1.bf16.msra.mxu0 %v10080
        %10685 = vmatprep.subr.bf16.mxu0 %v10079
        %10686 = vmatpush1.bf16.msra.mxu0 %v10078
        %10687 = vmatprep.subr.bf16.mxu0 %v10077
        %10688 = vmatpush1.bf16.msra.mxu0 %v10076
        %10689 = vmatprep.subr.bf16.mxu0 %v10075
        %10690 = vmatpush1.bf16.msra.mxu0 %v10074
        %10691 = vmatprep.subr.bf16.mxu0 %v10073
        %10692 = vmatpush1.bf16.msra.mxu0 %v10072
        %10693 = vmatprep.subr.bf16.mxu0 %v10071
        %10694 = vmatpush1.bf16.msra.mxu0 %v10070
        %10695 = vmatprep.subr.bf16.mxu0 %v10069
        %10696 = vmatpush1.bf16.msra.mxu0 %v10068
        %10697 = vmatprep.subr.bf16.mxu0 %v10067
        %10698 = vmatpush1.bf16.msra.mxu0 %v10066
        %10699 = vmatprep.subr.bf16.mxu0 %v10097
        %10700 = vmatpush2.bf16.msra.mxu0 %v10096
        %10701 = vmatprep.subr.bf16.mxu0 %v10095
        %10702 = vmatpush2.bf16.msra.mxu0 %v10094
        %10703 = vmatprep.subr.bf16.mxu0 %v10093
        %10704 = vmatpush2.bf16.msra.mxu0 %v10092
        %10705 = vmatprep.subr.bf16.mxu0 %v10091
        %10706 = vmatpush2.bf16.msra.mxu0 %v10090
        %10707 = vmatprep.subr.bf16.mxu0 %v10089
        %10708 = vmatpush2.bf16.msra.mxu0 %v10088
        %10709 = vmatprep.subr.bf16.mxu0 %v10087
        %10710 = vmatpush2.bf16.msra.mxu0 %v10086
        %10711 = vmatprep.subr.bf16.mxu0 %v10085
        %10712 = vmatpush2.bf16.msra.mxu0 %v10084
        %10713 = vmatprep.subr.bf16.mxu0 %v10083
        %10714 = vmatpush2.bf16.msra.mxu0 %v10082
        %10715 = vmatprep.mubr.bf16.mxu0 %v8615
        %10716 = vmatmul.mubr.bf16.gmra.mxu0 %v8614
        %v10717 = vpop.f32.mrf.mxu0
        %v10718 = vadd.f32 %v10645, %v10717
        %v10719 = vpop.f32.mrf.mxu0
        %v10720 = vadd.f32 %v10647, %v10719
        %v10721 = vpop.f32.mrf.mxu0
        %v10722 = vadd.f32 %v10649, %v10721
        %v10723 = vpop.f32.mrf.mxu0
        %v10724 = vadd.f32 %v10651, %v10723
        %10725 = vmatprep.mubr.bf16.mxu0 %v8617
        %10726 = vmatmul.mubr.bf16.gmra.mxu0 %v8616
        %v10727 = vpop.f32.mrf.mxu0
        %v10728 = vadd.f32 %v10655, %v10727
        %v10729 = vpop.f32.mrf.mxu0
        %v10730 = vadd.f32 %v10657, %v10729
        %v10731 = vpop.f32.mrf.mxu0
        %v10732 = vadd.f32 %v10659, %v10731
        %v10733 = vpop.f32.mrf.mxu0
        %v10734 = vadd.f32 %v10661, %v10733
        %10735 = vmatprep.mubr.bf16.mxu0 %v8619
        %10736 = vmatmul.mubr.bf16.gmra.mxu0 %v8618
        %v10737 = vpop.f32.mrf.mxu0
        %v10738 = vadd.f32 %v10665, %v10737
        %v10739 = vpop.f32.mrf.mxu0
        %v10740 = vadd.f32 %v10667, %v10739
        %v10741 = vpop.f32.mrf.mxu0
        %v10742 = vadd.f32 %v10669, %v10741
        %v10743 = vpop.f32.mrf.mxu0
        %v10744 = vadd.f32 %v10671, %v10743
        %10745 = vmatprep.mubr.bf16.mxu0 %v8621
        %10746 = vmatmul.mubr.bf16.gmra.mxu0 %v8620
        %v10747 = vpop.f32.mrf.mxu0
        %v10748 = vadd.f32 %v10675, %v10747
        %v10749 = vpop.f32.mrf.mxu0
        %v10750 = vadd.f32 %v10677, %v10749
        %v10751 = vpop.f32.mrf.mxu0
        %v10752 = vadd.f32 %v10679, %v10751
        %v10753 = vpop.f32.mrf.mxu0
        %v10754 = vadd.f32 %v10681, %v10753
        %10755 = vdwg.mxu0
        %10756 = vmatprep.subr.bf16.mxu0 %v10113
        %10757 = vmatpush1.bf16.msra.mxu0 %v10112
        %10758 = vmatprep.subr.bf16.mxu0 %v10111
        %10759 = vmatpush1.bf16.msra.mxu0 %v10110
        %10760 = vmatprep.subr.bf16.mxu0 %v10109
        %10761 = vmatpush1.bf16.msra.mxu0 %v10108
        %10762 = vmatprep.subr.bf16.mxu0 %v10107
        %10763 = vmatpush1.bf16.msra.mxu0 %v10106
        %10764 = vmatprep.subr.bf16.mxu0 %v10105
        %10765 = vmatpush1.bf16.msra.mxu0 %v10104
        %10766 = vmatprep.subr.bf16.mxu0 %v10103
        %10767 = vmatpush1.bf16.msra.mxu0 %v10102
        %10768 = vmatprep.subr.bf16.mxu0 %v10101
        %10769 = vmatpush1.bf16.msra.mxu0 %v10100
        %10770 = vmatprep.subr.bf16.mxu0 %v10099
        %10771 = vmatpush1.bf16.msra.mxu0 %v10098
        %10772 = vmatprep.subr.bf16.mxu0 %v10129
        %10773 = vmatpush2.bf16.msra.mxu0 %v10128
        %10774 = vmatprep.subr.bf16.mxu0 %v10127
        %10775 = vmatpush2.bf16.msra.mxu0 %v10126
        %10776 = vmatprep.subr.bf16.mxu0 %v10125
        %10777 = vmatpush2.bf16.msra.mxu0 %v10124
        %10778 = vmatprep.subr.bf16.mxu0 %v10123
        %10779 = vmatpush2.bf16.msra.mxu0 %v10122
        %10780 = vmatprep.subr.bf16.mxu0 %v10121
        %10781 = vmatpush2.bf16.msra.mxu0 %v10120
        %10782 = vmatprep.subr.bf16.mxu0 %v10119
        %10783 = vmatpush2.bf16.msra.mxu0 %v10118
        %10784 = vmatprep.subr.bf16.mxu0 %v10117
        %10785 = vmatpush2.bf16.msra.mxu0 %v10116
        %10786 = vmatprep.subr.bf16.mxu0 %v10115
        %10787 = vmatpush2.bf16.msra.mxu0 %v10114
        %10788 = vmatprep.mubr.bf16.mxu0 %v8647
        %10789 = vmatmul.mubr.bf16.gmra.mxu0 %v8646
        %v10790 = vpop.f32.mrf.mxu0
        %v10791 = vadd.f32 %v10718, %v10790
        %v10792 = vpop.f32.mrf.mxu0
        %v10793 = vadd.f32 %v10720, %v10792
        %v10794 = vpop.f32.mrf.mxu0
        %v10795 = vadd.f32 %v10722, %v10794
        %v10796 = vpop.f32.mrf.mxu0
        %v10797 = vadd.f32 %v10724, %v10796
        %10798 = vmatprep.mubr.bf16.mxu0 %v8649
        %10799 = vmatmul.mubr.bf16.gmra.mxu0 %v8648
        %v10800 = vpop.f32.mrf.mxu0
        %v10801 = vadd.f32 %v10728, %v10800
        %v10802 = vpop.f32.mrf.mxu0
        %v10803 = vadd.f32 %v10730, %v10802
        %v10804 = vpop.f32.mrf.mxu0
        %v10805 = vadd.f32 %v10732, %v10804
        %v10806 = vpop.f32.mrf.mxu0
        %v10807 = vadd.f32 %v10734, %v10806
        %10808 = vmatprep.mubr.bf16.mxu0 %v8651
        %10809 = vmatmul.mubr.bf16.gmra.mxu0 %v8650
        %v10810 = vpop.f32.mrf.mxu0
        %v10811 = vadd.f32 %v10738, %v10810
        %v10812 = vpop.f32.mrf.mxu0
        %v10813 = vadd.f32 %v10740, %v10812
        %v10814 = vpop.f32.mrf.mxu0
        %v10815 = vadd.f32 %v10742, %v10814
        %v10816 = vpop.f32.mrf.mxu0
        %v10817 = vadd.f32 %v10744, %v10816
        %10818 = vmatprep.mubr.bf16.mxu0 %v8653
        %10819 = vmatmul.mubr.bf16.gmra.mxu0 %v8652
        %v10820 = vpop.f32.mrf.mxu0
        %v10821 = vadd.f32 %v10748, %v10820
        %v10822 = vpop.f32.mrf.mxu0
        %v10823 = vadd.f32 %v10750, %v10822
        %v10824 = vpop.f32.mrf.mxu0
        %v10825 = vadd.f32 %v10752, %v10824
        %v10826 = vpop.f32.mrf.mxu0
        %v10827 = vadd.f32 %v10754, %v10826
        %10828 = vdwg.mxu0
        %10829 = vmatprep.subr.bf16.mxu0 %v10145
        %10830 = vmatpush1.bf16.msra.mxu0 %v10144
        %10831 = vmatprep.subr.bf16.mxu0 %v10143
        %10832 = vmatpush1.bf16.msra.mxu0 %v10142
        %10833 = vmatprep.subr.bf16.mxu0 %v10141
        %10834 = vmatpush1.bf16.msra.mxu0 %v10140
        %10835 = vmatprep.subr.bf16.mxu0 %v10139
        %10836 = vmatpush1.bf16.msra.mxu0 %v10138
        %10837 = vmatprep.subr.bf16.mxu0 %v10137
        %10838 = vmatpush1.bf16.msra.mxu0 %v10136
        %10839 = vmatprep.subr.bf16.mxu0 %v10135
        %10840 = vmatpush1.bf16.msra.mxu0 %v10134
        %10841 = vmatprep.subr.bf16.mxu0 %v10133
        %10842 = vmatpush1.bf16.msra.mxu0 %v10132
        %10843 = vmatprep.subr.bf16.mxu0 %v10131
        %10844 = vmatpush1.bf16.msra.mxu0 %v10130
        %10845 = vmatprep.subr.bf16.mxu0 %v10161
        %10846 = vmatpush2.bf16.msra.mxu0 %v10160
        %10847 = vmatprep.subr.bf16.mxu0 %v10159
        %10848 = vmatpush2.bf16.msra.mxu0 %v10158
        %10849 = vmatprep.subr.bf16.mxu0 %v10157
        %10850 = vmatpush2.bf16.msra.mxu0 %v10156
        %10851 = vmatprep.subr.bf16.mxu0 %v10155
        %10852 = vmatpush2.bf16.msra.mxu0 %v10154
        %10853 = vmatprep.subr.bf16.mxu0 %v10153
        %10854 = vmatpush2.bf16.msra.mxu0 %v10152
        %10855 = vmatprep.subr.bf16.mxu0 %v10151
        %10856 = vmatpush2.bf16.msra.mxu0 %v10150
        %10857 = vmatprep.subr.bf16.mxu0 %v10149
        %10858 = vmatpush2.bf16.msra.mxu0 %v10148
        %10859 = vmatprep.subr.bf16.mxu0 %v10147
        %10860 = vmatpush2.bf16.msra.mxu0 %v10146
        %10861 = vmatprep.mubr.bf16.mxu0 %v8687
        %10862 = vmatmul.mubr.bf16.gmra.mxu0 %v8686
        %v10863 = vpop.f32.mrf.mxu0
        %v10864 = vadd.f32 %v10791, %v10863
        %v10865 = vpop.f32.mrf.mxu0
        %v10866 = vadd.f32 %v10793, %v10865
        %v10867 = vpop.f32.mrf.mxu0
        %v10868 = vadd.f32 %v10795, %v10867
        %v10869 = vpop.f32.mrf.mxu0
        %v10870 = vadd.f32 %v10797, %v10869
        %10871 = vmatprep.mubr.bf16.mxu0 %v8689
        %10872 = vmatmul.mubr.bf16.gmra.mxu0 %v8688
        %v10873 = vpop.f32.mrf.mxu0
        %v10874 = vadd.f32 %v10801, %v10873
        %v10875 = vpop.f32.mrf.mxu0
        %v10876 = vadd.f32 %v10803, %v10875
        %v10877 = vpop.f32.mrf.mxu0
        %v10878 = vadd.f32 %v10805, %v10877
        %v10879 = vpop.f32.mrf.mxu0
        %v10880 = vadd.f32 %v10807, %v10879
        %10881 = vmatprep.mubr.bf16.mxu0 %v8691
        %10882 = vmatmul.mubr.bf16.gmra.mxu0 %v8690
        %v10883 = vpop.f32.mrf.mxu0
        %v10884 = vadd.f32 %v10811, %v10883
        %v10885 = vpop.f32.mrf.mxu0
        %v10886 = vadd.f32 %v10813, %v10885
        %v10887 = vpop.f32.mrf.mxu0
        %v10888 = vadd.f32 %v10815, %v10887
        %v10889 = vpop.f32.mrf.mxu0
        %v10890 = vadd.f32 %v10817, %v10889
        %10891 = vmatprep.mubr.bf16.mxu0 %v8693
        %10892 = vmatmul.mubr.bf16.gmra.mxu0 %v8692
        %v10893 = vpop.f32.mrf.mxu0
        %v10894 = vadd.f32 %v10821, %v10893
        %v10895 = vpop.f32.mrf.mxu0
        %v10896 = vadd.f32 %v10823, %v10895
        %v10897 = vpop.f32.mrf.mxu0
        %v10898 = vadd.f32 %v10825, %v10897
        %v10899 = vpop.f32.mrf.mxu0
        %v10900 = vadd.f32 %v10827, %v10899
        %10901 = vdwg.mxu0
        %10902 = vmatprep.subr.bf16.mxu0 %v10177
        %10903 = vmatpush1.bf16.msra.mxu0 %v10176
        %10904 = vmatprep.subr.bf16.mxu0 %v10175
        %10905 = vmatpush1.bf16.msra.mxu0 %v10174
        %10906 = vmatprep.subr.bf16.mxu0 %v10173
        %10907 = vmatpush1.bf16.msra.mxu0 %v10172
        %10908 = vmatprep.subr.bf16.mxu0 %v10171
        %10909 = vmatpush1.bf16.msra.mxu0 %v10170
        %10910 = vmatprep.subr.bf16.mxu0 %v10169
        %10911 = vmatpush1.bf16.msra.mxu0 %v10168
        %10912 = vmatprep.subr.bf16.mxu0 %v10167
        %10913 = vmatpush1.bf16.msra.mxu0 %v10166
        %10914 = vmatprep.subr.bf16.mxu0 %v10165
        %10915 = vmatpush1.bf16.msra.mxu0 %v10164
        %10916 = vmatprep.subr.bf16.mxu0 %v10163
        %10917 = vmatpush1.bf16.msra.mxu0 %v10162
        %10918 = vmatprep.subr.bf16.mxu0 %v10193
        %10919 = vmatpush2.bf16.msra.mxu0 %v10192
        %10920 = vmatprep.subr.bf16.mxu0 %v10191
        %10921 = vmatpush2.bf16.msra.mxu0 %v10190
        %10922 = vmatprep.subr.bf16.mxu0 %v10189
        %10923 = vmatpush2.bf16.msra.mxu0 %v10188
        %10924 = vmatprep.subr.bf16.mxu0 %v10187
        %10925 = vmatpush2.bf16.msra.mxu0 %v10186
        %10926 = vmatprep.subr.bf16.mxu0 %v10185
        %10927 = vmatpush2.bf16.msra.mxu0 %v10184
        %10928 = vmatprep.subr.bf16.mxu0 %v10183
        %10929 = vmatpush2.bf16.msra.mxu0 %v10182
        %10930 = vmatprep.subr.bf16.mxu0 %v10181
        %10931 = vmatpush2.bf16.msra.mxu0 %v10180
        %10932 = vmatprep.subr.bf16.mxu0 %v10179
        %10933 = vmatpush2.bf16.msra.mxu0 %v10178
        %10934 = vmatprep.mubr.bf16.mxu0 %v8719
        %10935 = vmatmul.mubr.bf16.gmra.mxu0 %v8718
        %v10936 = vpop.f32.mrf.mxu0
        %v10937 = vadd.f32 %v10864, %v10936
        %v10938 = vpop.f32.mrf.mxu0
        %v10939 = vadd.f32 %v10866, %v10938
        %v10940 = vpop.f32.mrf.mxu0
        %v10941 = vadd.f32 %v10868, %v10940
        %v10942 = vpop.f32.mrf.mxu0
        %v10943 = vadd.f32 %v10870, %v10942
        %10944 = vmatprep.mubr.bf16.mxu0 %v8721
        %10945 = vmatmul.mubr.bf16.gmra.mxu0 %v8720
        %v10946 = vpop.f32.mrf.mxu0
        %v10947 = vadd.f32 %v10874, %v10946
        %v10948 = vpop.f32.mrf.mxu0
        %v10949 = vadd.f32 %v10876, %v10948
        %v10950 = vpop.f32.mrf.mxu0
        %v10951 = vadd.f32 %v10878, %v10950
        %v10952 = vpop.f32.mrf.mxu0
        %v10953 = vadd.f32 %v10880, %v10952
        %10954 = vmatprep.mubr.bf16.mxu0 %v8723
        %10955 = vmatmul.mubr.bf16.gmra.mxu0 %v8722
        %v10956 = vpop.f32.mrf.mxu0
        %v10957 = vadd.f32 %v10884, %v10956
        %v10958 = vpop.f32.mrf.mxu0
        %v10959 = vadd.f32 %v10886, %v10958
        %v10960 = vpop.f32.mrf.mxu0
        %v10961 = vadd.f32 %v10888, %v10960
        %v10962 = vpop.f32.mrf.mxu0
        %v10963 = vadd.f32 %v10890, %v10962
        %10964 = vmatprep.mubr.bf16.mxu0 %v8725
        %10965 = vmatmul.mubr.bf16.gmra.mxu0 %v8724
        %v10966 = vpop.f32.mrf.mxu0
        %v10967 = vadd.f32 %v10894, %v10966
        %v10968 = vpop.f32.mrf.mxu0
        %v10969 = vadd.f32 %v10896, %v10968
        %v10970 = vpop.f32.mrf.mxu0
        %v10971 = vadd.f32 %v10898, %v10970
        %v10972 = vpop.f32.mrf.mxu0
        %v10973 = vadd.f32 %v10900, %v10972
        %10974 = vdwg.mxu0
        %10975 = vmatprep.subr.bf16.mxu0 %v10209
        %10976 = vmatpush1.bf16.msra.mxu0 %v10208
        %10977 = vmatprep.subr.bf16.mxu0 %v10207
        %10978 = vmatpush1.bf16.msra.mxu0 %v10206
        %10979 = vmatprep.subr.bf16.mxu0 %v10205
        %10980 = vmatpush1.bf16.msra.mxu0 %v10204
        %10981 = vmatprep.subr.bf16.mxu0 %v10203
        %10982 = vmatpush1.bf16.msra.mxu0 %v10202
        %10983 = vmatprep.subr.bf16.mxu0 %v10201
        %10984 = vmatpush1.bf16.msra.mxu0 %v10200
        %10985 = vmatprep.subr.bf16.mxu0 %v10199
        %10986 = vmatpush1.bf16.msra.mxu0 %v10198
        %10987 = vmatprep.subr.bf16.mxu0 %v10197
        %10988 = vmatpush1.bf16.msra.mxu0 %v10196
        %10989 = vmatprep.subr.bf16.mxu0 %v10195
        %10990 = vmatpush1.bf16.msra.mxu0 %v10194
        %10991 = vmatprep.subr.bf16.mxu0 %v10225
        %10992 = vmatpush2.bf16.msra.mxu0 %v10224
        %10993 = vmatprep.subr.bf16.mxu0 %v10223
        %10994 = vmatpush2.bf16.msra.mxu0 %v10222
        %10995 = vmatprep.subr.bf16.mxu0 %v10221
        %10996 = vmatpush2.bf16.msra.mxu0 %v10220
        %10997 = vmatprep.subr.bf16.mxu0 %v10219
        %10998 = vmatpush2.bf16.msra.mxu0 %v10218
        %10999 = vmatprep.subr.bf16.mxu0 %v10217
        %11000 = vmatpush2.bf16.msra.mxu0 %v10216
        %11001 = vmatprep.subr.bf16.mxu0 %v10215
        %11002 = vmatpush2.bf16.msra.mxu0 %v10214
        %11003 = vmatprep.subr.bf16.mxu0 %v10213
        %11004 = vmatpush2.bf16.msra.mxu0 %v10212
        %11005 = vmatprep.subr.bf16.mxu0 %v10211
        %11006 = vmatpush2.bf16.msra.mxu0 %v10210
        %11007 = vmatprep.mubr.bf16.mxu0 %v8751
        %11008 = vmatmul.mubr.bf16.gmra.mxu0 %v8750
        %v11009 = vpop.f32.mrf.mxu0
        %v11010 = vadd.f32 %v10937, %v11009
        %v11011 = vpop.f32.mrf.mxu0
        %v11012 = vadd.f32 %v10939, %v11011
        %v11013 = vpop.f32.mrf.mxu0
        %v11014 = vadd.f32 %v10941, %v11013
        %v11015 = vpop.f32.mrf.mxu0
        %v11016 = vadd.f32 %v10943, %v11015
        %11017 = vmatprep.mubr.bf16.mxu0 %v8753
        %11018 = vmatmul.mubr.bf16.gmra.mxu0 %v8752
        %v11019 = vpop.f32.mrf.mxu0
        %v11020 = vadd.f32 %v10947, %v11019
        %v11021 = vpop.f32.mrf.mxu0
        %v11022 = vadd.f32 %v10949, %v11021
        %v11023 = vpop.f32.mrf.mxu0
        %v11024 = vadd.f32 %v10951, %v11023
        %v11025 = vpop.f32.mrf.mxu0
        %v11026 = vadd.f32 %v10953, %v11025
        %11027 = vmatprep.mubr.bf16.mxu0 %v8755
        %11028 = vmatmul.mubr.bf16.gmra.mxu0 %v8754
        %v11029 = vpop.f32.mrf.mxu0
        %v11030 = vadd.f32 %v10957, %v11029
        %v11031 = vpop.f32.mrf.mxu0
        %v11032 = vadd.f32 %v10959, %v11031
        %v11033 = vpop.f32.mrf.mxu0
        %v11034 = vadd.f32 %v10961, %v11033
        %v11035 = vpop.f32.mrf.mxu0
        %v11036 = vadd.f32 %v10963, %v11035
        %11037 = vmatprep.mubr.bf16.mxu0 %v8757
        %11038 = vmatmul.mubr.bf16.gmra.mxu0 %v8756
        %v11039 = vpop.f32.mrf.mxu0
        %v11040 = vadd.f32 %v10967, %v11039
        %v11041 = vpop.f32.mrf.mxu0
        %v11042 = vadd.f32 %v10969, %v11041
        %v11043 = vpop.f32.mrf.mxu0
        %v11044 = vadd.f32 %v10971, %v11043
        %v11045 = vpop.f32.mrf.mxu0
        %v11046 = vadd.f32 %v10973, %v11045
        %11047 = vdwg.mxu0
        %11048 = vmatprep.subr.bf16.mxu0 %v10241
        %11049 = vmatpush1.bf16.msra.mxu0 %v10240
        %11050 = vmatprep.subr.bf16.mxu0 %v10239
        %11051 = vmatpush1.bf16.msra.mxu0 %v10238
        %11052 = vmatprep.subr.bf16.mxu0 %v10237
        %11053 = vmatpush1.bf16.msra.mxu0 %v10236
        %11054 = vmatprep.subr.bf16.mxu0 %v10235
        %11055 = vmatpush1.bf16.msra.mxu0 %v10234
        %11056 = vmatprep.subr.bf16.mxu0 %v10233
        %11057 = vmatpush1.bf16.msra.mxu0 %v10232
        %11058 = vmatprep.subr.bf16.mxu0 %v10231
        %11059 = vmatpush1.bf16.msra.mxu0 %v10230
        %11060 = vmatprep.subr.bf16.mxu0 %v10229
        %11061 = vmatpush1.bf16.msra.mxu0 %v10228
        %11062 = vmatprep.subr.bf16.mxu0 %v10227
        %11063 = vmatpush1.bf16.msra.mxu0 %v10226
        %11064 = vmatprep.subr.bf16.mxu0 %v10257
        %11065 = vmatpush2.bf16.msra.mxu0 %v10256
        %11066 = vmatprep.subr.bf16.mxu0 %v10255
        %11067 = vmatpush2.bf16.msra.mxu0 %v10254
        %11068 = vmatprep.subr.bf16.mxu0 %v10253
        %11069 = vmatpush2.bf16.msra.mxu0 %v10252
        %11070 = vmatprep.subr.bf16.mxu0 %v10251
        %11071 = vmatpush2.bf16.msra.mxu0 %v10250
        %11072 = vmatprep.subr.bf16.mxu0 %v10249
        %11073 = vmatpush2.bf16.msra.mxu0 %v10248
        %11074 = vmatprep.subr.bf16.mxu0 %v10247
        %11075 = vmatpush2.bf16.msra.mxu0 %v10246
        %11076 = vmatprep.subr.bf16.mxu0 %v10245
        %11077 = vmatpush2.bf16.msra.mxu0 %v10244
        %11078 = vmatprep.subr.bf16.mxu0 %v10243
        %11079 = vmatpush2.bf16.msra.mxu0 %v10242
        %11080 = vmatprep.mubr.bf16.mxu0 %v8791
        %11081 = vmatmul.mubr.bf16.gmra.mxu0 %v8790
        %v11082 = vpop.f32.mrf.mxu0
        %v11083 = vadd.f32 %v11010, %v11082
        %v11084 = vpop.f32.mrf.mxu0
        %v11085 = vadd.f32 %v11012, %v11084
        %v11086 = vpop.f32.mrf.mxu0
        %v11087 = vadd.f32 %v11014, %v11086
        %v11088 = vpop.f32.mrf.mxu0
        %v11089 = vadd.f32 %v11016, %v11088
        %11090 = vmatprep.mubr.bf16.mxu0 %v8793
        %11091 = vmatmul.mubr.bf16.gmra.mxu0 %v8792
        %v11092 = vpop.f32.mrf.mxu0
        %v11093 = vadd.f32 %v11020, %v11092
        %v11094 = vpop.f32.mrf.mxu0
        %v11095 = vadd.f32 %v11022, %v11094
        %v11096 = vpop.f32.mrf.mxu0
        %v11097 = vadd.f32 %v11024, %v11096
        %v11098 = vpop.f32.mrf.mxu0
        %v11099 = vadd.f32 %v11026, %v11098
        %11100 = vmatprep.mubr.bf16.mxu0 %v8795
        %11101 = vmatmul.mubr.bf16.gmra.mxu0 %v8794
        %v11102 = vpop.f32.mrf.mxu0
        %v11103 = vadd.f32 %v11030, %v11102
        %v11104 = vpop.f32.mrf.mxu0
        %v11105 = vadd.f32 %v11032, %v11104
        %v11106 = vpop.f32.mrf.mxu0
        %v11107 = vadd.f32 %v11034, %v11106
        %v11108 = vpop.f32.mrf.mxu0
        %v11109 = vadd.f32 %v11036, %v11108
        %11110 = vmatprep.mubr.bf16.mxu0 %v8797
        %11111 = vmatmul.mubr.bf16.gmra.mxu0 %v8796
        %v11112 = vpop.f32.mrf.mxu0
        %v11113 = vadd.f32 %v11040, %v11112
        %v11114 = vpop.f32.mrf.mxu0
        %v11115 = vadd.f32 %v11042, %v11114
        %v11116 = vpop.f32.mrf.mxu0
        %v11117 = vadd.f32 %v11044, %v11116
        %v11118 = vpop.f32.mrf.mxu0
        %v11119 = vadd.f32 %v11046, %v11118
        %11120 = vdwg.mxu0
        %11121 = vmatprep.subr.bf16.mxu0 %v10273
        %11122 = vmatpush1.bf16.msra.mxu0 %v10272
        %11123 = vmatprep.subr.bf16.mxu0 %v10271
        %11124 = vmatpush1.bf16.msra.mxu0 %v10270
        %11125 = vmatprep.subr.bf16.mxu0 %v10269
        %11126 = vmatpush1.bf16.msra.mxu0 %v10268
        %11127 = vmatprep.subr.bf16.mxu0 %v10267
        %11128 = vmatpush1.bf16.msra.mxu0 %v10266
        %11129 = vmatprep.subr.bf16.mxu0 %v10265
        %11130 = vmatpush1.bf16.msra.mxu0 %v10264
        %11131 = vmatprep.subr.bf16.mxu0 %v10263
        %11132 = vmatpush1.bf16.msra.mxu0 %v10262
        %11133 = vmatprep.subr.bf16.mxu0 %v10261
        %11134 = vmatpush1.bf16.msra.mxu0 %v10260
        %11135 = vmatprep.subr.bf16.mxu0 %v10259
        %11136 = vmatpush1.bf16.msra.mxu0 %v10258
        %11137 = vmatprep.subr.bf16.mxu0 %v10289
        %11138 = vmatpush2.bf16.msra.mxu0 %v10288
        %11139 = vmatprep.subr.bf16.mxu0 %v10287
        %11140 = vmatpush2.bf16.msra.mxu0 %v10286
        %11141 = vmatprep.subr.bf16.mxu0 %v10285
        %11142 = vmatpush2.bf16.msra.mxu0 %v10284
        %11143 = vmatprep.subr.bf16.mxu0 %v10283
        %11144 = vmatpush2.bf16.msra.mxu0 %v10282
        %11145 = vmatprep.subr.bf16.mxu0 %v10281
        %11146 = vmatpush2.bf16.msra.mxu0 %v10280
        %11147 = vmatprep.subr.bf16.mxu0 %v10279
        %11148 = vmatpush2.bf16.msra.mxu0 %v10278
        %11149 = vmatprep.subr.bf16.mxu0 %v10277
        %11150 = vmatpush2.bf16.msra.mxu0 %v10276
        %11151 = vmatprep.subr.bf16.mxu0 %v10275
        %11152 = vmatpush2.bf16.msra.mxu0 %v10274
        %11153 = vmatprep.mubr.bf16.mxu0 %v8823
        %11154 = vmatmul.mubr.bf16.gmra.mxu0 %v8822
        %v11155 = vpop.f32.mrf.mxu0
        %v11156 = vadd.f32 %v11083, %v11155
        %v11157 = vpop.f32.mrf.mxu0
        %v11158 = vadd.f32 %v11085, %v11157
        %v11159 = vpop.f32.mrf.mxu0
        %v11160 = vadd.f32 %v11087, %v11159
        %v11161 = vpop.f32.mrf.mxu0
        %v11162 = vadd.f32 %v11089, %v11161
        %11163 = vmatprep.mubr.bf16.mxu0 %v8825
        %11164 = vmatmul.mubr.bf16.gmra.mxu0 %v8824
        %v11165 = vpop.f32.mrf.mxu0
        %v11166 = vadd.f32 %v11093, %v11165
        %v11167 = vpop.f32.mrf.mxu0
        %v11168 = vadd.f32 %v11095, %v11167
        %v11169 = vpop.f32.mrf.mxu0
        %v11170 = vadd.f32 %v11097, %v11169
        %v11171 = vpop.f32.mrf.mxu0
        %v11172 = vadd.f32 %v11099, %v11171
        %11173 = vmatprep.mubr.bf16.mxu0 %v8827
        %11174 = vmatmul.mubr.bf16.gmra.mxu0 %v8826
        %v11175 = vpop.f32.mrf.mxu0
        %v11176 = vadd.f32 %v11103, %v11175
        %v11177 = vpop.f32.mrf.mxu0
        %v11178 = vadd.f32 %v11105, %v11177
        %v11179 = vpop.f32.mrf.mxu0
        %v11180 = vadd.f32 %v11107, %v11179
        %v11181 = vpop.f32.mrf.mxu0
        %v11182 = vadd.f32 %v11109, %v11181
        %11183 = vmatprep.mubr.bf16.mxu0 %v8829
        %11184 = vmatmul.mubr.bf16.gmra.mxu0 %v8828
        %v11185 = vpop.f32.mrf.mxu0
        %v11186 = vadd.f32 %v11113, %v11185
        %v11187 = vpop.f32.mrf.mxu0
        %v11188 = vadd.f32 %v11115, %v11187
        %v11189 = vpop.f32.mrf.mxu0
        %v11190 = vadd.f32 %v11117, %v11189
        %v11191 = vpop.f32.mrf.mxu0
        %v11192 = vadd.f32 %v11119, %v11191
        %11193 = vdwg.mxu0
        %11194 = vmatprep.subr.bf16.mxu0 %v10305
        %11195 = vmatpush1.bf16.msra.mxu0 %v10304
        %11196 = vmatprep.subr.bf16.mxu0 %v10303
        %11197 = vmatpush1.bf16.msra.mxu0 %v10302
        %11198 = vmatprep.subr.bf16.mxu0 %v10301
        %11199 = vmatpush1.bf16.msra.mxu0 %v10300
        %11200 = vmatprep.subr.bf16.mxu0 %v10299
        %11201 = vmatpush1.bf16.msra.mxu0 %v10298
        %11202 = vmatprep.subr.bf16.mxu0 %v10297
        %11203 = vmatpush1.bf16.msra.mxu0 %v10296
        %11204 = vmatprep.subr.bf16.mxu0 %v10295
        %11205 = vmatpush1.bf16.msra.mxu0 %v10294
        %11206 = vmatprep.subr.bf16.mxu0 %v10293
        %11207 = vmatpush1.bf16.msra.mxu0 %v10292
        %11208 = vmatprep.subr.bf16.mxu0 %v10291
        %11209 = vmatpush1.bf16.msra.mxu0 %v10290
        %11210 = vmatprep.subr.bf16.mxu0 %v10321
        %11211 = vmatpush2.bf16.msra.mxu0 %v10320
        %11212 = vmatprep.subr.bf16.mxu0 %v10319
        %11213 = vmatpush2.bf16.msra.mxu0 %v10318
        %11214 = vmatprep.subr.bf16.mxu0 %v10317
        %11215 = vmatpush2.bf16.msra.mxu0 %v10316
        %11216 = vmatprep.subr.bf16.mxu0 %v10315
        %11217 = vmatpush2.bf16.msra.mxu0 %v10314
        %11218 = vmatprep.subr.bf16.mxu0 %v10313
        %11219 = vmatpush2.bf16.msra.mxu0 %v10312
        %11220 = vmatprep.subr.bf16.mxu0 %v10311
        %11221 = vmatpush2.bf16.msra.mxu0 %v10310
        %11222 = vmatprep.subr.bf16.mxu0 %v10309
        %11223 = vmatpush2.bf16.msra.mxu0 %v10308
        %11224 = vmatprep.subr.bf16.mxu0 %v10307
        %11225 = vmatpush2.bf16.msra.mxu0 %v10306
        %11226 = vmatprep.mubr.bf16.mxu0 %v8855
        %11227 = vmatmul.mubr.bf16.gmra.mxu0 %v8854
        %v11228 = vpop.f32.mrf.mxu0
        %v11229 = vadd.f32 %v11156, %v11228
        %v11230 = vpop.f32.mrf.mxu0
        %v11231 = vadd.f32 %v11158, %v11230
        %v11232 = vpop.f32.mrf.mxu0
        %v11233 = vadd.f32 %v11160, %v11232
        %v11234 = vpop.f32.mrf.mxu0
        %v11235 = vadd.f32 %v11162, %v11234
        %11236 = vmatprep.mubr.bf16.mxu0 %v8857
        %11237 = vmatmul.mubr.bf16.gmra.mxu0 %v8856
        %v11238 = vpop.f32.mrf.mxu0
        %v11239 = vadd.f32 %v11166, %v11238
        %v11240 = vpop.f32.mrf.mxu0
        %v11241 = vadd.f32 %v11168, %v11240
        %v11242 = vpop.f32.mrf.mxu0
        %v11243 = vadd.f32 %v11170, %v11242
        %v11244 = vpop.f32.mrf.mxu0
        %v11245 = vadd.f32 %v11172, %v11244
        %11246 = vmatprep.mubr.bf16.mxu0 %v8859
        %11247 = vmatmul.mubr.bf16.gmra.mxu0 %v8858
        %v11248 = vpop.f32.mrf.mxu0
        %v11249 = vadd.f32 %v11176, %v11248
        %v11250 = vpop.f32.mrf.mxu0
        %v11251 = vadd.f32 %v11178, %v11250
        %v11252 = vpop.f32.mrf.mxu0
        %v11253 = vadd.f32 %v11180, %v11252
        %v11254 = vpop.f32.mrf.mxu0
        %v11255 = vadd.f32 %v11182, %v11254
        %11256 = vmatprep.mubr.bf16.mxu0 %v8861
        %11257 = vmatmul.mubr.bf16.gmra.mxu0 %v8860
        %v11258 = vpop.f32.mrf.mxu0
        %v11259 = vadd.f32 %v11186, %v11258
        %v11260 = vpop.f32.mrf.mxu0
        %v11261 = vadd.f32 %v11188, %v11260
        %v11262 = vpop.f32.mrf.mxu0
        %v11263 = vadd.f32 %v11190, %v11262
        %v11264 = vpop.f32.mrf.mxu0
        %v11265 = vadd.f32 %v11192, %v11264
        %11266 = vdwg.mxu0
        %v11267 = vmax.f32 %v11229, 0.0
        %v11268 = vmax.f32 %v11231, 0.0
        %v11269 = vmax.f32 %v11233, 0.0
        %v11270 = vmax.f32 %v11235, 0.0
        %v11271 = vmax.f32 %v11239, 0.0
        %v11272 = vmax.f32 %v11241, 0.0
        %v11273 = vmax.f32 %v11243, 0.0
        %v11274 = vmax.f32 %v11245, 0.0
        %v11275 = vmax.f32 %v11249, 0.0
        %v11276 = vmax.f32 %v11251, 0.0
        %v11277 = vmax.f32 %v11253, 0.0
        %v11278 = vmax.f32 %v11255, 0.0
        %v11279 = vmax.f32 %v11259, 0.0
        %v11280 = vmax.f32 %v11261, 0.0
        %v11281 = vmax.f32 %v11263, 0.0
        %v11282 = vmax.f32 %v11265, 0.0
        %v11283 = vadd.f32 %v11267, %v11269
        %v11284 = vadd.f32 %v11283, %v11271
        %v11285 = vadd.f32 %v11284, %v11273
        %v11286 = vadd.f32 %v11285, %v11275
        %v11287 = vadd.f32 %v11286, %v11277
        %v11288 = vadd.f32 %v11287, %v11279
        %v11289 = vadd.f32 %v11288, %v11281
        %v11290 = vrot.slane %v11289, 4
        %v11291 = vadd.f32 %v11289, %v11290
        %v11292 = vrot.slane %v11291, 2
        %v11293 = vadd.f32 %v11291, %v11292
        %v11294 = vrot.slane %v11293, 1
        %v11295 = vadd.f32 %v11293, %v11294
        %v11296 = vadd.f32 %v11268, %v11270
        %v11297 = vadd.f32 %v11296, %v11272
        %v11298 = vadd.f32 %v11297, %v11274
        %v11299 = vadd.f32 %v11298, %v11276
        %v11300 = vadd.f32 %v11299, %v11278
        %v11301 = vadd.f32 %v11300, %v11280
        %v11302 = vadd.f32 %v11301, %v11282
        %v11303 = vrot.slane %v11302, 4
        %v11304 = vadd.f32 %v11302, %v11303
        %v11305 = vrot.slane %v11304, 2
        %v11306 = vadd.f32 %v11304, %v11305
        %v11307 = vrot.slane %v11306, 1
        %v11308 = vadd.f32 %v11306, %v11307
        %v11309 = vrcp.pop 64.0
        %v11310 = vmul.f32 %v11295, %v11309
        %v11311 = vmul.f32 %v11308, %v11309
        %v11312 = vld [vmem:[#allocation16] sm:$0x3f]
        %v11313 = vld [vmem:[#allocation16 + $0x8] sm:$0x3f]
        %v11314 = vmul.f32 %v11310, %v11312
        %v11315 = vmul.f32 %v11311, %v11313
        %vm11316 = vcmask 1045504
        %v11317 = vsel %vm11316, %v11314, 0.0
        %v11318 = vsel %vm11316, %v11315, 0.0
        %v11319 = vadd.f32 %v11317, %v11318
        %11320 = vadd.xlane.f32.xlu0 %v11319
        %v11321 = vpop.xlane.xlu0 %11320
        %v11322 = vld [vmem:[#allocation18] sm:$0x1]
        %v11324 = vlaneseq
        %v11325 = vshrl.u32 %v11324, 7
        %v11326 = vsub.s32 0, %v11325
        %v11327 = vrot.slane %v11322, %v11326
        %11329 = vbcast.lane.b32.xlu0 %v11327, 256
        %v11330 = vpop.permute.xlu0 %11329
        %v11332 = vadd.f32 %v11321, %v11330
        %v11333 = vmul.f32 %v11332, 0.01
        %11335 = vset.pattern.permute.xlu0 0
        %11336 = vperm.xlu0 %11335, %v11333
        %v11337 = vpop.permute.xlu0 %11336
        %v11338 = vlaneseq
        %v11339 = vand.u32 %v11338, 127
        %v11340 = vlaneseq
        %v11341 = vshrl.u32 %v11340, 7
        %v11342 = vsub.s32 %v11339, %v11341
        %v11343 = vrot.slane %v11337, %v11342
        %vm11345 = vcmask 40960
        %11346 = vst.msk [vmem:[%s455] sm:$0x1] %vm11345, %v11343
        %s11347 = sand.u32 %s232, 1
        %s11348 = scalar_lea.sflag [#allocation6], %s11347
        %s11349 = sand.u32 %s232, 1
        %s11350 = scalar_lea.vmem [#allocation19], %s11349
        // Predicated region
        $region93: #{tpu_custom_call.1} parent=55 // pred_check
          %p11351 = pneg %p242
        $region94: #{tpu_custom_call.1} parent=55 // pred_check_branch
          %11353 = sbr.rel (%p11351) target = $region96
        $region95: #{tpu_custom_call.1} parent=55 // pred_region
          %s11355 = ssub.s32 16, 16
          %11356 = vsyncadd %s11348, %s11355
          %s11357 = smul.addr %s30, 16
          %s11358 = scalar_lea.hbm %s9, %s11357
          %s11360 = sshll.u32 %s11350, 4
          %s11361 = int_to_ptr.vmem [resolvable:$true] %s11360
          %11363 = dma.vmem_to_hbm [thread:$0]  %s11361, 16, %s11358, %s11348
        $region96: #{tpu_custom_call.1} parent=55 // pred_fallthru
          _
      $region56: #{tpu_custom_call.1} parent=5 // pred_fallthru
        _
      %p11364 = scmp.le.s32.totalorder 2, %s25
      // Predicated region
      $region97: #{tpu_custom_call.1} parent=5 // pred_check
        %p11365 = pneg %p11364
      $region98: #{tpu_custom_call.1} parent=5 // pred_check_branch
        %11367 = sbr.rel (%p11365) target = $region100
      $region99: #{tpu_custom_call.1} parent=5 // pred_region
        %s11368 = ssub.s32 %s25, 2
        // Predicated region
        $region101: #{tpu_custom_call.1} parent=99 // pred_check
          %p11369 = pneg %p248
        $region102: #{tpu_custom_call.1} parent=99 // pred_check_branch
          %11371 = sbr.rel (%p11369) target = $region104
        $region103: #{tpu_custom_call.1} parent=99 // pred_region
          %s11372 = sand.u32 %s233, 1
          %s11373 = scalar_lea.sflag [#allocation6], %s11372
          %s11374 = sand.u32 %s233, 1
          %s11375 = scalar_lea.vmem [#allocation19], %s11374
          %11376 = dma.done %s11373, 16
        $region104: #{tpu_custom_call.1} parent=99 // pred_fallthru
          _
      $region100: #{tpu_custom_call.1} parent=5 // pred_fallthru
        _
    $region6: #{tpu_custom_call.1} parent=1 // loop_footer
      %s29 = sadd.s32 1, %s25
    $region7: #{tpu_custom_call.1} parent=1 // loop_footer_branch
      %24 = sbr.rel target = $region3
    $region8: #{tpu_custom_call.1} parent=1 // loop_exit
      _
    %11377 = vsyncpa [#allocation5], 1
    %s11378 = scalar_lea.sflag [#allocation5], 1
    %11379 = vsyncpa %s11378, 1
    %11380 = vsyncpa [#allocation8], 1
    %11381 = vsyncpa [#allocation11], 1
    %11382 = vsyncpa [#allocation14], 1
    %11383 = vsyncpa [#allocation17], 1
    %11384 = vsyncpa [#allocation6], 1
    %s11385 = scalar_lea.sflag [#allocation6], 1
    %11386 = vsyncpa %s11385, 1

</llo_original>
